<compile_context>
chip_gen: v6e
topology: v6e:2x2x1
jax: 0.10.0
libtpu: 0.0.40
codegen_flags: <defaults>
</compile_context>

<pallas_src>
import functools

import jax
import jax.numpy as jnp
from jax.experimental import pallas as pl
from jax.experimental.pallas import tpu as pltpu


def _fused_kernel(lane_align,
                  off_ref,                       # SMEM: (6,) column offsets
                  x_ref, pool_ref, wf_ref, bf_ref, wc_ref, bc_ref,
                  wfin_ref, bfin_ref,            # inputs
                  o_ref,                         # output (B, NC)
                  ycomb_ref):                    # VMEM scratch (B, D_pad) f32
    """One grid step = one backbone; final head runs on the last step."""
    i = pl.program_id(0)

    @pl.when(i == 0)
    def _():
        ycomb_ref[...] = jnp.zeros_like(ycomb_ref)

    # ---- surrogate backbone ----
    x = x_ref[0]                                  # (B*HW, C) bf16
    # 1x1 conv over all spatial positions of the whole batch = one MXU matmul.
    f = jnp.dot(x, wf_ref[0], preferred_element_type=jnp.float32)   # (B*HW, F)
    f = f + bf_ref[0]                                                # (1, F) bias
    # SiLU; reciprocal goes to the EUP slot.
    f = f * pl.reciprocal(1.0 + jnp.exp(-f), approx=True)
    # Global average pool expressed as an MXU matmul with a (B, B*HW)
    # block-diagonal 1/HW matrix.
    pooled = jnp.dot(pool_ref[...], f.astype(jnp.bfloat16),
                     preferred_element_type=jnp.float32)             # (B, F)

    # ---- replaced classifier head (Dropout is identity in eval) ----
    y = jnp.dot(pooled.astype(jnp.bfloat16), wc_ref[0],
                preferred_element_type=jnp.float32) + bc_ref[0]      # (B, OUTK_pad)

    # Write into the combined-feature scratch at this backbone's column offset.
    # Padded (zero) tail columns are either overwritten by the next backbone's
    # valid columns (grid is sequential) or hit zero rows of the padded final
    # weight, so padding never changes the result.
    off = off_ref[i]
    if lane_align:
        off = pl.multiple_of(off, lane_align)
    ycomb_ref[:, pl.ds(off, y.shape[-1])] = y

    # ---- final Linear(15n, num_classes) + sigmoid on the last step ----
    @pl.when(i == pl.num_programs(0) - 1)
    def _():
        z = jnp.dot(ycomb_ref[...].astype(jnp.bfloat16), wfin_ref[...],
                    preferred_element_type=jnp.float32) + bfin_ref[...]
        o_ref[...] = (1.0 / (1.0 + jnp.exp(-z))).astype(o_ref.dtype)


def _round_up(x, m):
    return ((x + m - 1) // m) * m


def prepare_fused_params(params, num_outputs):
    """Stack / pad / cast per-backbone params for the fused kernel."""
    n = num_outputs
    widths = [3 * n] * 3 + [2 * n] * 3
    offsets = [0]
    for w in widths[:-1]:
        offsets.append(offsets[-1] + w)
    # Pad every classifier block only to the widest block rounded to a lane
    # multiple (128).  w_cls dominates this kernel's HBM traffic, so keeping
    # the padding minimal is the main perf lever.
    outk_pad = _round_up(max(widths), 128)
    d_valid = sum(widths)                         # 15 * n
    d_pad = offsets[-1] + outk_pad                # widest possible write extent

    wf = jnp.stack(params["w_feat"]).astype(jnp.bfloat16)           # (6, C, F)
    bf = jnp.stack(params["b_feat"]).astype(jnp.float32)            # (6, 1, F)
    wc = jnp.stack([jnp.pad(params["w_cls"][k],
                            ((0, 0), (0, outk_pad - widths[k])))
                    for k in range(6)]).astype(jnp.bfloat16)         # (6, F, OUTK_pad)
    bc = jnp.stack([jnp.pad(params["b_cls"][k],
                            ((0, 0), (0, outk_pad - widths[k])))
                    for k in range(6)]).astype(jnp.float32)          # (6, 1, OUTK_pad)
    w_final = jnp.pad(params["w_final"],
                      ((0, d_pad - d_valid), (0, 0))).astype(jnp.bfloat16)
    b_final = params["b_final"].astype(jnp.float32)
    col_off = jnp.asarray(offsets, dtype=jnp.int32)
    lane_align = 128 if all(o % 128 == 0 for o in offsets) else 0
    return {"w_feat": wf, "b_feat": bf, "w_cls": wc, "b_cls": bc,
            "w_final": w_final, "b_final": b_final,
            "col_off": col_off, "lane_align": lane_align}


def double_combined_classifier_forward(inputs, fused):
    """inputs: list of 6 NCHW tensors (same shape). fused: prepare_fused_params()."""
    B, C, H, W = inputs[0].shape
    HW = H * W
    BHW = B * HW

    # layout: stack the six views, NCHW -> (HW)C per sample, flatten batch into
    # the matmul M dimension -> (6, B*HW, C).
    x_all = jnp.stack(inputs)                                        # (6, B, C, H, W)
    x_all = jnp.transpose(x_all, (0, 1, 3, 4, 2)).reshape(6, BHW, C)
    x_all = x_all.astype(jnp.bfloat16)

    # Block-diagonal averaging matrix: pool[b, b*HW:(b+1)*HW] = 1/HW.
    pool = (jnp.repeat(jnp.eye(B, dtype=jnp.float32), HW, axis=1) / HW)
    pool = pool.astype(jnp.bfloat16)

    F = fused["w_feat"].shape[-1]
    OUTK = fused["w_cls"].shape[-1]
    D_PAD, NC = fused["w_final"].shape

    kernel = functools.partial(_fused_kernel, fused["lane_align"])

    grid_spec = pltpu.PrefetchScalarGridSpec(
        num_scalar_prefetch=1,                    # col_off -> SMEM
        grid=(6,),                                # one step per backbone
        in_specs=[
            pl.BlockSpec((1, BHW, C), lambda i, off: (i, 0, 0)),     # x_i
            pl.BlockSpec((B, BHW), lambda i, off: (0, 0)),           # pooling matrix (resident)
            pl.BlockSpec((1, C, F), lambda i, off: (i, 0, 0)),       # feature weight
            pl.BlockSpec((1, 1, F), lambda i, off: (i, 0, 0)),       # feature bias
            pl.BlockSpec((1, F, OUTK), lambda i, off: (i, 0, 0)),    # classifier weight
            pl.BlockSpec((1, 1, OUTK), lambda i, off: (i, 0, 0)),    # classifier bias
            pl.BlockSpec((D_PAD, NC), lambda i, off: (0, 0)),        # final weight (resident)
            pl.BlockSpec((1, NC), lambda i, off: (0, 0)),            # final bias (resident)
        ],
        out_specs=pl.BlockSpec((B, NC), lambda i, off: (0, 0)),      # resident output
        scratch_shapes=[pltpu.VMEM((B, D_PAD), jnp.float32)],        # concat buffer
    )

    return pl.pallas_call(
        kernel,
        out_shape=jax.ShapeDtypeStruct((B, NC), jnp.float32),
        grid_spec=grid_spec,
        compiler_params=pltpu.CompilerParams(
            # Sequential: scratch accumulation + last-step head require order.
            dimension_semantics=("arbitrary",),
            vmem_limit_bytes=32 * 1024 * 1024,
        ),
    )(fused["col_off"], x_all, pool,
      fused["w_feat"], fused["b_feat"], fused["w_cls"], fused["b_cls"],
      fused["w_final"], fused["b_final"])


def make_params(key, c_in, feat_dim, num_outputs, num_classes):
    # Classifier output widths: 3x for the first three backbones, 2x for the rest.
    out_dims = [num_outputs * 3] * 3 + [num_outputs * 2] * 3
    keys = jax.random.split(key, 6 * 4 + 2)
    ki = 0
    w_feat, b_feat, w_cls, b_cls = [], [], [], []
    for k in range(6):
        w_feat.append(0.5 * jax.random.normal(keys[ki], (c_in, feat_dim),
                                              dtype=jnp.float32)); ki += 1
        b_feat.append(0.5 * jax.random.normal(keys[ki], (1, feat_dim),
                                              dtype=jnp.float32)); ki += 1
        w_cls.append(0.1 * jax.random.normal(keys[ki], (feat_dim, out_dims[k]),
                                             dtype=jnp.float32)); ki += 1
        b_cls.append(0.1 * jax.random.normal(keys[ki], (1, out_dims[k]),
                                             dtype=jnp.float32)); ki += 1
    d_comb = num_outputs * 15
    w_final = 0.05 * jax.random.normal(keys[ki], (d_comb, num_classes),
                                       dtype=jnp.float32); ki += 1
    b_final = 0.05 * jax.random.normal(keys[ki], (1, num_classes),
                                       dtype=jnp.float32)
    return {"w_feat": w_feat, "b_feat": b_feat,
            "w_cls": w_cls, "b_cls": b_cls,
            "w_final": w_final, "b_final": b_final}


def reference_forward(inputs, params):
    """Pure-JAX reference with the same bf16 weight/activation casts."""
    outs = []
    for k in range(6):
        B, C, H, W = inputs[k].shape
        x = jnp.transpose(inputs[k], (0, 2, 3, 1)).reshape(B, H * W, C)
        x = x.astype(jnp.bfloat16)
        wf = params["w_feat"][k].astype(jnp.bfloat16)
        f = jnp.einsum("bsc,cf->bsf", x, wf,
                       preferred_element_type=jnp.float32)
        f = f + params["b_feat"][k][None]
        f = f * (1.0 / (1.0 + jnp.exp(-f)))                      # SiLU
        pooled = jnp.mean(f, axis=1)                             # global avg pool
        y = jnp.dot(pooled.astype(jnp.bfloat16),
                    params["w_cls"][k].astype(jnp.bfloat16),
                    preferred_element_type=jnp.float32) + params["b_cls"][k]
        outs.append(y)
    y_combined = jnp.concatenate(outs, axis=-1)                  # (B, 15n)
    z = jnp.dot(y_combined.astype(jnp.bfloat16),
                params["w_final"].astype(jnp.bfloat16),
                preferred_element_type=jnp.float32) + params["b_final"]
    return 1.0 / (1.0 + jnp.exp(-z))


if __name__ == "__main__":
    # Small synthetic shapes: batch=2, channels=4, spatial 16x16.
    B, C, H, W = 2, 4, 16, 16
    FEAT = 1280            # classifier input dim dictated by the module
    NUM_OUTPUTS = 128      # small stand-in for the default 512
    NUM_CLASSES = 5

    key = jax.random.PRNGKey(0)
    k_in, k_par = jax.random.split(key)
    in_keys = jax.random.split(k_in, 6)
    inputs = [jax.random.normal(in_keys[i], (B, C, H, W), dtype=jnp.float32)
              for i in range(6)]

    params = make_params(k_par, C, FEAT, NUM_OUTPUTS, NUM_CLASSES)
    fused = prepare_fused_params(params, NUM_OUTPUTS)

    out = double_combined_classifier_forward(inputs, fused)
    out = jax.block_until_ready(out)

    assert out.shape == (B, NUM_CLASSES)
    assert bool(jnp.all(jnp.isfinite(out)))
    assert bool(jnp.all((out >= 0.0) & (out <= 1.0)))

    ref = reference_forward(inputs, params)
    max_diff = float(jnp.max(jnp.abs(out - jnp.asarray(ref, jnp.float32))))
    assert max_diff < 5e-2, f"kernel vs reference max diff {max_diff}"
    print("KERNEL_OK")
</pallas_src>

<mosaic_0001>
module attributes {stable_mosaic.version = 11 : i64} {
  func.func @_fused_kernel(%arg0: i32, %arg1: memref<6xi32, #tpu.memory_space<smem>>, %arg2: memref<1x512x4xbf16, #tpu.memory_space<vmem>>, %arg3: memref<2x512xbf16, #tpu.memory_space<vmem>>, %arg4: memref<1x4x1280xbf16, #tpu.memory_space<vmem>>, %arg5: memref<1x1x1280xf32, #tpu.memory_space<vmem>>, %arg6: memref<1x1280x384xbf16, #tpu.memory_space<vmem>>, %arg7: memref<1x1x384xf32, #tpu.memory_space<vmem>>, %arg8: memref<2048x5xbf16, #tpu.memory_space<vmem>>, %arg9: memref<1x5xf32, #tpu.memory_space<vmem>>, %arg10: memref<2x5xf32, #tpu.memory_space<vmem>>, %arg11: memref<2x2048xf32, #tpu.memory_space<vmem>>) attributes {dimension_semantics = [#tpu.dimension_semantics<arbitrary>], iteration_bounds = array<i64: 6>, scalar_prefetch = 1 : i64, scratch_operands = 1 : i64, tpu.core_type = #tpu.core_type<tc>, window_params = [{transform_indices = @transform_0, window_bounds = array<i64: 1, 512, 4>}, {pipeline_mode = #tpu.pipeline_mode<synchronous>, transform_indices = @transform_1, window_bounds = array<i64: 2, 512>}, {transform_indices = @transform_2, window_bounds = array<i64: 1, 4, 1280>}, {transform_indices = @transform_3, window_bounds = array<i64: 1, 1, 1280>}, {transform_indices = @transform_4, window_bounds = array<i64: 1, 1280, 384>}, {transform_indices = @transform_5, window_bounds = array<i64: 1, 1, 384>}, {pipeline_mode = #tpu.pipeline_mode<synchronous>, transform_indices = @transform_6, window_bounds = array<i64: 2048, 5>}, {pipeline_mode = #tpu.pipeline_mode<synchronous>, transform_indices = @transform_7, window_bounds = array<i64: 1, 5>}, {pipeline_mode = #tpu.pipeline_mode<synchronous>, transform_indices = @transform_8, window_bounds = array<i64: 2, 5>}]} {
    %c0_i32 = arith.constant 0 : i32
    %0 = arith.cmpi eq, %arg0, %c0_i32 : i32
    %1 = arith.extui %0 : i1 to i32
    %c0_i32_0 = arith.constant 0 : i32
    %2 = arith.cmpi ne, %1, %c0_i32_0 : i32
    scf.if %2 {
      %cst_23 = arith.constant 0.000000e+00 : f32
      %38 = vector.broadcast %cst_23 : f32 to vector<2x2048xf32>
      %c0_24 = arith.constant 0 : index
      %c0_25 = arith.constant 0 : index
      %39 = vector.load %arg11[%c0_24, %c0_25] : memref<2x2048xf32, #tpu.memory_space<vmem>>, vector<2x2048xf32>
      tpu.vector_store %arg11[%c0_24, %c0_25], %38 {strides = array<i32>} : memref<2x2048xf32, #tpu.memory_space<vmem>>, vector<2x2048xf32>,
    } else {
    }
    %c0 = arith.constant 0 : index
    %c0_1 = arith.constant 0 : index
    %c0_2 = arith.constant 0 : index
    %3 = vector.load %arg2[%c0, %c0_1, %c0_2] : memref<1x512x4xbf16, #tpu.memory_space<vmem>>, vector<1x512x4xbf16>
    %4 = vector.shape_cast %3 : vector<1x512x4xbf16> to vector<512x4xbf16>
    %c0_3 = arith.constant 0 : index
    %c0_4 = arith.constant 0 : index
    %c0_5 = arith.constant 0 : index
    %5 = vector.load %arg4[%c0_3, %c0_4, %c0_5] : memref<1x4x1280xbf16, #tpu.memory_space<vmem>>, vector<1x4x1280xbf16>
    %6 = vector.shape_cast %5 : vector<1x4x1280xbf16> to vector<4x1280xbf16>
    %cst = arith.constant dense<0.000000e+00> : vector<512x1280xf32>
    %7 = tpu.matmul %4, %6, %cst {dimension_numbers = #tpu.dot_dimension_numbers<[1], [0], [0], [1], [0, 0, 1, 1], [], []>} : vector<512x4xbf16>, vector<4x1280xbf16>, vector<512x1280xf32> -> vector<512x1280xf32>
    %c0_6 = arith.constant 0 : index
    %c0_7 = arith.constant 0 : index
    %c0_8 = arith.constant 0 : index
    %8 = vector.load %arg5[%c0_6, %c0_7, %c0_8] : memref<1x1x1280xf32, #tpu.memory_space<vmem>>, vector<1x1x1280xf32>
    %9 = vector.shape_cast %8 : vector<1x1x1280xf32> to vector<1x1280xf32>
    %10 = vector.broadcast %9 : vector<1x1280xf32> to vector<512x1280xf32>
    %11 = arith.addf %7, %10 : vector<512x1280xf32>
    %cst_9 = arith.constant 0.000000e+00 : f32
    %12 = vector.broadcast %cst_9 : f32 to vector<512x1280xf32>
    %13 = arith.subf %12, %11 : vector<512x1280xf32>
    %14 = math.exp %13 : vector<512x1280xf32>
    %cst_10 = arith.constant 1.000000e+00 : f32
    %15 = vector.broadcast %cst_10 : f32 to vector<512x1280xf32>
    %16 = arith.addf %15, %14 : vector<512x1280xf32>
    %17 = tpu.reciprocal %16 {approx = true} : vector<512x1280xf32> -> vector<512x1280xf32>
    %18 = arith.mulf %11, %17 : vector<512x1280xf32>
    %c0_11 = arith.constant 0 : index
    %c0_12 = arith.constant 0 : index
    %19 = vector.load %arg3[%c0_11, %c0_12] : memref<2x512xbf16, #tpu.memory_space<vmem>>, vector<2x512xbf16>
    %20 = arith.truncf %18 : vector<512x1280xf32> to vector<512x1280xbf16>
    %cst_13 = arith.constant dense<0.000000e+00> : vector<2x1280xf32>
    %21 = tpu.matmul %19, %20, %cst_13 {dimension_numbers = #tpu.dot_dimension_numbers<[1], [0], [0], [1], [0, 0, 1, 1], [], []>} : vector<2x512xbf16>, vector<512x1280xbf16>, vector<2x1280xf32> -> vector<2x1280xf32>
    %22 = arith.truncf %21 : vector<2x1280xf32> to vector<2x1280xbf16>
    %c0_14 = arith.constant 0 : index
    %c0_15 = arith.constant 0 : index
    %c0_16 = arith.constant 0 : index
    %23 = vector.load %arg6[%c0_14, %c0_15, %c0_16] : memref<1x1280x384xbf16, #tpu.memory_space<vmem>>, vector<1x1280x384xbf16>
    %24 = vector.shape_cast %23 : vector<1x1280x384xbf16> to vector<1280x384xbf16>
    %cst_17 = arith.constant dense<0.000000e+00> : vector<2x384xf32>
    %25 = tpu.matmul %22, %24, %cst_17 {dimension_numbers = #tpu.dot_dimension_numbers<[1], [0], [0], [1], [0, 0, 1, 1], [], []>} : vector<2x1280xbf16>, vector<1280x384xbf16>, vector<2x384xf32> -> vector<2x384xf32>
    %c0_18 = arith.constant 0 : index
    %c0_19 = arith.constant 0 : index
    %c0_20 = arith.constant 0 : index
    %26 = vector.load %arg7[%c0_18, %c0_19, %c0_20] : memref<1x1x384xf32, #tpu.memory_space<vmem>>, vector<1x1x384xf32>
    %27 = vector.shape_cast %26 : vector<1x1x384xf32> to vector<1x384xf32>
    %28 = vector.broadcast %27 : vector<1x384xf32> to vector<2x384xf32>
    %29 = arith.addf %25, %28 : vector<2x384xf32>
    %30 = arith.index_cast %arg0 : i32 to index
    %31 = memref.load %arg1[%30] : memref<6xi32, #tpu.memory_space<smem>>
    %32 = tpu.assume_multiple %31, 128 : i32
    %c0_21 = arith.constant 0 : index
    %33 = arith.index_cast %32 : i32 to index
    %34 = vector.load %arg11[%c0_21, %33] : memref<2x2048xf32, #tpu.memory_space<vmem>>, vector<2x384xf32>
    tpu.vector_store %arg11[%c0_21, %33], %29 {strides = array<i32>} : memref<2x2048xf32, #tpu.memory_space<vmem>>, vector<2x384xf32>,
    %c5_i32 = arith.constant 5 : i32
    %35 = arith.cmpi eq, %arg0, %c5_i32 : i32
    %36 = arith.extui %35 : i1 to i32
    %c0_i32_22 = arith.constant 0 : i32
    %37 = arith.cmpi ne, %36, %c0_i32_22 : i32
    scf.if %37 {
      %c0_23 = arith.constant 0 : index
      %c0_24 = arith.constant 0 : index
      %38 = vector.load %arg11[%c0_23, %c0_24] : memref<2x2048xf32, #tpu.memory_space<vmem>>, vector<2x2048xf32>
      %39 = arith.truncf %38 : vector<2x2048xf32> to vector<2x2048xbf16>
      %c0_25 = arith.constant 0 : index
      %c0_26 = arith.constant 0 : index
      %40 = vector.load %arg8[%c0_25, %c0_26] : memref<2048x5xbf16, #tpu.memory_space<vmem>>, vector<2048x5xbf16>
      %cst_27 = arith.constant dense<0.000000e+00> : vector<2x5xf32>
      %41 = tpu.matmul %39, %40, %cst_27 {dimension_numbers = #tpu.dot_dimension_numbers<[1], [0], [0], [1], [0, 0, 1, 1], [], []>} : vector<2x2048xbf16>, vector<2048x5xbf16>, vector<2x5xf32> -> vector<2x5xf32>
      %c0_28 = arith.constant 0 : index
      %c0_29 = arith.constant 0 : index
      %42 = vector.load %arg9[%c0_28, %c0_29] : memref<1x5xf32, #tpu.memory_space<vmem>>, vector<1x5xf32>
      %43 = vector.broadcast %42 : vector<1x5xf32> to vector<2x5xf32>
      %44 = arith.addf %41, %43 : vector<2x5xf32>
      %cst_30 = arith.constant 0.000000e+00 : f32
      %45 = vector.broadcast %cst_30 : f32 to vector<2x5xf32>
      %46 = arith.subf %45, %44 : vector<2x5xf32>
      %47 = math.exp %46 : vector<2x5xf32>
      %cst_31 = arith.constant 1.000000e+00 : f32
      %48 = vector.broadcast %cst_31 : f32 to vector<2x5xf32>
      %49 = arith.addf %48, %47 : vector<2x5xf32>
      %cst_32 = arith.constant 1.000000e+00 : f32
      %50 = vector.broadcast %cst_32 : f32 to vector<2x5xf32>
      %51 = arith.divf %50, %49 : vector<2x5xf32>
      %c0_33 = arith.constant 0 : index
      %c0_34 = arith.constant 0 : index
      %52 = vector.load %arg10[%c0_33, %c0_34] : memref<2x5xf32, #tpu.memory_space<vmem>>, vector<2x5xf32>
      tpu.vector_store %arg10[%c0_33, %c0_34], %51 {strides = array<i32>} : memref<2x5xf32, #tpu.memory_space<vmem>>, vector<2x5xf32>,
    } else {
    }
    return
  }
  func.func @transform_0(%arg0: i32, %arg1: memref<6xi32, #tpu.memory_space<smem>>) -> (i32, i32, i32) {
    %c0_i32 = arith.constant 0 : i32
    %c0_i32_0 = arith.constant 0 : i32
    %c0_i32_1 = arith.constant 0 : i32
    return %arg0, %c0_i32, %c0_i32_0 : i32, i32, i32
  }
  func.func @transform_1(%arg0: i32, %arg1: memref<6xi32, #tpu.memory_space<smem>>) -> (i32, i32) {
    %c0_i32 = arith.constant 0 : i32
    %c0_i32_0 = arith.constant 0 : i32
    %c0_i32_1 = arith.constant 0 : i32
    return %c0_i32, %c0_i32_0 : i32, i32
  }
  func.func @transform_2(%arg0: i32, %arg1: memref<6xi32, #tpu.memory_space<smem>>) -> (i32, i32, i32) {
    %c0_i32 = arith.constant 0 : i32
    %c0_i32_0 = arith.constant 0 : i32
    %c0_i32_1 = arith.constant 0 : i32
    return %arg0, %c0_i32, %c0_i32_0 : i32, i32, i32
  }
  func.func @transform_3(%arg0: i32, %arg1: memref<6xi32, #tpu.memory_space<smem>>) -> (i32, i32, i32) {
    %c0_i32 = arith.constant 0 : i32
    %c0_i32_0 = arith.constant 0 : i32
    %c0_i32_1 = arith.constant 0 : i32
    return %arg0, %c0_i32, %c0_i32_0 : i32, i32, i32
  }
  func.func @transform_4(%arg0: i32, %arg1: memref<6xi32, #tpu.memory_space<smem>>) -> (i32, i32, i32) {
    %c0_i32 = arith.constant 0 : i32
    %c0_i32_0 = arith.constant 0 : i32
    %c0_i32_1 = arith.constant 0 : i32
    return %arg0, %c0_i32, %c0_i32_0 : i32, i32, i32
  }
  func.func @transform_5(%arg0: i32, %arg1: memref<6xi32, #tpu.memory_space<smem>>) -> (i32, i32, i32) {
    %c0_i32 = arith.constant 0 : i32
    %c0_i32_0 = arith.constant 0 : i32
    %c0_i32_1 = arith.constant 0 : i32
    return %arg0, %c0_i32, %c0_i32_0 : i32, i32, i32
  }
  func.func @transform_6(%arg0: i32, %arg1: memref<6xi32, #tpu.memory_space<smem>>) -> (i32, i32) {
    %c0_i32 = arith.constant 0 : i32
    %c0_i32_0 = arith.constant 0 : i32
    %c0_i32_1 = arith.constant 0 : i32
    return %c0_i32, %c0_i32_0 : i32, i32
  }
  func.func @transform_7(%arg0: i32, %arg1: memref<6xi32, #tpu.memory_space<smem>>) -> (i32, i32) {
    %c0_i32 = arith.constant 0 : i32
    %c0_i32_0 = arith.constant 0 : i32
    %c0_i32_1 = arith.constant 0 : i32
    return %c0_i32, %c0_i32_0 : i32, i32
  }
  func.func @transform_8(%arg0: i32, %arg1: memref<6xi32, #tpu.memory_space<smem>>) -> (i32, i32) {
    %c0_i32 = arith.constant 0 : i32
    %c0_i32_0 = arith.constant 0 : i32
    %c0_i32_1 = arith.constant 0 : i32
    return %c0_i32, %c0_i32_0 : i32, i32
  }
}

</mosaic_0001>

<llo_original>
// kernel: tpu_custom_call.1
$region0: #{tpu_custom_call.1}
  #allocation0 [shape = 'u32[]', space=smem, size = 0x4, offset = 0x4, fixed_abs, tag = 'smem constant byte address 0x4 - core index']
  #allocation1 [shape = 'u32[144,128]{1,0:T(1,128)}', space=vmem, size = 0x12000, scoped, tag = 'internal scratch']
  #allocation2 [shape = 'f32[2,2048]{1,0:T(2,128)}', space=vmem, size = 0x4000, scoped, tag = 'scratch operand']
  #allocation3 [shape = 's32[1]{0}', space=sflag, size = 0x4, scoped, tag = 'scoped memory for tpu_custom_call.1']
  #allocation4 [shape = 'u8[512]{0}', space=smem, size = 0x200, scoped, tag = 'prefetched SMEM operand 0']
  %s0 = inlined_call_operand.hbm [shape: s32[6], index: 0, kind: input, shape index: {}]
  %s1 = inlined_call_operand.vmem [shape: bf16[6,512,4], index: 1, kind: input, shape index: {}]
  %s2 = inlined_call_operand.hbm [shape: bf16[2,512], index: 2, kind: input, shape index: {}]
  %s3 = inlined_call_operand.hbm [shape: bf16[6,4,1280], index: 3, kind: input, shape index: {}]
  %s4 = inlined_call_operand.hbm [shape: f32[6,1,1280], index: 4, kind: input, shape index: {}]
  %s5 = inlined_call_operand.hbm [shape: bf16[6,1280,384], index: 5, kind: input, shape index: {}]
  %s6 = inlined_call_operand.hbm [shape: f32[6,1,384], index: 6, kind: input, shape index: {}]
  %s7 = inlined_call_operand.vmem [shape: bf16[2048,5], index: 7, kind: input, shape index: {}]
  %s8 = inlined_call_operand.hbm [shape: f32[1,5], index: 8, kind: input, shape index: {}]
  %s9 = inlined_call_operand.hbm [shape: f32[2,5], index: 9, kind: output, shape index: {}]
  %s10 = sld [smem:[#allocation0]]
  $region97: #{tpu_custom_call.1} parent=0
    _
  %s12 = ssub.s32 1, %s10
  %s13 = scalar_select 0, %s12, %s10
  %15 = dma.hbm_to_smem %s0, 16, [#allocation4], [#allocation3]
  %16 = dma.done [#allocation3], 16
  %17 = sfence
  $region1: #{tpu_custom_call.1} parent=0
    #allocation5 [shape = 'u8[2048]{0}', space=vmem, size = 0x800, scoped, tag = 'input window, operand 2, single buffered']
    #allocation6 [shape = 's32[2]{0}', space=sflag, size = 0x8, scoped, tag = 'scoped memory for tpu_custom_call.1']
    #allocation7 [shape = 's32[2]{0}', space=sflag, size = 0x8, scoped, tag = 'scoped memory for tpu_custom_call.1']
    #allocation8 [shape = 'u8[20480]{0}', space=vmem, size = 0x5000, scoped, tag = 'input window, operand 3']
    #allocation9 [shape = 's32[2]{0}', space=sflag, size = 0x8, scoped, tag = 'scoped memory for tpu_custom_call.1']
    #allocation10 [shape = 'u8[10240]{0}', space=vmem, size = 0x2800, scoped, tag = 'input window, operand 4']
    #allocation11 [shape = 'u8[1966080]{0}', space=vmem, size = 0x1e0000, scoped, tag = 'input window, operand 5']
    #allocation12 [shape = 's32[2]{0}', space=sflag, size = 0x8, scoped, tag = 'scoped memory for tpu_custom_call.1']
    #allocation13 [shape = 'u8[3072]{0}', space=vmem, size = 0xc00, scoped, tag = 'input window, operand 6']
    #allocation14 [shape = 'u8[512]{0}', space=vmem, size = 0x400, scoped, tag = 'input window, operand 8, single buffered']
    #allocation15 [shape = 's32[1]{0}', space=sflag, size = 0x4, scoped, tag = 'scoped memory for tpu_custom_call.1']
    #allocation16 [shape = 'u8[1024]{0}', space=vmem, size = 0x400, scoped, tag = 'output window, operand 0, single buffered']
    %18 = vsyncpa [#allocation6], 0
    %19 = vsyncpa [#allocation9], 0
    %s20 = scalar_lea.sflag [#allocation9], 1
    %21 = vsyncpa %s20, 0
    %22 = vsyncpa [#allocation12], 0
    %s23 = scalar_lea.sflag [#allocation12], 1
    %24 = vsyncpa %s23, 0
    %25 = vsyncpa [#allocation15], 0
    %26 = vsyncpa [#allocation7], 0
    loop: start=0, step=1, limit=8
    $region2: #{tpu_custom_call.1} parent=1 // loop_pre_header
      _
    $region3: #{tpu_custom_call.1} parent=1 // loop_header
      %s28 = sphi 0, %s32
      %p29 = scmp.ge.s32.totalorder %s28, 8
      %s38 = sphi 0, %s40
      %s41 = sphi 0, %s38
      %s42 = sphi 0, %s41
      %s58 = sphi 0, %s42
      %s62 = sphi 0, %s62
      %s64 = sphi 0, %s62
      %s65 = sphi 0, %s64
      %s79 = sphi 0, %s65
      %s85 = sphi 0, %s87
      %s88 = sphi 0, %s85
      %s89 = sphi 0, %s88
      %s105 = sphi 0, %s89
      %s111 = sphi 0, %s113
      %s114 = sphi 0, %s111
      %s115 = sphi 0, %s114
      %s131 = sphi 0, %s115
      %s137 = sphi 0, %s139
      %s140 = sphi 0, %s137
      %s141 = sphi 0, %s140
      %s157 = sphi 0, %s141
      %s163 = sphi 0, %s165
      %s166 = sphi 0, %s163
      %s167 = sphi 0, %s166
      %s183 = sphi 0, %s167
      %s187 = sphi 0, %s187
      %s189 = sphi 0, %s187
      %s190 = sphi 0, %s189
      %s204 = sphi 0, %s190
      %s208 = sphi 0, %s208
      %s210 = sphi 0, %s208
      %s211 = sphi 0, %s210
      %s225 = sphi 0, %s211
      %s229 = sphi 0, %s229
      %s231 = sphi 0, %s229
      %s232 = sphi 0, %s231
      %s246 = sphi 0, %s232
    $region4: #{tpu_custom_call.1} parent=1 // loop_header_branch
      %31 = sbr.rel (%p29) target = $region8
    $region5: #{tpu_custom_call.1} parent=1 // loop_body
      %s33 = ssub.s32 %s28, 1
      %s34 = ssub.s32 %s28, 2
      %s35 = sadd.s32 %s28, 1
      %s36 = ssub.s32 %s28, %s35
      %p37 = scmp.eq.s32.totalorder %s36, 0
      %s39 = sadd.s32 %s38, 1
      %s40 = scalar_select %p37, %s38, %s39
      %p43 = pneg %p37
      %p44 = scmp.eq.s32.totalorder %s28, 5
      %p45 = por %p43, %p44
      %p46 = scmp.ne.s32.totalorder %s38, %s41
      %p47 = scmp.eq.s32.totalorder %s28, 0
      %p48 = por %p46, %p47
      %p49 = scmp.ne.s32.totalorder %s38, %s41
      %p50 = scmp.eq.s32.totalorder %s33, 5
      %p51 = por %p49, %p50
      %p52 = scmp.ne.s32.totalorder %s41, %s42
      %p53 = scmp.eq.s32.totalorder %s33, 0
      %p54 = por %p52, %p53
      %p55 = scmp.ne.s32.totalorder %s41, %s42
      %p56 = scmp.eq.s32.totalorder %s34, 5
      %p57 = por %p55, %p56
      %p59 = scmp.ne.s32.totalorder %s42, %s58
      %p60 = scmp.eq.s32.totalorder %s34, 0
      %p61 = por %p59, %p60
      %s63 = sadd.s32 %s62, 1
      %p66 = scmp.eq.s32.totalorder %s28, 5
      %p67 = scmp.ne.s32.totalorder %s62, %s64
      %p68 = scmp.eq.s32.totalorder %s28, 0
      %p69 = por %p67, %p68
      %p70 = scmp.ne.s32.totalorder %s62, %s64
      %p71 = scmp.eq.s32.totalorder %s33, 5
      %p72 = por %p70, %p71
      %p73 = scmp.ne.s32.totalorder %s64, %s65
      %p74 = scmp.eq.s32.totalorder %s33, 0
      %p75 = por %p73, %p74
      %p76 = scmp.ne.s32.totalorder %s64, %s65
      %p77 = scmp.eq.s32.totalorder %s34, 5
      %p78 = por %p76, %p77
      %p80 = scmp.ne.s32.totalorder %s65, %s79
      %p81 = scmp.eq.s32.totalorder %s34, 0
      %p82 = por %p80, %p81
      %s83 = ssub.s32 %s28, %s35
      %p84 = scmp.eq.s32.totalorder %s83, 0
      %s86 = sadd.s32 %s85, 1
      %s87 = scalar_select %p84, %s85, %s86
      %p90 = pneg %p84
      %p91 = scmp.eq.s32.totalorder %s28, 5
      %p92 = por %p90, %p91
      %p93 = scmp.ne.s32.totalorder %s85, %s88
      %p94 = scmp.eq.s32.totalorder %s28, 0
      %p95 = por %p93, %p94
      %p96 = scmp.ne.s32.totalorder %s85, %s88
      %p97 = scmp.eq.s32.totalorder %s33, 5
      %p98 = por %p96, %p97
      %p99 = scmp.ne.s32.totalorder %s88, %s89
      %p100 = scmp.eq.s32.totalorder %s33, 0
      %p101 = por %p99, %p100
      %p102 = scmp.ne.s32.totalorder %s88, %s89
      %p103 = scmp.eq.s32.totalorder %s34, 5
      %p104 = por %p102, %p103
      %p106 = scmp.ne.s32.totalorder %s89, %s105
      %p107 = scmp.eq.s32.totalorder %s34, 0
      %p108 = por %p106, %p107
      %s109 = ssub.s32 %s28, %s35
      %p110 = scmp.eq.s32.totalorder %s109, 0
      %s112 = sadd.s32 %s111, 1
      %s113 = scalar_select %p110, %s111, %s112
      %p116 = pneg %p110
      %p117 = scmp.eq.s32.totalorder %s28, 5
      %p118 = por %p116, %p117
      %p119 = scmp.ne.s32.totalorder %s111, %s114
      %p120 = scmp.eq.s32.totalorder %s28, 0
      %p121 = por %p119, %p120
      %p122 = scmp.ne.s32.totalorder %s111, %s114
      %p123 = scmp.eq.s32.totalorder %s33, 5
      %p124 = por %p122, %p123
      %p125 = scmp.ne.s32.totalorder %s114, %s115
      %p126 = scmp.eq.s32.totalorder %s33, 0
      %p127 = por %p125, %p126
      %p128 = scmp.ne.s32.totalorder %s114, %s115
      %p129 = scmp.eq.s32.totalorder %s34, 5
      %p130 = por %p128, %p129
      %p132 = scmp.ne.s32.totalorder %s115, %s131
      %p133 = scmp.eq.s32.totalorder %s34, 0
      %p134 = por %p132, %p133
      %s135 = ssub.s32 %s28, %s35
      %p136 = scmp.eq.s32.totalorder %s135, 0
      %s138 = sadd.s32 %s137, 1
      %s139 = scalar_select %p136, %s137, %s138
      %p142 = pneg %p136
      %p143 = scmp.eq.s32.totalorder %s28, 5
      %p144 = por %p142, %p143
      %p145 = scmp.ne.s32.totalorder %s137, %s140
      %p146 = scmp.eq.s32.totalorder %s28, 0
      %p147 = por %p145, %p146
      %p148 = scmp.ne.s32.totalorder %s137, %s140
      %p149 = scmp.eq.s32.totalorder %s33, 5
      %p150 = por %p148, %p149
      %p151 = scmp.ne.s32.totalorder %s140, %s141
      %p152 = scmp.eq.s32.totalorder %s33, 0
      %p153 = por %p151, %p152
      %p154 = scmp.ne.s32.totalorder %s140, %s141
      %p155 = scmp.eq.s32.totalorder %s34, 5
      %p156 = por %p154, %p155
      %p158 = scmp.ne.s32.totalorder %s141, %s157
      %p159 = scmp.eq.s32.totalorder %s34, 0
      %p160 = por %p158, %p159
      %s161 = ssub.s32 %s28, %s35
      %p162 = scmp.eq.s32.totalorder %s161, 0
      %s164 = sadd.s32 %s163, 1
      %s165 = scalar_select %p162, %s163, %s164
      %p168 = pneg %p162
      %p169 = scmp.eq.s32.totalorder %s28, 5
      %p170 = por %p168, %p169
      %p171 = scmp.ne.s32.totalorder %s163, %s166
      %p172 = scmp.eq.s32.totalorder %s28, 0
      %p173 = por %p171, %p172
      %p174 = scmp.ne.s32.totalorder %s163, %s166
      %p175 = scmp.eq.s32.totalorder %s33, 5
      %p176 = por %p174, %p175
      %p177 = scmp.ne.s32.totalorder %s166, %s167
      %p178 = scmp.eq.s32.totalorder %s33, 0
      %p179 = por %p177, %p178
      %p180 = scmp.ne.s32.totalorder %s166, %s167
      %p181 = scmp.eq.s32.totalorder %s34, 5
      %p182 = por %p180, %p181
      %p184 = scmp.ne.s32.totalorder %s167, %s183
      %p185 = scmp.eq.s32.totalorder %s34, 0
      %p186 = por %p184, %p185
      %s188 = sadd.s32 %s187, 1
      %p191 = scmp.eq.s32.totalorder %s28, 5
      %p192 = scmp.ne.s32.totalorder %s187, %s189
      %p193 = scmp.eq.s32.totalorder %s28, 0
      %p194 = por %p192, %p193
      %p195 = scmp.ne.s32.totalorder %s187, %s189
      %p196 = scmp.eq.s32.totalorder %s33, 5
      %p197 = por %p195, %p196
      %p198 = scmp.ne.s32.totalorder %s189, %s190
      %p199 = scmp.eq.s32.totalorder %s33, 0
      %p200 = por %p198, %p199
      %p201 = scmp.ne.s32.totalorder %s189, %s190
      %p202 = scmp.eq.s32.totalorder %s34, 5
      %p203 = por %p201, %p202
      %p205 = scmp.ne.s32.totalorder %s190, %s204
      %p206 = scmp.eq.s32.totalorder %s34, 0
      %p207 = por %p205, %p206
      %s209 = sadd.s32 %s208, 1
      %p212 = scmp.eq.s32.totalorder %s28, 5
      %p213 = scmp.ne.s32.totalorder %s208, %s210
      %p214 = scmp.eq.s32.totalorder %s28, 0
      %p215 = por %p213, %p214
      %p216 = scmp.ne.s32.totalorder %s208, %s210
      %p217 = scmp.eq.s32.totalorder %s33, 5
      %p218 = por %p216, %p217
      %p219 = scmp.ne.s32.totalorder %s210, %s211
      %p220 = scmp.eq.s32.totalorder %s33, 0
      %p221 = por %p219, %p220
      %p222 = scmp.ne.s32.totalorder %s210, %s211
      %p223 = scmp.eq.s32.totalorder %s34, 5
      %p224 = por %p222, %p223
      %p226 = scmp.ne.s32.totalorder %s211, %s225
      %p227 = scmp.eq.s32.totalorder %s34, 0
      %p228 = por %p226, %p227
      %s230 = sadd.s32 %s229, 1
      %p233 = scmp.eq.s32.totalorder %s28, 5
      %p234 = scmp.ne.s32.totalorder %s229, %s231
      %p235 = scmp.eq.s32.totalorder %s28, 0
      %p236 = por %p234, %p235
      %p237 = scmp.ne.s32.totalorder %s229, %s231
      %p238 = scmp.eq.s32.totalorder %s33, 5
      %p239 = por %p237, %p238
      %p240 = scmp.ne.s32.totalorder %s231, %s232
      %p241 = scmp.eq.s32.totalorder %s33, 0
      %p242 = por %p240, %p241
      %p243 = scmp.ne.s32.totalorder %s231, %s232
      %p244 = scmp.eq.s32.totalorder %s34, 5
      %p245 = por %p243, %p244
      %p247 = scmp.ne.s32.totalorder %s232, %s246
      %p248 = scmp.eq.s32.totalorder %s34, 0
      %p249 = por %p247, %p248
      %p250 = scmp.le.s32.totalorder 1, %s28
      %p251 = scmp.lt.s32.totalorder %s28, 7
      %p252 = pnand %p250, %p251
      %p253 = pneg %p252
      // Predicated region
      $region9: #{tpu_custom_call.1} parent=5 // pred_check
        _
      $region10: #{tpu_custom_call.1} parent=5 // pred_check_branch
        %255 = sbr.rel (%p252) target = $region12
      $region11: #{tpu_custom_call.1} parent=5 // pred_region
        %s256 = ssub.s32 %s28, 1
        // Predicated region
        $region13: #{tpu_custom_call.1} parent=11 // pred_check
          %p257 = pneg %p75
        $region14: #{tpu_custom_call.1} parent=11 // pred_check_branch
          %259 = sbr.rel (%p257) target = $region16
        $region15: #{tpu_custom_call.1} parent=11 // pred_region
          %s261 = ssub.s32 64, 64
          %262 = vsyncadd [#allocation6], %s261
          %s264 = sshll.u32 [#allocation5], 4
          %s265 = int_to_ptr.vmem [resolvable:$true] %s264
          %267 = dma.hbm_to_vmem [thread:$0]  %s2, 64, %s265, [#allocation6]
        $region16: #{tpu_custom_call.1} parent=11 // pred_fallthru
          _
        // Predicated region
        $region17: #{tpu_custom_call.1} parent=11 // pred_check
          %p268 = pneg %p200
        $region18: #{tpu_custom_call.1} parent=11 // pred_check_branch
          %270 = sbr.rel (%p268) target = $region20
        $region19: #{tpu_custom_call.1} parent=11 // pred_region
          _
        $region20: #{tpu_custom_call.1} parent=11 // pred_fallthru
          _
        // Predicated region
        $region21: #{tpu_custom_call.1} parent=11 // pred_check
          %p271 = pneg %p221
        $region22: #{tpu_custom_call.1} parent=11 // pred_check_branch
          %273 = sbr.rel (%p271) target = $region24
        $region23: #{tpu_custom_call.1} parent=11 // pred_region
          %s275 = ssub.s32 16, 16
          %276 = vsyncadd [#allocation15], %s275
          %s278 = sshll.u32 [#allocation14], 4
          %s279 = int_to_ptr.vmem [resolvable:$true] %s278
          %281 = dma.hbm_to_vmem [thread:$0]  %s8, 16, %s279, [#allocation15]
        $region24: #{tpu_custom_call.1} parent=11 // pred_fallthru
          _
      $region12: #{tpu_custom_call.1} parent=5 // pred_fallthru
        _
      %p282 = scmp.lt.s32.totalorder %s28, 6
      // Predicated region
      $region25: #{tpu_custom_call.1} parent=5 // pred_check
        %p283 = pneg %p282
      $region26: #{tpu_custom_call.1} parent=5 // pred_check_branch
        %285 = sbr.rel (%p283) target = $region28
      $region27: #{tpu_custom_call.1} parent=5 // pred_region
        // Predicated region
        $region29: #{tpu_custom_call.1} parent=27 // pred_check
          %p286 = pneg %p48
        $region30: #{tpu_custom_call.1} parent=27 // pred_check_branch
          %288 = sbr.rel (%p286) target = $region32
        $region31: #{tpu_custom_call.1} parent=27 // pred_region
          %p289 = scmp.lt.s32.totalorder %s28, 5
          %s290 = scalar_select %p289, %s28, 5
          %s291 = smul.addr %s290, 64
          %s292 = smul.addr %s291, 4
          %s293 = scalar_lea.vmem %s1, %s292
        $region32: #{tpu_custom_call.1} parent=27 // pred_fallthru
          _
        // Predicated region
        $region33: #{tpu_custom_call.1} parent=27 // pred_check
          %p294 = pneg %p95
        $region34: #{tpu_custom_call.1} parent=27 // pred_check_branch
          %296 = sbr.rel (%p294) target = $region36
        $region35: #{tpu_custom_call.1} parent=27 // pred_region
          %s297 = sand.u32 %s28, 1
          %s298 = scalar_lea.sflag [#allocation9], %s297
          %s299 = sand.u32 %s85, 1
          %s300 = smul.addr %s299, 20
          %s301 = scalar_lea.vmem [#allocation8], %s300
          %s303 = ssub.s32 320, 320
          %304 = vsyncadd %s298, %s303
          %s305 = smul.addr %s28, 10
          %s306 = smul.addr %s305, 32
          %s307 = scalar_lea.hbm %s3, %s306
          %s309 = sshll.u32 %s301, 4
          %s310 = int_to_ptr.vmem [resolvable:$true] %s309
          %312 = dma.hbm_to_vmem [thread:$0]  %s307, 320, %s310, %s298
        $region36: #{tpu_custom_call.1} parent=27 // pred_fallthru
          _
        // Predicated region
        $region37: #{tpu_custom_call.1} parent=27 // pred_check
          %p313 = pneg %p121
        $region38: #{tpu_custom_call.1} parent=27 // pred_check_branch
          %315 = sbr.rel (%p313) target = $region40
        $region39: #{tpu_custom_call.1} parent=27 // pred_region
          %s316 = sand.u32 %s28, 1
          %s317 = scalar_lea.sflag [#allocation9], %s316
          %s318 = sand.u32 %s111, 1
          %s319 = smul.addr %s318, 10
          %s320 = scalar_lea.vmem [#allocation10], %s319
          %s322 = ssub.s32 160, 160
          %323 = vsyncadd %s317, %s322
          %s324 = smul.addr %s28, 10
          %s325 = smul.addr %s324, 16
          %s326 = scalar_lea.hbm %s4, %s325
          %s328 = sshll.u32 %s320, 4
          %s329 = int_to_ptr.vmem [resolvable:$true] %s328
          %331 = dma.hbm_to_vmem [thread:$0]  %s326, 160, %s329, %s317
        $region40: #{tpu_custom_call.1} parent=27 // pred_fallthru
          _
        // Predicated region
        $region41: #{tpu_custom_call.1} parent=27 // pred_check
          %p332 = pneg %p147
        $region42: #{tpu_custom_call.1} parent=27 // pred_check_branch
          %334 = sbr.rel (%p332) target = $region44
        $region43: #{tpu_custom_call.1} parent=27 // pred_region
          %s335 = sand.u32 %s28, 1
          %s336 = scalar_lea.sflag [#allocation12], %s335
          %s337 = sand.u32 %s137, 1
          %s338 = smul.addr %s337, 1920
          %s339 = scalar_lea.vmem [#allocation11], %s338
          %s341 = ssub.s32 30720, 30720
          %342 = vsyncadd %s336, %s341
          %s343 = smul.addr %s28, 480
          %s344 = smul.addr %s343, 64
          %s345 = scalar_lea.hbm %s5, %s344
          %s346 = sshll.u32 %s339, 4
          %s347 = int_to_ptr.vmem [resolvable:$true] %s346
          %352 = dma.hbm_to_vmem [thread:$0]  %s345, 30720, %s347, %s336, 192, 192, 12
        $region44: #{tpu_custom_call.1} parent=27 // pred_fallthru
          _
        // Predicated region
        $region45: #{tpu_custom_call.1} parent=27 // pred_check
          %p353 = pneg %p173
        $region46: #{tpu_custom_call.1} parent=27 // pred_check_branch
          %355 = sbr.rel (%p353) target = $region48
        $region47: #{tpu_custom_call.1} parent=27 // pred_region
          %s356 = sand.u32 %s28, 1
          %s357 = scalar_lea.sflag [#allocation12], %s356
          %s358 = sand.u32 %s163, 1
          %s359 = smul.addr %s358, 3
          %s360 = scalar_lea.vmem [#allocation13], %s359
          %s362 = ssub.s32 48, 48
          %363 = vsyncadd %s357, %s362
          %s364 = smul.addr %s28, 3
          %s365 = smul.addr %s364, 16
          %s366 = scalar_lea.hbm %s6, %s365
          %s368 = sshll.u32 %s360, 4
          %s369 = int_to_ptr.vmem [resolvable:$true] %s368
          %371 = dma.hbm_to_vmem [thread:$0]  %s366, 48, %s369, %s357
        $region48: #{tpu_custom_call.1} parent=27 // pred_fallthru
          _
      $region28: #{tpu_custom_call.1} parent=5 // pred_fallthru
        _
      %p372 = scmp.le.s32.totalorder 1, %s28
      %p373 = scmp.lt.s32.totalorder %s28, 7
      %p374 = pnand %p372, %p373
      %p375 = pneg %p374
      // Predicated region
      $region49: #{tpu_custom_call.1} parent=5 // pred_check
        _
      $region50: #{tpu_custom_call.1} parent=5 // pred_check_branch
        %377 = sbr.rel (%p374) target = $region52
      $region51: #{tpu_custom_call.1} parent=5 // pred_region
        %s378 = ssub.s32 %s28, 1
        // Predicated region
        $region53: #{tpu_custom_call.1} parent=51 // pred_check
          %p379 = pneg %p75
        $region54: #{tpu_custom_call.1} parent=51 // pred_check_branch
          %381 = sbr.rel (%p379) target = $region56
        $region55: #{tpu_custom_call.1} parent=51 // pred_region
          %382 = dma.done [#allocation6], 64
        $region56: #{tpu_custom_call.1} parent=51 // pred_fallthru
          _
        %s383 = sand.u32 %s33, 1
        %s384 = scalar_lea.sflag [#allocation9], %s383
        %s385 = sand.u32 %s88, 1
        %s386 = smul.addr %s385, 20
        %s387 = scalar_lea.vmem [#allocation8], %s386
        // Predicated region
        $region57: #{tpu_custom_call.1} parent=51 // pred_check
          %p388 = pneg %p101
        $region58: #{tpu_custom_call.1} parent=51 // pred_check_branch
          %390 = sbr.rel (%p388) target = $region60
        $region59: #{tpu_custom_call.1} parent=51 // pred_region
          %391 = dma.done %s384, 320
        $region60: #{tpu_custom_call.1} parent=51 // pred_fallthru
          _
        %s392 = sand.u32 %s33, 1
        %s393 = scalar_lea.sflag [#allocation9], %s392
        %s394 = sand.u32 %s114, 1
        %s395 = smul.addr %s394, 10
        %s396 = scalar_lea.vmem [#allocation10], %s395
        // Predicated region
        $region61: #{tpu_custom_call.1} parent=51 // pred_check
          %p397 = pneg %p127
        $region62: #{tpu_custom_call.1} parent=51 // pred_check_branch
          %399 = sbr.rel (%p397) target = $region64
        $region63: #{tpu_custom_call.1} parent=51 // pred_region
          %400 = dma.done %s393, 160
        $region64: #{tpu_custom_call.1} parent=51 // pred_fallthru
          _
        %s401 = sand.u32 %s33, 1
        %s402 = scalar_lea.sflag [#allocation12], %s401
        %s403 = sand.u32 %s140, 1
        %s404 = smul.addr %s403, 1920
        %s405 = scalar_lea.vmem [#allocation11], %s404
        // Predicated region
        $region65: #{tpu_custom_call.1} parent=51 // pred_check
          %p406 = pneg %p153
        $region66: #{tpu_custom_call.1} parent=51 // pred_check_branch
          %408 = sbr.rel (%p406) target = $region68
        $region67: #{tpu_custom_call.1} parent=51 // pred_region
          %409 = dma.done %s402, 30720
        $region68: #{tpu_custom_call.1} parent=51 // pred_fallthru
          _
        %s410 = sand.u32 %s33, 1
        %s411 = scalar_lea.sflag [#allocation12], %s410
        %s412 = sand.u32 %s166, 1
        %s413 = smul.addr %s412, 3
        %s414 = scalar_lea.vmem [#allocation13], %s413
        // Predicated region
        $region69: #{tpu_custom_call.1} parent=51 // pred_check
          %p415 = pneg %p179
        $region70: #{tpu_custom_call.1} parent=51 // pred_check_branch
          %417 = sbr.rel (%p415) target = $region72
        $region71: #{tpu_custom_call.1} parent=51 // pred_region
          %418 = dma.done %s411, 48
        $region72: #{tpu_custom_call.1} parent=51 // pred_fallthru
          _
        // Predicated region
        $region73: #{tpu_custom_call.1} parent=51 // pred_check
          %p419 = pneg %p221
        $region74: #{tpu_custom_call.1} parent=51 // pred_check_branch
          %421 = sbr.rel (%p419) target = $region76
        $region75: #{tpu_custom_call.1} parent=51 // pred_region
          %422 = dma.done [#allocation15], 16
        $region76: #{tpu_custom_call.1} parent=51 // pred_fallthru
          _
        %p423 = scmp.lt.s32.totalorder %s33, 5
        %s424 = scalar_select %p423, %s33, 5
        %s425 = smul.addr %s424, 64
        %s426 = smul.addr %s425, 4
        %s427 = scalar_lea.vmem %s1, %s426
        %p428 = pneg %p54
        %p429 = pneg %p51
        %p430 = pneg %p75
        %p431 = pneg %p72
        %s432 = sand.u32 %s33, 1
        %s433 = scalar_lea.sflag [#allocation9], %s432
        %s434 = sand.u32 %s88, 1
        %s435 = smul.addr %s434, 20
        %s436 = scalar_lea.vmem [#allocation8], %s435
        %p437 = pneg %p101
        %p438 = pneg %p98
        %s439 = sand.u32 %s33, 1
        %s440 = scalar_lea.sflag [#allocation9], %s439
        %s441 = sand.u32 %s114, 1
        %s442 = smul.addr %s441, 10
        %s443 = scalar_lea.vmem [#allocation10], %s442
        %p444 = pneg %p127
        %p445 = pneg %p124
        %s446 = sand.u32 %s33, 1
        %s447 = scalar_lea.sflag [#allocation12], %s446
        %s448 = sand.u32 %s140, 1
        %s449 = smul.addr %s448, 1920
        %s450 = scalar_lea.vmem [#allocation11], %s449
        %p451 = pneg %p153
        %p452 = pneg %p150
        %s453 = sand.u32 %s33, 1
        %s454 = scalar_lea.sflag [#allocation12], %s453
        %s455 = sand.u32 %s166, 1
        %s456 = smul.addr %s455, 3
        %s457 = scalar_lea.vmem [#allocation13], %s456
        %p458 = pneg %p179
        %p459 = pneg %p176
        %p460 = pneg %p200
        %p461 = pneg %p197
        %p462 = pneg %p221
        %p463 = pneg %p218
        %p464 = pneg %p242
        %p465 = pneg %p239
        %p466 = scmp.lt.s32.totalorder %s33, 5
        %s467 = scalar_select %p466, %s33, 5
        %s468 = smul.addr %s467, 64
        %s469 = smul.addr %s468, 4
        %s470 = scalar_lea.vmem %s1, %s469
        %p472 = scmp.eq.s32.totalorder %s33, 0
        // Predicated region
        $region77: #{tpu_custom_call.1} parent=51 // pred_check
          %p473 = pneg %p472
        $region78: #{tpu_custom_call.1} parent=51 // pred_check_branch
          %475 = sbr.rel (%p473) target = $region80
        $region79: #{tpu_custom_call.1} parent=51 // pred_region
          %476 = vst [vmem:[#allocation2] sm:$0xff] 0.0
          %477 = vst [vmem:[#allocation2 + $0x8] sm:$0xff] 0.0
          %478 = vst [vmem:[#allocation2 + $0x10] sm:$0xff] 0.0
          %479 = vst [vmem:[#allocation2 + $0x18] sm:$0xff] 0.0
        $region80: #{tpu_custom_call.1} parent=51 // pred_fallthru
          _
        %v480 = vld [vmem:[%s470] sm:$0xf]
        %v481 = vld [vmem:[%s470 + $0x4] sm:$0xf]
        %v482 = vld [vmem:[%s470 + $0x8] sm:$0xf]
        %v483 = vld [vmem:[%s470 + $0xc] sm:$0xf]
        %v484 = vld [vmem:[%s470 + $0x10] sm:$0xf]
        %v485 = vld [vmem:[%s470 + $0x14] sm:$0xf]
        %v486 = vld [vmem:[%s470 + $0x18] sm:$0xf]
        %v487 = vld [vmem:[%s470 + $0x1c] sm:$0xf]
        %v488 = vld [vmem:[%s470 + $0x20] sm:$0xf]
        %v489 = vld [vmem:[%s470 + $0x24] sm:$0xf]
        %v490 = vld [vmem:[%s470 + $0x28] sm:$0xf]
        %v491 = vld [vmem:[%s470 + $0x2c] sm:$0xf]
        %v492 = vld [vmem:[%s470 + $0x30] sm:$0xf]
        %v493 = vld [vmem:[%s470 + $0x34] sm:$0xf]
        %v494 = vld [vmem:[%s470 + $0x38] sm:$0xf]
        %v495 = vld [vmem:[%s470 + $0x3c] sm:$0xf]
        %v496 = vld [vmem:[%s470 + $0x40] sm:$0xf]
        %v497 = vld [vmem:[%s470 + $0x44] sm:$0xf]
        %v498 = vld [vmem:[%s470 + $0x48] sm:$0xf]
        %v499 = vld [vmem:[%s470 + $0x4c] sm:$0xf]
        %v500 = vld [vmem:[%s470 + $0x50] sm:$0xf]
        %v501 = vld [vmem:[%s470 + $0x54] sm:$0xf]
        %v502 = vld [vmem:[%s470 + $0x58] sm:$0xf]
        %v503 = vld [vmem:[%s470 + $0x5c] sm:$0xf]
        %v504 = vld [vmem:[%s470 + $0x60] sm:$0xf]
        %v505 = vld [vmem:[%s470 + $0x64] sm:$0xf]
        %v506 = vld [vmem:[%s470 + $0x68] sm:$0xf]
        %v507 = vld [vmem:[%s470 + $0x6c] sm:$0xf]
        %v508 = vld [vmem:[%s470 + $0x70] sm:$0xf]
        %v509 = vld [vmem:[%s470 + $0x74] sm:$0xf]
        %v510 = vld [vmem:[%s470 + $0x78] sm:$0xf]
        %v511 = vld [vmem:[%s470 + $0x7c] sm:$0xf]
        %v512 = vld [vmem:[%s470 + $0x80] sm:$0xf]
        %v513 = vld [vmem:[%s470 + $0x84] sm:$0xf]
        %v514 = vld [vmem:[%s470 + $0x88] sm:$0xf]
        %v515 = vld [vmem:[%s470 + $0x8c] sm:$0xf]
        %v516 = vld [vmem:[%s470 + $0x90] sm:$0xf]
        %v517 = vld [vmem:[%s470 + $0x94] sm:$0xf]
        %v518 = vld [vmem:[%s470 + $0x98] sm:$0xf]
        %v519 = vld [vmem:[%s470 + $0x9c] sm:$0xf]
        %v520 = vld [vmem:[%s470 + $0xa0] sm:$0xf]
        %v521 = vld [vmem:[%s470 + $0xa4] sm:$0xf]
        %v522 = vld [vmem:[%s470 + $0xa8] sm:$0xf]
        %v523 = vld [vmem:[%s470 + $0xac] sm:$0xf]
        %v524 = vld [vmem:[%s470 + $0xb0] sm:$0xf]
        %v525 = vld [vmem:[%s470 + $0xb4] sm:$0xf]
        %v526 = vld [vmem:[%s470 + $0xb8] sm:$0xf]
        %v527 = vld [vmem:[%s470 + $0xbc] sm:$0xf]
        %v528 = vld [vmem:[%s470 + $0xc0] sm:$0xf]
        %v529 = vld [vmem:[%s470 + $0xc4] sm:$0xf]
        %v530 = vld [vmem:[%s470 + $0xc8] sm:$0xf]
        %v531 = vld [vmem:[%s470 + $0xcc] sm:$0xf]
        %v532 = vld [vmem:[%s470 + $0xd0] sm:$0xf]
        %v533 = vld [vmem:[%s470 + $0xd4] sm:$0xf]
        %v534 = vld [vmem:[%s470 + $0xd8] sm:$0xf]
        %v535 = vld [vmem:[%s470 + $0xdc] sm:$0xf]
        %v536 = vld [vmem:[%s470 + $0xe0] sm:$0xf]
        %v537 = vld [vmem:[%s470 + $0xe4] sm:$0xf]
        %v538 = vld [vmem:[%s470 + $0xe8] sm:$0xf]
        %v539 = vld [vmem:[%s470 + $0xec] sm:$0xf]
        %v540 = vld [vmem:[%s470 + $0xf0] sm:$0xf]
        %v541 = vld [vmem:[%s470 + $0xf4] sm:$0xf]
        %v542 = vld [vmem:[%s470 + $0xf8] sm:$0xf]
        %v543 = vld [vmem:[%s470 + $0xfc] sm:$0xf]
        %v544 = vld [vmem:[%s387] sm:$0xff]
        %v545 = vld [vmem:[%s387 + $0x8] sm:$0xff]
        %v546 = vld [vmem:[%s387 + $0x10] sm:$0xf]
        %v547 = vld [vmem:[%s396] sm:$0xff]
        %v548 = vld [vmem:[%s396 + $0x8] sm:$0x3]
        %v551 = vlaneseq
        %v552 = vshrl.u32 %v551, 7
        %v553 = vsub.s32 0, %v552
        %v554 = vrot.slane %v547, %v553
        %v555 = vlaneseq
        %v556 = vshrl.u32 %v555, 7
        %v557 = vsub.s32 1, %v556
        %v558 = vrot.slane %v547, %v557
        %v559 = vlaneseq
        %v560 = vshrl.u32 %v559, 7
        %v561 = vsub.s32 2, %v560
        %v562 = vrot.slane %v547, %v561
        %v563 = vlaneseq
        %v564 = vshrl.u32 %v563, 7
        %v565 = vsub.s32 3, %v564
        %v566 = vrot.slane %v547, %v565
        %v567 = vlaneseq
        %v568 = vshrl.u32 %v567, 7
        %v569 = vsub.s32 4, %v568
        %v570 = vrot.slane %v547, %v569
        %v571 = vlaneseq
        %v572 = vshrl.u32 %v571, 7
        %v573 = vsub.s32 5, %v572
        %v574 = vrot.slane %v547, %v573
        %v575 = vlaneseq
        %v576 = vshrl.u32 %v575, 7
        %v577 = vsub.s32 6, %v576
        %v578 = vrot.slane %v547, %v577
        %v579 = vlaneseq
        %v580 = vshrl.u32 %v579, 7
        %v581 = vsub.s32 7, %v580
        %v582 = vrot.slane %v547, %v581
        %v583 = vlaneseq
        %v584 = vshrl.u32 %v583, 7
        %v585 = vsub.s32 0, %v584
        %v586 = vrot.slane %v548, %v585
        %v587 = vlaneseq
        %v588 = vshrl.u32 %v587, 7
        %v589 = vsub.s32 1, %v588
        %v590 = vrot.slane %v548, %v589
        %v665 = vunpack.c.l.b16 %v480
        %v666 = vunpack.c.l.b16 %v481
        %v667 = vunpack.c.l.b16 %v482
        %v668 = vunpack.c.l.b16 %v483
        %v669 = vunpack.c.l.b16 %v484
        %v670 = vunpack.c.l.b16 %v485
        %v671 = vunpack.c.l.b16 %v486
        %v672 = vunpack.c.l.b16 %v487
        %v673 = vunpack.c.l.b16 %v488
        %v674 = vunpack.c.l.b16 %v489
        %v675 = vunpack.c.l.b16 %v490
        %v676 = vunpack.c.l.b16 %v491
        %v677 = vunpack.c.l.b16 %v492
        %v678 = vunpack.c.l.b16 %v493
        %v679 = vunpack.c.l.b16 %v494
        %v680 = vunpack.c.l.b16 %v495
        %v681 = vunpack.c.l.b16 %v496
        %v682 = vunpack.c.l.b16 %v497
        %v683 = vunpack.c.l.b16 %v498
        %v684 = vunpack.c.l.b16 %v499
        %v685 = vunpack.c.l.b16 %v500
        %v686 = vunpack.c.l.b16 %v501
        %v687 = vunpack.c.l.b16 %v502
        %v688 = vunpack.c.l.b16 %v503
        %v689 = vunpack.c.l.b16 %v504
        %v690 = vunpack.c.l.b16 %v505
        %v691 = vunpack.c.l.b16 %v506
        %v692 = vunpack.c.l.b16 %v507
        %v693 = vunpack.c.l.b16 %v508
        %v694 = vunpack.c.l.b16 %v509
        %v695 = vunpack.c.l.b16 %v510
        %v696 = vunpack.c.l.b16 %v511
        %v697 = vunpack.c.l.b16 %v512
        %v698 = vunpack.c.l.b16 %v513
        %v699 = vunpack.c.l.b16 %v514
        %v700 = vunpack.c.l.b16 %v515
        %v701 = vunpack.c.l.b16 %v516
        %v702 = vunpack.c.l.b16 %v517
        %v703 = vunpack.c.l.b16 %v518
        %v704 = vunpack.c.l.b16 %v519
        %v705 = vunpack.c.l.b16 %v520
        %v706 = vunpack.c.l.b16 %v521
        %v707 = vunpack.c.l.b16 %v522
        %v708 = vunpack.c.l.b16 %v523
        %v709 = vunpack.c.l.b16 %v524
        %v710 = vunpack.c.l.b16 %v525
        %v711 = vunpack.c.l.b16 %v526
        %v712 = vunpack.c.l.b16 %v527
        %v713 = vunpack.c.l.b16 %v528
        %v714 = vunpack.c.l.b16 %v529
        %v715 = vunpack.c.l.b16 %v530
        %v716 = vunpack.c.l.b16 %v531
        %v717 = vunpack.c.l.b16 %v532
        %v718 = vunpack.c.l.b16 %v533
        %v719 = vunpack.c.l.b16 %v534
        %v720 = vunpack.c.l.b16 %v535
        %v721 = vunpack.c.l.b16 %v536
        %v722 = vunpack.c.l.b16 %v537
        %v723 = vunpack.c.l.b16 %v538
        %v724 = vunpack.c.l.b16 %v539
        %v725 = vunpack.c.l.b16 %v540
        %v726 = vunpack.c.l.b16 %v541
        %v727 = vunpack.c.l.b16 %v542
        %v728 = vunpack.c.l.b16 %v543
        %v729 = vpack.c.b16 %v666, %v665
        %v730 = vpack.c.b16 %v668, %v667
        %v731 = vpack.c.b16 %v670, %v669
        %v732 = vpack.c.b16 %v672, %v671
        %v733 = vpack.c.b16 %v674, %v673
        %v734 = vpack.c.b16 %v676, %v675
        %v735 = vpack.c.b16 %v678, %v677
        %v736 = vpack.c.b16 %v680, %v679
        %v737 = vpack.c.b16 %v682, %v681
        %v738 = vpack.c.b16 %v684, %v683
        %v739 = vpack.c.b16 %v686, %v685
        %v740 = vpack.c.b16 %v688, %v687
        %v741 = vpack.c.b16 %v690, %v689
        %v742 = vpack.c.b16 %v692, %v691
        %v743 = vpack.c.b16 %v694, %v693
        %v744 = vpack.c.b16 %v696, %v695
        %v745 = vpack.c.b16 %v698, %v697
        %v746 = vpack.c.b16 %v700, %v699
        %v747 = vpack.c.b16 %v702, %v701
        %v748 = vpack.c.b16 %v704, %v703
        %v749 = vpack.c.b16 %v706, %v705
        %v750 = vpack.c.b16 %v708, %v707
        %v751 = vpack.c.b16 %v710, %v709
        %v752 = vpack.c.b16 %v712, %v711
        %v753 = vpack.c.b16 %v714, %v713
        %v754 = vpack.c.b16 %v716, %v715
        %v755 = vpack.c.b16 %v718, %v717
        %v756 = vpack.c.b16 %v720, %v719
        %v757 = vpack.c.b16 %v722, %v721
        %v758 = vpack.c.b16 %v724, %v723
        %v759 = vpack.c.b16 %v726, %v725
        %v760 = vpack.c.b16 %v728, %v727
        %v764 = vcombine.high %v544, %v544
        %v766 = vunpack.c.l.s4 1983009808
        %v767 = vunpack.c.0.s8 %v766
        %v768 = vlaneseq
        %v769 = vshrl.u32 %v768, 7
        %v770 = vsub.s32 %v767, %v769
        %v771 = vrot.slane %v544, %v770
        %v773 = vunpack.c.l.s4 1983009808
        %v774 = vunpack.c.0.s8 %v773
        %v775 = vlaneseq
        %v776 = vshrl.u32 %v775, 7
        %v777 = vsub.s32 %v774, %v776
        %v778 = vrot.slane %v764, %v777
        %v779 = vcombine.high %v771, %v771
        %v780 = vcombine.high %v778, %v778
        %v781 = vcombine.high %v545, %v545
        %v783 = vunpack.c.l.s4 1983009808
        %v784 = vunpack.c.0.s8 %v783
        %v785 = vlaneseq
        %v786 = vshrl.u32 %v785, 7
        %v787 = vsub.s32 %v784, %v786
        %v788 = vrot.slane %v545, %v787
        %v790 = vunpack.c.l.s4 1983009808
        %v791 = vunpack.c.0.s8 %v790
        %v792 = vlaneseq
        %v793 = vshrl.u32 %v792, 7
        %v794 = vsub.s32 %v791, %v793
        %v795 = vrot.slane %v781, %v794
        %v796 = vcombine.high %v788, %v788
        %v797 = vcombine.high %v795, %v795
        %v799 = vunpack.c.l.s4 1983009808
        %v800 = vunpack.c.0.s8 %v799
        %v801 = vlaneseq
        %v802 = vshrl.u32 %v801, 7
        %v803 = vsub.s32 %v800, %v802
        %v804 = vrot.slane %v546, %v803
        %v805 = vcombine.high %v804, %v804
        %vm806 = vcmask 31744
        %v808 = vsel %vm806, %v729, 0
        %v811 = vsel %vm806, %v730, 0
        %v814 = vsel %vm806, %v731, 0
        %v817 = vsel %vm806, %v732, 0
        %v820 = vsel %vm806, %v733, 0
        %v823 = vsel %vm806, %v734, 0
        %v826 = vsel %vm806, %v735, 0
        %v829 = vsel %vm806, %v736, 0
        %v832 = vsel %vm806, %v737, 0
        %v835 = vsel %vm806, %v738, 0
        %v838 = vsel %vm806, %v739, 0
        %v841 = vsel %vm806, %v740, 0
        %v844 = vsel %vm806, %v741, 0
        %v847 = vsel %vm806, %v742, 0
        %v850 = vsel %vm806, %v743, 0
        %v853 = vsel %vm806, %v744, 0
        %v856 = vsel %vm806, %v745, 0
        %v859 = vsel %vm806, %v746, 0
        %v862 = vsel %vm806, %v747, 0
        %v865 = vsel %vm806, %v748, 0
        %v868 = vsel %vm806, %v749, 0
        %v871 = vsel %vm806, %v750, 0
        %v874 = vsel %vm806, %v751, 0
        %v877 = vsel %vm806, %v752, 0
        %v880 = vsel %vm806, %v753, 0
        %v883 = vsel %vm806, %v754, 0
        %v886 = vsel %vm806, %v755, 0
        %v889 = vsel %vm806, %v756, 0
        %v892 = vsel %vm806, %v757, 0
        %v895 = vsel %vm806, %v758, 0
        %v898 = vsel %vm806, %v759, 0
        %v901 = vsel %vm806, %v760, 0
        %vm903 = vcmask 1041408
        %v905 = vsel %vm903, %v771, 0
        %v908 = vsel %vm903, %v779, 0
        %v911 = vsel %vm903, %v778, 0
        %v914 = vsel %vm903, %v780, 0
        %v917 = vsel %vm903, %v788, 0
        %v920 = vsel %vm903, %v796, 0
        %v923 = vsel %vm903, %v795, 0
        %v926 = vsel %vm903, %v797, 0
        %v929 = vsel %vm903, %v804, 0
        %v932 = vsel %vm903, %v805, 0
        %934 = vmatprep.subr.bf16.mxu0 0
        %935 = vmatpush1.bf16.msra.mxu0 0
        %936 = vmatprep.subr.bf16.mxu0 0
        %937 = vmatpush1.bf16.msra.mxu0 0
        %938 = vmatprep.subr.bf16.mxu0 0
        %939 = vmatpush1.bf16.msra.mxu0 0
        %940 = vmatprep.subr.bf16.mxu0 0
        %941 = vmatpush1.bf16.msra.mxu0 0
        %942 = vmatprep.subr.bf16.mxu0 0
        %943 = vmatpush1.bf16.msra.mxu0 0
        %944 = vmatprep.subr.bf16.mxu0 0
        %945 = vmatpush1.bf16.msra.mxu0 0
        %946 = vmatprep.subr.bf16.mxu0 0
        %947 = vmatpush1.bf16.msra.mxu0 0
        %948 = vmatprep.subr.bf16.mxu0 %v908
        %949 = vmatpush1.bf16.msra.mxu0 %v905
        %950 = vmatprep.subr.bf16.mxu0 0
        %951 = vmatpush2.bf16.msra.mxu0 0
        %952 = vmatprep.subr.bf16.mxu0 0
        %953 = vmatpush2.bf16.msra.mxu0 0
        %954 = vmatprep.subr.bf16.mxu0 0
        %955 = vmatpush2.bf16.msra.mxu0 0
        %956 = vmatprep.subr.bf16.mxu0 0
        %957 = vmatpush2.bf16.msra.mxu0 0
        %958 = vmatprep.subr.bf16.mxu0 0
        %959 = vmatpush2.bf16.msra.mxu0 0
        %960 = vmatprep.subr.bf16.mxu0 0
        %961 = vmatpush2.bf16.msra.mxu0 0
        %962 = vmatprep.subr.bf16.mxu0 0
        %963 = vmatpush2.bf16.msra.mxu0 0
        %964 = vmatprep.subr.bf16.mxu0 0
        %965 = vmatpush2.bf16.msra.mxu0 0
        %966 = vmatprep.mubr.bf16.mxu0 0
        %967 = vmatmul.mubr.bf16.gmra.mxu0 %v808
        %v968 = vpop.f32.mrf.mxu0
        %v969 = vadd.f32 %v554, %v968
        %v970 = vpop.f32.mrf.mxu0
        %v971 = vadd.f32 %v558, %v970
        %v972 = vpop.f32.mrf.mxu0
        %v973 = vadd.f32 %v554, %v972
        %v974 = vpop.f32.mrf.mxu0
        %v975 = vadd.f32 %v558, %v974
        %976 = vmatprep.mubr.bf16.mxu0 0
        %977 = vmatmul.mubr.bf16.gmra.mxu0 %v811
        %v978 = vpop.f32.mrf.mxu0
        %v979 = vadd.f32 %v554, %v978
        %v980 = vpop.f32.mrf.mxu0
        %v981 = vadd.f32 %v558, %v980
        %v982 = vpop.f32.mrf.mxu0
        %v983 = vadd.f32 %v554, %v982
        %v984 = vpop.f32.mrf.mxu0
        %v985 = vadd.f32 %v558, %v984
        %986 = vmatprep.mubr.bf16.mxu0 0
        %987 = vmatmul.mubr.bf16.gmra.mxu0 %v814
        %v988 = vpop.f32.mrf.mxu0
        %v989 = vadd.f32 %v554, %v988
        %v990 = vpop.f32.mrf.mxu0
        %v991 = vadd.f32 %v558, %v990
        %v992 = vpop.f32.mrf.mxu0
        %v993 = vadd.f32 %v554, %v992
        %v994 = vpop.f32.mrf.mxu0
        %v995 = vadd.f32 %v558, %v994
        %996 = vmatprep.mubr.bf16.mxu0 0
        %997 = vmatmul.mubr.bf16.gmra.mxu0 %v817
        %v998 = vpop.f32.mrf.mxu0
        %v999 = vadd.f32 %v554, %v998
        %v1000 = vpop.f32.mrf.mxu0
        %v1001 = vadd.f32 %v558, %v1000
        %v1002 = vpop.f32.mrf.mxu0
        %v1003 = vadd.f32 %v554, %v1002
        %v1004 = vpop.f32.mrf.mxu0
        %v1005 = vadd.f32 %v558, %v1004
        %1006 = vmatprep.mubr.bf16.mxu0 0
        %1007 = vmatmul.mubr.bf16.gmra.mxu0 %v820
        %v1008 = vpop.f32.mrf.mxu0
        %v1009 = vadd.f32 %v554, %v1008
        %v1010 = vpop.f32.mrf.mxu0
        %v1011 = vadd.f32 %v558, %v1010
        %v1012 = vpop.f32.mrf.mxu0
        %v1013 = vadd.f32 %v554, %v1012
        %v1014 = vpop.f32.mrf.mxu0
        %v1015 = vadd.f32 %v558, %v1014
        %1016 = vmatprep.mubr.bf16.mxu0 0
        %1017 = vmatmul.mubr.bf16.gmra.mxu0 %v823
        %v1018 = vpop.f32.mrf.mxu0
        %v1019 = vadd.f32 %v554, %v1018
        %v1020 = vpop.f32.mrf.mxu0
        %v1021 = vadd.f32 %v558, %v1020
        %v1022 = vpop.f32.mrf.mxu0
        %v1023 = vadd.f32 %v554, %v1022
        %v1024 = vpop.f32.mrf.mxu0
        %v1025 = vadd.f32 %v558, %v1024
        %1026 = vmatprep.mubr.bf16.mxu0 0
        %1027 = vmatmul.mubr.bf16.gmra.mxu0 %v826
        %v1028 = vpop.f32.mrf.mxu0
        %v1029 = vadd.f32 %v554, %v1028
        %v1030 = vpop.f32.mrf.mxu0
        %v1031 = vadd.f32 %v558, %v1030
        %v1032 = vpop.f32.mrf.mxu0
        %v1033 = vadd.f32 %v554, %v1032
        %v1034 = vpop.f32.mrf.mxu0
        %v1035 = vadd.f32 %v558, %v1034
        %1036 = vmatprep.mubr.bf16.mxu0 0
        %1037 = vmatmul.mubr.bf16.gmra.mxu0 %v829
        %v1038 = vpop.f32.mrf.mxu0
        %v1039 = vadd.f32 %v554, %v1038
        %v1040 = vpop.f32.mrf.mxu0
        %v1041 = vadd.f32 %v558, %v1040
        %v1042 = vpop.f32.mrf.mxu0
        %v1043 = vadd.f32 %v554, %v1042
        %v1044 = vpop.f32.mrf.mxu0
        %v1045 = vadd.f32 %v558, %v1044
        %1046 = vmatprep.mubr.bf16.mxu0 0
        %1047 = vmatmul.mubr.bf16.gmra.mxu0 %v832
        %v1048 = vpop.f32.mrf.mxu0
        %v1049 = vadd.f32 %v554, %v1048
        %v1050 = vpop.f32.mrf.mxu0
        %v1051 = vadd.f32 %v558, %v1050
        %v1052 = vpop.f32.mrf.mxu0
        %v1053 = vadd.f32 %v554, %v1052
        %v1054 = vpop.f32.mrf.mxu0
        %v1055 = vadd.f32 %v558, %v1054
        %1056 = vmatprep.mubr.bf16.mxu0 0
        %1057 = vmatmul.mubr.bf16.gmra.mxu0 %v835
        %v1058 = vpop.f32.mrf.mxu0
        %v1059 = vadd.f32 %v554, %v1058
        %v1060 = vpop.f32.mrf.mxu0
        %v1061 = vadd.f32 %v558, %v1060
        %v1062 = vpop.f32.mrf.mxu0
        %v1063 = vadd.f32 %v554, %v1062
        %v1064 = vpop.f32.mrf.mxu0
        %v1065 = vadd.f32 %v558, %v1064
        %1066 = vmatprep.mubr.bf16.mxu0 0
        %1067 = vmatmul.mubr.bf16.gmra.mxu0 %v838
        %v1068 = vpop.f32.mrf.mxu0
        %v1069 = vadd.f32 %v554, %v1068
        %v1070 = vpop.f32.mrf.mxu0
        %v1071 = vadd.f32 %v558, %v1070
        %v1072 = vpop.f32.mrf.mxu0
        %v1073 = vadd.f32 %v554, %v1072
        %v1074 = vpop.f32.mrf.mxu0
        %v1075 = vadd.f32 %v558, %v1074
        %1076 = vmatprep.mubr.bf16.mxu0 0
        %1077 = vmatmul.mubr.bf16.gmra.mxu0 %v841
        %v1078 = vpop.f32.mrf.mxu0
        %v1079 = vadd.f32 %v554, %v1078
        %v1080 = vpop.f32.mrf.mxu0
        %v1081 = vadd.f32 %v558, %v1080
        %v1082 = vpop.f32.mrf.mxu0
        %v1083 = vadd.f32 %v554, %v1082
        %v1084 = vpop.f32.mrf.mxu0
        %v1085 = vadd.f32 %v558, %v1084
        %1086 = vmatprep.mubr.bf16.mxu0 0
        %1087 = vmatmul.mubr.bf16.gmra.mxu0 %v844
        %v1088 = vpop.f32.mrf.mxu0
        %v1089 = vadd.f32 %v554, %v1088
        %v1090 = vpop.f32.mrf.mxu0
        %v1091 = vadd.f32 %v558, %v1090
        %v1092 = vpop.f32.mrf.mxu0
        %v1093 = vadd.f32 %v554, %v1092
        %v1094 = vpop.f32.mrf.mxu0
        %v1095 = vadd.f32 %v558, %v1094
        %1096 = vmatprep.mubr.bf16.mxu0 0
        %1097 = vmatmul.mubr.bf16.gmra.mxu0 %v847
        %v1098 = vpop.f32.mrf.mxu0
        %v1099 = vadd.f32 %v554, %v1098
        %v1100 = vpop.f32.mrf.mxu0
        %v1101 = vadd.f32 %v558, %v1100
        %v1102 = vpop.f32.mrf.mxu0
        %v1103 = vadd.f32 %v554, %v1102
        %v1104 = vpop.f32.mrf.mxu0
        %v1105 = vadd.f32 %v558, %v1104
        %1106 = vmatprep.mubr.bf16.mxu0 0
        %1107 = vmatmul.mubr.bf16.gmra.mxu0 %v850
        %v1108 = vpop.f32.mrf.mxu0
        %v1109 = vadd.f32 %v554, %v1108
        %v1110 = vpop.f32.mrf.mxu0
        %v1111 = vadd.f32 %v558, %v1110
        %v1112 = vpop.f32.mrf.mxu0
        %v1113 = vadd.f32 %v554, %v1112
        %v1114 = vpop.f32.mrf.mxu0
        %v1115 = vadd.f32 %v558, %v1114
        %1116 = vmatprep.mubr.bf16.mxu0 0
        %1117 = vmatmul.mubr.bf16.gmra.mxu0 %v853
        %v1118 = vpop.f32.mrf.mxu0
        %v1119 = vadd.f32 %v554, %v1118
        %v1120 = vpop.f32.mrf.mxu0
        %v1121 = vadd.f32 %v558, %v1120
        %v1122 = vpop.f32.mrf.mxu0
        %v1123 = vadd.f32 %v554, %v1122
        %v1124 = vpop.f32.mrf.mxu0
        %v1125 = vadd.f32 %v558, %v1124
        %1126 = vmatprep.mubr.bf16.mxu0 0
        %1127 = vmatmul.mubr.bf16.gmra.mxu0 %v856
        %v1128 = vpop.f32.mrf.mxu0
        %v1129 = vadd.f32 %v554, %v1128
        %v1130 = vpop.f32.mrf.mxu0
        %v1131 = vadd.f32 %v558, %v1130
        %v1132 = vpop.f32.mrf.mxu0
        %v1133 = vadd.f32 %v554, %v1132
        %v1134 = vpop.f32.mrf.mxu0
        %v1135 = vadd.f32 %v558, %v1134
        %1136 = vmatprep.mubr.bf16.mxu0 0
        %1137 = vmatmul.mubr.bf16.gmra.mxu0 %v859
        %v1138 = vpop.f32.mrf.mxu0
        %v1139 = vadd.f32 %v554, %v1138
        %v1140 = vpop.f32.mrf.mxu0
        %v1141 = vadd.f32 %v558, %v1140
        %v1142 = vpop.f32.mrf.mxu0
        %v1143 = vadd.f32 %v554, %v1142
        %v1144 = vpop.f32.mrf.mxu0
        %v1145 = vadd.f32 %v558, %v1144
        %1146 = vmatprep.mubr.bf16.mxu0 0
        %1147 = vmatmul.mubr.bf16.gmra.mxu0 %v862
        %v1148 = vpop.f32.mrf.mxu0
        %v1149 = vadd.f32 %v554, %v1148
        %v1150 = vpop.f32.mrf.mxu0
        %v1151 = vadd.f32 %v558, %v1150
        %v1152 = vpop.f32.mrf.mxu0
        %v1153 = vadd.f32 %v554, %v1152
        %v1154 = vpop.f32.mrf.mxu0
        %v1155 = vadd.f32 %v558, %v1154
        %1156 = vmatprep.mubr.bf16.mxu0 0
        %1157 = vmatmul.mubr.bf16.gmra.mxu0 %v865
        %v1158 = vpop.f32.mrf.mxu0
        %v1159 = vadd.f32 %v554, %v1158
        %v1160 = vpop.f32.mrf.mxu0
        %v1161 = vadd.f32 %v558, %v1160
        %v1162 = vpop.f32.mrf.mxu0
        %v1163 = vadd.f32 %v554, %v1162
        %v1164 = vpop.f32.mrf.mxu0
        %v1165 = vadd.f32 %v558, %v1164
        %1166 = vmatprep.mubr.bf16.mxu0 0
        %1167 = vmatmul.mubr.bf16.gmra.mxu0 %v868
        %v1168 = vpop.f32.mrf.mxu0
        %v1169 = vadd.f32 %v554, %v1168
        %v1170 = vpop.f32.mrf.mxu0
        %v1171 = vadd.f32 %v558, %v1170
        %v1172 = vpop.f32.mrf.mxu0
        %v1173 = vadd.f32 %v554, %v1172
        %v1174 = vpop.f32.mrf.mxu0
        %v1175 = vadd.f32 %v558, %v1174
        %1176 = vmatprep.mubr.bf16.mxu0 0
        %1177 = vmatmul.mubr.bf16.gmra.mxu0 %v871
        %v1178 = vpop.f32.mrf.mxu0
        %v1179 = vadd.f32 %v554, %v1178
        %v1180 = vpop.f32.mrf.mxu0
        %v1181 = vadd.f32 %v558, %v1180
        %v1182 = vpop.f32.mrf.mxu0
        %v1183 = vadd.f32 %v554, %v1182
        %v1184 = vpop.f32.mrf.mxu0
        %v1185 = vadd.f32 %v558, %v1184
        %1186 = vmatprep.mubr.bf16.mxu0 0
        %1187 = vmatmul.mubr.bf16.gmra.mxu0 %v874
        %v1188 = vpop.f32.mrf.mxu0
        %v1189 = vadd.f32 %v554, %v1188
        %v1190 = vpop.f32.mrf.mxu0
        %v1191 = vadd.f32 %v558, %v1190
        %v1192 = vpop.f32.mrf.mxu0
        %v1193 = vadd.f32 %v554, %v1192
        %v1194 = vpop.f32.mrf.mxu0
        %v1195 = vadd.f32 %v558, %v1194
        %1196 = vmatprep.mubr.bf16.mxu0 0
        %1197 = vmatmul.mubr.bf16.gmra.mxu0 %v877
        %v1198 = vpop.f32.mrf.mxu0
        %v1199 = vadd.f32 %v554, %v1198
        %v1200 = vpop.f32.mrf.mxu0
        %v1201 = vadd.f32 %v558, %v1200
        %v1202 = vpop.f32.mrf.mxu0
        %v1203 = vadd.f32 %v554, %v1202
        %v1204 = vpop.f32.mrf.mxu0
        %v1205 = vadd.f32 %v558, %v1204
        %1206 = vmatprep.mubr.bf16.mxu0 0
        %1207 = vmatmul.mubr.bf16.gmra.mxu0 %v880
        %v1208 = vpop.f32.mrf.mxu0
        %v1209 = vadd.f32 %v554, %v1208
        %v1210 = vpop.f32.mrf.mxu0
        %v1211 = vadd.f32 %v558, %v1210
        %v1212 = vpop.f32.mrf.mxu0
        %v1213 = vadd.f32 %v554, %v1212
        %v1214 = vpop.f32.mrf.mxu0
        %v1215 = vadd.f32 %v558, %v1214
        %1216 = vmatprep.mubr.bf16.mxu0 0
        %1217 = vmatmul.mubr.bf16.gmra.mxu0 %v883
        %v1218 = vpop.f32.mrf.mxu0
        %v1219 = vadd.f32 %v554, %v1218
        %v1220 = vpop.f32.mrf.mxu0
        %v1221 = vadd.f32 %v558, %v1220
        %v1222 = vpop.f32.mrf.mxu0
        %v1223 = vadd.f32 %v554, %v1222
        %v1224 = vpop.f32.mrf.mxu0
        %v1225 = vadd.f32 %v558, %v1224
        %1226 = vmatprep.mubr.bf16.mxu0 0
        %1227 = vmatmul.mubr.bf16.gmra.mxu0 %v886
        %v1228 = vpop.f32.mrf.mxu0
        %v1229 = vadd.f32 %v554, %v1228
        %v1230 = vpop.f32.mrf.mxu0
        %v1231 = vadd.f32 %v558, %v1230
        %v1232 = vpop.f32.mrf.mxu0
        %v1233 = vadd.f32 %v554, %v1232
        %v1234 = vpop.f32.mrf.mxu0
        %v1235 = vadd.f32 %v558, %v1234
        %1236 = vmatprep.mubr.bf16.mxu0 0
        %1237 = vmatmul.mubr.bf16.gmra.mxu0 %v889
        %v1238 = vpop.f32.mrf.mxu0
        %v1239 = vadd.f32 %v554, %v1238
        %v1240 = vpop.f32.mrf.mxu0
        %v1241 = vadd.f32 %v558, %v1240
        %v1242 = vpop.f32.mrf.mxu0
        %v1243 = vadd.f32 %v554, %v1242
        %v1244 = vpop.f32.mrf.mxu0
        %v1245 = vadd.f32 %v558, %v1244
        %1246 = vmatprep.mubr.bf16.mxu0 0
        %1247 = vmatmul.mubr.bf16.gmra.mxu0 %v892
        %v1248 = vpop.f32.mrf.mxu0
        %v1249 = vadd.f32 %v554, %v1248
        %v1250 = vpop.f32.mrf.mxu0
        %v1251 = vadd.f32 %v558, %v1250
        %v1252 = vpop.f32.mrf.mxu0
        %v1253 = vadd.f32 %v554, %v1252
        %v1254 = vpop.f32.mrf.mxu0
        %v1255 = vadd.f32 %v558, %v1254
        %1256 = vmatprep.mubr.bf16.mxu0 0
        %1257 = vmatmul.mubr.bf16.gmra.mxu0 %v895
        %v1258 = vpop.f32.mrf.mxu0
        %v1259 = vadd.f32 %v554, %v1258
        %v1260 = vpop.f32.mrf.mxu0
        %v1261 = vadd.f32 %v558, %v1260
        %v1262 = vpop.f32.mrf.mxu0
        %v1263 = vadd.f32 %v554, %v1262
        %v1264 = vpop.f32.mrf.mxu0
        %v1265 = vadd.f32 %v558, %v1264
        %1266 = vmatprep.mubr.bf16.mxu0 0
        %1267 = vmatmul.mubr.bf16.gmra.mxu0 %v898
        %v1268 = vpop.f32.mrf.mxu0
        %v1269 = vadd.f32 %v554, %v1268
        %v1270 = vpop.f32.mrf.mxu0
        %v1271 = vadd.f32 %v558, %v1270
        %v1272 = vpop.f32.mrf.mxu0
        %v1273 = vadd.f32 %v554, %v1272
        %v1274 = vpop.f32.mrf.mxu0
        %v1275 = vadd.f32 %v558, %v1274
        %1276 = vmatprep.mubr.bf16.mxu0 0
        %1277 = vmatmul.mubr.bf16.gmra.mxu0 %v901
        %v1278 = vpop.f32.mrf.mxu0
        %v1279 = vadd.f32 %v554, %v1278
        %v1280 = vpop.f32.mrf.mxu0
        %v1281 = vadd.f32 %v558, %v1280
        %v1282 = vpop.f32.mrf.mxu0
        %v1283 = vadd.f32 %v554, %v1282
        %v1284 = vpop.f32.mrf.mxu0
        %v1285 = vadd.f32 %v558, %v1284
        %1286 = vdwg.mxu0
        %1287 = vmatprep.subr.bf16.mxu0 0
        %1288 = vmatpush1.bf16.msra.mxu0 0
        %1289 = vmatprep.subr.bf16.mxu0 0
        %1290 = vmatpush1.bf16.msra.mxu0 0
        %1291 = vmatprep.subr.bf16.mxu0 0
        %1292 = vmatpush1.bf16.msra.mxu0 0
        %1293 = vmatprep.subr.bf16.mxu0 0
        %1294 = vmatpush1.bf16.msra.mxu0 0
        %1295 = vmatprep.subr.bf16.mxu0 0
        %1296 = vmatpush1.bf16.msra.mxu0 0
        %1297 = vmatprep.subr.bf16.mxu0 0
        %1298 = vmatpush1.bf16.msra.mxu0 0
        %1299 = vmatprep.subr.bf16.mxu0 0
        %1300 = vmatpush1.bf16.msra.mxu0 0
        %1301 = vmatprep.subr.bf16.mxu0 %v914
        %1302 = vmatpush1.bf16.msra.mxu0 %v911
        %1303 = vmatprep.subr.bf16.mxu0 0
        %1304 = vmatpush2.bf16.msra.mxu0 0
        %1305 = vmatprep.subr.bf16.mxu0 0
        %1306 = vmatpush2.bf16.msra.mxu0 0
        %1307 = vmatprep.subr.bf16.mxu0 0
        %1308 = vmatpush2.bf16.msra.mxu0 0
        %1309 = vmatprep.subr.bf16.mxu0 0
        %1310 = vmatpush2.bf16.msra.mxu0 0
        %1311 = vmatprep.subr.bf16.mxu0 0
        %1312 = vmatpush2.bf16.msra.mxu0 0
        %1313 = vmatprep.subr.bf16.mxu0 0
        %1314 = vmatpush2.bf16.msra.mxu0 0
        %1315 = vmatprep.subr.bf16.mxu0 0
        %1316 = vmatpush2.bf16.msra.mxu0 0
        %1317 = vmatprep.subr.bf16.mxu0 0
        %1318 = vmatpush2.bf16.msra.mxu0 0
        %1319 = vmatprep.mubr.bf16.mxu0 0
        %1320 = vmatmul.mubr.bf16.gmra.mxu0 %v808
        %v1321 = vpop.f32.mrf.mxu0
        %v1322 = vadd.f32 %v562, %v1321
        %v1323 = vpop.f32.mrf.mxu0
        %v1324 = vadd.f32 %v566, %v1323
        %v1325 = vpop.f32.mrf.mxu0
        %v1326 = vadd.f32 %v562, %v1325
        %v1327 = vpop.f32.mrf.mxu0
        %v1328 = vadd.f32 %v566, %v1327
        %1329 = vmatprep.mubr.bf16.mxu0 0
        %1330 = vmatmul.mubr.bf16.gmra.mxu0 %v811
        %v1331 = vpop.f32.mrf.mxu0
        %v1332 = vadd.f32 %v562, %v1331
        %v1333 = vpop.f32.mrf.mxu0
        %v1334 = vadd.f32 %v566, %v1333
        %v1335 = vpop.f32.mrf.mxu0
        %v1336 = vadd.f32 %v562, %v1335
        %v1337 = vpop.f32.mrf.mxu0
        %v1338 = vadd.f32 %v566, %v1337
        %1339 = vmatprep.mubr.bf16.mxu0 0
        %1340 = vmatmul.mubr.bf16.gmra.mxu0 %v814
        %v1341 = vpop.f32.mrf.mxu0
        %v1342 = vadd.f32 %v562, %v1341
        %v1343 = vpop.f32.mrf.mxu0
        %v1344 = vadd.f32 %v566, %v1343
        %v1345 = vpop.f32.mrf.mxu0
        %v1346 = vadd.f32 %v562, %v1345
        %v1347 = vpop.f32.mrf.mxu0
        %v1348 = vadd.f32 %v566, %v1347
        %1349 = vmatprep.mubr.bf16.mxu0 0
        %1350 = vmatmul.mubr.bf16.gmra.mxu0 %v817
        %v1351 = vpop.f32.mrf.mxu0
        %v1352 = vadd.f32 %v562, %v1351
        %v1353 = vpop.f32.mrf.mxu0
        %v1354 = vadd.f32 %v566, %v1353
        %v1355 = vpop.f32.mrf.mxu0
        %v1356 = vadd.f32 %v562, %v1355
        %v1357 = vpop.f32.mrf.mxu0
        %v1358 = vadd.f32 %v566, %v1357
        %1359 = vmatprep.mubr.bf16.mxu0 0
        %1360 = vmatmul.mubr.bf16.gmra.mxu0 %v820
        %v1361 = vpop.f32.mrf.mxu0
        %v1362 = vadd.f32 %v562, %v1361
        %v1363 = vpop.f32.mrf.mxu0
        %v1364 = vadd.f32 %v566, %v1363
        %v1365 = vpop.f32.mrf.mxu0
        %v1366 = vadd.f32 %v562, %v1365
        %v1367 = vpop.f32.mrf.mxu0
        %v1368 = vadd.f32 %v566, %v1367
        %1369 = vmatprep.mubr.bf16.mxu0 0
        %1370 = vmatmul.mubr.bf16.gmra.mxu0 %v823
        %v1371 = vpop.f32.mrf.mxu0
        %v1372 = vadd.f32 %v562, %v1371
        %v1373 = vpop.f32.mrf.mxu0
        %v1374 = vadd.f32 %v566, %v1373
        %v1375 = vpop.f32.mrf.mxu0
        %v1376 = vadd.f32 %v562, %v1375
        %v1377 = vpop.f32.mrf.mxu0
        %v1378 = vadd.f32 %v566, %v1377
        %1379 = vmatprep.mubr.bf16.mxu0 0
        %1380 = vmatmul.mubr.bf16.gmra.mxu0 %v826
        %v1381 = vpop.f32.mrf.mxu0
        %v1382 = vadd.f32 %v562, %v1381
        %v1383 = vpop.f32.mrf.mxu0
        %v1384 = vadd.f32 %v566, %v1383
        %v1385 = vpop.f32.mrf.mxu0
        %v1386 = vadd.f32 %v562, %v1385
        %v1387 = vpop.f32.mrf.mxu0
        %v1388 = vadd.f32 %v566, %v1387
        %1389 = vmatprep.mubr.bf16.mxu0 0
        %1390 = vmatmul.mubr.bf16.gmra.mxu0 %v829
        %v1391 = vpop.f32.mrf.mxu0
        %v1392 = vadd.f32 %v562, %v1391
        %v1393 = vpop.f32.mrf.mxu0
        %v1394 = vadd.f32 %v566, %v1393
        %v1395 = vpop.f32.mrf.mxu0
        %v1396 = vadd.f32 %v562, %v1395
        %v1397 = vpop.f32.mrf.mxu0
        %v1398 = vadd.f32 %v566, %v1397
        %1399 = vmatprep.mubr.bf16.mxu0 0
        %1400 = vmatmul.mubr.bf16.gmra.mxu0 %v832
        %v1401 = vpop.f32.mrf.mxu0
        %v1402 = vadd.f32 %v562, %v1401
        %v1403 = vpop.f32.mrf.mxu0
        %v1404 = vadd.f32 %v566, %v1403
        %v1405 = vpop.f32.mrf.mxu0
        %v1406 = vadd.f32 %v562, %v1405
        %v1407 = vpop.f32.mrf.mxu0
        %v1408 = vadd.f32 %v566, %v1407
        %1409 = vmatprep.mubr.bf16.mxu0 0
        %1410 = vmatmul.mubr.bf16.gmra.mxu0 %v835
        %v1411 = vpop.f32.mrf.mxu0
        %v1412 = vadd.f32 %v562, %v1411
        %v1413 = vpop.f32.mrf.mxu0
        %v1414 = vadd.f32 %v566, %v1413
        %v1415 = vpop.f32.mrf.mxu0
        %v1416 = vadd.f32 %v562, %v1415
        %v1417 = vpop.f32.mrf.mxu0
        %v1418 = vadd.f32 %v566, %v1417
        %1419 = vmatprep.mubr.bf16.mxu0 0
        %1420 = vmatmul.mubr.bf16.gmra.mxu0 %v838
        %v1421 = vpop.f32.mrf.mxu0
        %v1422 = vadd.f32 %v562, %v1421
        %v1423 = vpop.f32.mrf.mxu0
        %v1424 = vadd.f32 %v566, %v1423
        %v1425 = vpop.f32.mrf.mxu0
        %v1426 = vadd.f32 %v562, %v1425
        %v1427 = vpop.f32.mrf.mxu0
        %v1428 = vadd.f32 %v566, %v1427
        %1429 = vmatprep.mubr.bf16.mxu0 0
        %1430 = vmatmul.mubr.bf16.gmra.mxu0 %v841
        %v1431 = vpop.f32.mrf.mxu0
        %v1432 = vadd.f32 %v562, %v1431
        %v1433 = vpop.f32.mrf.mxu0
        %v1434 = vadd.f32 %v566, %v1433
        %v1435 = vpop.f32.mrf.mxu0
        %v1436 = vadd.f32 %v562, %v1435
        %v1437 = vpop.f32.mrf.mxu0
        %v1438 = vadd.f32 %v566, %v1437
        %1439 = vmatprep.mubr.bf16.mxu0 0
        %1440 = vmatmul.mubr.bf16.gmra.mxu0 %v844
        %v1441 = vpop.f32.mrf.mxu0
        %v1442 = vadd.f32 %v562, %v1441
        %v1443 = vpop.f32.mrf.mxu0
        %v1444 = vadd.f32 %v566, %v1443
        %v1445 = vpop.f32.mrf.mxu0
        %v1446 = vadd.f32 %v562, %v1445
        %v1447 = vpop.f32.mrf.mxu0
        %v1448 = vadd.f32 %v566, %v1447
        %1449 = vmatprep.mubr.bf16.mxu0 0
        %1450 = vmatmul.mubr.bf16.gmra.mxu0 %v847
        %v1451 = vpop.f32.mrf.mxu0
        %v1452 = vadd.f32 %v562, %v1451
        %v1453 = vpop.f32.mrf.mxu0
        %v1454 = vadd.f32 %v566, %v1453
        %v1455 = vpop.f32.mrf.mxu0
        %v1456 = vadd.f32 %v562, %v1455
        %v1457 = vpop.f32.mrf.mxu0
        %v1458 = vadd.f32 %v566, %v1457
        %1459 = vmatprep.mubr.bf16.mxu0 0
        %1460 = vmatmul.mubr.bf16.gmra.mxu0 %v850
        %v1461 = vpop.f32.mrf.mxu0
        %v1462 = vadd.f32 %v562, %v1461
        %v1463 = vpop.f32.mrf.mxu0
        %v1464 = vadd.f32 %v566, %v1463
        %v1465 = vpop.f32.mrf.mxu0
        %v1466 = vadd.f32 %v562, %v1465
        %v1467 = vpop.f32.mrf.mxu0
        %v1468 = vadd.f32 %v566, %v1467
        %1469 = vmatprep.mubr.bf16.mxu0 0
        %1470 = vmatmul.mubr.bf16.gmra.mxu0 %v853
        %v1471 = vpop.f32.mrf.mxu0
        %v1472 = vadd.f32 %v562, %v1471
        %v1473 = vpop.f32.mrf.mxu0
        %v1474 = vadd.f32 %v566, %v1473
        %v1475 = vpop.f32.mrf.mxu0
        %v1476 = vadd.f32 %v562, %v1475
        %v1477 = vpop.f32.mrf.mxu0
        %v1478 = vadd.f32 %v566, %v1477
        %1479 = vmatprep.mubr.bf16.mxu0 0
        %1480 = vmatmul.mubr.bf16.gmra.mxu0 %v856
        %v1481 = vpop.f32.mrf.mxu0
        %v1482 = vadd.f32 %v562, %v1481
        %v1483 = vpop.f32.mrf.mxu0
        %v1484 = vadd.f32 %v566, %v1483
        %v1485 = vpop.f32.mrf.mxu0
        %v1486 = vadd.f32 %v562, %v1485
        %v1487 = vpop.f32.mrf.mxu0
        %v1488 = vadd.f32 %v566, %v1487
        %1489 = vmatprep.mubr.bf16.mxu0 0
        %1490 = vmatmul.mubr.bf16.gmra.mxu0 %v859
        %v1491 = vpop.f32.mrf.mxu0
        %v1492 = vadd.f32 %v562, %v1491
        %v1493 = vpop.f32.mrf.mxu0
        %v1494 = vadd.f32 %v566, %v1493
        %v1495 = vpop.f32.mrf.mxu0
        %v1496 = vadd.f32 %v562, %v1495
        %v1497 = vpop.f32.mrf.mxu0
        %v1498 = vadd.f32 %v566, %v1497
        %1499 = vmatprep.mubr.bf16.mxu0 0
        %1500 = vmatmul.mubr.bf16.gmra.mxu0 %v862
        %v1501 = vpop.f32.mrf.mxu0
        %v1502 = vadd.f32 %v562, %v1501
        %v1503 = vpop.f32.mrf.mxu0
        %v1504 = vadd.f32 %v566, %v1503
        %v1505 = vpop.f32.mrf.mxu0
        %v1506 = vadd.f32 %v562, %v1505
        %v1507 = vpop.f32.mrf.mxu0
        %v1508 = vadd.f32 %v566, %v1507
        %1509 = vmatprep.mubr.bf16.mxu0 0
        %1510 = vmatmul.mubr.bf16.gmra.mxu0 %v865
        %v1511 = vpop.f32.mrf.mxu0
        %v1512 = vadd.f32 %v562, %v1511
        %v1513 = vpop.f32.mrf.mxu0
        %v1514 = vadd.f32 %v566, %v1513
        %v1515 = vpop.f32.mrf.mxu0
        %v1516 = vadd.f32 %v562, %v1515
        %v1517 = vpop.f32.mrf.mxu0
        %v1518 = vadd.f32 %v566, %v1517
        %1519 = vmatprep.mubr.bf16.mxu0 0
        %1520 = vmatmul.mubr.bf16.gmra.mxu0 %v868
        %v1521 = vpop.f32.mrf.mxu0
        %v1522 = vadd.f32 %v562, %v1521
        %v1523 = vpop.f32.mrf.mxu0
        %v1524 = vadd.f32 %v566, %v1523
        %v1525 = vpop.f32.mrf.mxu0
        %v1526 = vadd.f32 %v562, %v1525
        %v1527 = vpop.f32.mrf.mxu0
        %v1528 = vadd.f32 %v566, %v1527
        %1529 = vmatprep.mubr.bf16.mxu0 0
        %1530 = vmatmul.mubr.bf16.gmra.mxu0 %v871
        %v1531 = vpop.f32.mrf.mxu0
        %v1532 = vadd.f32 %v562, %v1531
        %v1533 = vpop.f32.mrf.mxu0
        %v1534 = vadd.f32 %v566, %v1533
        %v1535 = vpop.f32.mrf.mxu0
        %v1536 = vadd.f32 %v562, %v1535
        %v1537 = vpop.f32.mrf.mxu0
        %v1538 = vadd.f32 %v566, %v1537
        %1539 = vmatprep.mubr.bf16.mxu0 0
        %1540 = vmatmul.mubr.bf16.gmra.mxu0 %v874
        %v1541 = vpop.f32.mrf.mxu0
        %v1542 = vadd.f32 %v562, %v1541
        %v1543 = vpop.f32.mrf.mxu0
        %v1544 = vadd.f32 %v566, %v1543
        %v1545 = vpop.f32.mrf.mxu0
        %v1546 = vadd.f32 %v562, %v1545
        %v1547 = vpop.f32.mrf.mxu0
        %v1548 = vadd.f32 %v566, %v1547
        %1549 = vmatprep.mubr.bf16.mxu0 0
        %1550 = vmatmul.mubr.bf16.gmra.mxu0 %v877
        %v1551 = vpop.f32.mrf.mxu0
        %v1552 = vadd.f32 %v562, %v1551
        %v1553 = vpop.f32.mrf.mxu0
        %v1554 = vadd.f32 %v566, %v1553
        %v1555 = vpop.f32.mrf.mxu0
        %v1556 = vadd.f32 %v562, %v1555
        %v1557 = vpop.f32.mrf.mxu0
        %v1558 = vadd.f32 %v566, %v1557
        %1559 = vmatprep.mubr.bf16.mxu0 0
        %1560 = vmatmul.mubr.bf16.gmra.mxu0 %v880
        %v1561 = vpop.f32.mrf.mxu0
        %v1562 = vadd.f32 %v562, %v1561
        %v1563 = vpop.f32.mrf.mxu0
        %v1564 = vadd.f32 %v566, %v1563
        %v1565 = vpop.f32.mrf.mxu0
        %v1566 = vadd.f32 %v562, %v1565
        %v1567 = vpop.f32.mrf.mxu0
        %v1568 = vadd.f32 %v566, %v1567
        %1569 = vmatprep.mubr.bf16.mxu0 0
        %1570 = vmatmul.mubr.bf16.gmra.mxu0 %v883
        %v1571 = vpop.f32.mrf.mxu0
        %v1572 = vadd.f32 %v562, %v1571
        %v1573 = vpop.f32.mrf.mxu0
        %v1574 = vadd.f32 %v566, %v1573
        %v1575 = vpop.f32.mrf.mxu0
        %v1576 = vadd.f32 %v562, %v1575
        %v1577 = vpop.f32.mrf.mxu0
        %v1578 = vadd.f32 %v566, %v1577
        %1579 = vmatprep.mubr.bf16.mxu0 0
        %1580 = vmatmul.mubr.bf16.gmra.mxu0 %v886
        %v1581 = vpop.f32.mrf.mxu0
        %v1582 = vadd.f32 %v562, %v1581
        %v1583 = vpop.f32.mrf.mxu0
        %v1584 = vadd.f32 %v566, %v1583
        %v1585 = vpop.f32.mrf.mxu0
        %v1586 = vadd.f32 %v562, %v1585
        %v1587 = vpop.f32.mrf.mxu0
        %v1588 = vadd.f32 %v566, %v1587
        %1589 = vmatprep.mubr.bf16.mxu0 0
        %1590 = vmatmul.mubr.bf16.gmra.mxu0 %v889
        %v1591 = vpop.f32.mrf.mxu0
        %v1592 = vadd.f32 %v562, %v1591
        %v1593 = vpop.f32.mrf.mxu0
        %v1594 = vadd.f32 %v566, %v1593
        %v1595 = vpop.f32.mrf.mxu0
        %v1596 = vadd.f32 %v562, %v1595
        %v1597 = vpop.f32.mrf.mxu0
        %v1598 = vadd.f32 %v566, %v1597
        %1599 = vmatprep.mubr.bf16.mxu0 0
        %1600 = vmatmul.mubr.bf16.gmra.mxu0 %v892
        %v1601 = vpop.f32.mrf.mxu0
        %v1602 = vadd.f32 %v562, %v1601
        %v1603 = vpop.f32.mrf.mxu0
        %v1604 = vadd.f32 %v566, %v1603
        %v1605 = vpop.f32.mrf.mxu0
        %v1606 = vadd.f32 %v562, %v1605
        %v1607 = vpop.f32.mrf.mxu0
        %v1608 = vadd.f32 %v566, %v1607
        %1609 = vmatprep.mubr.bf16.mxu0 0
        %1610 = vmatmul.mubr.bf16.gmra.mxu0 %v895
        %v1611 = vpop.f32.mrf.mxu0
        %v1612 = vadd.f32 %v562, %v1611
        %v1613 = vpop.f32.mrf.mxu0
        %v1614 = vadd.f32 %v566, %v1613
        %v1615 = vpop.f32.mrf.mxu0
        %v1616 = vadd.f32 %v562, %v1615
        %v1617 = vpop.f32.mrf.mxu0
        %v1618 = vadd.f32 %v566, %v1617
        %1619 = vmatprep.mubr.bf16.mxu0 0
        %1620 = vmatmul.mubr.bf16.gmra.mxu0 %v898
        %v1621 = vpop.f32.mrf.mxu0
        %v1622 = vadd.f32 %v562, %v1621
        %v1623 = vpop.f32.mrf.mxu0
        %v1624 = vadd.f32 %v566, %v1623
        %v1625 = vpop.f32.mrf.mxu0
        %v1626 = vadd.f32 %v562, %v1625
        %v1627 = vpop.f32.mrf.mxu0
        %v1628 = vadd.f32 %v566, %v1627
        %1629 = vmatprep.mubr.bf16.mxu0 0
        %1630 = vmatmul.mubr.bf16.gmra.mxu0 %v901
        %v1631 = vpop.f32.mrf.mxu0
        %v1632 = vadd.f32 %v562, %v1631
        %v1633 = vpop.f32.mrf.mxu0
        %v1634 = vadd.f32 %v566, %v1633
        %v1635 = vpop.f32.mrf.mxu0
        %v1636 = vadd.f32 %v562, %v1635
        %v1637 = vpop.f32.mrf.mxu0
        %v1638 = vadd.f32 %v566, %v1637
        %1639 = vdwg.mxu0
        %1640 = vmatprep.subr.bf16.mxu0 0
        %1641 = vmatpush1.bf16.msra.mxu0 0
        %1642 = vmatprep.subr.bf16.mxu0 0
        %1643 = vmatpush1.bf16.msra.mxu0 0
        %1644 = vmatprep.subr.bf16.mxu0 0
        %1645 = vmatpush1.bf16.msra.mxu0 0
        %1646 = vmatprep.subr.bf16.mxu0 0
        %1647 = vmatpush1.bf16.msra.mxu0 0
        %1648 = vmatprep.subr.bf16.mxu0 0
        %1649 = vmatpush1.bf16.msra.mxu0 0
        %1650 = vmatprep.subr.bf16.mxu0 0
        %1651 = vmatpush1.bf16.msra.mxu0 0
        %1652 = vmatprep.subr.bf16.mxu0 0
        %1653 = vmatpush1.bf16.msra.mxu0 0
        %1654 = vmatprep.subr.bf16.mxu0 %v920
        %1655 = vmatpush1.bf16.msra.mxu0 %v917
        %1656 = vmatprep.subr.bf16.mxu0 0
        %1657 = vmatpush2.bf16.msra.mxu0 0
        %1658 = vmatprep.subr.bf16.mxu0 0
        %1659 = vmatpush2.bf16.msra.mxu0 0
        %1660 = vmatprep.subr.bf16.mxu0 0
        %1661 = vmatpush2.bf16.msra.mxu0 0
        %1662 = vmatprep.subr.bf16.mxu0 0
        %1663 = vmatpush2.bf16.msra.mxu0 0
        %1664 = vmatprep.subr.bf16.mxu0 0
        %1665 = vmatpush2.bf16.msra.mxu0 0
        %1666 = vmatprep.subr.bf16.mxu0 0
        %1667 = vmatpush2.bf16.msra.mxu0 0
        %1668 = vmatprep.subr.bf16.mxu0 0
        %1669 = vmatpush2.bf16.msra.mxu0 0
        %1670 = vmatprep.subr.bf16.mxu0 0
        %1671 = vmatpush2.bf16.msra.mxu0 0
        %1672 = vmatprep.mubr.bf16.mxu0 0
        %1673 = vmatmul.mubr.bf16.gmra.mxu0 %v808
        %v1674 = vpop.f32.mrf.mxu0
        %v1675 = vadd.f32 %v570, %v1674
        %v1676 = vpop.f32.mrf.mxu0
        %v1677 = vadd.f32 %v574, %v1676
        %v1678 = vpop.f32.mrf.mxu0
        %v1679 = vadd.f32 %v570, %v1678
        %v1680 = vpop.f32.mrf.mxu0
        %v1681 = vadd.f32 %v574, %v1680
        %1682 = vmatprep.mubr.bf16.mxu0 0
        %1683 = vmatmul.mubr.bf16.gmra.mxu0 %v811
        %v1684 = vpop.f32.mrf.mxu0
        %v1685 = vadd.f32 %v570, %v1684
        %v1686 = vpop.f32.mrf.mxu0
        %v1687 = vadd.f32 %v574, %v1686
        %v1688 = vpop.f32.mrf.mxu0
        %v1689 = vadd.f32 %v570, %v1688
        %v1690 = vpop.f32.mrf.mxu0
        %v1691 = vadd.f32 %v574, %v1690
        %1692 = vmatprep.mubr.bf16.mxu0 0
        %1693 = vmatmul.mubr.bf16.gmra.mxu0 %v814
        %v1694 = vpop.f32.mrf.mxu0
        %v1695 = vadd.f32 %v570, %v1694
        %v1696 = vpop.f32.mrf.mxu0
        %v1697 = vadd.f32 %v574, %v1696
        %v1698 = vpop.f32.mrf.mxu0
        %v1699 = vadd.f32 %v570, %v1698
        %v1700 = vpop.f32.mrf.mxu0
        %v1701 = vadd.f32 %v574, %v1700
        %1702 = vmatprep.mubr.bf16.mxu0 0
        %1703 = vmatmul.mubr.bf16.gmra.mxu0 %v817
        %v1704 = vpop.f32.mrf.mxu0
        %v1705 = vadd.f32 %v570, %v1704
        %v1706 = vpop.f32.mrf.mxu0
        %v1707 = vadd.f32 %v574, %v1706
        %v1708 = vpop.f32.mrf.mxu0
        %v1709 = vadd.f32 %v570, %v1708
        %v1710 = vpop.f32.mrf.mxu0
        %v1711 = vadd.f32 %v574, %v1710
        %1712 = vmatprep.mubr.bf16.mxu0 0
        %1713 = vmatmul.mubr.bf16.gmra.mxu0 %v820
        %v1714 = vpop.f32.mrf.mxu0
        %v1715 = vadd.f32 %v570, %v1714
        %v1716 = vpop.f32.mrf.mxu0
        %v1717 = vadd.f32 %v574, %v1716
        %v1718 = vpop.f32.mrf.mxu0
        %v1719 = vadd.f32 %v570, %v1718
        %v1720 = vpop.f32.mrf.mxu0
        %v1721 = vadd.f32 %v574, %v1720
        %1722 = vmatprep.mubr.bf16.mxu0 0
        %1723 = vmatmul.mubr.bf16.gmra.mxu0 %v823
        %v1724 = vpop.f32.mrf.mxu0
        %v1725 = vadd.f32 %v570, %v1724
        %v1726 = vpop.f32.mrf.mxu0
        %v1727 = vadd.f32 %v574, %v1726
        %v1728 = vpop.f32.mrf.mxu0
        %v1729 = vadd.f32 %v570, %v1728
        %v1730 = vpop.f32.mrf.mxu0
        %v1731 = vadd.f32 %v574, %v1730
        %1732 = vmatprep.mubr.bf16.mxu0 0
        %1733 = vmatmul.mubr.bf16.gmra.mxu0 %v826
        %v1734 = vpop.f32.mrf.mxu0
        %v1735 = vadd.f32 %v570, %v1734
        %v1736 = vpop.f32.mrf.mxu0
        %v1737 = vadd.f32 %v574, %v1736
        %v1738 = vpop.f32.mrf.mxu0
        %v1739 = vadd.f32 %v570, %v1738
        %v1740 = vpop.f32.mrf.mxu0
        %v1741 = vadd.f32 %v574, %v1740
        %1742 = vmatprep.mubr.bf16.mxu0 0
        %1743 = vmatmul.mubr.bf16.gmra.mxu0 %v829
        %v1744 = vpop.f32.mrf.mxu0
        %v1745 = vadd.f32 %v570, %v1744
        %v1746 = vpop.f32.mrf.mxu0
        %v1747 = vadd.f32 %v574, %v1746
        %v1748 = vpop.f32.mrf.mxu0
        %v1749 = vadd.f32 %v570, %v1748
        %v1750 = vpop.f32.mrf.mxu0
        %v1751 = vadd.f32 %v574, %v1750
        %1752 = vmatprep.mubr.bf16.mxu0 0
        %1753 = vmatmul.mubr.bf16.gmra.mxu0 %v832
        %v1754 = vpop.f32.mrf.mxu0
        %v1755 = vadd.f32 %v570, %v1754
        %v1756 = vpop.f32.mrf.mxu0
        %v1757 = vadd.f32 %v574, %v1756
        %v1758 = vpop.f32.mrf.mxu0
        %v1759 = vadd.f32 %v570, %v1758
        %v1760 = vpop.f32.mrf.mxu0
        %v1761 = vadd.f32 %v574, %v1760
        %1762 = vmatprep.mubr.bf16.mxu0 0
        %1763 = vmatmul.mubr.bf16.gmra.mxu0 %v835
        %v1764 = vpop.f32.mrf.mxu0
        %v1765 = vadd.f32 %v570, %v1764
        %v1766 = vpop.f32.mrf.mxu0
        %v1767 = vadd.f32 %v574, %v1766
        %v1768 = vpop.f32.mrf.mxu0
        %v1769 = vadd.f32 %v570, %v1768
        %v1770 = vpop.f32.mrf.mxu0
        %v1771 = vadd.f32 %v574, %v1770
        %1772 = vmatprep.mubr.bf16.mxu0 0
        %1773 = vmatmul.mubr.bf16.gmra.mxu0 %v838
        %v1774 = vpop.f32.mrf.mxu0
        %v1775 = vadd.f32 %v570, %v1774
        %v1776 = vpop.f32.mrf.mxu0
        %v1777 = vadd.f32 %v574, %v1776
        %v1778 = vpop.f32.mrf.mxu0
        %v1779 = vadd.f32 %v570, %v1778
        %v1780 = vpop.f32.mrf.mxu0
        %v1781 = vadd.f32 %v574, %v1780
        %1782 = vmatprep.mubr.bf16.mxu0 0
        %1783 = vmatmul.mubr.bf16.gmra.mxu0 %v841
        %v1784 = vpop.f32.mrf.mxu0
        %v1785 = vadd.f32 %v570, %v1784
        %v1786 = vpop.f32.mrf.mxu0
        %v1787 = vadd.f32 %v574, %v1786
        %v1788 = vpop.f32.mrf.mxu0
        %v1789 = vadd.f32 %v570, %v1788
        %v1790 = vpop.f32.mrf.mxu0
        %v1791 = vadd.f32 %v574, %v1790
        %1792 = vmatprep.mubr.bf16.mxu0 0
        %1793 = vmatmul.mubr.bf16.gmra.mxu0 %v844
        %v1794 = vpop.f32.mrf.mxu0
        %v1795 = vadd.f32 %v570, %v1794
        %v1796 = vpop.f32.mrf.mxu0
        %v1797 = vadd.f32 %v574, %v1796
        %v1798 = vpop.f32.mrf.mxu0
        %v1799 = vadd.f32 %v570, %v1798
        %v1800 = vpop.f32.mrf.mxu0
        %v1801 = vadd.f32 %v574, %v1800
        %1802 = vmatprep.mubr.bf16.mxu0 0
        %1803 = vmatmul.mubr.bf16.gmra.mxu0 %v847
        %v1804 = vpop.f32.mrf.mxu0
        %v1805 = vadd.f32 %v570, %v1804
        %v1806 = vpop.f32.mrf.mxu0
        %v1807 = vadd.f32 %v574, %v1806
        %v1808 = vpop.f32.mrf.mxu0
        %v1809 = vadd.f32 %v570, %v1808
        %v1810 = vpop.f32.mrf.mxu0
        %v1811 = vadd.f32 %v574, %v1810
        %1812 = vmatprep.mubr.bf16.mxu0 0
        %1813 = vmatmul.mubr.bf16.gmra.mxu0 %v850
        %v1814 = vpop.f32.mrf.mxu0
        %v1815 = vadd.f32 %v570, %v1814
        %v1816 = vpop.f32.mrf.mxu0
        %v1817 = vadd.f32 %v574, %v1816
        %v1818 = vpop.f32.mrf.mxu0
        %v1819 = vadd.f32 %v570, %v1818
        %v1820 = vpop.f32.mrf.mxu0
        %v1821 = vadd.f32 %v574, %v1820
        %1822 = vmatprep.mubr.bf16.mxu0 0
        %1823 = vmatmul.mubr.bf16.gmra.mxu0 %v853
        %v1824 = vpop.f32.mrf.mxu0
        %v1825 = vadd.f32 %v570, %v1824
        %v1826 = vpop.f32.mrf.mxu0
        %v1827 = vadd.f32 %v574, %v1826
        %v1828 = vpop.f32.mrf.mxu0
        %v1829 = vadd.f32 %v570, %v1828
        %v1830 = vpop.f32.mrf.mxu0
        %v1831 = vadd.f32 %v574, %v1830
        %1832 = vmatprep.mubr.bf16.mxu0 0
        %1833 = vmatmul.mubr.bf16.gmra.mxu0 %v856
        %v1834 = vpop.f32.mrf.mxu0
        %v1835 = vadd.f32 %v570, %v1834
        %v1836 = vpop.f32.mrf.mxu0
        %v1837 = vadd.f32 %v574, %v1836
        %v1838 = vpop.f32.mrf.mxu0
        %v1839 = vadd.f32 %v570, %v1838
        %v1840 = vpop.f32.mrf.mxu0
        %v1841 = vadd.f32 %v574, %v1840
        %1842 = vmatprep.mubr.bf16.mxu0 0
        %1843 = vmatmul.mubr.bf16.gmra.mxu0 %v859
        %v1844 = vpop.f32.mrf.mxu0
        %v1845 = vadd.f32 %v570, %v1844
        %v1846 = vpop.f32.mrf.mxu0
        %v1847 = vadd.f32 %v574, %v1846
        %v1848 = vpop.f32.mrf.mxu0
        %v1849 = vadd.f32 %v570, %v1848
        %v1850 = vpop.f32.mrf.mxu0
        %v1851 = vadd.f32 %v574, %v1850
        %1852 = vmatprep.mubr.bf16.mxu0 0
        %1853 = vmatmul.mubr.bf16.gmra.mxu0 %v862
        %v1854 = vpop.f32.mrf.mxu0
        %v1855 = vadd.f32 %v570, %v1854
        %v1856 = vpop.f32.mrf.mxu0
        %v1857 = vadd.f32 %v574, %v1856
        %v1858 = vpop.f32.mrf.mxu0
        %v1859 = vadd.f32 %v570, %v1858
        %v1860 = vpop.f32.mrf.mxu0
        %v1861 = vadd.f32 %v574, %v1860
        %1862 = vmatprep.mubr.bf16.mxu0 0
        %1863 = vmatmul.mubr.bf16.gmra.mxu0 %v865
        %v1864 = vpop.f32.mrf.mxu0
        %v1865 = vadd.f32 %v570, %v1864
        %v1866 = vpop.f32.mrf.mxu0
        %v1867 = vadd.f32 %v574, %v1866
        %v1868 = vpop.f32.mrf.mxu0
        %v1869 = vadd.f32 %v570, %v1868
        %v1870 = vpop.f32.mrf.mxu0
        %v1871 = vadd.f32 %v574, %v1870
        %1872 = vmatprep.mubr.bf16.mxu0 0
        %1873 = vmatmul.mubr.bf16.gmra.mxu0 %v868
        %v1874 = vpop.f32.mrf.mxu0
        %v1875 = vadd.f32 %v570, %v1874
        %v1876 = vpop.f32.mrf.mxu0
        %v1877 = vadd.f32 %v574, %v1876
        %v1878 = vpop.f32.mrf.mxu0
        %v1879 = vadd.f32 %v570, %v1878
        %v1880 = vpop.f32.mrf.mxu0
        %v1881 = vadd.f32 %v574, %v1880
        %1882 = vmatprep.mubr.bf16.mxu0 0
        %1883 = vmatmul.mubr.bf16.gmra.mxu0 %v871
        %v1884 = vpop.f32.mrf.mxu0
        %v1885 = vadd.f32 %v570, %v1884
        %v1886 = vpop.f32.mrf.mxu0
        %v1887 = vadd.f32 %v574, %v1886
        %v1888 = vpop.f32.mrf.mxu0
        %v1889 = vadd.f32 %v570, %v1888
        %v1890 = vpop.f32.mrf.mxu0
        %v1891 = vadd.f32 %v574, %v1890
        %1892 = vmatprep.mubr.bf16.mxu0 0
        %1893 = vmatmul.mubr.bf16.gmra.mxu0 %v874
        %v1894 = vpop.f32.mrf.mxu0
        %v1895 = vadd.f32 %v570, %v1894
        %v1896 = vpop.f32.mrf.mxu0
        %v1897 = vadd.f32 %v574, %v1896
        %v1898 = vpop.f32.mrf.mxu0
        %v1899 = vadd.f32 %v570, %v1898
        %v1900 = vpop.f32.mrf.mxu0
        %v1901 = vadd.f32 %v574, %v1900
        %1902 = vmatprep.mubr.bf16.mxu0 0
        %1903 = vmatmul.mubr.bf16.gmra.mxu0 %v877
        %v1904 = vpop.f32.mrf.mxu0
        %v1905 = vadd.f32 %v570, %v1904
        %v1906 = vpop.f32.mrf.mxu0
        %v1907 = vadd.f32 %v574, %v1906
        %v1908 = vpop.f32.mrf.mxu0
        %v1909 = vadd.f32 %v570, %v1908
        %v1910 = vpop.f32.mrf.mxu0
        %v1911 = vadd.f32 %v574, %v1910
        %1912 = vmatprep.mubr.bf16.mxu0 0
        %1913 = vmatmul.mubr.bf16.gmra.mxu0 %v880
        %v1914 = vpop.f32.mrf.mxu0
        %v1915 = vadd.f32 %v570, %v1914
        %v1916 = vpop.f32.mrf.mxu0
        %v1917 = vadd.f32 %v574, %v1916
        %v1918 = vpop.f32.mrf.mxu0
        %v1919 = vadd.f32 %v570, %v1918
        %v1920 = vpop.f32.mrf.mxu0
        %v1921 = vadd.f32 %v574, %v1920
        %1922 = vmatprep.mubr.bf16.mxu0 0
        %1923 = vmatmul.mubr.bf16.gmra.mxu0 %v883
        %v1924 = vpop.f32.mrf.mxu0
        %v1925 = vadd.f32 %v570, %v1924
        %v1926 = vpop.f32.mrf.mxu0
        %v1927 = vadd.f32 %v574, %v1926
        %v1928 = vpop.f32.mrf.mxu0
        %v1929 = vadd.f32 %v570, %v1928
        %v1930 = vpop.f32.mrf.mxu0
        %v1931 = vadd.f32 %v574, %v1930
        %1932 = vmatprep.mubr.bf16.mxu0 0
        %1933 = vmatmul.mubr.bf16.gmra.mxu0 %v886
        %v1934 = vpop.f32.mrf.mxu0
        %v1935 = vadd.f32 %v570, %v1934
        %v1936 = vpop.f32.mrf.mxu0
        %v1937 = vadd.f32 %v574, %v1936
        %v1938 = vpop.f32.mrf.mxu0
        %v1939 = vadd.f32 %v570, %v1938
        %v1940 = vpop.f32.mrf.mxu0
        %v1941 = vadd.f32 %v574, %v1940
        %1942 = vmatprep.mubr.bf16.mxu0 0
        %1943 = vmatmul.mubr.bf16.gmra.mxu0 %v889
        %v1944 = vpop.f32.mrf.mxu0
        %v1945 = vadd.f32 %v570, %v1944
        %v1946 = vpop.f32.mrf.mxu0
        %v1947 = vadd.f32 %v574, %v1946
        %v1948 = vpop.f32.mrf.mxu0
        %v1949 = vadd.f32 %v570, %v1948
        %v1950 = vpop.f32.mrf.mxu0
        %v1951 = vadd.f32 %v574, %v1950
        %1952 = vmatprep.mubr.bf16.mxu0 0
        %1953 = vmatmul.mubr.bf16.gmra.mxu0 %v892
        %v1954 = vpop.f32.mrf.mxu0
        %v1955 = vadd.f32 %v570, %v1954
        %v1956 = vpop.f32.mrf.mxu0
        %v1957 = vadd.f32 %v574, %v1956
        %v1958 = vpop.f32.mrf.mxu0
        %v1959 = vadd.f32 %v570, %v1958
        %v1960 = vpop.f32.mrf.mxu0
        %v1961 = vadd.f32 %v574, %v1960
        %1962 = vmatprep.mubr.bf16.mxu0 0
        %1963 = vmatmul.mubr.bf16.gmra.mxu0 %v895
        %v1964 = vpop.f32.mrf.mxu0
        %v1965 = vadd.f32 %v570, %v1964
        %v1966 = vpop.f32.mrf.mxu0
        %v1967 = vadd.f32 %v574, %v1966
        %v1968 = vpop.f32.mrf.mxu0
        %v1969 = vadd.f32 %v570, %v1968
        %v1970 = vpop.f32.mrf.mxu0
        %v1971 = vadd.f32 %v574, %v1970
        %1972 = vmatprep.mubr.bf16.mxu0 0
        %1973 = vmatmul.mubr.bf16.gmra.mxu0 %v898
        %v1974 = vpop.f32.mrf.mxu0
        %v1975 = vadd.f32 %v570, %v1974
        %v1976 = vpop.f32.mrf.mxu0
        %v1977 = vadd.f32 %v574, %v1976
        %v1978 = vpop.f32.mrf.mxu0
        %v1979 = vadd.f32 %v570, %v1978
        %v1980 = vpop.f32.mrf.mxu0
        %v1981 = vadd.f32 %v574, %v1980
        %1982 = vmatprep.mubr.bf16.mxu0 0
        %1983 = vmatmul.mubr.bf16.gmra.mxu0 %v901
        %v1984 = vpop.f32.mrf.mxu0
        %v1985 = vadd.f32 %v570, %v1984
        %v1986 = vpop.f32.mrf.mxu0
        %v1987 = vadd.f32 %v574, %v1986
        %v1988 = vpop.f32.mrf.mxu0
        %v1989 = vadd.f32 %v570, %v1988
        %v1990 = vpop.f32.mrf.mxu0
        %v1991 = vadd.f32 %v574, %v1990
        %1992 = vdwg.mxu0
        %1993 = vmatprep.subr.bf16.mxu0 0
        %1994 = vmatpush1.bf16.msra.mxu0 0
        %1995 = vmatprep.subr.bf16.mxu0 0
        %1996 = vmatpush1.bf16.msra.mxu0 0
        %1997 = vmatprep.subr.bf16.mxu0 0
        %1998 = vmatpush1.bf16.msra.mxu0 0
        %1999 = vmatprep.subr.bf16.mxu0 0
        %2000 = vmatpush1.bf16.msra.mxu0 0
        %2001 = vmatprep.subr.bf16.mxu0 0
        %2002 = vmatpush1.bf16.msra.mxu0 0
        %2003 = vmatprep.subr.bf16.mxu0 0
        %2004 = vmatpush1.bf16.msra.mxu0 0
        %2005 = vmatprep.subr.bf16.mxu0 0
        %2006 = vmatpush1.bf16.msra.mxu0 0
        %2007 = vmatprep.subr.bf16.mxu0 %v926
        %2008 = vmatpush1.bf16.msra.mxu0 %v923
        %2009 = vmatprep.subr.bf16.mxu0 0
        %2010 = vmatpush2.bf16.msra.mxu0 0
        %2011 = vmatprep.subr.bf16.mxu0 0
        %2012 = vmatpush2.bf16.msra.mxu0 0
        %2013 = vmatprep.subr.bf16.mxu0 0
        %2014 = vmatpush2.bf16.msra.mxu0 0
        %2015 = vmatprep.subr.bf16.mxu0 0
        %2016 = vmatpush2.bf16.msra.mxu0 0
        %2017 = vmatprep.subr.bf16.mxu0 0
        %2018 = vmatpush2.bf16.msra.mxu0 0
        %2019 = vmatprep.subr.bf16.mxu0 0
        %2020 = vmatpush2.bf16.msra.mxu0 0
        %2021 = vmatprep.subr.bf16.mxu0 0
        %2022 = vmatpush2.bf16.msra.mxu0 0
        %2023 = vmatprep.subr.bf16.mxu0 0
        %2024 = vmatpush2.bf16.msra.mxu0 0
        %2025 = vmatprep.mubr.bf16.mxu0 0
        %2026 = vmatmul.mubr.bf16.gmra.mxu0 %v808
        %v2027 = vpop.f32.mrf.mxu0
        %v2028 = vadd.f32 %v578, %v2027
        %v2029 = vpop.f32.mrf.mxu0
        %v2030 = vadd.f32 %v582, %v2029
        %v2031 = vpop.f32.mrf.mxu0
        %v2032 = vadd.f32 %v578, %v2031
        %v2033 = vpop.f32.mrf.mxu0
        %v2034 = vadd.f32 %v582, %v2033
        %2035 = vmatprep.mubr.bf16.mxu0 0
        %2036 = vmatmul.mubr.bf16.gmra.mxu0 %v811
        %v2037 = vpop.f32.mrf.mxu0
        %v2038 = vadd.f32 %v578, %v2037
        %v2039 = vpop.f32.mrf.mxu0
        %v2040 = vadd.f32 %v582, %v2039
        %v2041 = vpop.f32.mrf.mxu0
        %v2042 = vadd.f32 %v578, %v2041
        %v2043 = vpop.f32.mrf.mxu0
        %v2044 = vadd.f32 %v582, %v2043
        %2045 = vmatprep.mubr.bf16.mxu0 0
        %2046 = vmatmul.mubr.bf16.gmra.mxu0 %v814
        %v2047 = vpop.f32.mrf.mxu0
        %v2048 = vadd.f32 %v578, %v2047
        %v2049 = vpop.f32.mrf.mxu0
        %v2050 = vadd.f32 %v582, %v2049
        %v2051 = vpop.f32.mrf.mxu0
        %v2052 = vadd.f32 %v578, %v2051
        %v2053 = vpop.f32.mrf.mxu0
        %v2054 = vadd.f32 %v582, %v2053
        %2055 = vmatprep.mubr.bf16.mxu0 0
        %2056 = vmatmul.mubr.bf16.gmra.mxu0 %v817
        %v2057 = vpop.f32.mrf.mxu0
        %v2058 = vadd.f32 %v578, %v2057
        %v2059 = vpop.f32.mrf.mxu0
        %v2060 = vadd.f32 %v582, %v2059
        %v2061 = vpop.f32.mrf.mxu0
        %v2062 = vadd.f32 %v578, %v2061
        %v2063 = vpop.f32.mrf.mxu0
        %v2064 = vadd.f32 %v582, %v2063
        %2065 = vmatprep.mubr.bf16.mxu0 0
        %2066 = vmatmul.mubr.bf16.gmra.mxu0 %v820
        %v2067 = vpop.f32.mrf.mxu0
        %v2068 = vadd.f32 %v578, %v2067
        %v2069 = vpop.f32.mrf.mxu0
        %v2070 = vadd.f32 %v582, %v2069
        %v2071 = vpop.f32.mrf.mxu0
        %v2072 = vadd.f32 %v578, %v2071
        %v2073 = vpop.f32.mrf.mxu0
        %v2074 = vadd.f32 %v582, %v2073
        %2075 = vmatprep.mubr.bf16.mxu0 0
        %2076 = vmatmul.mubr.bf16.gmra.mxu0 %v823
        %v2077 = vpop.f32.mrf.mxu0
        %v2078 = vadd.f32 %v578, %v2077
        %v2079 = vpop.f32.mrf.mxu0
        %v2080 = vadd.f32 %v582, %v2079
        %v2081 = vpop.f32.mrf.mxu0
        %v2082 = vadd.f32 %v578, %v2081
        %v2083 = vpop.f32.mrf.mxu0
        %v2084 = vadd.f32 %v582, %v2083
        %2085 = vmatprep.mubr.bf16.mxu0 0
        %2086 = vmatmul.mubr.bf16.gmra.mxu0 %v826
        %v2087 = vpop.f32.mrf.mxu0
        %v2088 = vadd.f32 %v578, %v2087
        %v2089 = vpop.f32.mrf.mxu0
        %v2090 = vadd.f32 %v582, %v2089
        %v2091 = vpop.f32.mrf.mxu0
        %v2092 = vadd.f32 %v578, %v2091
        %v2093 = vpop.f32.mrf.mxu0
        %v2094 = vadd.f32 %v582, %v2093
        %2095 = vmatprep.mubr.bf16.mxu0 0
        %2096 = vmatmul.mubr.bf16.gmra.mxu0 %v829
        %v2097 = vpop.f32.mrf.mxu0
        %v2098 = vadd.f32 %v578, %v2097
        %v2099 = vpop.f32.mrf.mxu0
        %v2100 = vadd.f32 %v582, %v2099
        %v2101 = vpop.f32.mrf.mxu0
        %v2102 = vadd.f32 %v578, %v2101
        %v2103 = vpop.f32.mrf.mxu0
        %v2104 = vadd.f32 %v582, %v2103
        %2105 = vmatprep.mubr.bf16.mxu0 0
        %2106 = vmatmul.mubr.bf16.gmra.mxu0 %v832
        %v2107 = vpop.f32.mrf.mxu0
        %v2108 = vadd.f32 %v578, %v2107
        %v2109 = vpop.f32.mrf.mxu0
        %v2110 = vadd.f32 %v582, %v2109
        %v2111 = vpop.f32.mrf.mxu0
        %v2112 = vadd.f32 %v578, %v2111
        %v2113 = vpop.f32.mrf.mxu0
        %v2114 = vadd.f32 %v582, %v2113
        %2115 = vmatprep.mubr.bf16.mxu0 0
        %2116 = vmatmul.mubr.bf16.gmra.mxu0 %v835
        %v2117 = vpop.f32.mrf.mxu0
        %v2118 = vadd.f32 %v578, %v2117
        %v2119 = vpop.f32.mrf.mxu0
        %v2120 = vadd.f32 %v582, %v2119
        %v2121 = vpop.f32.mrf.mxu0
        %v2122 = vadd.f32 %v578, %v2121
        %v2123 = vpop.f32.mrf.mxu0
        %v2124 = vadd.f32 %v582, %v2123
        %2125 = vmatprep.mubr.bf16.mxu0 0
        %2126 = vmatmul.mubr.bf16.gmra.mxu0 %v838
        %v2127 = vpop.f32.mrf.mxu0
        %v2128 = vadd.f32 %v578, %v2127
        %v2129 = vpop.f32.mrf.mxu0
        %v2130 = vadd.f32 %v582, %v2129
        %v2131 = vpop.f32.mrf.mxu0
        %v2132 = vadd.f32 %v578, %v2131
        %v2133 = vpop.f32.mrf.mxu0
        %v2134 = vadd.f32 %v582, %v2133
        %2135 = vmatprep.mubr.bf16.mxu0 0
        %2136 = vmatmul.mubr.bf16.gmra.mxu0 %v841
        %v2137 = vpop.f32.mrf.mxu0
        %v2138 = vadd.f32 %v578, %v2137
        %v2139 = vpop.f32.mrf.mxu0
        %v2140 = vadd.f32 %v582, %v2139
        %v2141 = vpop.f32.mrf.mxu0
        %v2142 = vadd.f32 %v578, %v2141
        %v2143 = vpop.f32.mrf.mxu0
        %v2144 = vadd.f32 %v582, %v2143
        %2145 = vmatprep.mubr.bf16.mxu0 0
        %2146 = vmatmul.mubr.bf16.gmra.mxu0 %v844
        %v2147 = vpop.f32.mrf.mxu0
        %v2148 = vadd.f32 %v578, %v2147
        %v2149 = vpop.f32.mrf.mxu0
        %v2150 = vadd.f32 %v582, %v2149
        %v2151 = vpop.f32.mrf.mxu0
        %v2152 = vadd.f32 %v578, %v2151
        %v2153 = vpop.f32.mrf.mxu0
        %v2154 = vadd.f32 %v582, %v2153
        %2155 = vmatprep.mubr.bf16.mxu0 0
        %2156 = vmatmul.mubr.bf16.gmra.mxu0 %v847
        %v2157 = vpop.f32.mrf.mxu0
        %v2158 = vadd.f32 %v578, %v2157
        %v2159 = vpop.f32.mrf.mxu0
        %v2160 = vadd.f32 %v582, %v2159
        %v2161 = vpop.f32.mrf.mxu0
        %v2162 = vadd.f32 %v578, %v2161
        %v2163 = vpop.f32.mrf.mxu0
        %v2164 = vadd.f32 %v582, %v2163
        %2165 = vmatprep.mubr.bf16.mxu0 0
        %2166 = vmatmul.mubr.bf16.gmra.mxu0 %v850
        %v2167 = vpop.f32.mrf.mxu0
        %v2168 = vadd.f32 %v578, %v2167
        %v2169 = vpop.f32.mrf.mxu0
        %v2170 = vadd.f32 %v582, %v2169
        %v2171 = vpop.f32.mrf.mxu0
        %v2172 = vadd.f32 %v578, %v2171
        %v2173 = vpop.f32.mrf.mxu0
        %v2174 = vadd.f32 %v582, %v2173
        %2175 = vmatprep.mubr.bf16.mxu0 0
        %2176 = vmatmul.mubr.bf16.gmra.mxu0 %v853
        %v2177 = vpop.f32.mrf.mxu0
        %v2178 = vadd.f32 %v578, %v2177
        %v2179 = vpop.f32.mrf.mxu0
        %v2180 = vadd.f32 %v582, %v2179
        %v2181 = vpop.f32.mrf.mxu0
        %v2182 = vadd.f32 %v578, %v2181
        %v2183 = vpop.f32.mrf.mxu0
        %v2184 = vadd.f32 %v582, %v2183
        %2185 = vmatprep.mubr.bf16.mxu0 0
        %2186 = vmatmul.mubr.bf16.gmra.mxu0 %v856
        %v2187 = vpop.f32.mrf.mxu0
        %v2188 = vadd.f32 %v578, %v2187
        %v2189 = vpop.f32.mrf.mxu0
        %v2190 = vadd.f32 %v582, %v2189
        %v2191 = vpop.f32.mrf.mxu0
        %v2192 = vadd.f32 %v578, %v2191
        %v2193 = vpop.f32.mrf.mxu0
        %v2194 = vadd.f32 %v582, %v2193
        %2195 = vmatprep.mubr.bf16.mxu0 0
        %2196 = vmatmul.mubr.bf16.gmra.mxu0 %v859
        %v2197 = vpop.f32.mrf.mxu0
        %v2198 = vadd.f32 %v578, %v2197
        %v2199 = vpop.f32.mrf.mxu0
        %v2200 = vadd.f32 %v582, %v2199
        %v2201 = vpop.f32.mrf.mxu0
        %v2202 = vadd.f32 %v578, %v2201
        %v2203 = vpop.f32.mrf.mxu0
        %v2204 = vadd.f32 %v582, %v2203
        %2205 = vmatprep.mubr.bf16.mxu0 0
        %2206 = vmatmul.mubr.bf16.gmra.mxu0 %v862
        %v2207 = vpop.f32.mrf.mxu0
        %v2208 = vadd.f32 %v578, %v2207
        %v2209 = vpop.f32.mrf.mxu0
        %v2210 = vadd.f32 %v582, %v2209
        %v2211 = vpop.f32.mrf.mxu0
        %v2212 = vadd.f32 %v578, %v2211
        %v2213 = vpop.f32.mrf.mxu0
        %v2214 = vadd.f32 %v582, %v2213
        %2215 = vmatprep.mubr.bf16.mxu0 0
        %2216 = vmatmul.mubr.bf16.gmra.mxu0 %v865
        %v2217 = vpop.f32.mrf.mxu0
        %v2218 = vadd.f32 %v578, %v2217
        %v2219 = vpop.f32.mrf.mxu0
        %v2220 = vadd.f32 %v582, %v2219
        %v2221 = vpop.f32.mrf.mxu0
        %v2222 = vadd.f32 %v578, %v2221
        %v2223 = vpop.f32.mrf.mxu0
        %v2224 = vadd.f32 %v582, %v2223
        %2225 = vmatprep.mubr.bf16.mxu0 0
        %2226 = vmatmul.mubr.bf16.gmra.mxu0 %v868
        %v2227 = vpop.f32.mrf.mxu0
        %v2228 = vadd.f32 %v578, %v2227
        %v2229 = vpop.f32.mrf.mxu0
        %v2230 = vadd.f32 %v582, %v2229
        %v2231 = vpop.f32.mrf.mxu0
        %v2232 = vadd.f32 %v578, %v2231
        %v2233 = vpop.f32.mrf.mxu0
        %v2234 = vadd.f32 %v582, %v2233
        %2235 = vmatprep.mubr.bf16.mxu0 0
        %2236 = vmatmul.mubr.bf16.gmra.mxu0 %v871
        %v2237 = vpop.f32.mrf.mxu0
        %v2238 = vadd.f32 %v578, %v2237
        %v2239 = vpop.f32.mrf.mxu0
        %v2240 = vadd.f32 %v582, %v2239
        %v2241 = vpop.f32.mrf.mxu0
        %v2242 = vadd.f32 %v578, %v2241
        %v2243 = vpop.f32.mrf.mxu0
        %v2244 = vadd.f32 %v582, %v2243
        %2245 = vmatprep.mubr.bf16.mxu0 0
        %2246 = vmatmul.mubr.bf16.gmra.mxu0 %v874
        %v2247 = vpop.f32.mrf.mxu0
        %v2248 = vadd.f32 %v578, %v2247
        %v2249 = vpop.f32.mrf.mxu0
        %v2250 = vadd.f32 %v582, %v2249
        %v2251 = vpop.f32.mrf.mxu0
        %v2252 = vadd.f32 %v578, %v2251
        %v2253 = vpop.f32.mrf.mxu0
        %v2254 = vadd.f32 %v582, %v2253
        %2255 = vmatprep.mubr.bf16.mxu0 0
        %2256 = vmatmul.mubr.bf16.gmra.mxu0 %v877
        %v2257 = vpop.f32.mrf.mxu0
        %v2258 = vadd.f32 %v578, %v2257
        %v2259 = vpop.f32.mrf.mxu0
        %v2260 = vadd.f32 %v582, %v2259
        %v2261 = vpop.f32.mrf.mxu0
        %v2262 = vadd.f32 %v578, %v2261
        %v2263 = vpop.f32.mrf.mxu0
        %v2264 = vadd.f32 %v582, %v2263
        %2265 = vmatprep.mubr.bf16.mxu0 0
        %2266 = vmatmul.mubr.bf16.gmra.mxu0 %v880
        %v2267 = vpop.f32.mrf.mxu0
        %v2268 = vadd.f32 %v578, %v2267
        %v2269 = vpop.f32.mrf.mxu0
        %v2270 = vadd.f32 %v582, %v2269
        %v2271 = vpop.f32.mrf.mxu0
        %v2272 = vadd.f32 %v578, %v2271
        %v2273 = vpop.f32.mrf.mxu0
        %v2274 = vadd.f32 %v582, %v2273
        %2275 = vmatprep.mubr.bf16.mxu0 0
        %2276 = vmatmul.mubr.bf16.gmra.mxu0 %v883
        %v2277 = vpop.f32.mrf.mxu0
        %v2278 = vadd.f32 %v578, %v2277
        %v2279 = vpop.f32.mrf.mxu0
        %v2280 = vadd.f32 %v582, %v2279
        %v2281 = vpop.f32.mrf.mxu0
        %v2282 = vadd.f32 %v578, %v2281
        %v2283 = vpop.f32.mrf.mxu0
        %v2284 = vadd.f32 %v582, %v2283
        %2285 = vmatprep.mubr.bf16.mxu0 0
        %2286 = vmatmul.mubr.bf16.gmra.mxu0 %v886
        %v2287 = vpop.f32.mrf.mxu0
        %v2288 = vadd.f32 %v578, %v2287
        %v2289 = vpop.f32.mrf.mxu0
        %v2290 = vadd.f32 %v582, %v2289
        %v2291 = vpop.f32.mrf.mxu0
        %v2292 = vadd.f32 %v578, %v2291
        %v2293 = vpop.f32.mrf.mxu0
        %v2294 = vadd.f32 %v582, %v2293
        %2295 = vmatprep.mubr.bf16.mxu0 0
        %2296 = vmatmul.mubr.bf16.gmra.mxu0 %v889
        %v2297 = vpop.f32.mrf.mxu0
        %v2298 = vadd.f32 %v578, %v2297
        %v2299 = vpop.f32.mrf.mxu0
        %v2300 = vadd.f32 %v582, %v2299
        %v2301 = vpop.f32.mrf.mxu0
        %v2302 = vadd.f32 %v578, %v2301
        %v2303 = vpop.f32.mrf.mxu0
        %v2304 = vadd.f32 %v582, %v2303
        %2305 = vmatprep.mubr.bf16.mxu0 0
        %2306 = vmatmul.mubr.bf16.gmra.mxu0 %v892
        %v2307 = vpop.f32.mrf.mxu0
        %v2308 = vadd.f32 %v578, %v2307
        %v2309 = vpop.f32.mrf.mxu0
        %v2310 = vadd.f32 %v582, %v2309
        %v2311 = vpop.f32.mrf.mxu0
        %v2312 = vadd.f32 %v578, %v2311
        %v2313 = vpop.f32.mrf.mxu0
        %v2314 = vadd.f32 %v582, %v2313
        %2315 = vmatprep.mubr.bf16.mxu0 0
        %2316 = vmatmul.mubr.bf16.gmra.mxu0 %v895
        %v2317 = vpop.f32.mrf.mxu0
        %v2318 = vadd.f32 %v578, %v2317
        %v2319 = vpop.f32.mrf.mxu0
        %v2320 = vadd.f32 %v582, %v2319
        %v2321 = vpop.f32.mrf.mxu0
        %v2322 = vadd.f32 %v578, %v2321
        %v2323 = vpop.f32.mrf.mxu0
        %v2324 = vadd.f32 %v582, %v2323
        %2325 = vmatprep.mubr.bf16.mxu0 0
        %2326 = vmatmul.mubr.bf16.gmra.mxu0 %v898
        %v2327 = vpop.f32.mrf.mxu0
        %v2328 = vadd.f32 %v578, %v2327
        %v2329 = vpop.f32.mrf.mxu0
        %v2330 = vadd.f32 %v582, %v2329
        %v2331 = vpop.f32.mrf.mxu0
        %v2332 = vadd.f32 %v578, %v2331
        %v2333 = vpop.f32.mrf.mxu0
        %v2334 = vadd.f32 %v582, %v2333
        %2335 = vmatprep.mubr.bf16.mxu0 0
        %2336 = vmatmul.mubr.bf16.gmra.mxu0 %v901
        %v2337 = vpop.f32.mrf.mxu0
        %v2338 = vadd.f32 %v578, %v2337
        %v2339 = vpop.f32.mrf.mxu0
        %v2340 = vadd.f32 %v582, %v2339
        %v2341 = vpop.f32.mrf.mxu0
        %v2342 = vadd.f32 %v578, %v2341
        %v2343 = vpop.f32.mrf.mxu0
        %v2344 = vadd.f32 %v582, %v2343
        %2345 = vdwg.mxu0
        %2346 = vmatprep.subr.bf16.mxu0 0
        %2347 = vmatpush1.bf16.msra.mxu0 0
        %2348 = vmatprep.subr.bf16.mxu0 0
        %2349 = vmatpush1.bf16.msra.mxu0 0
        %2350 = vmatprep.subr.bf16.mxu0 0
        %2351 = vmatpush1.bf16.msra.mxu0 0
        %2352 = vmatprep.subr.bf16.mxu0 0
        %2353 = vmatpush1.bf16.msra.mxu0 0
        %2354 = vmatprep.subr.bf16.mxu0 0
        %2355 = vmatpush1.bf16.msra.mxu0 0
        %2356 = vmatprep.subr.bf16.mxu0 0
        %2357 = vmatpush1.bf16.msra.mxu0 0
        %2358 = vmatprep.subr.bf16.mxu0 0
        %2359 = vmatpush1.bf16.msra.mxu0 0
        %2360 = vmatprep.subr.bf16.mxu0 %v932
        %2361 = vmatpush1.bf16.msra.mxu0 %v929
        %2362 = vmatprep.subr.bf16.mxu0 0
        %2363 = vmatpush2.bf16.msra.mxu0 0
        %2364 = vmatprep.subr.bf16.mxu0 0
        %2365 = vmatpush2.bf16.msra.mxu0 0
        %2366 = vmatprep.subr.bf16.mxu0 0
        %2367 = vmatpush2.bf16.msra.mxu0 0
        %2368 = vmatprep.subr.bf16.mxu0 0
        %2369 = vmatpush2.bf16.msra.mxu0 0
        %2370 = vmatprep.subr.bf16.mxu0 0
        %2371 = vmatpush2.bf16.msra.mxu0 0
        %2372 = vmatprep.subr.bf16.mxu0 0
        %2373 = vmatpush2.bf16.msra.mxu0 0
        %2374 = vmatprep.subr.bf16.mxu0 0
        %2375 = vmatpush2.bf16.msra.mxu0 0
        %2376 = vmatprep.subr.bf16.mxu0 0
        %2377 = vmatpush2.bf16.msra.mxu0 0
        %2378 = vmatprep.mubr.bf16.mxu0 0
        %2379 = vmatmul.mubr.bf16.gmra.mxu0 %v808
        %v2380 = vpop.f32.mrf.mxu0
        %v2381 = vadd.f32 %v586, %v2380
        %v2382 = vpop.f32.mrf.mxu0
        %v2383 = vadd.f32 %v590, %v2382
        %v2384 = vpop.f32.mrf.mxu0
        %v2385 = vadd.f32 %v586, %v2384
        %v2386 = vpop.f32.mrf.mxu0
        %v2387 = vadd.f32 %v590, %v2386
        %2388 = vmatprep.mubr.bf16.mxu0 0
        %2389 = vmatmul.mubr.bf16.gmra.mxu0 %v811
        %v2390 = vpop.f32.mrf.mxu0
        %v2391 = vadd.f32 %v586, %v2390
        %v2392 = vpop.f32.mrf.mxu0
        %v2393 = vadd.f32 %v590, %v2392
        %v2394 = vpop.f32.mrf.mxu0
        %v2395 = vadd.f32 %v586, %v2394
        %v2396 = vpop.f32.mrf.mxu0
        %v2397 = vadd.f32 %v590, %v2396
        %2398 = vmatprep.mubr.bf16.mxu0 0
        %2399 = vmatmul.mubr.bf16.gmra.mxu0 %v814
        %v2400 = vpop.f32.mrf.mxu0
        %v2401 = vadd.f32 %v586, %v2400
        %v2402 = vpop.f32.mrf.mxu0
        %v2403 = vadd.f32 %v590, %v2402
        %v2404 = vpop.f32.mrf.mxu0
        %v2405 = vadd.f32 %v586, %v2404
        %v2406 = vpop.f32.mrf.mxu0
        %v2407 = vadd.f32 %v590, %v2406
        %2408 = vmatprep.mubr.bf16.mxu0 0
        %2409 = vmatmul.mubr.bf16.gmra.mxu0 %v817
        %v2410 = vpop.f32.mrf.mxu0
        %v2411 = vadd.f32 %v586, %v2410
        %v2412 = vpop.f32.mrf.mxu0
        %v2413 = vadd.f32 %v590, %v2412
        %v2414 = vpop.f32.mrf.mxu0
        %v2415 = vadd.f32 %v586, %v2414
        %v2416 = vpop.f32.mrf.mxu0
        %v2417 = vadd.f32 %v590, %v2416
        %2418 = vmatprep.mubr.bf16.mxu0 0
        %2419 = vmatmul.mubr.bf16.gmra.mxu0 %v820
        %v2420 = vpop.f32.mrf.mxu0
        %v2421 = vadd.f32 %v586, %v2420
        %v2422 = vpop.f32.mrf.mxu0
        %v2423 = vadd.f32 %v590, %v2422
        %v2424 = vpop.f32.mrf.mxu0
        %v2425 = vadd.f32 %v586, %v2424
        %v2426 = vpop.f32.mrf.mxu0
        %v2427 = vadd.f32 %v590, %v2426
        %2428 = vmatprep.mubr.bf16.mxu0 0
        %2429 = vmatmul.mubr.bf16.gmra.mxu0 %v823
        %v2430 = vpop.f32.mrf.mxu0
        %v2431 = vadd.f32 %v586, %v2430
        %v2432 = vpop.f32.mrf.mxu0
        %v2433 = vadd.f32 %v590, %v2432
        %v2434 = vpop.f32.mrf.mxu0
        %v2435 = vadd.f32 %v586, %v2434
        %v2436 = vpop.f32.mrf.mxu0
        %v2437 = vadd.f32 %v590, %v2436
        %2438 = vmatprep.mubr.bf16.mxu0 0
        %2439 = vmatmul.mubr.bf16.gmra.mxu0 %v826
        %v2440 = vpop.f32.mrf.mxu0
        %v2441 = vadd.f32 %v586, %v2440
        %v2442 = vpop.f32.mrf.mxu0
        %v2443 = vadd.f32 %v590, %v2442
        %v2444 = vpop.f32.mrf.mxu0
        %v2445 = vadd.f32 %v586, %v2444
        %v2446 = vpop.f32.mrf.mxu0
        %v2447 = vadd.f32 %v590, %v2446
        %2448 = vmatprep.mubr.bf16.mxu0 0
        %2449 = vmatmul.mubr.bf16.gmra.mxu0 %v829
        %v2450 = vpop.f32.mrf.mxu0
        %v2451 = vadd.f32 %v586, %v2450
        %v2452 = vpop.f32.mrf.mxu0
        %v2453 = vadd.f32 %v590, %v2452
        %v2454 = vpop.f32.mrf.mxu0
        %v2455 = vadd.f32 %v586, %v2454
        %v2456 = vpop.f32.mrf.mxu0
        %v2457 = vadd.f32 %v590, %v2456
        %2458 = vmatprep.mubr.bf16.mxu0 0
        %2459 = vmatmul.mubr.bf16.gmra.mxu0 %v832
        %v2460 = vpop.f32.mrf.mxu0
        %v2461 = vadd.f32 %v586, %v2460
        %v2462 = vpop.f32.mrf.mxu0
        %v2463 = vadd.f32 %v590, %v2462
        %v2464 = vpop.f32.mrf.mxu0
        %v2465 = vadd.f32 %v586, %v2464
        %v2466 = vpop.f32.mrf.mxu0
        %v2467 = vadd.f32 %v590, %v2466
        %2468 = vmatprep.mubr.bf16.mxu0 0
        %2469 = vmatmul.mubr.bf16.gmra.mxu0 %v835
        %v2470 = vpop.f32.mrf.mxu0
        %v2471 = vadd.f32 %v586, %v2470
        %v2472 = vpop.f32.mrf.mxu0
        %v2473 = vadd.f32 %v590, %v2472
        %v2474 = vpop.f32.mrf.mxu0
        %v2475 = vadd.f32 %v586, %v2474
        %v2476 = vpop.f32.mrf.mxu0
        %v2477 = vadd.f32 %v590, %v2476
        %2478 = vmatprep.mubr.bf16.mxu0 0
        %2479 = vmatmul.mubr.bf16.gmra.mxu0 %v838
        %v2480 = vpop.f32.mrf.mxu0
        %v2481 = vadd.f32 %v586, %v2480
        %v2482 = vpop.f32.mrf.mxu0
        %v2483 = vadd.f32 %v590, %v2482
        %v2484 = vpop.f32.mrf.mxu0
        %v2485 = vadd.f32 %v586, %v2484
        %v2486 = vpop.f32.mrf.mxu0
        %v2487 = vadd.f32 %v590, %v2486
        %2488 = vmatprep.mubr.bf16.mxu0 0
        %2489 = vmatmul.mubr.bf16.gmra.mxu0 %v841
        %v2490 = vpop.f32.mrf.mxu0
        %v2491 = vadd.f32 %v586, %v2490
        %v2492 = vpop.f32.mrf.mxu0
        %v2493 = vadd.f32 %v590, %v2492
        %v2494 = vpop.f32.mrf.mxu0
        %v2495 = vadd.f32 %v586, %v2494
        %v2496 = vpop.f32.mrf.mxu0
        %v2497 = vadd.f32 %v590, %v2496
        %2498 = vmatprep.mubr.bf16.mxu0 0
        %2499 = vmatmul.mubr.bf16.gmra.mxu0 %v844
        %v2500 = vpop.f32.mrf.mxu0
        %v2501 = vadd.f32 %v586, %v2500
        %v2502 = vpop.f32.mrf.mxu0
        %v2503 = vadd.f32 %v590, %v2502
        %v2504 = vpop.f32.mrf.mxu0
        %v2505 = vadd.f32 %v586, %v2504
        %v2506 = vpop.f32.mrf.mxu0
        %v2507 = vadd.f32 %v590, %v2506
        %2508 = vmatprep.mubr.bf16.mxu0 0
        %2509 = vmatmul.mubr.bf16.gmra.mxu0 %v847
        %v2510 = vpop.f32.mrf.mxu0
        %v2511 = vadd.f32 %v586, %v2510
        %v2512 = vpop.f32.mrf.mxu0
        %v2513 = vadd.f32 %v590, %v2512
        %v2514 = vpop.f32.mrf.mxu0
        %v2515 = vadd.f32 %v586, %v2514
        %v2516 = vpop.f32.mrf.mxu0
        %v2517 = vadd.f32 %v590, %v2516
        %2518 = vmatprep.mubr.bf16.mxu0 0
        %2519 = vmatmul.mubr.bf16.gmra.mxu0 %v850
        %v2520 = vpop.f32.mrf.mxu0
        %v2521 = vadd.f32 %v586, %v2520
        %v2522 = vpop.f32.mrf.mxu0
        %v2523 = vadd.f32 %v590, %v2522
        %v2524 = vpop.f32.mrf.mxu0
        %v2525 = vadd.f32 %v586, %v2524
        %v2526 = vpop.f32.mrf.mxu0
        %v2527 = vadd.f32 %v590, %v2526
        %2528 = vmatprep.mubr.bf16.mxu0 0
        %2529 = vmatmul.mubr.bf16.gmra.mxu0 %v853
        %v2530 = vpop.f32.mrf.mxu0
        %v2531 = vadd.f32 %v586, %v2530
        %v2532 = vpop.f32.mrf.mxu0
        %v2533 = vadd.f32 %v590, %v2532
        %v2534 = vpop.f32.mrf.mxu0
        %v2535 = vadd.f32 %v586, %v2534
        %v2536 = vpop.f32.mrf.mxu0
        %v2537 = vadd.f32 %v590, %v2536
        %2538 = vmatprep.mubr.bf16.mxu0 0
        %2539 = vmatmul.mubr.bf16.gmra.mxu0 %v856
        %v2540 = vpop.f32.mrf.mxu0
        %v2541 = vadd.f32 %v586, %v2540
        %v2542 = vpop.f32.mrf.mxu0
        %v2543 = vadd.f32 %v590, %v2542
        %v2544 = vpop.f32.mrf.mxu0
        %v2545 = vadd.f32 %v586, %v2544
        %v2546 = vpop.f32.mrf.mxu0
        %v2547 = vadd.f32 %v590, %v2546
        %2548 = vmatprep.mubr.bf16.mxu0 0
        %2549 = vmatmul.mubr.bf16.gmra.mxu0 %v859
        %v2550 = vpop.f32.mrf.mxu0
        %v2551 = vadd.f32 %v586, %v2550
        %v2552 = vpop.f32.mrf.mxu0
        %v2553 = vadd.f32 %v590, %v2552
        %v2554 = vpop.f32.mrf.mxu0
        %v2555 = vadd.f32 %v586, %v2554
        %v2556 = vpop.f32.mrf.mxu0
        %v2557 = vadd.f32 %v590, %v2556
        %2558 = vmatprep.mubr.bf16.mxu0 0
        %2559 = vmatmul.mubr.bf16.gmra.mxu0 %v862
        %v2560 = vpop.f32.mrf.mxu0
        %v2561 = vadd.f32 %v586, %v2560
        %v2562 = vpop.f32.mrf.mxu0
        %v2563 = vadd.f32 %v590, %v2562
        %v2564 = vpop.f32.mrf.mxu0
        %v2565 = vadd.f32 %v586, %v2564
        %v2566 = vpop.f32.mrf.mxu0
        %v2567 = vadd.f32 %v590, %v2566
        %2568 = vmatprep.mubr.bf16.mxu0 0
        %2569 = vmatmul.mubr.bf16.gmra.mxu0 %v865
        %v2570 = vpop.f32.mrf.mxu0
        %v2571 = vadd.f32 %v586, %v2570
        %v2572 = vpop.f32.mrf.mxu0
        %v2573 = vadd.f32 %v590, %v2572
        %v2574 = vpop.f32.mrf.mxu0
        %v2575 = vadd.f32 %v586, %v2574
        %v2576 = vpop.f32.mrf.mxu0
        %v2577 = vadd.f32 %v590, %v2576
        %2578 = vmatprep.mubr.bf16.mxu0 0
        %2579 = vmatmul.mubr.bf16.gmra.mxu0 %v868
        %v2580 = vpop.f32.mrf.mxu0
        %v2581 = vadd.f32 %v586, %v2580
        %v2582 = vpop.f32.mrf.mxu0
        %v2583 = vadd.f32 %v590, %v2582
        %v2584 = vpop.f32.mrf.mxu0
        %v2585 = vadd.f32 %v586, %v2584
        %v2586 = vpop.f32.mrf.mxu0
        %v2587 = vadd.f32 %v590, %v2586
        %2588 = vmatprep.mubr.bf16.mxu0 0
        %2589 = vmatmul.mubr.bf16.gmra.mxu0 %v871
        %v2590 = vpop.f32.mrf.mxu0
        %v2591 = vadd.f32 %v586, %v2590
        %v2592 = vpop.f32.mrf.mxu0
        %v2593 = vadd.f32 %v590, %v2592
        %v2594 = vpop.f32.mrf.mxu0
        %v2595 = vadd.f32 %v586, %v2594
        %v2596 = vpop.f32.mrf.mxu0
        %v2597 = vadd.f32 %v590, %v2596
        %2598 = vmatprep.mubr.bf16.mxu0 0
        %2599 = vmatmul.mubr.bf16.gmra.mxu0 %v874
        %v2600 = vpop.f32.mrf.mxu0
        %v2601 = vadd.f32 %v586, %v2600
        %v2602 = vpop.f32.mrf.mxu0
        %v2603 = vadd.f32 %v590, %v2602
        %v2604 = vpop.f32.mrf.mxu0
        %v2605 = vadd.f32 %v586, %v2604
        %v2606 = vpop.f32.mrf.mxu0
        %v2607 = vadd.f32 %v590, %v2606
        %2608 = vmatprep.mubr.bf16.mxu0 0
        %2609 = vmatmul.mubr.bf16.gmra.mxu0 %v877
        %v2610 = vpop.f32.mrf.mxu0
        %v2611 = vadd.f32 %v586, %v2610
        %v2612 = vpop.f32.mrf.mxu0
        %v2613 = vadd.f32 %v590, %v2612
        %v2614 = vpop.f32.mrf.mxu0
        %v2615 = vadd.f32 %v586, %v2614
        %v2616 = vpop.f32.mrf.mxu0
        %v2617 = vadd.f32 %v590, %v2616
        %2618 = vmatprep.mubr.bf16.mxu0 0
        %2619 = vmatmul.mubr.bf16.gmra.mxu0 %v880
        %v2620 = vpop.f32.mrf.mxu0
        %v2621 = vadd.f32 %v586, %v2620
        %v2622 = vpop.f32.mrf.mxu0
        %v2623 = vadd.f32 %v590, %v2622
        %v2624 = vpop.f32.mrf.mxu0
        %v2625 = vadd.f32 %v586, %v2624
        %v2626 = vpop.f32.mrf.mxu0
        %v2627 = vadd.f32 %v590, %v2626
        %2628 = vmatprep.mubr.bf16.mxu0 0
        %2629 = vmatmul.mubr.bf16.gmra.mxu0 %v883
        %v2630 = vpop.f32.mrf.mxu0
        %v2631 = vadd.f32 %v586, %v2630
        %v2632 = vpop.f32.mrf.mxu0
        %v2633 = vadd.f32 %v590, %v2632
        %v2634 = vpop.f32.mrf.mxu0
        %v2635 = vadd.f32 %v586, %v2634
        %v2636 = vpop.f32.mrf.mxu0
        %v2637 = vadd.f32 %v590, %v2636
        %2638 = vmatprep.mubr.bf16.mxu0 0
        %2639 = vmatmul.mubr.bf16.gmra.mxu0 %v886
        %v2640 = vpop.f32.mrf.mxu0
        %v2641 = vadd.f32 %v586, %v2640
        %v2642 = vpop.f32.mrf.mxu0
        %v2643 = vadd.f32 %v590, %v2642
        %v2644 = vpop.f32.mrf.mxu0
        %v2645 = vadd.f32 %v586, %v2644
        %v2646 = vpop.f32.mrf.mxu0
        %v2647 = vadd.f32 %v590, %v2646
        %2648 = vmatprep.mubr.bf16.mxu0 0
        %2649 = vmatmul.mubr.bf16.gmra.mxu0 %v889
        %v2650 = vpop.f32.mrf.mxu0
        %v2651 = vadd.f32 %v586, %v2650
        %v2652 = vpop.f32.mrf.mxu0
        %v2653 = vadd.f32 %v590, %v2652
        %v2654 = vpop.f32.mrf.mxu0
        %v2655 = vadd.f32 %v586, %v2654
        %v2656 = vpop.f32.mrf.mxu0
        %v2657 = vadd.f32 %v590, %v2656
        %2658 = vmatprep.mubr.bf16.mxu0 0
        %2659 = vmatmul.mubr.bf16.gmra.mxu0 %v892
        %v2660 = vpop.f32.mrf.mxu0
        %v2661 = vadd.f32 %v586, %v2660
        %v2662 = vpop.f32.mrf.mxu0
        %v2663 = vadd.f32 %v590, %v2662
        %v2664 = vpop.f32.mrf.mxu0
        %v2665 = vadd.f32 %v586, %v2664
        %v2666 = vpop.f32.mrf.mxu0
        %v2667 = vadd.f32 %v590, %v2666
        %2668 = vmatprep.mubr.bf16.mxu0 0
        %2669 = vmatmul.mubr.bf16.gmra.mxu0 %v895
        %v2670 = vpop.f32.mrf.mxu0
        %v2671 = vadd.f32 %v586, %v2670
        %v2672 = vpop.f32.mrf.mxu0
        %v2673 = vadd.f32 %v590, %v2672
        %v2674 = vpop.f32.mrf.mxu0
        %v2675 = vadd.f32 %v586, %v2674
        %v2676 = vpop.f32.mrf.mxu0
        %v2677 = vadd.f32 %v590, %v2676
        %2678 = vmatprep.mubr.bf16.mxu0 0
        %2679 = vmatmul.mubr.bf16.gmra.mxu0 %v898
        %v2680 = vpop.f32.mrf.mxu0
        %v2681 = vadd.f32 %v586, %v2680
        %v2682 = vpop.f32.mrf.mxu0
        %v2683 = vadd.f32 %v590, %v2682
        %v2684 = vpop.f32.mrf.mxu0
        %v2685 = vadd.f32 %v586, %v2684
        %v2686 = vpop.f32.mrf.mxu0
        %v2687 = vadd.f32 %v590, %v2686
        %2688 = vmatprep.mubr.bf16.mxu0 0
        %2689 = vmatmul.mubr.bf16.gmra.mxu0 %v901
        %v2690 = vpop.f32.mrf.mxu0
        %v2691 = vadd.f32 %v586, %v2690
        %v2692 = vpop.f32.mrf.mxu0
        %v2693 = vadd.f32 %v590, %v2692
        %v2694 = vpop.f32.mrf.mxu0
        %v2695 = vadd.f32 %v586, %v2694
        %v2696 = vpop.f32.mrf.mxu0
        %v2697 = vadd.f32 %v590, %v2696
        %2698 = vdwg.mxu0
        %v2699 = vsub.f32 0.0, %v969
        %v2700 = vsub.f32 0.0, %v971
        %v2701 = vsub.f32 0.0, %v1322
        %v2702 = vsub.f32 0.0, %v1324
        %v2703 = vsub.f32 0.0, %v1675
        %v2704 = vsub.f32 0.0, %v1677
        %v2705 = vsub.f32 0.0, %v2028
        %v2706 = vsub.f32 0.0, %v2030
        %v2707 = vsub.f32 0.0, %v2381
        %v2708 = vsub.f32 0.0, %v2383
        %v2709 = vsub.f32 0.0, %v973
        %v2710 = vsub.f32 0.0, %v975
        %v2711 = vsub.f32 0.0, %v1326
        %v2712 = vsub.f32 0.0, %v1328
        %v2713 = vsub.f32 0.0, %v1679
        %v2714 = vsub.f32 0.0, %v1681
        %v2715 = vsub.f32 0.0, %v2032
        %v2716 = vsub.f32 0.0, %v2034
        %v2717 = vsub.f32 0.0, %v2385
        %v2718 = vsub.f32 0.0, %v2387
        %v2719 = vsub.f32 0.0, %v979
        %v2720 = vsub.f32 0.0, %v981
        %v2721 = vsub.f32 0.0, %v1332
        %v2722 = vsub.f32 0.0, %v1334
        %v2723 = vsub.f32 0.0, %v1685
        %v2724 = vsub.f32 0.0, %v1687
        %v2725 = vsub.f32 0.0, %v2038
        %v2726 = vsub.f32 0.0, %v2040
        %v2727 = vsub.f32 0.0, %v2391
        %v2728 = vsub.f32 0.0, %v2393
        %v2729 = vsub.f32 0.0, %v983
        %v2730 = vsub.f32 0.0, %v985
        %v2731 = vsub.f32 0.0, %v1336
        %v2732 = vsub.f32 0.0, %v1338
        %v2733 = vsub.f32 0.0, %v1689
        %v2734 = vsub.f32 0.0, %v1691
        %v2735 = vsub.f32 0.0, %v2042
        %v2736 = vsub.f32 0.0, %v2044
        %v2737 = vsub.f32 0.0, %v2395
        %v2738 = vsub.f32 0.0, %v2397
        %v2739 = vsub.f32 0.0, %v989
        %v2740 = vsub.f32 0.0, %v991
        %v2741 = vsub.f32 0.0, %v1342
        %v2742 = vsub.f32 0.0, %v1344
        %v2743 = vsub.f32 0.0, %v1695
        %v2744 = vsub.f32 0.0, %v1697
        %v2745 = vsub.f32 0.0, %v2048
        %v2746 = vsub.f32 0.0, %v2050
        %v2747 = vsub.f32 0.0, %v2401
        %v2748 = vsub.f32 0.0, %v2403
        %v2749 = vsub.f32 0.0, %v993
        %v2750 = vsub.f32 0.0, %v995
        %v2751 = vsub.f32 0.0, %v1346
        %v2752 = vsub.f32 0.0, %v1348
        %v2753 = vsub.f32 0.0, %v1699
        %v2754 = vsub.f32 0.0, %v1701
        %v2755 = vsub.f32 0.0, %v2052
        %v2756 = vsub.f32 0.0, %v2054
        %v2757 = vsub.f32 0.0, %v2405
        %v2758 = vsub.f32 0.0, %v2407
        %v2759 = vsub.f32 0.0, %v999
        %v2760 = vsub.f32 0.0, %v1001
        %v2761 = vsub.f32 0.0, %v1352
        %v2762 = vsub.f32 0.0, %v1354
        %v2763 = vsub.f32 0.0, %v1705
        %v2764 = vsub.f32 0.0, %v1707
        %v2765 = vsub.f32 0.0, %v2058
        %v2766 = vsub.f32 0.0, %v2060
        %v2767 = vsub.f32 0.0, %v2411
        %v2768 = vsub.f32 0.0, %v2413
        %v2769 = vsub.f32 0.0, %v1003
        %v2770 = vsub.f32 0.0, %v1005
        %v2771 = vsub.f32 0.0, %v1356
        %v2772 = vsub.f32 0.0, %v1358
        %v2773 = vsub.f32 0.0, %v1709
        %v2774 = vsub.f32 0.0, %v1711
        %v2775 = vsub.f32 0.0, %v2062
        %v2776 = vsub.f32 0.0, %v2064
        %v2777 = vsub.f32 0.0, %v2415
        %v2778 = vsub.f32 0.0, %v2417
        %v2779 = vsub.f32 0.0, %v1009
        %v2780 = vsub.f32 0.0, %v1011
        %v2781 = vsub.f32 0.0, %v1362
        %v2782 = vsub.f32 0.0, %v1364
        %v2783 = vsub.f32 0.0, %v1715
        %v2784 = vsub.f32 0.0, %v1717
        %v2785 = vsub.f32 0.0, %v2068
        %v2786 = vsub.f32 0.0, %v2070
        %v2787 = vsub.f32 0.0, %v2421
        %v2788 = vsub.f32 0.0, %v2423
        %v2789 = vsub.f32 0.0, %v1013
        %v2790 = vsub.f32 0.0, %v1015
        %v2791 = vsub.f32 0.0, %v1366
        %v2792 = vsub.f32 0.0, %v1368
        %v2793 = vsub.f32 0.0, %v1719
        %v2794 = vsub.f32 0.0, %v1721
        %v2795 = vsub.f32 0.0, %v2072
        %v2796 = vsub.f32 0.0, %v2074
        %v2797 = vsub.f32 0.0, %v2425
        %v2798 = vsub.f32 0.0, %v2427
        %v2799 = vsub.f32 0.0, %v1019
        %v2800 = vsub.f32 0.0, %v1021
        %v2801 = vsub.f32 0.0, %v1372
        %v2802 = vsub.f32 0.0, %v1374
        %v2803 = vsub.f32 0.0, %v1725
        %v2804 = vsub.f32 0.0, %v1727
        %v2805 = vsub.f32 0.0, %v2078
        %v2806 = vsub.f32 0.0, %v2080
        %v2807 = vsub.f32 0.0, %v2431
        %v2808 = vsub.f32 0.0, %v2433
        %v2809 = vsub.f32 0.0, %v1023
        %v2810 = vsub.f32 0.0, %v1025
        %v2811 = vsub.f32 0.0, %v1376
        %v2812 = vsub.f32 0.0, %v1378
        %v2813 = vsub.f32 0.0, %v1729
        %v2814 = vsub.f32 0.0, %v1731
        %v2815 = vsub.f32 0.0, %v2082
        %v2816 = vsub.f32 0.0, %v2084
        %v2817 = vsub.f32 0.0, %v2435
        %v2818 = vsub.f32 0.0, %v2437
        %v2819 = vsub.f32 0.0, %v1029
        %v2820 = vsub.f32 0.0, %v1031
        %v2821 = vsub.f32 0.0, %v1382
        %v2822 = vsub.f32 0.0, %v1384
        %v2823 = vsub.f32 0.0, %v1735
        %v2824 = vsub.f32 0.0, %v1737
        %v2825 = vsub.f32 0.0, %v2088
        %v2826 = vsub.f32 0.0, %v2090
        %v2827 = vsub.f32 0.0, %v2441
        %v2828 = vsub.f32 0.0, %v2443
        %v2829 = vsub.f32 0.0, %v1033
        %v2830 = vsub.f32 0.0, %v1035
        %v2831 = vsub.f32 0.0, %v1386
        %v2832 = vsub.f32 0.0, %v1388
        %v2833 = vsub.f32 0.0, %v1739
        %v2834 = vsub.f32 0.0, %v1741
        %v2835 = vsub.f32 0.0, %v2092
        %v2836 = vsub.f32 0.0, %v2094
        %v2837 = vsub.f32 0.0, %v2445
        %v2838 = vsub.f32 0.0, %v2447
        %v2839 = vsub.f32 0.0, %v1039
        %v2840 = vsub.f32 0.0, %v1041
        %v2841 = vsub.f32 0.0, %v1392
        %v2842 = vsub.f32 0.0, %v1394
        %v2843 = vsub.f32 0.0, %v1745
        %v2844 = vsub.f32 0.0, %v1747
        %v2845 = vsub.f32 0.0, %v2098
        %v2846 = vsub.f32 0.0, %v2100
        %v2847 = vsub.f32 0.0, %v2451
        %v2848 = vsub.f32 0.0, %v2453
        %v2849 = vsub.f32 0.0, %v1043
        %v2850 = vsub.f32 0.0, %v1045
        %v2851 = vsub.f32 0.0, %v1396
        %v2852 = vsub.f32 0.0, %v1398
        %v2853 = vsub.f32 0.0, %v1749
        %v2854 = vsub.f32 0.0, %v1751
        %v2855 = vsub.f32 0.0, %v2102
        %v2856 = vsub.f32 0.0, %v2104
        %v2857 = vsub.f32 0.0, %v2455
        %v2858 = vsub.f32 0.0, %v2457
        %v2859 = vsub.f32 0.0, %v1049
        %v2860 = vsub.f32 0.0, %v1051
        %v2861 = vsub.f32 0.0, %v1402
        %v2862 = vsub.f32 0.0, %v1404
        %v2863 = vsub.f32 0.0, %v1755
        %v2864 = vsub.f32 0.0, %v1757
        %v2865 = vsub.f32 0.0, %v2108
        %v2866 = vsub.f32 0.0, %v2110
        %v2867 = vsub.f32 0.0, %v2461
        %v2868 = vsub.f32 0.0, %v2463
        %v2869 = vsub.f32 0.0, %v1053
        %v2870 = vsub.f32 0.0, %v1055
        %v2871 = vsub.f32 0.0, %v1406
        %v2872 = vsub.f32 0.0, %v1408
        %v2873 = vsub.f32 0.0, %v1759
        %v2874 = vsub.f32 0.0, %v1761
        %v2875 = vsub.f32 0.0, %v2112
        %v2876 = vsub.f32 0.0, %v2114
        %v2877 = vsub.f32 0.0, %v2465
        %v2878 = vsub.f32 0.0, %v2467
        %v2879 = vsub.f32 0.0, %v1059
        %v2880 = vsub.f32 0.0, %v1061
        %v2881 = vsub.f32 0.0, %v1412
        %v2882 = vsub.f32 0.0, %v1414
        %v2883 = vsub.f32 0.0, %v1765
        %v2884 = vsub.f32 0.0, %v1767
        %v2885 = vsub.f32 0.0, %v2118
        %v2886 = vsub.f32 0.0, %v2120
        %v2887 = vsub.f32 0.0, %v2471
        %v2888 = vsub.f32 0.0, %v2473
        %v2889 = vsub.f32 0.0, %v1063
        %v2890 = vsub.f32 0.0, %v1065
        %v2891 = vsub.f32 0.0, %v1416
        %v2892 = vsub.f32 0.0, %v1418
        %v2893 = vsub.f32 0.0, %v1769
        %v2894 = vsub.f32 0.0, %v1771
        %v2895 = vsub.f32 0.0, %v2122
        %v2896 = vsub.f32 0.0, %v2124
        %v2897 = vsub.f32 0.0, %v2475
        %v2898 = vsub.f32 0.0, %v2477
        %v2899 = vsub.f32 0.0, %v1069
        %v2900 = vsub.f32 0.0, %v1071
        %v2901 = vsub.f32 0.0, %v1422
        %v2902 = vsub.f32 0.0, %v1424
        %v2903 = vsub.f32 0.0, %v1775
        %v2904 = vsub.f32 0.0, %v1777
        %v2905 = vsub.f32 0.0, %v2128
        %v2906 = vsub.f32 0.0, %v2130
        %v2907 = vsub.f32 0.0, %v2481
        %v2908 = vsub.f32 0.0, %v2483
        %v2909 = vsub.f32 0.0, %v1073
        %v2910 = vsub.f32 0.0, %v1075
        %v2911 = vsub.f32 0.0, %v1426
        %v2912 = vsub.f32 0.0, %v1428
        %v2913 = vsub.f32 0.0, %v1779
        %v2914 = vsub.f32 0.0, %v1781
        %v2915 = vsub.f32 0.0, %v2132
        %v2916 = vsub.f32 0.0, %v2134
        %v2917 = vsub.f32 0.0, %v2485
        %v2918 = vsub.f32 0.0, %v2487
        %v2919 = vsub.f32 0.0, %v1079
        %v2920 = vsub.f32 0.0, %v1081
        %v2921 = vsub.f32 0.0, %v1432
        %v2922 = vsub.f32 0.0, %v1434
        %v2923 = vsub.f32 0.0, %v1785
        %v2924 = vsub.f32 0.0, %v1787
        %v2925 = vsub.f32 0.0, %v2138
        %v2926 = vsub.f32 0.0, %v2140
        %v2927 = vsub.f32 0.0, %v2491
        %v2928 = vsub.f32 0.0, %v2493
        %v2929 = vsub.f32 0.0, %v1083
        %v2930 = vsub.f32 0.0, %v1085
        %v2931 = vsub.f32 0.0, %v1436
        %v2932 = vsub.f32 0.0, %v1438
        %v2933 = vsub.f32 0.0, %v1789
        %v2934 = vsub.f32 0.0, %v1791
        %v2935 = vsub.f32 0.0, %v2142
        %v2936 = vsub.f32 0.0, %v2144
        %v2937 = vsub.f32 0.0, %v2495
        %v2938 = vsub.f32 0.0, %v2497
        %v2939 = vsub.f32 0.0, %v1089
        %v2940 = vsub.f32 0.0, %v1091
        %v2941 = vsub.f32 0.0, %v1442
        %v2942 = vsub.f32 0.0, %v1444
        %v2943 = vsub.f32 0.0, %v1795
        %v2944 = vsub.f32 0.0, %v1797
        %v2945 = vsub.f32 0.0, %v2148
        %v2946 = vsub.f32 0.0, %v2150
        %v2947 = vsub.f32 0.0, %v2501
        %v2948 = vsub.f32 0.0, %v2503
        %v2949 = vsub.f32 0.0, %v1093
        %v2950 = vsub.f32 0.0, %v1095
        %v2951 = vsub.f32 0.0, %v1446
        %v2952 = vsub.f32 0.0, %v1448
        %v2953 = vsub.f32 0.0, %v1799
        %v2954 = vsub.f32 0.0, %v1801
        %v2955 = vsub.f32 0.0, %v2152
        %v2956 = vsub.f32 0.0, %v2154
        %v2957 = vsub.f32 0.0, %v2505
        %v2958 = vsub.f32 0.0, %v2507
        %v2959 = vsub.f32 0.0, %v1099
        %v2960 = vsub.f32 0.0, %v1101
        %v2961 = vsub.f32 0.0, %v1452
        %v2962 = vsub.f32 0.0, %v1454
        %v2963 = vsub.f32 0.0, %v1805
        %v2964 = vsub.f32 0.0, %v1807
        %v2965 = vsub.f32 0.0, %v2158
        %v2966 = vsub.f32 0.0, %v2160
        %v2967 = vsub.f32 0.0, %v2511
        %v2968 = vsub.f32 0.0, %v2513
        %v2969 = vsub.f32 0.0, %v1103
        %v2970 = vsub.f32 0.0, %v1105
        %v2971 = vsub.f32 0.0, %v1456
        %v2972 = vsub.f32 0.0, %v1458
        %v2973 = vsub.f32 0.0, %v1809
        %v2974 = vsub.f32 0.0, %v1811
        %v2975 = vsub.f32 0.0, %v2162
        %v2976 = vsub.f32 0.0, %v2164
        %v2977 = vsub.f32 0.0, %v2515
        %v2978 = vsub.f32 0.0, %v2517
        %v2979 = vsub.f32 0.0, %v1109
        %v2980 = vsub.f32 0.0, %v1111
        %v2981 = vsub.f32 0.0, %v1462
        %v2982 = vsub.f32 0.0, %v1464
        %v2983 = vsub.f32 0.0, %v1815
        %v2984 = vsub.f32 0.0, %v1817
        %v2985 = vsub.f32 0.0, %v2168
        %v2986 = vsub.f32 0.0, %v2170
        %v2987 = vsub.f32 0.0, %v2521
        %v2988 = vsub.f32 0.0, %v2523
        %v2989 = vsub.f32 0.0, %v1113
        %v2990 = vsub.f32 0.0, %v1115
        %v2991 = vsub.f32 0.0, %v1466
        %v2992 = vsub.f32 0.0, %v1468
        %v2993 = vsub.f32 0.0, %v1819
        %v2994 = vsub.f32 0.0, %v1821
        %v2995 = vsub.f32 0.0, %v2172
        %v2996 = vsub.f32 0.0, %v2174
        %v2997 = vsub.f32 0.0, %v2525
        %v2998 = vsub.f32 0.0, %v2527
        %v2999 = vsub.f32 0.0, %v1119
        %v3000 = vsub.f32 0.0, %v1121
        %v3001 = vsub.f32 0.0, %v1472
        %v3002 = vsub.f32 0.0, %v1474
        %v3003 = vsub.f32 0.0, %v1825
        %v3004 = vsub.f32 0.0, %v1827
        %v3005 = vsub.f32 0.0, %v2178
        %v3006 = vsub.f32 0.0, %v2180
        %v3007 = vsub.f32 0.0, %v2531
        %v3008 = vsub.f32 0.0, %v2533
        %v3009 = vsub.f32 0.0, %v1123
        %v3010 = vsub.f32 0.0, %v1125
        %v3011 = vsub.f32 0.0, %v1476
        %v3012 = vsub.f32 0.0, %v1478
        %v3013 = vsub.f32 0.0, %v1829
        %v3014 = vsub.f32 0.0, %v1831
        %v3015 = vsub.f32 0.0, %v2182
        %v3016 = vsub.f32 0.0, %v2184
        %v3017 = vsub.f32 0.0, %v2535
        %v3018 = vsub.f32 0.0, %v2537
        %v3019 = vsub.f32 0.0, %v1129
        %v3020 = vsub.f32 0.0, %v1131
        %v3021 = vsub.f32 0.0, %v1482
        %v3022 = vsub.f32 0.0, %v1484
        %v3023 = vsub.f32 0.0, %v1835
        %v3024 = vsub.f32 0.0, %v1837
        %v3025 = vsub.f32 0.0, %v2188
        %v3026 = vsub.f32 0.0, %v2190
        %v3027 = vsub.f32 0.0, %v2541
        %v3028 = vsub.f32 0.0, %v2543
        %v3029 = vsub.f32 0.0, %v1133
        %v3030 = vsub.f32 0.0, %v1135
        %v3031 = vsub.f32 0.0, %v1486
        %v3032 = vsub.f32 0.0, %v1488
        %v3033 = vsub.f32 0.0, %v1839
        %v3034 = vsub.f32 0.0, %v1841
        %v3035 = vsub.f32 0.0, %v2192
        %v3036 = vsub.f32 0.0, %v2194
        %v3037 = vsub.f32 0.0, %v2545
        %v3038 = vsub.f32 0.0, %v2547
        %v3039 = vsub.f32 0.0, %v1139
        %v3040 = vsub.f32 0.0, %v1141
        %v3041 = vsub.f32 0.0, %v1492
        %v3042 = vsub.f32 0.0, %v1494
        %v3043 = vsub.f32 0.0, %v1845
        %v3044 = vsub.f32 0.0, %v1847
        %v3045 = vsub.f32 0.0, %v2198
        %v3046 = vsub.f32 0.0, %v2200
        %v3047 = vsub.f32 0.0, %v2551
        %v3048 = vsub.f32 0.0, %v2553
        %v3049 = vsub.f32 0.0, %v1143
        %v3050 = vsub.f32 0.0, %v1145
        %v3051 = vsub.f32 0.0, %v1496
        %v3052 = vsub.f32 0.0, %v1498
        %v3053 = vsub.f32 0.0, %v1849
        %v3054 = vsub.f32 0.0, %v1851
        %v3055 = vsub.f32 0.0, %v2202
        %v3056 = vsub.f32 0.0, %v2204
        %v3057 = vsub.f32 0.0, %v2555
        %v3058 = vsub.f32 0.0, %v2557
        %v3059 = vsub.f32 0.0, %v1149
        %v3060 = vsub.f32 0.0, %v1151
        %v3061 = vsub.f32 0.0, %v1502
        %v3062 = vsub.f32 0.0, %v1504
        %v3063 = vsub.f32 0.0, %v1855
        %v3064 = vsub.f32 0.0, %v1857
        %v3065 = vsub.f32 0.0, %v2208
        %v3066 = vsub.f32 0.0, %v2210
        %v3067 = vsub.f32 0.0, %v2561
        %v3068 = vsub.f32 0.0, %v2563
        %v3069 = vsub.f32 0.0, %v1153
        %v3070 = vsub.f32 0.0, %v1155
        %v3071 = vsub.f32 0.0, %v1506
        %v3072 = vsub.f32 0.0, %v1508
        %v3073 = vsub.f32 0.0, %v1859
        %v3074 = vsub.f32 0.0, %v1861
        %v3075 = vsub.f32 0.0, %v2212
        %v3076 = vsub.f32 0.0, %v2214
        %v3077 = vsub.f32 0.0, %v2565
        %v3078 = vsub.f32 0.0, %v2567
        %v3079 = vsub.f32 0.0, %v1159
        %v3080 = vsub.f32 0.0, %v1161
        %v3081 = vsub.f32 0.0, %v1512
        %v3082 = vsub.f32 0.0, %v1514
        %v3083 = vsub.f32 0.0, %v1865
        %v3084 = vsub.f32 0.0, %v1867
        %v3085 = vsub.f32 0.0, %v2218
        %v3086 = vsub.f32 0.0, %v2220
        %v3087 = vsub.f32 0.0, %v2571
        %v3088 = vsub.f32 0.0, %v2573
        %v3089 = vsub.f32 0.0, %v1163
        %v3090 = vsub.f32 0.0, %v1165
        %v3091 = vsub.f32 0.0, %v1516
        %v3092 = vsub.f32 0.0, %v1518
        %v3093 = vsub.f32 0.0, %v1869
        %v3094 = vsub.f32 0.0, %v1871
        %v3095 = vsub.f32 0.0, %v2222
        %v3096 = vsub.f32 0.0, %v2224
        %v3097 = vsub.f32 0.0, %v2575
        %v3098 = vsub.f32 0.0, %v2577
        %v3099 = vsub.f32 0.0, %v1169
        %v3100 = vsub.f32 0.0, %v1171
        %v3101 = vsub.f32 0.0, %v1522
        %v3102 = vsub.f32 0.0, %v1524
        %v3103 = vsub.f32 0.0, %v1875
        %v3104 = vsub.f32 0.0, %v1877
        %v3105 = vsub.f32 0.0, %v2228
        %v3106 = vsub.f32 0.0, %v2230
        %v3107 = vsub.f32 0.0, %v2581
        %v3108 = vsub.f32 0.0, %v2583
        %v3109 = vsub.f32 0.0, %v1173
        %v3110 = vsub.f32 0.0, %v1175
        %v3111 = vsub.f32 0.0, %v1526
        %v3112 = vsub.f32 0.0, %v1528
        %v3113 = vsub.f32 0.0, %v1879
        %v3114 = vsub.f32 0.0, %v1881
        %v3115 = vsub.f32 0.0, %v2232
        %v3116 = vsub.f32 0.0, %v2234
        %v3117 = vsub.f32 0.0, %v2585
        %v3118 = vsub.f32 0.0, %v2587
        %v3119 = vsub.f32 0.0, %v1179
        %v3120 = vsub.f32 0.0, %v1181
        %v3121 = vsub.f32 0.0, %v1532
        %v3122 = vsub.f32 0.0, %v1534
        %v3123 = vsub.f32 0.0, %v1885
        %v3124 = vsub.f32 0.0, %v1887
        %v3125 = vsub.f32 0.0, %v2238
        %v3126 = vsub.f32 0.0, %v2240
        %v3127 = vsub.f32 0.0, %v2591
        %v3128 = vsub.f32 0.0, %v2593
        %v3129 = vsub.f32 0.0, %v1183
        %v3130 = vsub.f32 0.0, %v1185
        %v3131 = vsub.f32 0.0, %v1536
        %v3132 = vsub.f32 0.0, %v1538
        %v3133 = vsub.f32 0.0, %v1889
        %v3134 = vsub.f32 0.0, %v1891
        %v3135 = vsub.f32 0.0, %v2242
        %v3136 = vsub.f32 0.0, %v2244
        %v3137 = vsub.f32 0.0, %v2595
        %v3138 = vsub.f32 0.0, %v2597
        %v3139 = vsub.f32 0.0, %v1189
        %v3140 = vsub.f32 0.0, %v1191
        %v3141 = vsub.f32 0.0, %v1542
        %v3142 = vsub.f32 0.0, %v1544
        %v3143 = vsub.f32 0.0, %v1895
        %v3144 = vsub.f32 0.0, %v1897
        %v3145 = vsub.f32 0.0, %v2248
        %v3146 = vsub.f32 0.0, %v2250
        %v3147 = vsub.f32 0.0, %v2601
        %v3148 = vsub.f32 0.0, %v2603
        %v3149 = vsub.f32 0.0, %v1193
        %v3150 = vsub.f32 0.0, %v1195
        %v3151 = vsub.f32 0.0, %v1546
        %v3152 = vsub.f32 0.0, %v1548
        %v3153 = vsub.f32 0.0, %v1899
        %v3154 = vsub.f32 0.0, %v1901
        %v3155 = vsub.f32 0.0, %v2252
        %v3156 = vsub.f32 0.0, %v2254
        %v3157 = vsub.f32 0.0, %v2605
        %v3158 = vsub.f32 0.0, %v2607
        %v3159 = vsub.f32 0.0, %v1199
        %v3160 = vsub.f32 0.0, %v1201
        %v3161 = vsub.f32 0.0, %v1552
        %v3162 = vsub.f32 0.0, %v1554
        %v3163 = vsub.f32 0.0, %v1905
        %v3164 = vsub.f32 0.0, %v1907
        %v3165 = vsub.f32 0.0, %v2258
        %v3166 = vsub.f32 0.0, %v2260
        %v3167 = vsub.f32 0.0, %v2611
        %v3168 = vsub.f32 0.0, %v2613
        %v3169 = vsub.f32 0.0, %v1203
        %v3170 = vsub.f32 0.0, %v1205
        %v3171 = vsub.f32 0.0, %v1556
        %v3172 = vsub.f32 0.0, %v1558
        %v3173 = vsub.f32 0.0, %v1909
        %v3174 = vsub.f32 0.0, %v1911
        %v3175 = vsub.f32 0.0, %v2262
        %v3176 = vsub.f32 0.0, %v2264
        %v3177 = vsub.f32 0.0, %v2615
        %v3178 = vsub.f32 0.0, %v2617
        %v3179 = vsub.f32 0.0, %v1209
        %v3180 = vsub.f32 0.0, %v1211
        %v3181 = vsub.f32 0.0, %v1562
        %v3182 = vsub.f32 0.0, %v1564
        %v3183 = vsub.f32 0.0, %v1915
        %v3184 = vsub.f32 0.0, %v1917
        %v3185 = vsub.f32 0.0, %v2268
        %v3186 = vsub.f32 0.0, %v2270
        %v3187 = vsub.f32 0.0, %v2621
        %v3188 = vsub.f32 0.0, %v2623
        %v3189 = vsub.f32 0.0, %v1213
        %v3190 = vsub.f32 0.0, %v1215
        %v3191 = vsub.f32 0.0, %v1566
        %v3192 = vsub.f32 0.0, %v1568
        %v3193 = vsub.f32 0.0, %v1919
        %v3194 = vsub.f32 0.0, %v1921
        %v3195 = vsub.f32 0.0, %v2272
        %v3196 = vsub.f32 0.0, %v2274
        %v3197 = vsub.f32 0.0, %v2625
        %v3198 = vsub.f32 0.0, %v2627
        %v3199 = vsub.f32 0.0, %v1219
        %v3200 = vsub.f32 0.0, %v1221
        %v3201 = vsub.f32 0.0, %v1572
        %v3202 = vsub.f32 0.0, %v1574
        %v3203 = vsub.f32 0.0, %v1925
        %v3204 = vsub.f32 0.0, %v1927
        %v3205 = vsub.f32 0.0, %v2278
        %v3206 = vsub.f32 0.0, %v2280
        %v3207 = vsub.f32 0.0, %v2631
        %v3208 = vsub.f32 0.0, %v2633
        %v3209 = vsub.f32 0.0, %v1223
        %v3210 = vsub.f32 0.0, %v1225
        %v3211 = vsub.f32 0.0, %v1576
        %v3212 = vsub.f32 0.0, %v1578
        %v3213 = vsub.f32 0.0, %v1929
        %v3214 = vsub.f32 0.0, %v1931
        %v3215 = vsub.f32 0.0, %v2282
        %v3216 = vsub.f32 0.0, %v2284
        %v3217 = vsub.f32 0.0, %v2635
        %v3218 = vsub.f32 0.0, %v2637
        %v3219 = vsub.f32 0.0, %v1229
        %v3220 = vsub.f32 0.0, %v1231
        %v3221 = vsub.f32 0.0, %v1582
        %v3222 = vsub.f32 0.0, %v1584
        %v3223 = vsub.f32 0.0, %v1935
        %v3224 = vsub.f32 0.0, %v1937
        %v3225 = vsub.f32 0.0, %v2288
        %v3226 = vsub.f32 0.0, %v2290
        %v3227 = vsub.f32 0.0, %v2641
        %v3228 = vsub.f32 0.0, %v2643
        %v3229 = vsub.f32 0.0, %v1233
        %v3230 = vsub.f32 0.0, %v1235
        %v3231 = vsub.f32 0.0, %v1586
        %v3232 = vsub.f32 0.0, %v1588
        %v3233 = vsub.f32 0.0, %v1939
        %v3234 = vsub.f32 0.0, %v1941
        %v3235 = vsub.f32 0.0, %v2292
        %v3236 = vsub.f32 0.0, %v2294
        %v3237 = vsub.f32 0.0, %v2645
        %v3238 = vsub.f32 0.0, %v2647
        %v3239 = vsub.f32 0.0, %v1239
        %v3240 = vsub.f32 0.0, %v1241
        %v3241 = vsub.f32 0.0, %v1592
        %v3242 = vsub.f32 0.0, %v1594
        %v3243 = vsub.f32 0.0, %v1945
        %v3244 = vsub.f32 0.0, %v1947
        %v3245 = vsub.f32 0.0, %v2298
        %v3246 = vsub.f32 0.0, %v2300
        %v3247 = vsub.f32 0.0, %v2651
        %v3248 = vsub.f32 0.0, %v2653
        %v3249 = vsub.f32 0.0, %v1243
        %v3250 = vsub.f32 0.0, %v1245
        %v3251 = vsub.f32 0.0, %v1596
        %v3252 = vsub.f32 0.0, %v1598
        %v3253 = vsub.f32 0.0, %v1949
        %v3254 = vsub.f32 0.0, %v1951
        %v3255 = vsub.f32 0.0, %v2302
        %v3256 = vsub.f32 0.0, %v2304
        %v3257 = vsub.f32 0.0, %v2655
        %v3258 = vsub.f32 0.0, %v2657
        %v3259 = vsub.f32 0.0, %v1249
        %v3260 = vsub.f32 0.0, %v1251
        %v3261 = vsub.f32 0.0, %v1602
        %v3262 = vsub.f32 0.0, %v1604
        %v3263 = vsub.f32 0.0, %v1955
        %v3264 = vsub.f32 0.0, %v1957
        %v3265 = vsub.f32 0.0, %v2308
        %v3266 = vsub.f32 0.0, %v2310
        %v3267 = vsub.f32 0.0, %v2661
        %v3268 = vsub.f32 0.0, %v2663
        %v3269 = vsub.f32 0.0, %v1253
        %v3270 = vsub.f32 0.0, %v1255
        %v3271 = vsub.f32 0.0, %v1606
        %v3272 = vsub.f32 0.0, %v1608
        %v3273 = vsub.f32 0.0, %v1959
        %v3274 = vsub.f32 0.0, %v1961
        %v3275 = vsub.f32 0.0, %v2312
        %v3276 = vsub.f32 0.0, %v2314
        %v3277 = vsub.f32 0.0, %v2665
        %v3278 = vsub.f32 0.0, %v2667
        %v3279 = vsub.f32 0.0, %v1259
        %v3280 = vsub.f32 0.0, %v1261
        %v3281 = vsub.f32 0.0, %v1612
        %v3282 = vsub.f32 0.0, %v1614
        %v3283 = vsub.f32 0.0, %v1965
        %v3284 = vsub.f32 0.0, %v1967
        %v3285 = vsub.f32 0.0, %v2318
        %v3286 = vsub.f32 0.0, %v2320
        %v3287 = vsub.f32 0.0, %v2671
        %v3288 = vsub.f32 0.0, %v2673
        %v3289 = vsub.f32 0.0, %v1263
        %v3290 = vsub.f32 0.0, %v1265
        %v3291 = vsub.f32 0.0, %v1616
        %v3292 = vsub.f32 0.0, %v1618
        %v3293 = vsub.f32 0.0, %v1969
        %v3294 = vsub.f32 0.0, %v1971
        %v3295 = vsub.f32 0.0, %v2322
        %v3296 = vsub.f32 0.0, %v2324
        %v3297 = vsub.f32 0.0, %v2675
        %v3298 = vsub.f32 0.0, %v2677
        %v3299 = vsub.f32 0.0, %v1269
        %v3300 = vsub.f32 0.0, %v1271
        %v3301 = vsub.f32 0.0, %v1622
        %v3302 = vsub.f32 0.0, %v1624
        %v3303 = vsub.f32 0.0, %v1975
        %v3304 = vsub.f32 0.0, %v1977
        %v3305 = vsub.f32 0.0, %v2328
        %v3306 = vsub.f32 0.0, %v2330
        %v3307 = vsub.f32 0.0, %v2681
        %v3308 = vsub.f32 0.0, %v2683
        %v3309 = vsub.f32 0.0, %v1273
        %v3310 = vsub.f32 0.0, %v1275
        %v3311 = vsub.f32 0.0, %v1626
        %v3312 = vsub.f32 0.0, %v1628
        %v3313 = vsub.f32 0.0, %v1979
        %v3314 = vsub.f32 0.0, %v1981
        %v3315 = vsub.f32 0.0, %v2332
        %v3316 = vsub.f32 0.0, %v2334
        %v3317 = vsub.f32 0.0, %v2685
        %v3318 = vsub.f32 0.0, %v2687
        %v3319 = vsub.f32 0.0, %v1279
        %v3320 = vsub.f32 0.0, %v1281
        %v3321 = vsub.f32 0.0, %v1632
        %v3322 = vsub.f32 0.0, %v1634
        %v3323 = vsub.f32 0.0, %v1985
        %v3324 = vsub.f32 0.0, %v1987
        %v3325 = vsub.f32 0.0, %v2338
        %v3326 = vsub.f32 0.0, %v2340
        %v3327 = vsub.f32 0.0, %v2691
        %v3328 = vsub.f32 0.0, %v2693
        %v3329 = vsub.f32 0.0, %v1283
        %v3330 = vsub.f32 0.0, %v1285
        %v3331 = vsub.f32 0.0, %v1636
        %v3332 = vsub.f32 0.0, %v1638
        %v3333 = vsub.f32 0.0, %v1989
        %v3334 = vsub.f32 0.0, %v1991
        %v3335 = vsub.f32 0.0, %v2342
        %v3336 = vsub.f32 0.0, %v2344
        %v3337 = vsub.f32 0.0, %v2695
        %v3338 = vsub.f32 0.0, %v2697
        %v3339 = vmul.f32 %v2699, 1.442695
        %v3340 = vpow.pop %v3339
        %v3341 = vmul.f32 %v2700, 1.442695
        %v3342 = vpow.pop %v3341
        %v3343 = vmul.f32 %v2701, 1.442695
        %v3344 = vpow.pop %v3343
        %v3345 = vmul.f32 %v2702, 1.442695
        %v3346 = vpow.pop %v3345
        %v3347 = vmul.f32 %v2703, 1.442695
        %v3348 = vpow.pop %v3347
        %v3349 = vmul.f32 %v2704, 1.442695
        %v3350 = vpow.pop %v3349
        %v3351 = vmul.f32 %v2705, 1.442695
        %v3352 = vpow.pop %v3351
        %v3353 = vmul.f32 %v2706, 1.442695
        %v3354 = vpow.pop %v3353
        %v3355 = vmul.f32 %v2707, 1.442695
        %v3356 = vpow.pop %v3355
        %v3357 = vmul.f32 %v2708, 1.442695
        %v3358 = vpow.pop %v3357
        %v3359 = vmul.f32 %v2709, 1.442695
        %v3360 = vpow.pop %v3359
        %v3361 = vmul.f32 %v2710, 1.442695
        %v3362 = vpow.pop %v3361
        %v3363 = vmul.f32 %v2711, 1.442695
        %v3364 = vpow.pop %v3363
        %v3365 = vmul.f32 %v2712, 1.442695
        %v3366 = vpow.pop %v3365
        %v3367 = vmul.f32 %v2713, 1.442695
        %v3368 = vpow.pop %v3367
        %v3369 = vmul.f32 %v2714, 1.442695
        %v3370 = vpow.pop %v3369
        %v3371 = vmul.f32 %v2715, 1.442695
        %v3372 = vpow.pop %v3371
        %v3373 = vmul.f32 %v2716, 1.442695
        %v3374 = vpow.pop %v3373
        %v3375 = vmul.f32 %v2717, 1.442695
        %v3376 = vpow.pop %v3375
        %v3377 = vmul.f32 %v2718, 1.442695
        %v3378 = vpow.pop %v3377
        %v3379 = vmul.f32 %v2719, 1.442695
        %v3380 = vpow.pop %v3379
        %v3381 = vmul.f32 %v2720, 1.442695
        %v3382 = vpow.pop %v3381
        %v3383 = vmul.f32 %v2721, 1.442695
        %v3384 = vpow.pop %v3383
        %v3385 = vmul.f32 %v2722, 1.442695
        %v3386 = vpow.pop %v3385
        %v3387 = vmul.f32 %v2723, 1.442695
        %v3388 = vpow.pop %v3387
        %v3389 = vmul.f32 %v2724, 1.442695
        %v3390 = vpow.pop %v3389
        %v3391 = vmul.f32 %v2725, 1.442695
        %v3392 = vpow.pop %v3391
        %v3393 = vmul.f32 %v2726, 1.442695
        %v3394 = vpow.pop %v3393
        %v3395 = vmul.f32 %v2727, 1.442695
        %v3396 = vpow.pop %v3395
        %v3397 = vmul.f32 %v2728, 1.442695
        %v3398 = vpow.pop %v3397
        %v3399 = vmul.f32 %v2729, 1.442695
        %v3400 = vpow.pop %v3399
        %v3401 = vmul.f32 %v2730, 1.442695
        %v3402 = vpow.pop %v3401
        %v3403 = vmul.f32 %v2731, 1.442695
        %v3404 = vpow.pop %v3403
        %v3405 = vmul.f32 %v2732, 1.442695
        %v3406 = vpow.pop %v3405
        %v3407 = vmul.f32 %v2733, 1.442695
        %v3408 = vpow.pop %v3407
        %v3409 = vmul.f32 %v2734, 1.442695
        %v3410 = vpow.pop %v3409
        %v3411 = vmul.f32 %v2735, 1.442695
        %v3412 = vpow.pop %v3411
        %v3413 = vmul.f32 %v2736, 1.442695
        %v3414 = vpow.pop %v3413
        %v3415 = vmul.f32 %v2737, 1.442695
        %v3416 = vpow.pop %v3415
        %v3417 = vmul.f32 %v2738, 1.442695
        %v3418 = vpow.pop %v3417
        %v3419 = vmul.f32 %v2739, 1.442695
        %v3420 = vpow.pop %v3419
        %v3421 = vmul.f32 %v2740, 1.442695
        %v3422 = vpow.pop %v3421
        %v3423 = vmul.f32 %v2741, 1.442695
        %v3424 = vpow.pop %v3423
        %v3425 = vmul.f32 %v2742, 1.442695
        %v3426 = vpow.pop %v3425
        %v3427 = vmul.f32 %v2743, 1.442695
        %v3428 = vpow.pop %v3427
        %v3429 = vmul.f32 %v2744, 1.442695
        %v3430 = vpow.pop %v3429
        %v3431 = vmul.f32 %v2745, 1.442695
        %v3432 = vpow.pop %v3431
        %v3433 = vmul.f32 %v2746, 1.442695
        %v3434 = vpow.pop %v3433
        %v3435 = vmul.f32 %v2747, 1.442695
        %v3436 = vpow.pop %v3435
        %v3437 = vmul.f32 %v2748, 1.442695
        %v3438 = vpow.pop %v3437
        %v3439 = vmul.f32 %v2749, 1.442695
        %v3440 = vpow.pop %v3439
        %v3441 = vmul.f32 %v2750, 1.442695
        %v3442 = vpow.pop %v3441
        %v3443 = vmul.f32 %v2751, 1.442695
        %v3444 = vpow.pop %v3443
        %v3445 = vmul.f32 %v2752, 1.442695
        %v3446 = vpow.pop %v3445
        %v3447 = vmul.f32 %v2753, 1.442695
        %v3448 = vpow.pop %v3447
        %v3449 = vmul.f32 %v2754, 1.442695
        %v3450 = vpow.pop %v3449
        %v3451 = vmul.f32 %v2755, 1.442695
        %v3452 = vpow.pop %v3451
        %v3453 = vmul.f32 %v2756, 1.442695
        %v3454 = vpow.pop %v3453
        %v3455 = vmul.f32 %v2757, 1.442695
        %v3456 = vpow.pop %v3455
        %v3457 = vmul.f32 %v2758, 1.442695
        %v3458 = vpow.pop %v3457
        %v3459 = vmul.f32 %v2759, 1.442695
        %v3460 = vpow.pop %v3459
        %v3461 = vmul.f32 %v2760, 1.442695
        %v3462 = vpow.pop %v3461
        %v3463 = vmul.f32 %v2761, 1.442695
        %v3464 = vpow.pop %v3463
        %v3465 = vmul.f32 %v2762, 1.442695
        %v3466 = vpow.pop %v3465
        %v3467 = vmul.f32 %v2763, 1.442695
        %v3468 = vpow.pop %v3467
        %v3469 = vmul.f32 %v2764, 1.442695
        %v3470 = vpow.pop %v3469
        %v3471 = vmul.f32 %v2765, 1.442695
        %v3472 = vpow.pop %v3471
        %v3473 = vmul.f32 %v2766, 1.442695
        %v3474 = vpow.pop %v3473
        %v3475 = vmul.f32 %v2767, 1.442695
        %v3476 = vpow.pop %v3475
        %v3477 = vmul.f32 %v2768, 1.442695
        %v3478 = vpow.pop %v3477
        %v3479 = vmul.f32 %v2769, 1.442695
        %v3480 = vpow.pop %v3479
        %v3481 = vmul.f32 %v2770, 1.442695
        %v3482 = vpow.pop %v3481
        %v3483 = vmul.f32 %v2771, 1.442695
        %v3484 = vpow.pop %v3483
        %v3485 = vmul.f32 %v2772, 1.442695
        %v3486 = vpow.pop %v3485
        %v3487 = vmul.f32 %v2773, 1.442695
        %v3488 = vpow.pop %v3487
        %v3489 = vmul.f32 %v2774, 1.442695
        %v3490 = vpow.pop %v3489
        %v3491 = vmul.f32 %v2775, 1.442695
        %v3492 = vpow.pop %v3491
        %v3493 = vmul.f32 %v2776, 1.442695
        %v3494 = vpow.pop %v3493
        %v3495 = vmul.f32 %v2777, 1.442695
        %v3496 = vpow.pop %v3495
        %v3497 = vmul.f32 %v2778, 1.442695
        %v3498 = vpow.pop %v3497
        %v3499 = vmul.f32 %v2779, 1.442695
        %v3500 = vpow.pop %v3499
        %v3501 = vmul.f32 %v2780, 1.442695
        %v3502 = vpow.pop %v3501
        %v3503 = vmul.f32 %v2781, 1.442695
        %v3504 = vpow.pop %v3503
        %v3505 = vmul.f32 %v2782, 1.442695
        %v3506 = vpow.pop %v3505
        %v3507 = vmul.f32 %v2783, 1.442695
        %v3508 = vpow.pop %v3507
        %v3509 = vmul.f32 %v2784, 1.442695
        %v3510 = vpow.pop %v3509
        %v3511 = vmul.f32 %v2785, 1.442695
        %v3512 = vpow.pop %v3511
        %v3513 = vmul.f32 %v2786, 1.442695
        %v3514 = vpow.pop %v3513
        %v3515 = vmul.f32 %v2787, 1.442695
        %v3516 = vpow.pop %v3515
        %v3517 = vmul.f32 %v2788, 1.442695
        %v3518 = vpow.pop %v3517
        %v3519 = vmul.f32 %v2789, 1.442695
        %v3520 = vpow.pop %v3519
        %v3521 = vmul.f32 %v2790, 1.442695
        %v3522 = vpow.pop %v3521
        %v3523 = vmul.f32 %v2791, 1.442695
        %v3524 = vpow.pop %v3523
        %v3525 = vmul.f32 %v2792, 1.442695
        %v3526 = vpow.pop %v3525
        %v3527 = vmul.f32 %v2793, 1.442695
        %v3528 = vpow.pop %v3527
        %v3529 = vmul.f32 %v2794, 1.442695
        %v3530 = vpow.pop %v3529
        %v3531 = vmul.f32 %v2795, 1.442695
        %v3532 = vpow.pop %v3531
        %v3533 = vmul.f32 %v2796, 1.442695
        %v3534 = vpow.pop %v3533
        %v3535 = vmul.f32 %v2797, 1.442695
        %v3536 = vpow.pop %v3535
        %v3537 = vmul.f32 %v2798, 1.442695
        %v3538 = vpow.pop %v3537
        %v3539 = vmul.f32 %v2799, 1.442695
        %v3540 = vpow.pop %v3539
        %v3541 = vmul.f32 %v2800, 1.442695
        %v3542 = vpow.pop %v3541
        %v3543 = vmul.f32 %v2801, 1.442695
        %v3544 = vpow.pop %v3543
        %v3545 = vmul.f32 %v2802, 1.442695
        %v3546 = vpow.pop %v3545
        %v3547 = vmul.f32 %v2803, 1.442695
        %v3548 = vpow.pop %v3547
        %v3549 = vmul.f32 %v2804, 1.442695
        %v3550 = vpow.pop %v3549
        %v3551 = vmul.f32 %v2805, 1.442695
        %v3552 = vpow.pop %v3551
        %v3553 = vmul.f32 %v2806, 1.442695
        %v3554 = vpow.pop %v3553
        %v3555 = vmul.f32 %v2807, 1.442695
        %v3556 = vpow.pop %v3555
        %v3557 = vmul.f32 %v2808, 1.442695
        %v3558 = vpow.pop %v3557
        %v3559 = vmul.f32 %v2809, 1.442695
        %v3560 = vpow.pop %v3559
        %v3561 = vmul.f32 %v2810, 1.442695
        %v3562 = vpow.pop %v3561
        %v3563 = vmul.f32 %v2811, 1.442695
        %v3564 = vpow.pop %v3563
        %v3565 = vmul.f32 %v2812, 1.442695
        %v3566 = vpow.pop %v3565
        %v3567 = vmul.f32 %v2813, 1.442695
        %v3568 = vpow.pop %v3567
        %v3569 = vmul.f32 %v2814, 1.442695
        %v3570 = vpow.pop %v3569
        %v3571 = vmul.f32 %v2815, 1.442695
        %v3572 = vpow.pop %v3571
        %v3573 = vmul.f32 %v2816, 1.442695
        %v3574 = vpow.pop %v3573
        %v3575 = vmul.f32 %v2817, 1.442695
        %v3576 = vpow.pop %v3575
        %v3577 = vmul.f32 %v2818, 1.442695
        %v3578 = vpow.pop %v3577
        %v3579 = vmul.f32 %v2819, 1.442695
        %v3580 = vpow.pop %v3579
        %v3581 = vmul.f32 %v2820, 1.442695
        %v3582 = vpow.pop %v3581
        %v3583 = vmul.f32 %v2821, 1.442695
        %v3584 = vpow.pop %v3583
        %v3585 = vmul.f32 %v2822, 1.442695
        %v3586 = vpow.pop %v3585
        %v3587 = vmul.f32 %v2823, 1.442695
        %v3588 = vpow.pop %v3587
        %v3589 = vmul.f32 %v2824, 1.442695
        %v3590 = vpow.pop %v3589
        %v3591 = vmul.f32 %v2825, 1.442695
        %v3592 = vpow.pop %v3591
        %v3593 = vmul.f32 %v2826, 1.442695
        %v3594 = vpow.pop %v3593
        %v3595 = vmul.f32 %v2827, 1.442695
        %v3596 = vpow.pop %v3595
        %v3597 = vmul.f32 %v2828, 1.442695
        %v3598 = vpow.pop %v3597
        %v3599 = vmul.f32 %v2829, 1.442695
        %v3600 = vpow.pop %v3599
        %v3601 = vmul.f32 %v2830, 1.442695
        %v3602 = vpow.pop %v3601
        %v3603 = vmul.f32 %v2831, 1.442695
        %v3604 = vpow.pop %v3603
        %v3605 = vmul.f32 %v2832, 1.442695
        %v3606 = vpow.pop %v3605
        %v3607 = vmul.f32 %v2833, 1.442695
        %v3608 = vpow.pop %v3607
        %v3609 = vmul.f32 %v2834, 1.442695
        %v3610 = vpow.pop %v3609
        %v3611 = vmul.f32 %v2835, 1.442695
        %v3612 = vpow.pop %v3611
        %v3613 = vmul.f32 %v2836, 1.442695
        %v3614 = vpow.pop %v3613
        %v3615 = vmul.f32 %v2837, 1.442695
        %v3616 = vpow.pop %v3615
        %v3617 = vmul.f32 %v2838, 1.442695
        %v3618 = vpow.pop %v3617
        %v3619 = vmul.f32 %v2839, 1.442695
        %v3620 = vpow.pop %v3619
        %v3621 = vmul.f32 %v2840, 1.442695
        %v3622 = vpow.pop %v3621
        %v3623 = vmul.f32 %v2841, 1.442695
        %v3624 = vpow.pop %v3623
        %v3625 = vmul.f32 %v2842, 1.442695
        %v3626 = vpow.pop %v3625
        %v3627 = vmul.f32 %v2843, 1.442695
        %v3628 = vpow.pop %v3627
        %v3629 = vmul.f32 %v2844, 1.442695
        %v3630 = vpow.pop %v3629
        %v3631 = vmul.f32 %v2845, 1.442695
        %v3632 = vpow.pop %v3631
        %v3633 = vmul.f32 %v2846, 1.442695
        %v3634 = vpow.pop %v3633
        %v3635 = vmul.f32 %v2847, 1.442695
        %v3636 = vpow.pop %v3635
        %v3637 = vmul.f32 %v2848, 1.442695
        %v3638 = vpow.pop %v3637
        %v3639 = vmul.f32 %v2849, 1.442695
        %v3640 = vpow.pop %v3639
        %v3641 = vmul.f32 %v2850, 1.442695
        %v3642 = vpow.pop %v3641
        %v3643 = vmul.f32 %v2851, 1.442695
        %v3644 = vpow.pop %v3643
        %v3645 = vmul.f32 %v2852, 1.442695
        %v3646 = vpow.pop %v3645
        %v3647 = vmul.f32 %v2853, 1.442695
        %v3648 = vpow.pop %v3647
        %v3649 = vmul.f32 %v2854, 1.442695
        %v3650 = vpow.pop %v3649
        %v3651 = vmul.f32 %v2855, 1.442695
        %v3652 = vpow.pop %v3651
        %v3653 = vmul.f32 %v2856, 1.442695
        %v3654 = vpow.pop %v3653
        %v3655 = vmul.f32 %v2857, 1.442695
        %v3656 = vpow.pop %v3655
        %v3657 = vmul.f32 %v2858, 1.442695
        %v3658 = vpow.pop %v3657
        %v3659 = vmul.f32 %v2859, 1.442695
        %v3660 = vpow.pop %v3659
        %v3661 = vmul.f32 %v2860, 1.442695
        %v3662 = vpow.pop %v3661
        %v3663 = vmul.f32 %v2861, 1.442695
        %v3664 = vpow.pop %v3663
        %v3665 = vmul.f32 %v2862, 1.442695
        %v3666 = vpow.pop %v3665
        %v3667 = vmul.f32 %v2863, 1.442695
        %v3668 = vpow.pop %v3667
        %v3669 = vmul.f32 %v2864, 1.442695
        %v3670 = vpow.pop %v3669
        %v3671 = vmul.f32 %v2865, 1.442695
        %v3672 = vpow.pop %v3671
        %v3673 = vmul.f32 %v2866, 1.442695
        %v3674 = vpow.pop %v3673
        %v3675 = vmul.f32 %v2867, 1.442695
        %v3676 = vpow.pop %v3675
        %v3677 = vmul.f32 %v2868, 1.442695
        %v3678 = vpow.pop %v3677
        %v3679 = vmul.f32 %v2869, 1.442695
        %v3680 = vpow.pop %v3679
        %v3681 = vmul.f32 %v2870, 1.442695
        %v3682 = vpow.pop %v3681
        %v3683 = vmul.f32 %v2871, 1.442695
        %v3684 = vpow.pop %v3683
        %v3685 = vmul.f32 %v2872, 1.442695
        %v3686 = vpow.pop %v3685
        %v3687 = vmul.f32 %v2873, 1.442695
        %v3688 = vpow.pop %v3687
        %v3689 = vmul.f32 %v2874, 1.442695
        %v3690 = vpow.pop %v3689
        %v3691 = vmul.f32 %v2875, 1.442695
        %v3692 = vpow.pop %v3691
        %v3693 = vmul.f32 %v2876, 1.442695
        %v3694 = vpow.pop %v3693
        %v3695 = vmul.f32 %v2877, 1.442695
        %v3696 = vpow.pop %v3695
        %v3697 = vmul.f32 %v2878, 1.442695
        %v3698 = vpow.pop %v3697
        %v3699 = vmul.f32 %v2879, 1.442695
        %v3700 = vpow.pop %v3699
        %v3701 = vmul.f32 %v2880, 1.442695
        %v3702 = vpow.pop %v3701
        %v3703 = vmul.f32 %v2881, 1.442695
        %v3704 = vpow.pop %v3703
        %v3705 = vmul.f32 %v2882, 1.442695
        %v3706 = vpow.pop %v3705
        %v3707 = vmul.f32 %v2883, 1.442695
        %v3708 = vpow.pop %v3707
        %v3709 = vmul.f32 %v2884, 1.442695
        %v3710 = vpow.pop %v3709
        %v3711 = vmul.f32 %v2885, 1.442695
        %v3712 = vpow.pop %v3711
        %v3713 = vmul.f32 %v2886, 1.442695
        %v3714 = vpow.pop %v3713
        %v3715 = vmul.f32 %v2887, 1.442695
        %v3716 = vpow.pop %v3715
        %v3717 = vmul.f32 %v2888, 1.442695
        %v3718 = vpow.pop %v3717
        %v3719 = vmul.f32 %v2889, 1.442695
        %v3720 = vpow.pop %v3719
        %v3721 = vmul.f32 %v2890, 1.442695
        %v3722 = vpow.pop %v3721
        %v3723 = vmul.f32 %v2891, 1.442695
        %v3724 = vpow.pop %v3723
        %v3725 = vmul.f32 %v2892, 1.442695
        %v3726 = vpow.pop %v3725
        %v3727 = vmul.f32 %v2893, 1.442695
        %v3728 = vpow.pop %v3727
        %v3729 = vmul.f32 %v2894, 1.442695
        %v3730 = vpow.pop %v3729
        %v3731 = vmul.f32 %v2895, 1.442695
        %v3732 = vpow.pop %v3731
        %v3733 = vmul.f32 %v2896, 1.442695
        %v3734 = vpow.pop %v3733
        %v3735 = vmul.f32 %v2897, 1.442695
        %v3736 = vpow.pop %v3735
        %v3737 = vmul.f32 %v2898, 1.442695
        %v3738 = vpow.pop %v3737
        %v3739 = vmul.f32 %v2899, 1.442695
        %v3740 = vpow.pop %v3739
        %v3741 = vmul.f32 %v2900, 1.442695
        %v3742 = vpow.pop %v3741
        %v3743 = vmul.f32 %v2901, 1.442695
        %v3744 = vpow.pop %v3743
        %v3745 = vmul.f32 %v2902, 1.442695
        %v3746 = vpow.pop %v3745
        %v3747 = vmul.f32 %v2903, 1.442695
        %v3748 = vpow.pop %v3747
        %v3749 = vmul.f32 %v2904, 1.442695
        %v3750 = vpow.pop %v3749
        %v3751 = vmul.f32 %v2905, 1.442695
        %v3752 = vpow.pop %v3751
        %v3753 = vmul.f32 %v2906, 1.442695
        %v3754 = vpow.pop %v3753
        %v3755 = vmul.f32 %v2907, 1.442695
        %v3756 = vpow.pop %v3755
        %v3757 = vmul.f32 %v2908, 1.442695
        %v3758 = vpow.pop %v3757
        %v3759 = vmul.f32 %v2909, 1.442695
        %v3760 = vpow.pop %v3759
        %v3761 = vmul.f32 %v2910, 1.442695
        %v3762 = vpow.pop %v3761
        %v3763 = vmul.f32 %v2911, 1.442695
        %v3764 = vpow.pop %v3763
        %v3765 = vmul.f32 %v2912, 1.442695
        %v3766 = vpow.pop %v3765
        %v3767 = vmul.f32 %v2913, 1.442695
        %v3768 = vpow.pop %v3767
        %v3769 = vmul.f32 %v2914, 1.442695
        %v3770 = vpow.pop %v3769
        %v3771 = vmul.f32 %v2915, 1.442695
        %v3772 = vpow.pop %v3771
        %v3773 = vmul.f32 %v2916, 1.442695
        %v3774 = vpow.pop %v3773
        %v3775 = vmul.f32 %v2917, 1.442695
        %v3776 = vpow.pop %v3775
        %v3777 = vmul.f32 %v2918, 1.442695
        %v3778 = vpow.pop %v3777
        %v3779 = vmul.f32 %v2919, 1.442695
        %v3780 = vpow.pop %v3779
        %v3781 = vmul.f32 %v2920, 1.442695
        %v3782 = vpow.pop %v3781
        %v3783 = vmul.f32 %v2921, 1.442695
        %v3784 = vpow.pop %v3783
        %v3785 = vmul.f32 %v2922, 1.442695
        %v3786 = vpow.pop %v3785
        %v3787 = vmul.f32 %v2923, 1.442695
        %v3788 = vpow.pop %v3787
        %v3789 = vmul.f32 %v2924, 1.442695
        %v3790 = vpow.pop %v3789
        %v3791 = vmul.f32 %v2925, 1.442695
        %v3792 = vpow.pop %v3791
        %v3793 = vmul.f32 %v2926, 1.442695
        %v3794 = vpow.pop %v3793
        %v3795 = vmul.f32 %v2927, 1.442695
        %v3796 = vpow.pop %v3795
        %v3797 = vmul.f32 %v2928, 1.442695
        %v3798 = vpow.pop %v3797
        %v3799 = vmul.f32 %v2929, 1.442695
        %v3800 = vpow.pop %v3799
        %v3801 = vmul.f32 %v2930, 1.442695
        %v3802 = vpow.pop %v3801
        %v3803 = vmul.f32 %v2931, 1.442695
        %v3804 = vpow.pop %v3803
        %v3805 = vmul.f32 %v2932, 1.442695
        %v3806 = vpow.pop %v3805
        %v3807 = vmul.f32 %v2933, 1.442695
        %v3808 = vpow.pop %v3807
        %v3809 = vmul.f32 %v2934, 1.442695
        %v3810 = vpow.pop %v3809
        %v3811 = vmul.f32 %v2935, 1.442695
        %v3812 = vpow.pop %v3811
        %v3813 = vmul.f32 %v2936, 1.442695
        %v3814 = vpow.pop %v3813
        %v3815 = vmul.f32 %v2937, 1.442695
        %v3816 = vpow.pop %v3815
        %v3817 = vmul.f32 %v2938, 1.442695
        %v3818 = vpow.pop %v3817
        %v3819 = vmul.f32 %v2939, 1.442695
        %v3820 = vpow.pop %v3819
        %v3821 = vmul.f32 %v2940, 1.442695
        %v3822 = vpow.pop %v3821
        %v3823 = vmul.f32 %v2941, 1.442695
        %v3824 = vpow.pop %v3823
        %v3825 = vmul.f32 %v2942, 1.442695
        %v3826 = vpow.pop %v3825
        %v3827 = vmul.f32 %v2943, 1.442695
        %v3828 = vpow.pop %v3827
        %v3829 = vmul.f32 %v2944, 1.442695
        %v3830 = vpow.pop %v3829
        %v3831 = vmul.f32 %v2945, 1.442695
        %v3832 = vpow.pop %v3831
        %v3833 = vmul.f32 %v2946, 1.442695
        %v3834 = vpow.pop %v3833
        %v3835 = vmul.f32 %v2947, 1.442695
        %v3836 = vpow.pop %v3835
        %v3837 = vmul.f32 %v2948, 1.442695
        %v3838 = vpow.pop %v3837
        %v3839 = vmul.f32 %v2949, 1.442695
        %v3840 = vpow.pop %v3839
        %v3841 = vmul.f32 %v2950, 1.442695
        %v3842 = vpow.pop %v3841
        %v3843 = vmul.f32 %v2951, 1.442695
        %v3844 = vpow.pop %v3843
        %v3845 = vmul.f32 %v2952, 1.442695
        %v3846 = vpow.pop %v3845
        %v3847 = vmul.f32 %v2953, 1.442695
        %v3848 = vpow.pop %v3847
        %v3849 = vmul.f32 %v2954, 1.442695
        %v3850 = vpow.pop %v3849
        %v3851 = vmul.f32 %v2955, 1.442695
        %v3852 = vpow.pop %v3851
        %v3853 = vmul.f32 %v2956, 1.442695
        %v3854 = vpow.pop %v3853
        %v3855 = vmul.f32 %v2957, 1.442695
        %v3856 = vpow.pop %v3855
        %v3857 = vmul.f32 %v2958, 1.442695
        %v3858 = vpow.pop %v3857
        %v3859 = vmul.f32 %v2959, 1.442695
        %v3860 = vpow.pop %v3859
        %v3861 = vmul.f32 %v2960, 1.442695
        %v3862 = vpow.pop %v3861
        %v3863 = vmul.f32 %v2961, 1.442695
        %v3864 = vpow.pop %v3863
        %v3865 = vmul.f32 %v2962, 1.442695
        %v3866 = vpow.pop %v3865
        %v3867 = vmul.f32 %v2963, 1.442695
        %v3868 = vpow.pop %v3867
        %v3869 = vmul.f32 %v2964, 1.442695
        %v3870 = vpow.pop %v3869
        %v3871 = vmul.f32 %v2965, 1.442695
        %v3872 = vpow.pop %v3871
        %v3873 = vmul.f32 %v2966, 1.442695
        %v3874 = vpow.pop %v3873
        %v3875 = vmul.f32 %v2967, 1.442695
        %v3876 = vpow.pop %v3875
        %v3877 = vmul.f32 %v2968, 1.442695
        %v3878 = vpow.pop %v3877
        %v3879 = vmul.f32 %v2969, 1.442695
        %v3880 = vpow.pop %v3879
        %v3881 = vmul.f32 %v2970, 1.442695
        %v3882 = vpow.pop %v3881
        %v3883 = vmul.f32 %v2971, 1.442695
        %v3884 = vpow.pop %v3883
        %v3885 = vmul.f32 %v2972, 1.442695
        %v3886 = vpow.pop %v3885
        %v3887 = vmul.f32 %v2973, 1.442695
        %v3888 = vpow.pop %v3887
        %v3889 = vmul.f32 %v2974, 1.442695
        %v3890 = vpow.pop %v3889
        %v3891 = vmul.f32 %v2975, 1.442695
        %v3892 = vpow.pop %v3891
        %v3893 = vmul.f32 %v2976, 1.442695
        %v3894 = vpow.pop %v3893
        %v3895 = vmul.f32 %v2977, 1.442695
        %v3896 = vpow.pop %v3895
        %v3897 = vmul.f32 %v2978, 1.442695
        %v3898 = vpow.pop %v3897
        %v3899 = vmul.f32 %v2979, 1.442695
        %v3900 = vpow.pop %v3899
        %v3901 = vmul.f32 %v2980, 1.442695
        %v3902 = vpow.pop %v3901
        %v3903 = vmul.f32 %v2981, 1.442695
        %v3904 = vpow.pop %v3903
        %v3905 = vmul.f32 %v2982, 1.442695
        %v3906 = vpow.pop %v3905
        %v3907 = vmul.f32 %v2983, 1.442695
        %v3908 = vpow.pop %v3907
        %v3909 = vmul.f32 %v2984, 1.442695
        %v3910 = vpow.pop %v3909
        %v3911 = vmul.f32 %v2985, 1.442695
        %v3912 = vpow.pop %v3911
        %v3913 = vmul.f32 %v2986, 1.442695
        %v3914 = vpow.pop %v3913
        %v3915 = vmul.f32 %v2987, 1.442695
        %v3916 = vpow.pop %v3915
        %v3917 = vmul.f32 %v2988, 1.442695
        %v3918 = vpow.pop %v3917
        %v3919 = vmul.f32 %v2989, 1.442695
        %v3920 = vpow.pop %v3919
        %v3921 = vmul.f32 %v2990, 1.442695
        %v3922 = vpow.pop %v3921
        %v3923 = vmul.f32 %v2991, 1.442695
        %v3924 = vpow.pop %v3923
        %v3925 = vmul.f32 %v2992, 1.442695
        %v3926 = vpow.pop %v3925
        %v3927 = vmul.f32 %v2993, 1.442695
        %v3928 = vpow.pop %v3927
        %v3929 = vmul.f32 %v2994, 1.442695
        %v3930 = vpow.pop %v3929
        %v3931 = vmul.f32 %v2995, 1.442695
        %v3932 = vpow.pop %v3931
        %v3933 = vmul.f32 %v2996, 1.442695
        %v3934 = vpow.pop %v3933
        %v3935 = vmul.f32 %v2997, 1.442695
        %v3936 = vpow.pop %v3935
        %v3937 = vmul.f32 %v2998, 1.442695
        %v3938 = vpow.pop %v3937
        %v3939 = vmul.f32 %v2999, 1.442695
        %v3940 = vpow.pop %v3939
        %v3941 = vmul.f32 %v3000, 1.442695
        %v3942 = vpow.pop %v3941
        %v3943 = vmul.f32 %v3001, 1.442695
        %v3944 = vpow.pop %v3943
        %v3945 = vmul.f32 %v3002, 1.442695
        %v3946 = vpow.pop %v3945
        %v3947 = vmul.f32 %v3003, 1.442695
        %v3948 = vpow.pop %v3947
        %v3949 = vmul.f32 %v3004, 1.442695
        %v3950 = vpow.pop %v3949
        %v3951 = vmul.f32 %v3005, 1.442695
        %v3952 = vpow.pop %v3951
        %v3953 = vmul.f32 %v3006, 1.442695
        %v3954 = vpow.pop %v3953
        %v3955 = vmul.f32 %v3007, 1.442695
        %v3956 = vpow.pop %v3955
        %v3957 = vmul.f32 %v3008, 1.442695
        %v3958 = vpow.pop %v3957
        %v3959 = vmul.f32 %v3009, 1.442695
        %v3960 = vpow.pop %v3959
        %v3961 = vmul.f32 %v3010, 1.442695
        %v3962 = vpow.pop %v3961
        %v3963 = vmul.f32 %v3011, 1.442695
        %v3964 = vpow.pop %v3963
        %v3965 = vmul.f32 %v3012, 1.442695
        %v3966 = vpow.pop %v3965
        %v3967 = vmul.f32 %v3013, 1.442695
        %v3968 = vpow.pop %v3967
        %v3969 = vmul.f32 %v3014, 1.442695
        %v3970 = vpow.pop %v3969
        %v3971 = vmul.f32 %v3015, 1.442695
        %v3972 = vpow.pop %v3971
        %v3973 = vmul.f32 %v3016, 1.442695
        %v3974 = vpow.pop %v3973
        %v3975 = vmul.f32 %v3017, 1.442695
        %v3976 = vpow.pop %v3975
        %v3977 = vmul.f32 %v3018, 1.442695
        %v3978 = vpow.pop %v3977
        %v3979 = vmul.f32 %v3019, 1.442695
        %v3980 = vpow.pop %v3979
        %v3981 = vmul.f32 %v3020, 1.442695
        %v3982 = vpow.pop %v3981
        %v3983 = vmul.f32 %v3021, 1.442695
        %v3984 = vpow.pop %v3983
        %v3985 = vmul.f32 %v3022, 1.442695
        %v3986 = vpow.pop %v3985
        %v3987 = vmul.f32 %v3023, 1.442695
        %v3988 = vpow.pop %v3987
        %v3989 = vmul.f32 %v3024, 1.442695
        %v3990 = vpow.pop %v3989
        %v3991 = vmul.f32 %v3025, 1.442695
        %v3992 = vpow.pop %v3991
        %v3993 = vmul.f32 %v3026, 1.442695
        %v3994 = vpow.pop %v3993
        %v3995 = vmul.f32 %v3027, 1.442695
        %v3996 = vpow.pop %v3995
        %v3997 = vmul.f32 %v3028, 1.442695
        %v3998 = vpow.pop %v3997
        %v3999 = vmul.f32 %v3029, 1.442695
        %v4000 = vpow.pop %v3999
        %v4001 = vmul.f32 %v3030, 1.442695
        %v4002 = vpow.pop %v4001
        %v4003 = vmul.f32 %v3031, 1.442695
        %v4004 = vpow.pop %v4003
        %v4005 = vmul.f32 %v3032, 1.442695
        %v4006 = vpow.pop %v4005
        %v4007 = vmul.f32 %v3033, 1.442695
        %v4008 = vpow.pop %v4007
        %v4009 = vmul.f32 %v3034, 1.442695
        %v4010 = vpow.pop %v4009
        %v4011 = vmul.f32 %v3035, 1.442695
        %v4012 = vpow.pop %v4011
        %v4013 = vmul.f32 %v3036, 1.442695
        %v4014 = vpow.pop %v4013
        %v4015 = vmul.f32 %v3037, 1.442695
        %v4016 = vpow.pop %v4015
        %v4017 = vmul.f32 %v3038, 1.442695
        %v4018 = vpow.pop %v4017
        %v4019 = vmul.f32 %v3039, 1.442695
        %v4020 = vpow.pop %v4019
        %v4021 = vmul.f32 %v3040, 1.442695
        %v4022 = vpow.pop %v4021
        %v4023 = vmul.f32 %v3041, 1.442695
        %v4024 = vpow.pop %v4023
        %v4025 = vmul.f32 %v3042, 1.442695
        %v4026 = vpow.pop %v4025
        %v4027 = vmul.f32 %v3043, 1.442695
        %v4028 = vpow.pop %v4027
        %v4029 = vmul.f32 %v3044, 1.442695
        %v4030 = vpow.pop %v4029
        %v4031 = vmul.f32 %v3045, 1.442695
        %v4032 = vpow.pop %v4031
        %v4033 = vmul.f32 %v3046, 1.442695
        %v4034 = vpow.pop %v4033
        %v4035 = vmul.f32 %v3047, 1.442695
        %v4036 = vpow.pop %v4035
        %v4037 = vmul.f32 %v3048, 1.442695
        %v4038 = vpow.pop %v4037
        %v4039 = vmul.f32 %v3049, 1.442695
        %v4040 = vpow.pop %v4039
        %v4041 = vmul.f32 %v3050, 1.442695
        %v4042 = vpow.pop %v4041
        %v4043 = vmul.f32 %v3051, 1.442695
        %v4044 = vpow.pop %v4043
        %v4045 = vmul.f32 %v3052, 1.442695
        %v4046 = vpow.pop %v4045
        %v4047 = vmul.f32 %v3053, 1.442695
        %v4048 = vpow.pop %v4047
        %v4049 = vmul.f32 %v3054, 1.442695
        %v4050 = vpow.pop %v4049
        %v4051 = vmul.f32 %v3055, 1.442695
        %v4052 = vpow.pop %v4051
        %v4053 = vmul.f32 %v3056, 1.442695
        %v4054 = vpow.pop %v4053
        %v4055 = vmul.f32 %v3057, 1.442695
        %v4056 = vpow.pop %v4055
        %v4057 = vmul.f32 %v3058, 1.442695
        %v4058 = vpow.pop %v4057
        %v4059 = vmul.f32 %v3059, 1.442695
        %v4060 = vpow.pop %v4059
        %v4061 = vmul.f32 %v3060, 1.442695
        %v4062 = vpow.pop %v4061
        %v4063 = vmul.f32 %v3061, 1.442695
        %v4064 = vpow.pop %v4063
        %v4065 = vmul.f32 %v3062, 1.442695
        %v4066 = vpow.pop %v4065
        %v4067 = vmul.f32 %v3063, 1.442695
        %v4068 = vpow.pop %v4067
        %v4069 = vmul.f32 %v3064, 1.442695
        %v4070 = vpow.pop %v4069
        %v4071 = vmul.f32 %v3065, 1.442695
        %v4072 = vpow.pop %v4071
        %v4073 = vmul.f32 %v3066, 1.442695
        %v4074 = vpow.pop %v4073
        %v4075 = vmul.f32 %v3067, 1.442695
        %v4076 = vpow.pop %v4075
        %v4077 = vmul.f32 %v3068, 1.442695
        %v4078 = vpow.pop %v4077
        %v4079 = vmul.f32 %v3069, 1.442695
        %v4080 = vpow.pop %v4079
        %v4081 = vmul.f32 %v3070, 1.442695
        %v4082 = vpow.pop %v4081
        %v4083 = vmul.f32 %v3071, 1.442695
        %v4084 = vpow.pop %v4083
        %v4085 = vmul.f32 %v3072, 1.442695
        %v4086 = vpow.pop %v4085
        %v4087 = vmul.f32 %v3073, 1.442695
        %v4088 = vpow.pop %v4087
        %v4089 = vmul.f32 %v3074, 1.442695
        %v4090 = vpow.pop %v4089
        %v4091 = vmul.f32 %v3075, 1.442695
        %v4092 = vpow.pop %v4091
        %v4093 = vmul.f32 %v3076, 1.442695
        %v4094 = vpow.pop %v4093
        %v4095 = vmul.f32 %v3077, 1.442695
        %v4096 = vpow.pop %v4095
        %v4097 = vmul.f32 %v3078, 1.442695
        %v4098 = vpow.pop %v4097
        %v4099 = vmul.f32 %v3079, 1.442695
        %v4100 = vpow.pop %v4099
        %v4101 = vmul.f32 %v3080, 1.442695
        %v4102 = vpow.pop %v4101
        %v4103 = vmul.f32 %v3081, 1.442695
        %v4104 = vpow.pop %v4103
        %v4105 = vmul.f32 %v3082, 1.442695
        %v4106 = vpow.pop %v4105
        %v4107 = vmul.f32 %v3083, 1.442695
        %v4108 = vpow.pop %v4107
        %v4109 = vmul.f32 %v3084, 1.442695
        %v4110 = vpow.pop %v4109
        %v4111 = vmul.f32 %v3085, 1.442695
        %v4112 = vpow.pop %v4111
        %v4113 = vmul.f32 %v3086, 1.442695
        %v4114 = vpow.pop %v4113
        %v4115 = vmul.f32 %v3087, 1.442695
        %v4116 = vpow.pop %v4115
        %v4117 = vmul.f32 %v3088, 1.442695
        %v4118 = vpow.pop %v4117
        %v4119 = vmul.f32 %v3089, 1.442695
        %v4120 = vpow.pop %v4119
        %v4121 = vmul.f32 %v3090, 1.442695
        %v4122 = vpow.pop %v4121
        %v4123 = vmul.f32 %v3091, 1.442695
        %v4124 = vpow.pop %v4123
        %v4125 = vmul.f32 %v3092, 1.442695
        %v4126 = vpow.pop %v4125
        %v4127 = vmul.f32 %v3093, 1.442695
        %v4128 = vpow.pop %v4127
        %v4129 = vmul.f32 %v3094, 1.442695
        %v4130 = vpow.pop %v4129
        %v4131 = vmul.f32 %v3095, 1.442695
        %v4132 = vpow.pop %v4131
        %v4133 = vmul.f32 %v3096, 1.442695
        %v4134 = vpow.pop %v4133
        %v4135 = vmul.f32 %v3097, 1.442695
        %v4136 = vpow.pop %v4135
        %v4137 = vmul.f32 %v3098, 1.442695
        %v4138 = vpow.pop %v4137
        %v4139 = vmul.f32 %v3099, 1.442695
        %v4140 = vpow.pop %v4139
        %v4141 = vmul.f32 %v3100, 1.442695
        %v4142 = vpow.pop %v4141
        %v4143 = vmul.f32 %v3101, 1.442695
        %v4144 = vpow.pop %v4143
        %v4145 = vmul.f32 %v3102, 1.442695
        %v4146 = vpow.pop %v4145
        %v4147 = vmul.f32 %v3103, 1.442695
        %v4148 = vpow.pop %v4147
        %v4149 = vmul.f32 %v3104, 1.442695
        %v4150 = vpow.pop %v4149
        %v4151 = vmul.f32 %v3105, 1.442695
        %v4152 = vpow.pop %v4151
        %v4153 = vmul.f32 %v3106, 1.442695
        %v4154 = vpow.pop %v4153
        %v4155 = vmul.f32 %v3107, 1.442695
        %v4156 = vpow.pop %v4155
        %v4157 = vmul.f32 %v3108, 1.442695
        %v4158 = vpow.pop %v4157
        %v4159 = vmul.f32 %v3109, 1.442695
        %v4160 = vpow.pop %v4159
        %v4161 = vmul.f32 %v3110, 1.442695
        %v4162 = vpow.pop %v4161
        %v4163 = vmul.f32 %v3111, 1.442695
        %v4164 = vpow.pop %v4163
        %v4165 = vmul.f32 %v3112, 1.442695
        %v4166 = vpow.pop %v4165
        %v4167 = vmul.f32 %v3113, 1.442695
        %v4168 = vpow.pop %v4167
        %v4169 = vmul.f32 %v3114, 1.442695
        %v4170 = vpow.pop %v4169
        %v4171 = vmul.f32 %v3115, 1.442695
        %v4172 = vpow.pop %v4171
        %v4173 = vmul.f32 %v3116, 1.442695
        %v4174 = vpow.pop %v4173
        %v4175 = vmul.f32 %v3117, 1.442695
        %v4176 = vpow.pop %v4175
        %v4177 = vmul.f32 %v3118, 1.442695
        %v4178 = vpow.pop %v4177
        %v4179 = vmul.f32 %v3119, 1.442695
        %v4180 = vpow.pop %v4179
        %v4181 = vmul.f32 %v3120, 1.442695
        %v4182 = vpow.pop %v4181
        %v4183 = vmul.f32 %v3121, 1.442695
        %v4184 = vpow.pop %v4183
        %v4185 = vmul.f32 %v3122, 1.442695
        %v4186 = vpow.pop %v4185
        %v4187 = vmul.f32 %v3123, 1.442695
        %v4188 = vpow.pop %v4187
        %v4189 = vmul.f32 %v3124, 1.442695
        %v4190 = vpow.pop %v4189
        %v4191 = vmul.f32 %v3125, 1.442695
        %v4192 = vpow.pop %v4191
        %v4193 = vmul.f32 %v3126, 1.442695
        %v4194 = vpow.pop %v4193
        %v4195 = vmul.f32 %v3127, 1.442695
        %v4196 = vpow.pop %v4195
        %v4197 = vmul.f32 %v3128, 1.442695
        %v4198 = vpow.pop %v4197
        %v4199 = vmul.f32 %v3129, 1.442695
        %v4200 = vpow.pop %v4199
        %v4201 = vmul.f32 %v3130, 1.442695
        %v4202 = vpow.pop %v4201
        %v4203 = vmul.f32 %v3131, 1.442695
        %v4204 = vpow.pop %v4203
        %v4205 = vmul.f32 %v3132, 1.442695
        %v4206 = vpow.pop %v4205
        %v4207 = vmul.f32 %v3133, 1.442695
        %v4208 = vpow.pop %v4207
        %v4209 = vmul.f32 %v3134, 1.442695
        %v4210 = vpow.pop %v4209
        %v4211 = vmul.f32 %v3135, 1.442695
        %v4212 = vpow.pop %v4211
        %v4213 = vmul.f32 %v3136, 1.442695
        %v4214 = vpow.pop %v4213
        %v4215 = vmul.f32 %v3137, 1.442695
        %v4216 = vpow.pop %v4215
        %v4217 = vmul.f32 %v3138, 1.442695
        %v4218 = vpow.pop %v4217
        %v4219 = vmul.f32 %v3139, 1.442695
        %v4220 = vpow.pop %v4219
        %v4221 = vmul.f32 %v3140, 1.442695
        %v4222 = vpow.pop %v4221
        %v4223 = vmul.f32 %v3141, 1.442695
        %v4224 = vpow.pop %v4223
        %v4225 = vmul.f32 %v3142, 1.442695
        %v4226 = vpow.pop %v4225
        %v4227 = vmul.f32 %v3143, 1.442695
        %v4228 = vpow.pop %v4227
        %v4229 = vmul.f32 %v3144, 1.442695
        %v4230 = vpow.pop %v4229
        %v4231 = vmul.f32 %v3145, 1.442695
        %v4232 = vpow.pop %v4231
        %v4233 = vmul.f32 %v3146, 1.442695
        %v4234 = vpow.pop %v4233
        %v4235 = vmul.f32 %v3147, 1.442695
        %v4236 = vpow.pop %v4235
        %v4237 = vmul.f32 %v3148, 1.442695
        %v4238 = vpow.pop %v4237
        %v4239 = vmul.f32 %v3149, 1.442695
        %v4240 = vpow.pop %v4239
        %v4241 = vmul.f32 %v3150, 1.442695
        %v4242 = vpow.pop %v4241
        %v4243 = vmul.f32 %v3151, 1.442695
        %v4244 = vpow.pop %v4243
        %v4245 = vmul.f32 %v3152, 1.442695
        %v4246 = vpow.pop %v4245
        %v4247 = vmul.f32 %v3153, 1.442695
        %v4248 = vpow.pop %v4247
        %v4249 = vmul.f32 %v3154, 1.442695
        %v4250 = vpow.pop %v4249
        %v4251 = vmul.f32 %v3155, 1.442695
        %v4252 = vpow.pop %v4251
        %v4253 = vmul.f32 %v3156, 1.442695
        %v4254 = vpow.pop %v4253
        %v4255 = vmul.f32 %v3157, 1.442695
        %v4256 = vpow.pop %v4255
        %v4257 = vmul.f32 %v3158, 1.442695
        %v4258 = vpow.pop %v4257
        %v4259 = vmul.f32 %v3159, 1.442695
        %v4260 = vpow.pop %v4259
        %v4261 = vmul.f32 %v3160, 1.442695
        %v4262 = vpow.pop %v4261
        %v4263 = vmul.f32 %v3161, 1.442695
        %v4264 = vpow.pop %v4263
        %v4265 = vmul.f32 %v3162, 1.442695
        %v4266 = vpow.pop %v4265
        %v4267 = vmul.f32 %v3163, 1.442695
        %v4268 = vpow.pop %v4267
        %v4269 = vmul.f32 %v3164, 1.442695
        %v4270 = vpow.pop %v4269
        %v4271 = vmul.f32 %v3165, 1.442695
        %v4272 = vpow.pop %v4271
        %v4273 = vmul.f32 %v3166, 1.442695
        %v4274 = vpow.pop %v4273
        %v4275 = vmul.f32 %v3167, 1.442695
        %v4276 = vpow.pop %v4275
        %v4277 = vmul.f32 %v3168, 1.442695
        %v4278 = vpow.pop %v4277
        %v4279 = vmul.f32 %v3169, 1.442695
        %v4280 = vpow.pop %v4279
        %v4281 = vmul.f32 %v3170, 1.442695
        %v4282 = vpow.pop %v4281
        %v4283 = vmul.f32 %v3171, 1.442695
        %v4284 = vpow.pop %v4283
        %v4285 = vmul.f32 %v3172, 1.442695
        %v4286 = vpow.pop %v4285
        %v4287 = vmul.f32 %v3173, 1.442695
        %v4288 = vpow.pop %v4287
        %v4289 = vmul.f32 %v3174, 1.442695
        %v4290 = vpow.pop %v4289
        %v4291 = vmul.f32 %v3175, 1.442695
        %v4292 = vpow.pop %v4291
        %v4293 = vmul.f32 %v3176, 1.442695
        %v4294 = vpow.pop %v4293
        %v4295 = vmul.f32 %v3177, 1.442695
        %v4296 = vpow.pop %v4295
        %v4297 = vmul.f32 %v3178, 1.442695
        %v4298 = vpow.pop %v4297
        %v4299 = vmul.f32 %v3179, 1.442695
        %v4300 = vpow.pop %v4299
        %v4301 = vmul.f32 %v3180, 1.442695
        %v4302 = vpow.pop %v4301
        %v4303 = vmul.f32 %v3181, 1.442695
        %v4304 = vpow.pop %v4303
        %v4305 = vmul.f32 %v3182, 1.442695
        %v4306 = vpow.pop %v4305
        %v4307 = vmul.f32 %v3183, 1.442695
        %v4308 = vpow.pop %v4307
        %v4309 = vmul.f32 %v3184, 1.442695
        %v4310 = vpow.pop %v4309
        %v4311 = vmul.f32 %v3185, 1.442695
        %v4312 = vpow.pop %v4311
        %v4313 = vmul.f32 %v3186, 1.442695
        %v4314 = vpow.pop %v4313
        %v4315 = vmul.f32 %v3187, 1.442695
        %v4316 = vpow.pop %v4315
        %v4317 = vmul.f32 %v3188, 1.442695
        %v4318 = vpow.pop %v4317
        %v4319 = vmul.f32 %v3189, 1.442695
        %v4320 = vpow.pop %v4319
        %v4321 = vmul.f32 %v3190, 1.442695
        %v4322 = vpow.pop %v4321
        %v4323 = vmul.f32 %v3191, 1.442695
        %v4324 = vpow.pop %v4323
        %v4325 = vmul.f32 %v3192, 1.442695
        %v4326 = vpow.pop %v4325
        %v4327 = vmul.f32 %v3193, 1.442695
        %v4328 = vpow.pop %v4327
        %v4329 = vmul.f32 %v3194, 1.442695
        %v4330 = vpow.pop %v4329
        %v4331 = vmul.f32 %v3195, 1.442695
        %v4332 = vpow.pop %v4331
        %v4333 = vmul.f32 %v3196, 1.442695
        %v4334 = vpow.pop %v4333
        %v4335 = vmul.f32 %v3197, 1.442695
        %v4336 = vpow.pop %v4335
        %v4337 = vmul.f32 %v3198, 1.442695
        %v4338 = vpow.pop %v4337
        %v4339 = vmul.f32 %v3199, 1.442695
        %v4340 = vpow.pop %v4339
        %v4341 = vmul.f32 %v3200, 1.442695
        %v4342 = vpow.pop %v4341
        %v4343 = vmul.f32 %v3201, 1.442695
        %v4344 = vpow.pop %v4343
        %v4345 = vmul.f32 %v3202, 1.442695
        %v4346 = vpow.pop %v4345
        %v4347 = vmul.f32 %v3203, 1.442695
        %v4348 = vpow.pop %v4347
        %v4349 = vmul.f32 %v3204, 1.442695
        %v4350 = vpow.pop %v4349
        %v4351 = vmul.f32 %v3205, 1.442695
        %v4352 = vpow.pop %v4351
        %v4353 = vmul.f32 %v3206, 1.442695
        %v4354 = vpow.pop %v4353
        %v4355 = vmul.f32 %v3207, 1.442695
        %v4356 = vpow.pop %v4355
        %v4357 = vmul.f32 %v3208, 1.442695
        %v4358 = vpow.pop %v4357
        %v4359 = vmul.f32 %v3209, 1.442695
        %v4360 = vpow.pop %v4359
        %v4361 = vmul.f32 %v3210, 1.442695
        %v4362 = vpow.pop %v4361
        %v4363 = vmul.f32 %v3211, 1.442695
        %v4364 = vpow.pop %v4363
        %v4365 = vmul.f32 %v3212, 1.442695
        %v4366 = vpow.pop %v4365
        %v4367 = vmul.f32 %v3213, 1.442695
        %v4368 = vpow.pop %v4367
        %v4369 = vmul.f32 %v3214, 1.442695
        %v4370 = vpow.pop %v4369
        %v4371 = vmul.f32 %v3215, 1.442695
        %v4372 = vpow.pop %v4371
        %v4373 = vmul.f32 %v3216, 1.442695
        %v4374 = vpow.pop %v4373
        %v4375 = vmul.f32 %v3217, 1.442695
        %v4376 = vpow.pop %v4375
        %v4377 = vmul.f32 %v3218, 1.442695
        %v4378 = vpow.pop %v4377
        %v4379 = vmul.f32 %v3219, 1.442695
        %v4380 = vpow.pop %v4379
        %v4381 = vmul.f32 %v3220, 1.442695
        %v4382 = vpow.pop %v4381
        %v4383 = vmul.f32 %v3221, 1.442695
        %v4384 = vpow.pop %v4383
        %v4385 = vmul.f32 %v3222, 1.442695
        %v4386 = vpow.pop %v4385
        %v4387 = vmul.f32 %v3223, 1.442695
        %v4388 = vpow.pop %v4387
        %v4389 = vmul.f32 %v3224, 1.442695
        %v4390 = vpow.pop %v4389
        %v4391 = vmul.f32 %v3225, 1.442695
        %v4392 = vpow.pop %v4391
        %v4393 = vmul.f32 %v3226, 1.442695
        %v4394 = vpow.pop %v4393
        %v4395 = vmul.f32 %v3227, 1.442695
        %v4396 = vpow.pop %v4395
        %v4397 = vmul.f32 %v3228, 1.442695
        %v4398 = vpow.pop %v4397
        %v4399 = vmul.f32 %v3229, 1.442695
        %v4400 = vpow.pop %v4399
        %v4401 = vmul.f32 %v3230, 1.442695
        %v4402 = vpow.pop %v4401
        %v4403 = vmul.f32 %v3231, 1.442695
        %v4404 = vpow.pop %v4403
        %v4405 = vmul.f32 %v3232, 1.442695
        %v4406 = vpow.pop %v4405
        %v4407 = vmul.f32 %v3233, 1.442695
        %v4408 = vpow.pop %v4407
        %v4409 = vmul.f32 %v3234, 1.442695
        %v4410 = vpow.pop %v4409
        %v4411 = vmul.f32 %v3235, 1.442695
        %v4412 = vpow.pop %v4411
        %v4413 = vmul.f32 %v3236, 1.442695
        %v4414 = vpow.pop %v4413
        %v4415 = vmul.f32 %v3237, 1.442695
        %v4416 = vpow.pop %v4415
        %v4417 = vmul.f32 %v3238, 1.442695
        %v4418 = vpow.pop %v4417
        %v4419 = vmul.f32 %v3239, 1.442695
        %v4420 = vpow.pop %v4419
        %v4421 = vmul.f32 %v3240, 1.442695
        %v4422 = vpow.pop %v4421
        %v4423 = vmul.f32 %v3241, 1.442695
        %v4424 = vpow.pop %v4423
        %v4425 = vmul.f32 %v3242, 1.442695
        %v4426 = vpow.pop %v4425
        %v4427 = vmul.f32 %v3243, 1.442695
        %v4428 = vpow.pop %v4427
        %v4429 = vmul.f32 %v3244, 1.442695
        %v4430 = vpow.pop %v4429
        %v4431 = vmul.f32 %v3245, 1.442695
        %v4432 = vpow.pop %v4431
        %v4433 = vmul.f32 %v3246, 1.442695
        %v4434 = vpow.pop %v4433
        %v4435 = vmul.f32 %v3247, 1.442695
        %v4436 = vpow.pop %v4435
        %v4437 = vmul.f32 %v3248, 1.442695
        %v4438 = vpow.pop %v4437
        %v4439 = vmul.f32 %v3249, 1.442695
        %v4440 = vpow.pop %v4439
        %v4441 = vmul.f32 %v3250, 1.442695
        %v4442 = vpow.pop %v4441
        %v4443 = vmul.f32 %v3251, 1.442695
        %v4444 = vpow.pop %v4443
        %v4445 = vmul.f32 %v3252, 1.442695
        %v4446 = vpow.pop %v4445
        %v4447 = vmul.f32 %v3253, 1.442695
        %v4448 = vpow.pop %v4447
        %v4449 = vmul.f32 %v3254, 1.442695
        %v4450 = vpow.pop %v4449
        %v4451 = vmul.f32 %v3255, 1.442695
        %v4452 = vpow.pop %v4451
        %v4453 = vmul.f32 %v3256, 1.442695
        %v4454 = vpow.pop %v4453
        %v4455 = vmul.f32 %v3257, 1.442695
        %v4456 = vpow.pop %v4455
        %v4457 = vmul.f32 %v3258, 1.442695
        %v4458 = vpow.pop %v4457
        %v4459 = vmul.f32 %v3259, 1.442695
        %v4460 = vpow.pop %v4459
        %v4461 = vmul.f32 %v3260, 1.442695
        %v4462 = vpow.pop %v4461
        %v4463 = vmul.f32 %v3261, 1.442695
        %v4464 = vpow.pop %v4463
        %v4465 = vmul.f32 %v3262, 1.442695
        %v4466 = vpow.pop %v4465
        %v4467 = vmul.f32 %v3263, 1.442695
        %v4468 = vpow.pop %v4467
        %v4469 = vmul.f32 %v3264, 1.442695
        %v4470 = vpow.pop %v4469
        %v4471 = vmul.f32 %v3265, 1.442695
        %v4472 = vpow.pop %v4471
        %v4473 = vmul.f32 %v3266, 1.442695
        %v4474 = vpow.pop %v4473
        %v4475 = vmul.f32 %v3267, 1.442695
        %v4476 = vpow.pop %v4475
        %v4477 = vmul.f32 %v3268, 1.442695
        %v4478 = vpow.pop %v4477
        %v4479 = vmul.f32 %v3269, 1.442695
        %v4480 = vpow.pop %v4479
        %v4481 = vmul.f32 %v3270, 1.442695
        %v4482 = vpow.pop %v4481
        %v4483 = vmul.f32 %v3271, 1.442695
        %v4484 = vpow.pop %v4483
        %v4485 = vmul.f32 %v3272, 1.442695
        %v4486 = vpow.pop %v4485
        %v4487 = vmul.f32 %v3273, 1.442695
        %v4488 = vpow.pop %v4487
        %v4489 = vmul.f32 %v3274, 1.442695
        %v4490 = vpow.pop %v4489
        %v4491 = vmul.f32 %v3275, 1.442695
        %v4492 = vpow.pop %v4491
        %v4493 = vmul.f32 %v3276, 1.442695
        %v4494 = vpow.pop %v4493
        %v4495 = vmul.f32 %v3277, 1.442695
        %v4496 = vpow.pop %v4495
        %v4497 = vmul.f32 %v3278, 1.442695
        %v4498 = vpow.pop %v4497
        %v4499 = vmul.f32 %v3279, 1.442695
        %v4500 = vpow.pop %v4499
        %v4501 = vmul.f32 %v3280, 1.442695
        %v4502 = vpow.pop %v4501
        %v4503 = vmul.f32 %v3281, 1.442695
        %v4504 = vpow.pop %v4503
        %v4505 = vmul.f32 %v3282, 1.442695
        %v4506 = vpow.pop %v4505
        %v4507 = vmul.f32 %v3283, 1.442695
        %v4508 = vpow.pop %v4507
        %v4509 = vmul.f32 %v3284, 1.442695
        %v4510 = vpow.pop %v4509
        %v4511 = vmul.f32 %v3285, 1.442695
        %v4512 = vpow.pop %v4511
        %v4513 = vmul.f32 %v3286, 1.442695
        %v4514 = vpow.pop %v4513
        %v4515 = vmul.f32 %v3287, 1.442695
        %v4516 = vpow.pop %v4515
        %v4517 = vmul.f32 %v3288, 1.442695
        %v4518 = vpow.pop %v4517
        %v4519 = vmul.f32 %v3289, 1.442695
        %v4520 = vpow.pop %v4519
        %v4521 = vmul.f32 %v3290, 1.442695
        %v4522 = vpow.pop %v4521
        %v4523 = vmul.f32 %v3291, 1.442695
        %v4524 = vpow.pop %v4523
        %v4525 = vmul.f32 %v3292, 1.442695
        %v4526 = vpow.pop %v4525
        %v4527 = vmul.f32 %v3293, 1.442695
        %v4528 = vpow.pop %v4527
        %v4529 = vmul.f32 %v3294, 1.442695
        %v4530 = vpow.pop %v4529
        %v4531 = vmul.f32 %v3295, 1.442695
        %v4532 = vpow.pop %v4531
        %v4533 = vmul.f32 %v3296, 1.442695
        %v4534 = vpow.pop %v4533
        %v4535 = vmul.f32 %v3297, 1.442695
        %v4536 = vpow.pop %v4535
        %v4537 = vmul.f32 %v3298, 1.442695
        %v4538 = vpow.pop %v4537
        %v4539 = vmul.f32 %v3299, 1.442695
        %v4540 = vpow.pop %v4539
        %v4541 = vmul.f32 %v3300, 1.442695
        %v4542 = vpow.pop %v4541
        %v4543 = vmul.f32 %v3301, 1.442695
        %v4544 = vpow.pop %v4543
        %v4545 = vmul.f32 %v3302, 1.442695
        %v4546 = vpow.pop %v4545
        %v4547 = vmul.f32 %v3303, 1.442695
        %v4548 = vpow.pop %v4547
        %v4549 = vmul.f32 %v3304, 1.442695
        %v4550 = vpow.pop %v4549
        %v4551 = vmul.f32 %v3305, 1.442695
        %v4552 = vpow.pop %v4551
        %v4553 = vmul.f32 %v3306, 1.442695
        %v4554 = vpow.pop %v4553
        %v4555 = vmul.f32 %v3307, 1.442695
        %v4556 = vpow.pop %v4555
        %v4557 = vmul.f32 %v3308, 1.442695
        %v4558 = vpow.pop %v4557
        %v4559 = vmul.f32 %v3309, 1.442695
        %v4560 = vpow.pop %v4559
        %v4561 = vmul.f32 %v3310, 1.442695
        %v4562 = vpow.pop %v4561
        %v4563 = vmul.f32 %v3311, 1.442695
        %v4564 = vpow.pop %v4563
        %v4565 = vmul.f32 %v3312, 1.442695
        %v4566 = vpow.pop %v4565
        %v4567 = vmul.f32 %v3313, 1.442695
        %v4568 = vpow.pop %v4567
        %v4569 = vmul.f32 %v3314, 1.442695
        %v4570 = vpow.pop %v4569
        %v4571 = vmul.f32 %v3315, 1.442695
        %v4572 = vpow.pop %v4571
        %v4573 = vmul.f32 %v3316, 1.442695
        %v4574 = vpow.pop %v4573
        %v4575 = vmul.f32 %v3317, 1.442695
        %v4576 = vpow.pop %v4575
        %v4577 = vmul.f32 %v3318, 1.442695
        %v4578 = vpow.pop %v4577
        %v4579 = vmul.f32 %v3319, 1.442695
        %v4580 = vpow.pop %v4579
        %v4581 = vmul.f32 %v3320, 1.442695
        %v4582 = vpow.pop %v4581
        %v4583 = vmul.f32 %v3321, 1.442695
        %v4584 = vpow.pop %v4583
        %v4585 = vmul.f32 %v3322, 1.442695
        %v4586 = vpow.pop %v4585
        %v4587 = vmul.f32 %v3323, 1.442695
        %v4588 = vpow.pop %v4587
        %v4589 = vmul.f32 %v3324, 1.442695
        %v4590 = vpow.pop %v4589
        %v4591 = vmul.f32 %v3325, 1.442695
        %v4592 = vpow.pop %v4591
        %v4593 = vmul.f32 %v3326, 1.442695
        %v4594 = vpow.pop %v4593
        %v4595 = vmul.f32 %v3327, 1.442695
        %v4596 = vpow.pop %v4595
        %v4597 = vmul.f32 %v3328, 1.442695
        %v4598 = vpow.pop %v4597
        %v4599 = vmul.f32 %v3329, 1.442695
        %v4600 = vpow.pop %v4599
        %v4601 = vmul.f32 %v3330, 1.442695
        %v4602 = vpow.pop %v4601
        %v4603 = vmul.f32 %v3331, 1.442695
        %v4604 = vpow.pop %v4603
        %v4605 = vmul.f32 %v3332, 1.442695
        %v4606 = vpow.pop %v4605
        %v4607 = vmul.f32 %v3333, 1.442695
        %v4608 = vpow.pop %v4607
        %v4609 = vmul.f32 %v3334, 1.442695
        %v4610 = vpow.pop %v4609
        %v4611 = vmul.f32 %v3335, 1.442695
        %v4612 = vpow.pop %v4611
        %v4613 = vmul.f32 %v3336, 1.442695
        %v4614 = vpow.pop %v4613
        %v4615 = vmul.f32 %v3337, 1.442695
        %v4616 = vpow.pop %v4615
        %v4617 = vmul.f32 %v3338, 1.442695
        %v4618 = vpow.pop %v4617
        %v4619 = vadd.f32 %v3340, 1.0
        %v4620 = vadd.f32 %v3342, 1.0
        %v4621 = vadd.f32 %v3344, 1.0
        %v4622 = vadd.f32 %v3346, 1.0
        %v4623 = vadd.f32 %v3348, 1.0
        %v4624 = vadd.f32 %v3350, 1.0
        %v4625 = vadd.f32 %v3352, 1.0
        %v4626 = vadd.f32 %v3354, 1.0
        %v4627 = vadd.f32 %v3356, 1.0
        %v4628 = vadd.f32 %v3358, 1.0
        %v4629 = vadd.f32 %v3360, 1.0
        %v4630 = vadd.f32 %v3362, 1.0
        %v4631 = vadd.f32 %v3364, 1.0
        %v4632 = vadd.f32 %v3366, 1.0
        %v4633 = vadd.f32 %v3368, 1.0
        %v4634 = vadd.f32 %v3370, 1.0
        %v4635 = vadd.f32 %v3372, 1.0
        %v4636 = vadd.f32 %v3374, 1.0
        %v4637 = vadd.f32 %v3376, 1.0
        %v4638 = vadd.f32 %v3378, 1.0
        %v4639 = vadd.f32 %v3380, 1.0
        %v4640 = vadd.f32 %v3382, 1.0
        %v4641 = vadd.f32 %v3384, 1.0
        %v4642 = vadd.f32 %v3386, 1.0
        %v4643 = vadd.f32 %v3388, 1.0
        %v4644 = vadd.f32 %v3390, 1.0
        %v4645 = vadd.f32 %v3392, 1.0
        %v4646 = vadd.f32 %v3394, 1.0
        %v4647 = vadd.f32 %v3396, 1.0
        %v4648 = vadd.f32 %v3398, 1.0
        %v4649 = vadd.f32 %v3400, 1.0
        %v4650 = vadd.f32 %v3402, 1.0
        %v4651 = vadd.f32 %v3404, 1.0
        %v4652 = vadd.f32 %v3406, 1.0
        %v4653 = vadd.f32 %v3408, 1.0
        %v4654 = vadd.f32 %v3410, 1.0
        %v4655 = vadd.f32 %v3412, 1.0
        %v4656 = vadd.f32 %v3414, 1.0
        %v4657 = vadd.f32 %v3416, 1.0
        %v4658 = vadd.f32 %v3418, 1.0
        %v4659 = vadd.f32 %v3420, 1.0
        %v4660 = vadd.f32 %v3422, 1.0
        %v4661 = vadd.f32 %v3424, 1.0
        %v4662 = vadd.f32 %v3426, 1.0
        %v4663 = vadd.f32 %v3428, 1.0
        %v4664 = vadd.f32 %v3430, 1.0
        %v4665 = vadd.f32 %v3432, 1.0
        %v4666 = vadd.f32 %v3434, 1.0
        %v4667 = vadd.f32 %v3436, 1.0
        %v4668 = vadd.f32 %v3438, 1.0
        %v4669 = vadd.f32 %v3440, 1.0
        %v4670 = vadd.f32 %v3442, 1.0
        %v4671 = vadd.f32 %v3444, 1.0
        %v4672 = vadd.f32 %v3446, 1.0
        %v4673 = vadd.f32 %v3448, 1.0
        %v4674 = vadd.f32 %v3450, 1.0
        %v4675 = vadd.f32 %v3452, 1.0
        %v4676 = vadd.f32 %v3454, 1.0
        %v4677 = vadd.f32 %v3456, 1.0
        %v4678 = vadd.f32 %v3458, 1.0
        %v4679 = vadd.f32 %v3460, 1.0
        %v4680 = vadd.f32 %v3462, 1.0
        %v4681 = vadd.f32 %v3464, 1.0
        %v4682 = vadd.f32 %v3466, 1.0
        %v4683 = vadd.f32 %v3468, 1.0
        %v4684 = vadd.f32 %v3470, 1.0
        %v4685 = vadd.f32 %v3472, 1.0
        %v4686 = vadd.f32 %v3474, 1.0
        %v4687 = vadd.f32 %v3476, 1.0
        %v4688 = vadd.f32 %v3478, 1.0
        %v4689 = vadd.f32 %v3480, 1.0
        %v4690 = vadd.f32 %v3482, 1.0
        %v4691 = vadd.f32 %v3484, 1.0
        %v4692 = vadd.f32 %v3486, 1.0
        %v4693 = vadd.f32 %v3488, 1.0
        %v4694 = vadd.f32 %v3490, 1.0
        %v4695 = vadd.f32 %v3492, 1.0
        %v4696 = vadd.f32 %v3494, 1.0
        %v4697 = vadd.f32 %v3496, 1.0
        %v4698 = vadd.f32 %v3498, 1.0
        %v4699 = vadd.f32 %v3500, 1.0
        %v4700 = vadd.f32 %v3502, 1.0
        %v4701 = vadd.f32 %v3504, 1.0
        %v4702 = vadd.f32 %v3506, 1.0
        %v4703 = vadd.f32 %v3508, 1.0
        %v4704 = vadd.f32 %v3510, 1.0
        %v4705 = vadd.f32 %v3512, 1.0
        %v4706 = vadd.f32 %v3514, 1.0
        %v4707 = vadd.f32 %v3516, 1.0
        %v4708 = vadd.f32 %v3518, 1.0
        %v4709 = vadd.f32 %v3520, 1.0
        %v4710 = vadd.f32 %v3522, 1.0
        %v4711 = vadd.f32 %v3524, 1.0
        %v4712 = vadd.f32 %v3526, 1.0
        %v4713 = vadd.f32 %v3528, 1.0
        %v4714 = vadd.f32 %v3530, 1.0
        %v4715 = vadd.f32 %v3532, 1.0
        %v4716 = vadd.f32 %v3534, 1.0
        %v4717 = vadd.f32 %v3536, 1.0
        %v4718 = vadd.f32 %v3538, 1.0
        %v4719 = vadd.f32 %v3540, 1.0
        %v4720 = vadd.f32 %v3542, 1.0
        %v4721 = vadd.f32 %v3544, 1.0
        %v4722 = vadd.f32 %v3546, 1.0
        %v4723 = vadd.f32 %v3548, 1.0
        %v4724 = vadd.f32 %v3550, 1.0
        %v4725 = vadd.f32 %v3552, 1.0
        %v4726 = vadd.f32 %v3554, 1.0
        %v4727 = vadd.f32 %v3556, 1.0
        %v4728 = vadd.f32 %v3558, 1.0
        %v4729 = vadd.f32 %v3560, 1.0
        %v4730 = vadd.f32 %v3562, 1.0
        %v4731 = vadd.f32 %v3564, 1.0
        %v4732 = vadd.f32 %v3566, 1.0
        %v4733 = vadd.f32 %v3568, 1.0
        %v4734 = vadd.f32 %v3570, 1.0
        %v4735 = vadd.f32 %v3572, 1.0
        %v4736 = vadd.f32 %v3574, 1.0
        %v4737 = vadd.f32 %v3576, 1.0
        %v4738 = vadd.f32 %v3578, 1.0
        %v4739 = vadd.f32 %v3580, 1.0
        %v4740 = vadd.f32 %v3582, 1.0
        %v4741 = vadd.f32 %v3584, 1.0
        %v4742 = vadd.f32 %v3586, 1.0
        %v4743 = vadd.f32 %v3588, 1.0
        %v4744 = vadd.f32 %v3590, 1.0
        %v4745 = vadd.f32 %v3592, 1.0
        %v4746 = vadd.f32 %v3594, 1.0
        %v4747 = vadd.f32 %v3596, 1.0
        %v4748 = vadd.f32 %v3598, 1.0
        %v4749 = vadd.f32 %v3600, 1.0
        %v4750 = vadd.f32 %v3602, 1.0
        %v4751 = vadd.f32 %v3604, 1.0
        %v4752 = vadd.f32 %v3606, 1.0
        %v4753 = vadd.f32 %v3608, 1.0
        %v4754 = vadd.f32 %v3610, 1.0
        %v4755 = vadd.f32 %v3612, 1.0
        %v4756 = vadd.f32 %v3614, 1.0
        %v4757 = vadd.f32 %v3616, 1.0
        %v4758 = vadd.f32 %v3618, 1.0
        %v4759 = vadd.f32 %v3620, 1.0
        %v4760 = vadd.f32 %v3622, 1.0
        %v4761 = vadd.f32 %v3624, 1.0
        %v4762 = vadd.f32 %v3626, 1.0
        %v4763 = vadd.f32 %v3628, 1.0
        %v4764 = vadd.f32 %v3630, 1.0
        %v4765 = vadd.f32 %v3632, 1.0
        %v4766 = vadd.f32 %v3634, 1.0
        %v4767 = vadd.f32 %v3636, 1.0
        %v4768 = vadd.f32 %v3638, 1.0
        %v4769 = vadd.f32 %v3640, 1.0
        %v4770 = vadd.f32 %v3642, 1.0
        %v4771 = vadd.f32 %v3644, 1.0
        %v4772 = vadd.f32 %v3646, 1.0
        %v4773 = vadd.f32 %v3648, 1.0
        %v4774 = vadd.f32 %v3650, 1.0
        %v4775 = vadd.f32 %v3652, 1.0
        %v4776 = vadd.f32 %v3654, 1.0
        %v4777 = vadd.f32 %v3656, 1.0
        %v4778 = vadd.f32 %v3658, 1.0
        %v4779 = vadd.f32 %v3660, 1.0
        %v4780 = vadd.f32 %v3662, 1.0
        %v4781 = vadd.f32 %v3664, 1.0
        %v4782 = vadd.f32 %v3666, 1.0
        %v4783 = vadd.f32 %v3668, 1.0
        %v4784 = vadd.f32 %v3670, 1.0
        %v4785 = vadd.f32 %v3672, 1.0
        %v4786 = vadd.f32 %v3674, 1.0
        %v4787 = vadd.f32 %v3676, 1.0
        %v4788 = vadd.f32 %v3678, 1.0
        %v4789 = vadd.f32 %v3680, 1.0
        %v4790 = vadd.f32 %v3682, 1.0
        %v4791 = vadd.f32 %v3684, 1.0
        %v4792 = vadd.f32 %v3686, 1.0
        %v4793 = vadd.f32 %v3688, 1.0
        %v4794 = vadd.f32 %v3690, 1.0
        %v4795 = vadd.f32 %v3692, 1.0
        %v4796 = vadd.f32 %v3694, 1.0
        %v4797 = vadd.f32 %v3696, 1.0
        %v4798 = vadd.f32 %v3698, 1.0
        %v4799 = vadd.f32 %v3700, 1.0
        %v4800 = vadd.f32 %v3702, 1.0
        %v4801 = vadd.f32 %v3704, 1.0
        %v4802 = vadd.f32 %v3706, 1.0
        %v4803 = vadd.f32 %v3708, 1.0
        %v4804 = vadd.f32 %v3710, 1.0
        %v4805 = vadd.f32 %v3712, 1.0
        %v4806 = vadd.f32 %v3714, 1.0
        %v4807 = vadd.f32 %v3716, 1.0
        %v4808 = vadd.f32 %v3718, 1.0
        %v4809 = vadd.f32 %v3720, 1.0
        %v4810 = vadd.f32 %v3722, 1.0
        %v4811 = vadd.f32 %v3724, 1.0
        %v4812 = vadd.f32 %v3726, 1.0
        %v4813 = vadd.f32 %v3728, 1.0
        %v4814 = vadd.f32 %v3730, 1.0
        %v4815 = vadd.f32 %v3732, 1.0
        %v4816 = vadd.f32 %v3734, 1.0
        %v4817 = vadd.f32 %v3736, 1.0
        %v4818 = vadd.f32 %v3738, 1.0
        %v4819 = vadd.f32 %v3740, 1.0
        %v4820 = vadd.f32 %v3742, 1.0
        %v4821 = vadd.f32 %v3744, 1.0
        %v4822 = vadd.f32 %v3746, 1.0
        %v4823 = vadd.f32 %v3748, 1.0
        %v4824 = vadd.f32 %v3750, 1.0
        %v4825 = vadd.f32 %v3752, 1.0
        %v4826 = vadd.f32 %v3754, 1.0
        %v4827 = vadd.f32 %v3756, 1.0
        %v4828 = vadd.f32 %v3758, 1.0
        %v4829 = vadd.f32 %v3760, 1.0
        %v4830 = vadd.f32 %v3762, 1.0
        %v4831 = vadd.f32 %v3764, 1.0
        %v4832 = vadd.f32 %v3766, 1.0
        %v4833 = vadd.f32 %v3768, 1.0
        %v4834 = vadd.f32 %v3770, 1.0
        %v4835 = vadd.f32 %v3772, 1.0
        %v4836 = vadd.f32 %v3774, 1.0
        %v4837 = vadd.f32 %v3776, 1.0
        %v4838 = vadd.f32 %v3778, 1.0
        %v4839 = vadd.f32 %v3780, 1.0
        %v4840 = vadd.f32 %v3782, 1.0
        %v4841 = vadd.f32 %v3784, 1.0
        %v4842 = vadd.f32 %v3786, 1.0
        %v4843 = vadd.f32 %v3788, 1.0
        %v4844 = vadd.f32 %v3790, 1.0
        %v4845 = vadd.f32 %v3792, 1.0
        %v4846 = vadd.f32 %v3794, 1.0
        %v4847 = vadd.f32 %v3796, 1.0
        %v4848 = vadd.f32 %v3798, 1.0
        %v4849 = vadd.f32 %v3800, 1.0
        %v4850 = vadd.f32 %v3802, 1.0
        %v4851 = vadd.f32 %v3804, 1.0
        %v4852 = vadd.f32 %v3806, 1.0
        %v4853 = vadd.f32 %v3808, 1.0
        %v4854 = vadd.f32 %v3810, 1.0
        %v4855 = vadd.f32 %v3812, 1.0
        %v4856 = vadd.f32 %v3814, 1.0
        %v4857 = vadd.f32 %v3816, 1.0
        %v4858 = vadd.f32 %v3818, 1.0
        %v4859 = vadd.f32 %v3820, 1.0
        %v4860 = vadd.f32 %v3822, 1.0
        %v4861 = vadd.f32 %v3824, 1.0
        %v4862 = vadd.f32 %v3826, 1.0
        %v4863 = vadd.f32 %v3828, 1.0
        %v4864 = vadd.f32 %v3830, 1.0
        %v4865 = vadd.f32 %v3832, 1.0
        %v4866 = vadd.f32 %v3834, 1.0
        %v4867 = vadd.f32 %v3836, 1.0
        %v4868 = vadd.f32 %v3838, 1.0
        %v4869 = vadd.f32 %v3840, 1.0
        %v4870 = vadd.f32 %v3842, 1.0
        %v4871 = vadd.f32 %v3844, 1.0
        %v4872 = vadd.f32 %v3846, 1.0
        %v4873 = vadd.f32 %v3848, 1.0
        %v4874 = vadd.f32 %v3850, 1.0
        %v4875 = vadd.f32 %v3852, 1.0
        %v4876 = vadd.f32 %v3854, 1.0
        %v4877 = vadd.f32 %v3856, 1.0
        %v4878 = vadd.f32 %v3858, 1.0
        %v4879 = vadd.f32 %v3860, 1.0
        %v4880 = vadd.f32 %v3862, 1.0
        %v4881 = vadd.f32 %v3864, 1.0
        %v4882 = vadd.f32 %v3866, 1.0
        %v4883 = vadd.f32 %v3868, 1.0
        %v4884 = vadd.f32 %v3870, 1.0
        %v4885 = vadd.f32 %v3872, 1.0
        %v4886 = vadd.f32 %v3874, 1.0
        %v4887 = vadd.f32 %v3876, 1.0
        %v4888 = vadd.f32 %v3878, 1.0
        %v4889 = vadd.f32 %v3880, 1.0
        %v4890 = vadd.f32 %v3882, 1.0
        %v4891 = vadd.f32 %v3884, 1.0
        %v4892 = vadd.f32 %v3886, 1.0
        %v4893 = vadd.f32 %v3888, 1.0
        %v4894 = vadd.f32 %v3890, 1.0
        %v4895 = vadd.f32 %v3892, 1.0
        %v4896 = vadd.f32 %v3894, 1.0
        %v4897 = vadd.f32 %v3896, 1.0
        %v4898 = vadd.f32 %v3898, 1.0
        %v4899 = vadd.f32 %v3900, 1.0
        %v4900 = vadd.f32 %v3902, 1.0
        %v4901 = vadd.f32 %v3904, 1.0
        %v4902 = vadd.f32 %v3906, 1.0
        %v4903 = vadd.f32 %v3908, 1.0
        %v4904 = vadd.f32 %v3910, 1.0
        %v4905 = vadd.f32 %v3912, 1.0
        %v4906 = vadd.f32 %v3914, 1.0
        %v4907 = vadd.f32 %v3916, 1.0
        %v4908 = vadd.f32 %v3918, 1.0
        %v4909 = vadd.f32 %v3920, 1.0
        %v4910 = vadd.f32 %v3922, 1.0
        %v4911 = vadd.f32 %v3924, 1.0
        %v4912 = vadd.f32 %v3926, 1.0
        %v4913 = vadd.f32 %v3928, 1.0
        %v4914 = vadd.f32 %v3930, 1.0
        %v4915 = vadd.f32 %v3932, 1.0
        %v4916 = vadd.f32 %v3934, 1.0
        %v4917 = vadd.f32 %v3936, 1.0
        %v4918 = vadd.f32 %v3938, 1.0
        %v4919 = vadd.f32 %v3940, 1.0
        %v4920 = vadd.f32 %v3942, 1.0
        %v4921 = vadd.f32 %v3944, 1.0
        %v4922 = vadd.f32 %v3946, 1.0
        %v4923 = vadd.f32 %v3948, 1.0
        %v4924 = vadd.f32 %v3950, 1.0
        %v4925 = vadd.f32 %v3952, 1.0
        %v4926 = vadd.f32 %v3954, 1.0
        %v4927 = vadd.f32 %v3956, 1.0
        %v4928 = vadd.f32 %v3958, 1.0
        %v4929 = vadd.f32 %v3960, 1.0
        %v4930 = vadd.f32 %v3962, 1.0
        %v4931 = vadd.f32 %v3964, 1.0
        %v4932 = vadd.f32 %v3966, 1.0
        %v4933 = vadd.f32 %v3968, 1.0
        %v4934 = vadd.f32 %v3970, 1.0
        %v4935 = vadd.f32 %v3972, 1.0
        %v4936 = vadd.f32 %v3974, 1.0
        %v4937 = vadd.f32 %v3976, 1.0
        %v4938 = vadd.f32 %v3978, 1.0
        %v4939 = vadd.f32 %v3980, 1.0
        %v4940 = vadd.f32 %v3982, 1.0
        %v4941 = vadd.f32 %v3984, 1.0
        %v4942 = vadd.f32 %v3986, 1.0
        %v4943 = vadd.f32 %v3988, 1.0
        %v4944 = vadd.f32 %v3990, 1.0
        %v4945 = vadd.f32 %v3992, 1.0
        %v4946 = vadd.f32 %v3994, 1.0
        %v4947 = vadd.f32 %v3996, 1.0
        %v4948 = vadd.f32 %v3998, 1.0
        %v4949 = vadd.f32 %v4000, 1.0
        %v4950 = vadd.f32 %v4002, 1.0
        %v4951 = vadd.f32 %v4004, 1.0
        %v4952 = vadd.f32 %v4006, 1.0
        %v4953 = vadd.f32 %v4008, 1.0
        %v4954 = vadd.f32 %v4010, 1.0
        %v4955 = vadd.f32 %v4012, 1.0
        %v4956 = vadd.f32 %v4014, 1.0
        %v4957 = vadd.f32 %v4016, 1.0
        %v4958 = vadd.f32 %v4018, 1.0
        %v4959 = vadd.f32 %v4020, 1.0
        %v4960 = vadd.f32 %v4022, 1.0
        %v4961 = vadd.f32 %v4024, 1.0
        %v4962 = vadd.f32 %v4026, 1.0
        %v4963 = vadd.f32 %v4028, 1.0
        %v4964 = vadd.f32 %v4030, 1.0
        %v4965 = vadd.f32 %v4032, 1.0
        %v4966 = vadd.f32 %v4034, 1.0
        %v4967 = vadd.f32 %v4036, 1.0
        %v4968 = vadd.f32 %v4038, 1.0
        %v4969 = vadd.f32 %v4040, 1.0
        %v4970 = vadd.f32 %v4042, 1.0
        %v4971 = vadd.f32 %v4044, 1.0
        %v4972 = vadd.f32 %v4046, 1.0
        %v4973 = vadd.f32 %v4048, 1.0
        %v4974 = vadd.f32 %v4050, 1.0
        %v4975 = vadd.f32 %v4052, 1.0
        %v4976 = vadd.f32 %v4054, 1.0
        %v4977 = vadd.f32 %v4056, 1.0
        %v4978 = vadd.f32 %v4058, 1.0
        %v4979 = vadd.f32 %v4060, 1.0
        %v4980 = vadd.f32 %v4062, 1.0
        %v4981 = vadd.f32 %v4064, 1.0
        %v4982 = vadd.f32 %v4066, 1.0
        %v4983 = vadd.f32 %v4068, 1.0
        %v4984 = vadd.f32 %v4070, 1.0
        %v4985 = vadd.f32 %v4072, 1.0
        %v4986 = vadd.f32 %v4074, 1.0
        %v4987 = vadd.f32 %v4076, 1.0
        %v4988 = vadd.f32 %v4078, 1.0
        %v4989 = vadd.f32 %v4080, 1.0
        %v4990 = vadd.f32 %v4082, 1.0
        %v4991 = vadd.f32 %v4084, 1.0
        %v4992 = vadd.f32 %v4086, 1.0
        %v4993 = vadd.f32 %v4088, 1.0
        %v4994 = vadd.f32 %v4090, 1.0
        %v4995 = vadd.f32 %v4092, 1.0
        %v4996 = vadd.f32 %v4094, 1.0
        %v4997 = vadd.f32 %v4096, 1.0
        %v4998 = vadd.f32 %v4098, 1.0
        %v4999 = vadd.f32 %v4100, 1.0
        %v5000 = vadd.f32 %v4102, 1.0
        %v5001 = vadd.f32 %v4104, 1.0
        %v5002 = vadd.f32 %v4106, 1.0
        %v5003 = vadd.f32 %v4108, 1.0
        %v5004 = vadd.f32 %v4110, 1.0
        %v5005 = vadd.f32 %v4112, 1.0
        %v5006 = vadd.f32 %v4114, 1.0
        %v5007 = vadd.f32 %v4116, 1.0
        %v5008 = vadd.f32 %v4118, 1.0
        %v5009 = vadd.f32 %v4120, 1.0
        %v5010 = vadd.f32 %v4122, 1.0
        %v5011 = vadd.f32 %v4124, 1.0
        %v5012 = vadd.f32 %v4126, 1.0
        %v5013 = vadd.f32 %v4128, 1.0
        %v5014 = vadd.f32 %v4130, 1.0
        %v5015 = vadd.f32 %v4132, 1.0
        %v5016 = vadd.f32 %v4134, 1.0
        %v5017 = vadd.f32 %v4136, 1.0
        %v5018 = vadd.f32 %v4138, 1.0
        %v5019 = vadd.f32 %v4140, 1.0
        %v5020 = vadd.f32 %v4142, 1.0
        %v5021 = vadd.f32 %v4144, 1.0
        %v5022 = vadd.f32 %v4146, 1.0
        %v5023 = vadd.f32 %v4148, 1.0
        %v5024 = vadd.f32 %v4150, 1.0
        %v5025 = vadd.f32 %v4152, 1.0
        %v5026 = vadd.f32 %v4154, 1.0
        %v5027 = vadd.f32 %v4156, 1.0
        %v5028 = vadd.f32 %v4158, 1.0
        %v5029 = vadd.f32 %v4160, 1.0
        %v5030 = vadd.f32 %v4162, 1.0
        %v5031 = vadd.f32 %v4164, 1.0
        %v5032 = vadd.f32 %v4166, 1.0
        %v5033 = vadd.f32 %v4168, 1.0
        %v5034 = vadd.f32 %v4170, 1.0
        %v5035 = vadd.f32 %v4172, 1.0
        %v5036 = vadd.f32 %v4174, 1.0
        %v5037 = vadd.f32 %v4176, 1.0
        %v5038 = vadd.f32 %v4178, 1.0
        %v5039 = vadd.f32 %v4180, 1.0
        %v5040 = vadd.f32 %v4182, 1.0
        %v5041 = vadd.f32 %v4184, 1.0
        %v5042 = vadd.f32 %v4186, 1.0
        %v5043 = vadd.f32 %v4188, 1.0
        %v5044 = vadd.f32 %v4190, 1.0
        %v5045 = vadd.f32 %v4192, 1.0
        %v5046 = vadd.f32 %v4194, 1.0
        %v5047 = vadd.f32 %v4196, 1.0
        %v5048 = vadd.f32 %v4198, 1.0
        %v5049 = vadd.f32 %v4200, 1.0
        %v5050 = vadd.f32 %v4202, 1.0
        %v5051 = vadd.f32 %v4204, 1.0
        %v5052 = vadd.f32 %v4206, 1.0
        %v5053 = vadd.f32 %v4208, 1.0
        %v5054 = vadd.f32 %v4210, 1.0
        %v5055 = vadd.f32 %v4212, 1.0
        %v5056 = vadd.f32 %v4214, 1.0
        %v5057 = vadd.f32 %v4216, 1.0
        %v5058 = vadd.f32 %v4218, 1.0
        %v5059 = vadd.f32 %v4220, 1.0
        %v5060 = vadd.f32 %v4222, 1.0
        %v5061 = vadd.f32 %v4224, 1.0
        %v5062 = vadd.f32 %v4226, 1.0
        %v5063 = vadd.f32 %v4228, 1.0
        %v5064 = vadd.f32 %v4230, 1.0
        %v5065 = vadd.f32 %v4232, 1.0
        %v5066 = vadd.f32 %v4234, 1.0
        %v5067 = vadd.f32 %v4236, 1.0
        %v5068 = vadd.f32 %v4238, 1.0
        %v5069 = vadd.f32 %v4240, 1.0
        %v5070 = vadd.f32 %v4242, 1.0
        %v5071 = vadd.f32 %v4244, 1.0
        %v5072 = vadd.f32 %v4246, 1.0
        %v5073 = vadd.f32 %v4248, 1.0
        %v5074 = vadd.f32 %v4250, 1.0
        %v5075 = vadd.f32 %v4252, 1.0
        %v5076 = vadd.f32 %v4254, 1.0
        %v5077 = vadd.f32 %v4256, 1.0
        %v5078 = vadd.f32 %v4258, 1.0
        %v5079 = vadd.f32 %v4260, 1.0
        %v5080 = vadd.f32 %v4262, 1.0
        %v5081 = vadd.f32 %v4264, 1.0
        %v5082 = vadd.f32 %v4266, 1.0
        %v5083 = vadd.f32 %v4268, 1.0
        %v5084 = vadd.f32 %v4270, 1.0
        %v5085 = vadd.f32 %v4272, 1.0
        %v5086 = vadd.f32 %v4274, 1.0
        %v5087 = vadd.f32 %v4276, 1.0
        %v5088 = vadd.f32 %v4278, 1.0
        %v5089 = vadd.f32 %v4280, 1.0
        %v5090 = vadd.f32 %v4282, 1.0
        %v5091 = vadd.f32 %v4284, 1.0
        %v5092 = vadd.f32 %v4286, 1.0
        %v5093 = vadd.f32 %v4288, 1.0
        %v5094 = vadd.f32 %v4290, 1.0
        %v5095 = vadd.f32 %v4292, 1.0
        %v5096 = vadd.f32 %v4294, 1.0
        %v5097 = vadd.f32 %v4296, 1.0
        %v5098 = vadd.f32 %v4298, 1.0
        %v5099 = vadd.f32 %v4300, 1.0
        %v5100 = vadd.f32 %v4302, 1.0
        %v5101 = vadd.f32 %v4304, 1.0
        %v5102 = vadd.f32 %v4306, 1.0
        %v5103 = vadd.f32 %v4308, 1.0
        %v5104 = vadd.f32 %v4310, 1.0
        %v5105 = vadd.f32 %v4312, 1.0
        %v5106 = vadd.f32 %v4314, 1.0
        %v5107 = vadd.f32 %v4316, 1.0
        %v5108 = vadd.f32 %v4318, 1.0
        %v5109 = vadd.f32 %v4320, 1.0
        %v5110 = vadd.f32 %v4322, 1.0
        %v5111 = vadd.f32 %v4324, 1.0
        %v5112 = vadd.f32 %v4326, 1.0
        %v5113 = vadd.f32 %v4328, 1.0
        %v5114 = vadd.f32 %v4330, 1.0
        %v5115 = vadd.f32 %v4332, 1.0
        %v5116 = vadd.f32 %v4334, 1.0
        %v5117 = vadd.f32 %v4336, 1.0
        %v5118 = vadd.f32 %v4338, 1.0
        %v5119 = vadd.f32 %v4340, 1.0
        %v5120 = vadd.f32 %v4342, 1.0
        %v5121 = vadd.f32 %v4344, 1.0
        %v5122 = vadd.f32 %v4346, 1.0
        %v5123 = vadd.f32 %v4348, 1.0
        %v5124 = vadd.f32 %v4350, 1.0
        %v5125 = vadd.f32 %v4352, 1.0
        %v5126 = vadd.f32 %v4354, 1.0
        %v5127 = vadd.f32 %v4356, 1.0
        %v5128 = vadd.f32 %v4358, 1.0
        %v5129 = vadd.f32 %v4360, 1.0
        %v5130 = vadd.f32 %v4362, 1.0
        %v5131 = vadd.f32 %v4364, 1.0
        %v5132 = vadd.f32 %v4366, 1.0
        %v5133 = vadd.f32 %v4368, 1.0
        %v5134 = vadd.f32 %v4370, 1.0
        %v5135 = vadd.f32 %v4372, 1.0
        %v5136 = vadd.f32 %v4374, 1.0
        %v5137 = vadd.f32 %v4376, 1.0
        %v5138 = vadd.f32 %v4378, 1.0
        %v5139 = vadd.f32 %v4380, 1.0
        %v5140 = vadd.f32 %v4382, 1.0
        %v5141 = vadd.f32 %v4384, 1.0
        %v5142 = vadd.f32 %v4386, 1.0
        %v5143 = vadd.f32 %v4388, 1.0
        %v5144 = vadd.f32 %v4390, 1.0
        %v5145 = vadd.f32 %v4392, 1.0
        %v5146 = vadd.f32 %v4394, 1.0
        %v5147 = vadd.f32 %v4396, 1.0
        %v5148 = vadd.f32 %v4398, 1.0
        %v5149 = vadd.f32 %v4400, 1.0
        %v5150 = vadd.f32 %v4402, 1.0
        %v5151 = vadd.f32 %v4404, 1.0
        %v5152 = vadd.f32 %v4406, 1.0
        %v5153 = vadd.f32 %v4408, 1.0
        %v5154 = vadd.f32 %v4410, 1.0
        %v5155 = vadd.f32 %v4412, 1.0
        %v5156 = vadd.f32 %v4414, 1.0
        %v5157 = vadd.f32 %v4416, 1.0
        %v5158 = vadd.f32 %v4418, 1.0
        %v5159 = vadd.f32 %v4420, 1.0
        %v5160 = vadd.f32 %v4422, 1.0
        %v5161 = vadd.f32 %v4424, 1.0
        %v5162 = vadd.f32 %v4426, 1.0
        %v5163 = vadd.f32 %v4428, 1.0
        %v5164 = vadd.f32 %v4430, 1.0
        %v5165 = vadd.f32 %v4432, 1.0
        %v5166 = vadd.f32 %v4434, 1.0
        %v5167 = vadd.f32 %v4436, 1.0
        %v5168 = vadd.f32 %v4438, 1.0
        %v5169 = vadd.f32 %v4440, 1.0
        %v5170 = vadd.f32 %v4442, 1.0
        %v5171 = vadd.f32 %v4444, 1.0
        %v5172 = vadd.f32 %v4446, 1.0
        %v5173 = vadd.f32 %v4448, 1.0
        %v5174 = vadd.f32 %v4450, 1.0
        %v5175 = vadd.f32 %v4452, 1.0
        %v5176 = vadd.f32 %v4454, 1.0
        %v5177 = vadd.f32 %v4456, 1.0
        %v5178 = vadd.f32 %v4458, 1.0
        %v5179 = vadd.f32 %v4460, 1.0
        %v5180 = vadd.f32 %v4462, 1.0
        %v5181 = vadd.f32 %v4464, 1.0
        %v5182 = vadd.f32 %v4466, 1.0
        %v5183 = vadd.f32 %v4468, 1.0
        %v5184 = vadd.f32 %v4470, 1.0
        %v5185 = vadd.f32 %v4472, 1.0
        %v5186 = vadd.f32 %v4474, 1.0
        %v5187 = vadd.f32 %v4476, 1.0
        %v5188 = vadd.f32 %v4478, 1.0
        %v5189 = vadd.f32 %v4480, 1.0
        %v5190 = vadd.f32 %v4482, 1.0
        %v5191 = vadd.f32 %v4484, 1.0
        %v5192 = vadd.f32 %v4486, 1.0
        %v5193 = vadd.f32 %v4488, 1.0
        %v5194 = vadd.f32 %v4490, 1.0
        %v5195 = vadd.f32 %v4492, 1.0
        %v5196 = vadd.f32 %v4494, 1.0
        %v5197 = vadd.f32 %v4496, 1.0
        %v5198 = vadd.f32 %v4498, 1.0
        %v5199 = vadd.f32 %v4500, 1.0
        %v5200 = vadd.f32 %v4502, 1.0
        %v5201 = vadd.f32 %v4504, 1.0
        %v5202 = vadd.f32 %v4506, 1.0
        %v5203 = vadd.f32 %v4508, 1.0
        %v5204 = vadd.f32 %v4510, 1.0
        %v5205 = vadd.f32 %v4512, 1.0
        %v5206 = vadd.f32 %v4514, 1.0
        %v5207 = vadd.f32 %v4516, 1.0
        %v5208 = vadd.f32 %v4518, 1.0
        %v5209 = vadd.f32 %v4520, 1.0
        %v5210 = vadd.f32 %v4522, 1.0
        %v5211 = vadd.f32 %v4524, 1.0
        %v5212 = vadd.f32 %v4526, 1.0
        %v5213 = vadd.f32 %v4528, 1.0
        %v5214 = vadd.f32 %v4530, 1.0
        %v5215 = vadd.f32 %v4532, 1.0
        %v5216 = vadd.f32 %v4534, 1.0
        %v5217 = vadd.f32 %v4536, 1.0
        %v5218 = vadd.f32 %v4538, 1.0
        %v5219 = vadd.f32 %v4540, 1.0
        %v5220 = vadd.f32 %v4542, 1.0
        %v5221 = vadd.f32 %v4544, 1.0
        %v5222 = vadd.f32 %v4546, 1.0
        %v5223 = vadd.f32 %v4548, 1.0
        %v5224 = vadd.f32 %v4550, 1.0
        %v5225 = vadd.f32 %v4552, 1.0
        %v5226 = vadd.f32 %v4554, 1.0
        %v5227 = vadd.f32 %v4556, 1.0
        %v5228 = vadd.f32 %v4558, 1.0
        %v5229 = vadd.f32 %v4560, 1.0
        %v5230 = vadd.f32 %v4562, 1.0
        %v5231 = vadd.f32 %v4564, 1.0
        %v5232 = vadd.f32 %v4566, 1.0
        %v5233 = vadd.f32 %v4568, 1.0
        %v5234 = vadd.f32 %v4570, 1.0
        %v5235 = vadd.f32 %v4572, 1.0
        %v5236 = vadd.f32 %v4574, 1.0
        %v5237 = vadd.f32 %v4576, 1.0
        %v5238 = vadd.f32 %v4578, 1.0
        %v5239 = vadd.f32 %v4580, 1.0
        %v5240 = vadd.f32 %v4582, 1.0
        %v5241 = vadd.f32 %v4584, 1.0
        %v5242 = vadd.f32 %v4586, 1.0
        %v5243 = vadd.f32 %v4588, 1.0
        %v5244 = vadd.f32 %v4590, 1.0
        %v5245 = vadd.f32 %v4592, 1.0
        %v5246 = vadd.f32 %v4594, 1.0
        %v5247 = vadd.f32 %v4596, 1.0
        %v5248 = vadd.f32 %v4598, 1.0
        %v5249 = vadd.f32 %v4600, 1.0
        %v5250 = vadd.f32 %v4602, 1.0
        %v5251 = vadd.f32 %v4604, 1.0
        %v5252 = vadd.f32 %v4606, 1.0
        %v5253 = vadd.f32 %v4608, 1.0
        %v5254 = vadd.f32 %v4610, 1.0
        %v5255 = vadd.f32 %v4612, 1.0
        %v5256 = vadd.f32 %v4614, 1.0
        %v5257 = vadd.f32 %v4616, 1.0
        %v5258 = vadd.f32 %v4618, 1.0
        %v5259 = vrcp.pop %v4619
        %v5260 = vrcp.pop %v4620
        %v5261 = vrcp.pop %v4621
        %v5262 = vrcp.pop %v4622
        %v5263 = vrcp.pop %v4623
        %v5264 = vrcp.pop %v4624
        %v5265 = vrcp.pop %v4625
        %v5266 = vrcp.pop %v4626
        %v5267 = vrcp.pop %v4627
        %v5268 = vrcp.pop %v4628
        %v5269 = vrcp.pop %v4629
        %v5270 = vrcp.pop %v4630
        %v5271 = vrcp.pop %v4631
        %v5272 = vrcp.pop %v4632
        %v5273 = vrcp.pop %v4633
        %v5274 = vrcp.pop %v4634
        %v5275 = vrcp.pop %v4635
        %v5276 = vrcp.pop %v4636
        %v5277 = vrcp.pop %v4637
        %v5278 = vrcp.pop %v4638
        %v5279 = vrcp.pop %v4639
        %v5280 = vrcp.pop %v4640
        %v5281 = vrcp.pop %v4641
        %v5282 = vrcp.pop %v4642
        %v5283 = vrcp.pop %v4643
        %v5284 = vrcp.pop %v4644
        %v5285 = vrcp.pop %v4645
        %v5286 = vrcp.pop %v4646
        %v5287 = vrcp.pop %v4647
        %v5288 = vrcp.pop %v4648
        %v5289 = vrcp.pop %v4649
        %v5290 = vrcp.pop %v4650
        %v5291 = vrcp.pop %v4651
        %v5292 = vrcp.pop %v4652
        %v5293 = vrcp.pop %v4653
        %v5294 = vrcp.pop %v4654
        %v5295 = vrcp.pop %v4655
        %v5296 = vrcp.pop %v4656
        %v5297 = vrcp.pop %v4657
        %v5298 = vrcp.pop %v4658
        %v5299 = vrcp.pop %v4659
        %v5300 = vrcp.pop %v4660
        %v5301 = vrcp.pop %v4661
        %v5302 = vrcp.pop %v4662
        %v5303 = vrcp.pop %v4663
        %v5304 = vrcp.pop %v4664
        %v5305 = vrcp.pop %v4665
        %v5306 = vrcp.pop %v4666
        %v5307 = vrcp.pop %v4667
        %v5308 = vrcp.pop %v4668
        %v5309 = vrcp.pop %v4669
        %v5310 = vrcp.pop %v4670
        %v5311 = vrcp.pop %v4671
        %v5312 = vrcp.pop %v4672
        %v5313 = vrcp.pop %v4673
        %v5314 = vrcp.pop %v4674
        %v5315 = vrcp.pop %v4675
        %v5316 = vrcp.pop %v4676
        %v5317 = vrcp.pop %v4677
        %v5318 = vrcp.pop %v4678
        %v5319 = vrcp.pop %v4679
        %v5320 = vrcp.pop %v4680
        %v5321 = vrcp.pop %v4681
        %v5322 = vrcp.pop %v4682
        %v5323 = vrcp.pop %v4683
        %v5324 = vrcp.pop %v4684
        %v5325 = vrcp.pop %v4685
        %v5326 = vrcp.pop %v4686
        %v5327 = vrcp.pop %v4687
        %v5328 = vrcp.pop %v4688
        %v5329 = vrcp.pop %v4689
        %v5330 = vrcp.pop %v4690
        %v5331 = vrcp.pop %v4691
        %v5332 = vrcp.pop %v4692
        %v5333 = vrcp.pop %v4693
        %v5334 = vrcp.pop %v4694
        %v5335 = vrcp.pop %v4695
        %v5336 = vrcp.pop %v4696
        %v5337 = vrcp.pop %v4697
        %v5338 = vrcp.pop %v4698
        %v5339 = vrcp.pop %v4699
        %v5340 = vrcp.pop %v4700
        %v5341 = vrcp.pop %v4701
        %v5342 = vrcp.pop %v4702
        %v5343 = vrcp.pop %v4703
        %v5344 = vrcp.pop %v4704
        %v5345 = vrcp.pop %v4705
        %v5346 = vrcp.pop %v4706
        %v5347 = vrcp.pop %v4707
        %v5348 = vrcp.pop %v4708
        %v5349 = vrcp.pop %v4709
        %v5350 = vrcp.pop %v4710
        %v5351 = vrcp.pop %v4711
        %v5352 = vrcp.pop %v4712
        %v5353 = vrcp.pop %v4713
        %v5354 = vrcp.pop %v4714
        %v5355 = vrcp.pop %v4715
        %v5356 = vrcp.pop %v4716
        %v5357 = vrcp.pop %v4717
        %v5358 = vrcp.pop %v4718
        %v5359 = vrcp.pop %v4719
        %v5360 = vrcp.pop %v4720
        %v5361 = vrcp.pop %v4721
        %v5362 = vrcp.pop %v4722
        %v5363 = vrcp.pop %v4723
        %v5364 = vrcp.pop %v4724
        %v5365 = vrcp.pop %v4725
        %v5366 = vrcp.pop %v4726
        %v5367 = vrcp.pop %v4727
        %v5368 = vrcp.pop %v4728
        %v5369 = vrcp.pop %v4729
        %v5370 = vrcp.pop %v4730
        %v5371 = vrcp.pop %v4731
        %v5372 = vrcp.pop %v4732
        %v5373 = vrcp.pop %v4733
        %v5374 = vrcp.pop %v4734
        %v5375 = vrcp.pop %v4735
        %v5376 = vrcp.pop %v4736
        %v5377 = vrcp.pop %v4737
        %v5378 = vrcp.pop %v4738
        %v5379 = vrcp.pop %v4739
        %v5380 = vrcp.pop %v4740
        %v5381 = vrcp.pop %v4741
        %v5382 = vrcp.pop %v4742
        %v5383 = vrcp.pop %v4743
        %v5384 = vrcp.pop %v4744
        %v5385 = vrcp.pop %v4745
        %v5386 = vrcp.pop %v4746
        %v5387 = vrcp.pop %v4747
        %v5388 = vrcp.pop %v4748
        %v5389 = vrcp.pop %v4749
        %v5390 = vrcp.pop %v4750
        %v5391 = vrcp.pop %v4751
        %v5392 = vrcp.pop %v4752
        %v5393 = vrcp.pop %v4753
        %v5394 = vrcp.pop %v4754
        %v5395 = vrcp.pop %v4755
        %v5396 = vrcp.pop %v4756
        %v5397 = vrcp.pop %v4757
        %v5398 = vrcp.pop %v4758
        %v5399 = vrcp.pop %v4759
        %v5400 = vrcp.pop %v4760
        %v5401 = vrcp.pop %v4761
        %v5402 = vrcp.pop %v4762
        %v5403 = vrcp.pop %v4763
        %v5404 = vrcp.pop %v4764
        %v5405 = vrcp.pop %v4765
        %v5406 = vrcp.pop %v4766
        %v5407 = vrcp.pop %v4767
        %v5408 = vrcp.pop %v4768
        %v5409 = vrcp.pop %v4769
        %v5410 = vrcp.pop %v4770
        %v5411 = vrcp.pop %v4771
        %v5412 = vrcp.pop %v4772
        %v5413 = vrcp.pop %v4773
        %v5414 = vrcp.pop %v4774
        %v5415 = vrcp.pop %v4775
        %v5416 = vrcp.pop %v4776
        %v5417 = vrcp.pop %v4777
        %v5418 = vrcp.pop %v4778
        %v5419 = vrcp.pop %v4779
        %v5420 = vrcp.pop %v4780
        %v5421 = vrcp.pop %v4781
        %v5422 = vrcp.pop %v4782
        %v5423 = vrcp.pop %v4783
        %v5424 = vrcp.pop %v4784
        %v5425 = vrcp.pop %v4785
        %v5426 = vrcp.pop %v4786
        %v5427 = vrcp.pop %v4787
        %v5428 = vrcp.pop %v4788
        %v5429 = vrcp.pop %v4789
        %v5430 = vrcp.pop %v4790
        %v5431 = vrcp.pop %v4791
        %v5432 = vrcp.pop %v4792
        %v5433 = vrcp.pop %v4793
        %v5434 = vrcp.pop %v4794
        %v5435 = vrcp.pop %v4795
        %v5436 = vrcp.pop %v4796
        %v5437 = vrcp.pop %v4797
        %v5438 = vrcp.pop %v4798
        %v5439 = vrcp.pop %v4799
        %v5440 = vrcp.pop %v4800
        %v5441 = vrcp.pop %v4801
        %v5442 = vrcp.pop %v4802
        %v5443 = vrcp.pop %v4803
        %v5444 = vrcp.pop %v4804
        %v5445 = vrcp.pop %v4805
        %v5446 = vrcp.pop %v4806
        %v5447 = vrcp.pop %v4807
        %v5448 = vrcp.pop %v4808
        %v5449 = vrcp.pop %v4809
        %v5450 = vrcp.pop %v4810
        %v5451 = vrcp.pop %v4811
        %v5452 = vrcp.pop %v4812
        %v5453 = vrcp.pop %v4813
        %v5454 = vrcp.pop %v4814
        %v5455 = vrcp.pop %v4815
        %v5456 = vrcp.pop %v4816
        %v5457 = vrcp.pop %v4817
        %v5458 = vrcp.pop %v4818
        %v5459 = vrcp.pop %v4819
        %v5460 = vrcp.pop %v4820
        %v5461 = vrcp.pop %v4821
        %v5462 = vrcp.pop %v4822
        %v5463 = vrcp.pop %v4823
        %v5464 = vrcp.pop %v4824
        %v5465 = vrcp.pop %v4825
        %v5466 = vrcp.pop %v4826
        %v5467 = vrcp.pop %v4827
        %v5468 = vrcp.pop %v4828
        %v5469 = vrcp.pop %v4829
        %v5470 = vrcp.pop %v4830
        %v5471 = vrcp.pop %v4831
        %v5472 = vrcp.pop %v4832
        %v5473 = vrcp.pop %v4833
        %v5474 = vrcp.pop %v4834
        %v5475 = vrcp.pop %v4835
        %v5476 = vrcp.pop %v4836
        %v5477 = vrcp.pop %v4837
        %v5478 = vrcp.pop %v4838
        %v5479 = vrcp.pop %v4839
        %v5480 = vrcp.pop %v4840
        %v5481 = vrcp.pop %v4841
        %v5482 = vrcp.pop %v4842
        %v5483 = vrcp.pop %v4843
        %v5484 = vrcp.pop %v4844
        %v5485 = vrcp.pop %v4845
        %v5486 = vrcp.pop %v4846
        %v5487 = vrcp.pop %v4847
        %v5488 = vrcp.pop %v4848
        %v5489 = vrcp.pop %v4849
        %v5490 = vrcp.pop %v4850
        %v5491 = vrcp.pop %v4851
        %v5492 = vrcp.pop %v4852
        %v5493 = vrcp.pop %v4853
        %v5494 = vrcp.pop %v4854
        %v5495 = vrcp.pop %v4855
        %v5496 = vrcp.pop %v4856
        %v5497 = vrcp.pop %v4857
        %v5498 = vrcp.pop %v4858
        %v5499 = vrcp.pop %v4859
        %v5500 = vrcp.pop %v4860
        %v5501 = vrcp.pop %v4861
        %v5502 = vrcp.pop %v4862
        %v5503 = vrcp.pop %v4863
        %v5504 = vrcp.pop %v4864
        %v5505 = vrcp.pop %v4865
        %v5506 = vrcp.pop %v4866
        %v5507 = vrcp.pop %v4867
        %v5508 = vrcp.pop %v4868
        %v5509 = vrcp.pop %v4869
        %v5510 = vrcp.pop %v4870
        %v5511 = vrcp.pop %v4871
        %v5512 = vrcp.pop %v4872
        %v5513 = vrcp.pop %v4873
        %v5514 = vrcp.pop %v4874
        %v5515 = vrcp.pop %v4875
        %v5516 = vrcp.pop %v4876
        %v5517 = vrcp.pop %v4877
        %v5518 = vrcp.pop %v4878
        %v5519 = vrcp.pop %v4879
        %v5520 = vrcp.pop %v4880
        %v5521 = vrcp.pop %v4881
        %v5522 = vrcp.pop %v4882
        %v5523 = vrcp.pop %v4883
        %v5524 = vrcp.pop %v4884
        %v5525 = vrcp.pop %v4885
        %v5526 = vrcp.pop %v4886
        %v5527 = vrcp.pop %v4887
        %v5528 = vrcp.pop %v4888
        %v5529 = vrcp.pop %v4889
        %v5530 = vrcp.pop %v4890
        %v5531 = vrcp.pop %v4891
        %v5532 = vrcp.pop %v4892
        %v5533 = vrcp.pop %v4893
        %v5534 = vrcp.pop %v4894
        %v5535 = vrcp.pop %v4895
        %v5536 = vrcp.pop %v4896
        %v5537 = vrcp.pop %v4897
        %v5538 = vrcp.pop %v4898
        %v5539 = vrcp.pop %v4899
        %v5540 = vrcp.pop %v4900
        %v5541 = vrcp.pop %v4901
        %v5542 = vrcp.pop %v4902
        %v5543 = vrcp.pop %v4903
        %v5544 = vrcp.pop %v4904
        %v5545 = vrcp.pop %v4905
        %v5546 = vrcp.pop %v4906
        %v5547 = vrcp.pop %v4907
        %v5548 = vrcp.pop %v4908
        %v5549 = vrcp.pop %v4909
        %v5550 = vrcp.pop %v4910
        %v5551 = vrcp.pop %v4911
        %v5552 = vrcp.pop %v4912
        %v5553 = vrcp.pop %v4913
        %v5554 = vrcp.pop %v4914
        %v5555 = vrcp.pop %v4915
        %v5556 = vrcp.pop %v4916
        %v5557 = vrcp.pop %v4917
        %v5558 = vrcp.pop %v4918
        %v5559 = vrcp.pop %v4919
        %v5560 = vrcp.pop %v4920
        %v5561 = vrcp.pop %v4921
        %v5562 = vrcp.pop %v4922
        %v5563 = vrcp.pop %v4923
        %v5564 = vrcp.pop %v4924
        %v5565 = vrcp.pop %v4925
        %v5566 = vrcp.pop %v4926
        %v5567 = vrcp.pop %v4927
        %v5568 = vrcp.pop %v4928
        %v5569 = vrcp.pop %v4929
        %v5570 = vrcp.pop %v4930
        %v5571 = vrcp.pop %v4931
        %v5572 = vrcp.pop %v4932
        %v5573 = vrcp.pop %v4933
        %v5574 = vrcp.pop %v4934
        %v5575 = vrcp.pop %v4935
        %v5576 = vrcp.pop %v4936
        %v5577 = vrcp.pop %v4937
        %v5578 = vrcp.pop %v4938
        %v5579 = vrcp.pop %v4939
        %v5580 = vrcp.pop %v4940
        %v5581 = vrcp.pop %v4941
        %v5582 = vrcp.pop %v4942
        %v5583 = vrcp.pop %v4943
        %v5584 = vrcp.pop %v4944
        %v5585 = vrcp.pop %v4945
        %v5586 = vrcp.pop %v4946
        %v5587 = vrcp.pop %v4947
        %v5588 = vrcp.pop %v4948
        %v5589 = vrcp.pop %v4949
        %v5590 = vrcp.pop %v4950
        %v5591 = vrcp.pop %v4951
        %v5592 = vrcp.pop %v4952
        %v5593 = vrcp.pop %v4953
        %v5594 = vrcp.pop %v4954
        %v5595 = vrcp.pop %v4955
        %v5596 = vrcp.pop %v4956
        %v5597 = vrcp.pop %v4957
        %v5598 = vrcp.pop %v4958
        %v5599 = vrcp.pop %v4959
        %v5600 = vrcp.pop %v4960
        %v5601 = vrcp.pop %v4961
        %v5602 = vrcp.pop %v4962
        %v5603 = vrcp.pop %v4963
        %v5604 = vrcp.pop %v4964
        %v5605 = vrcp.pop %v4965
        %v5606 = vrcp.pop %v4966
        %v5607 = vrcp.pop %v4967
        %v5608 = vrcp.pop %v4968
        %v5609 = vrcp.pop %v4969
        %v5610 = vrcp.pop %v4970
        %v5611 = vrcp.pop %v4971
        %v5612 = vrcp.pop %v4972
        %v5613 = vrcp.pop %v4973
        %v5614 = vrcp.pop %v4974
        %v5615 = vrcp.pop %v4975
        %v5616 = vrcp.pop %v4976
        %v5617 = vrcp.pop %v4977
        %v5618 = vrcp.pop %v4978
        %v5619 = vrcp.pop %v4979
        %v5620 = vrcp.pop %v4980
        %v5621 = vrcp.pop %v4981
        %v5622 = vrcp.pop %v4982
        %v5623 = vrcp.pop %v4983
        %v5624 = vrcp.pop %v4984
        %v5625 = vrcp.pop %v4985
        %v5626 = vrcp.pop %v4986
        %v5627 = vrcp.pop %v4987
        %v5628 = vrcp.pop %v4988
        %v5629 = vrcp.pop %v4989
        %v5630 = vrcp.pop %v4990
        %v5631 = vrcp.pop %v4991
        %v5632 = vrcp.pop %v4992
        %v5633 = vrcp.pop %v4993
        %v5634 = vrcp.pop %v4994
        %v5635 = vrcp.pop %v4995
        %v5636 = vrcp.pop %v4996
        %v5637 = vrcp.pop %v4997
        %v5638 = vrcp.pop %v4998
        %v5639 = vrcp.pop %v4999
        %v5640 = vrcp.pop %v5000
        %v5641 = vrcp.pop %v5001
        %v5642 = vrcp.pop %v5002
        %v5643 = vrcp.pop %v5003
        %v5644 = vrcp.pop %v5004
        %v5645 = vrcp.pop %v5005
        %v5646 = vrcp.pop %v5006
        %v5647 = vrcp.pop %v5007
        %v5648 = vrcp.pop %v5008
        %v5649 = vrcp.pop %v5009
        %v5650 = vrcp.pop %v5010
        %v5651 = vrcp.pop %v5011
        %v5652 = vrcp.pop %v5012
        %v5653 = vrcp.pop %v5013
        %v5654 = vrcp.pop %v5014
        %v5655 = vrcp.pop %v5015
        %v5656 = vrcp.pop %v5016
        %v5657 = vrcp.pop %v5017
        %v5658 = vrcp.pop %v5018
        %v5659 = vrcp.pop %v5019
        %v5660 = vrcp.pop %v5020
        %v5661 = vrcp.pop %v5021
        %v5662 = vrcp.pop %v5022
        %v5663 = vrcp.pop %v5023
        %v5664 = vrcp.pop %v5024
        %v5665 = vrcp.pop %v5025
        %v5666 = vrcp.pop %v5026
        %v5667 = vrcp.pop %v5027
        %v5668 = vrcp.pop %v5028
        %v5669 = vrcp.pop %v5029
        %v5670 = vrcp.pop %v5030
        %v5671 = vrcp.pop %v5031
        %v5672 = vrcp.pop %v5032
        %v5673 = vrcp.pop %v5033
        %v5674 = vrcp.pop %v5034
        %v5675 = vrcp.pop %v5035
        %v5676 = vrcp.pop %v5036
        %v5677 = vrcp.pop %v5037
        %v5678 = vrcp.pop %v5038
        %v5679 = vrcp.pop %v5039
        %v5680 = vrcp.pop %v5040
        %v5681 = vrcp.pop %v5041
        %v5682 = vrcp.pop %v5042
        %v5683 = vrcp.pop %v5043
        %v5684 = vrcp.pop %v5044
        %v5685 = vrcp.pop %v5045
        %v5686 = vrcp.pop %v5046
        %v5687 = vrcp.pop %v5047
        %v5688 = vrcp.pop %v5048
        %v5689 = vrcp.pop %v5049
        %v5690 = vrcp.pop %v5050
        %v5691 = vrcp.pop %v5051
        %v5692 = vrcp.pop %v5052
        %v5693 = vrcp.pop %v5053
        %v5694 = vrcp.pop %v5054
        %v5695 = vrcp.pop %v5055
        %v5696 = vrcp.pop %v5056
        %v5697 = vrcp.pop %v5057
        %v5698 = vrcp.pop %v5058
        %v5699 = vrcp.pop %v5059
        %v5700 = vrcp.pop %v5060
        %v5701 = vrcp.pop %v5061
        %v5702 = vrcp.pop %v5062
        %v5703 = vrcp.pop %v5063
        %v5704 = vrcp.pop %v5064
        %v5705 = vrcp.pop %v5065
        %v5706 = vrcp.pop %v5066
        %v5707 = vrcp.pop %v5067
        %v5708 = vrcp.pop %v5068
        %v5709 = vrcp.pop %v5069
        %v5710 = vrcp.pop %v5070
        %v5711 = vrcp.pop %v5071
        %v5712 = vrcp.pop %v5072
        %v5713 = vrcp.pop %v5073
        %v5714 = vrcp.pop %v5074
        %v5715 = vrcp.pop %v5075
        %v5716 = vrcp.pop %v5076
        %v5717 = vrcp.pop %v5077
        %v5718 = vrcp.pop %v5078
        %v5719 = vrcp.pop %v5079
        %v5720 = vrcp.pop %v5080
        %v5721 = vrcp.pop %v5081
        %v5722 = vrcp.pop %v5082
        %v5723 = vrcp.pop %v5083
        %v5724 = vrcp.pop %v5084
        %v5725 = vrcp.pop %v5085
        %v5726 = vrcp.pop %v5086
        %v5727 = vrcp.pop %v5087
        %v5728 = vrcp.pop %v5088
        %v5729 = vrcp.pop %v5089
        %v5730 = vrcp.pop %v5090
        %v5731 = vrcp.pop %v5091
        %v5732 = vrcp.pop %v5092
        %v5733 = vrcp.pop %v5093
        %v5734 = vrcp.pop %v5094
        %v5735 = vrcp.pop %v5095
        %v5736 = vrcp.pop %v5096
        %v5737 = vrcp.pop %v5097
        %v5738 = vrcp.pop %v5098
        %v5739 = vrcp.pop %v5099
        %v5740 = vrcp.pop %v5100
        %v5741 = vrcp.pop %v5101
        %v5742 = vrcp.pop %v5102
        %v5743 = vrcp.pop %v5103
        %v5744 = vrcp.pop %v5104
        %v5745 = vrcp.pop %v5105
        %v5746 = vrcp.pop %v5106
        %v5747 = vrcp.pop %v5107
        %v5748 = vrcp.pop %v5108
        %v5749 = vrcp.pop %v5109
        %v5750 = vrcp.pop %v5110
        %v5751 = vrcp.pop %v5111
        %v5752 = vrcp.pop %v5112
        %v5753 = vrcp.pop %v5113
        %v5754 = vrcp.pop %v5114
        %v5755 = vrcp.pop %v5115
        %v5756 = vrcp.pop %v5116
        %v5757 = vrcp.pop %v5117
        %v5758 = vrcp.pop %v5118
        %v5759 = vrcp.pop %v5119
        %v5760 = vrcp.pop %v5120
        %v5761 = vrcp.pop %v5121
        %v5762 = vrcp.pop %v5122
        %v5763 = vrcp.pop %v5123
        %v5764 = vrcp.pop %v5124
        %v5765 = vrcp.pop %v5125
        %v5766 = vrcp.pop %v5126
        %v5767 = vrcp.pop %v5127
        %v5768 = vrcp.pop %v5128
        %v5769 = vrcp.pop %v5129
        %v5770 = vrcp.pop %v5130
        %v5771 = vrcp.pop %v5131
        %v5772 = vrcp.pop %v5132
        %v5773 = vrcp.pop %v5133
        %v5774 = vrcp.pop %v5134
        %v5775 = vrcp.pop %v5135
        %v5776 = vrcp.pop %v5136
        %v5777 = vrcp.pop %v5137
        %v5778 = vrcp.pop %v5138
        %v5779 = vrcp.pop %v5139
        %v5780 = vrcp.pop %v5140
        %v5781 = vrcp.pop %v5141
        %v5782 = vrcp.pop %v5142
        %v5783 = vrcp.pop %v5143
        %v5784 = vrcp.pop %v5144
        %v5785 = vrcp.pop %v5145
        %v5786 = vrcp.pop %v5146
        %v5787 = vrcp.pop %v5147
        %v5788 = vrcp.pop %v5148
        %v5789 = vrcp.pop %v5149
        %v5790 = vrcp.pop %v5150
        %v5791 = vrcp.pop %v5151
        %v5792 = vrcp.pop %v5152
        %v5793 = vrcp.pop %v5153
        %v5794 = vrcp.pop %v5154
        %v5795 = vrcp.pop %v5155
        %v5796 = vrcp.pop %v5156
        %v5797 = vrcp.pop %v5157
        %v5798 = vrcp.pop %v5158
        %v5799 = vrcp.pop %v5159
        %v5800 = vrcp.pop %v5160
        %v5801 = vrcp.pop %v5161
        %v5802 = vrcp.pop %v5162
        %v5803 = vrcp.pop %v5163
        %v5804 = vrcp.pop %v5164
        %v5805 = vrcp.pop %v5165
        %v5806 = vrcp.pop %v5166
        %v5807 = vrcp.pop %v5167
        %v5808 = vrcp.pop %v5168
        %v5809 = vrcp.pop %v5169
        %v5810 = vrcp.pop %v5170
        %v5811 = vrcp.pop %v5171
        %v5812 = vrcp.pop %v5172
        %v5813 = vrcp.pop %v5173
        %v5814 = vrcp.pop %v5174
        %v5815 = vrcp.pop %v5175
        %v5816 = vrcp.pop %v5176
        %v5817 = vrcp.pop %v5177
        %v5818 = vrcp.pop %v5178
        %v5819 = vrcp.pop %v5179
        %v5820 = vrcp.pop %v5180
        %v5821 = vrcp.pop %v5181
        %v5822 = vrcp.pop %v5182
        %v5823 = vrcp.pop %v5183
        %v5824 = vrcp.pop %v5184
        %v5825 = vrcp.pop %v5185
        %v5826 = vrcp.pop %v5186
        %v5827 = vrcp.pop %v5187
        %v5828 = vrcp.pop %v5188
        %v5829 = vrcp.pop %v5189
        %v5830 = vrcp.pop %v5190
        %v5831 = vrcp.pop %v5191
        %v5832 = vrcp.pop %v5192
        %v5833 = vrcp.pop %v5193
        %v5834 = vrcp.pop %v5194
        %v5835 = vrcp.pop %v5195
        %v5836 = vrcp.pop %v5196
        %v5837 = vrcp.pop %v5197
        %v5838 = vrcp.pop %v5198
        %v5839 = vrcp.pop %v5199
        %v5840 = vrcp.pop %v5200
        %v5841 = vrcp.pop %v5201
        %v5842 = vrcp.pop %v5202
        %v5843 = vrcp.pop %v5203
        %v5844 = vrcp.pop %v5204
        %v5845 = vrcp.pop %v5205
        %v5846 = vrcp.pop %v5206
        %v5847 = vrcp.pop %v5207
        %v5848 = vrcp.pop %v5208
        %v5849 = vrcp.pop %v5209
        %v5850 = vrcp.pop %v5210
        %v5851 = vrcp.pop %v5211
        %v5852 = vrcp.pop %v5212
        %v5853 = vrcp.pop %v5213
        %v5854 = vrcp.pop %v5214
        %v5855 = vrcp.pop %v5215
        %v5856 = vrcp.pop %v5216
        %v5857 = vrcp.pop %v5217
        %v5858 = vrcp.pop %v5218
        %v5859 = vrcp.pop %v5219
        %v5860 = vrcp.pop %v5220
        %v5861 = vrcp.pop %v5221
        %v5862 = vrcp.pop %v5222
        %v5863 = vrcp.pop %v5223
        %v5864 = vrcp.pop %v5224
        %v5865 = vrcp.pop %v5225
        %v5866 = vrcp.pop %v5226
        %v5867 = vrcp.pop %v5227
        %v5868 = vrcp.pop %v5228
        %v5869 = vrcp.pop %v5229
        %v5870 = vrcp.pop %v5230
        %v5871 = vrcp.pop %v5231
        %v5872 = vrcp.pop %v5232
        %v5873 = vrcp.pop %v5233
        %v5874 = vrcp.pop %v5234
        %v5875 = vrcp.pop %v5235
        %v5876 = vrcp.pop %v5236
        %v5877 = vrcp.pop %v5237
        %v5878 = vrcp.pop %v5238
        %v5879 = vrcp.pop %v5239
        %v5880 = vrcp.pop %v5240
        %v5881 = vrcp.pop %v5241
        %v5882 = vrcp.pop %v5242
        %v5883 = vrcp.pop %v5243
        %v5884 = vrcp.pop %v5244
        %v5885 = vrcp.pop %v5245
        %v5886 = vrcp.pop %v5246
        %v5887 = vrcp.pop %v5247
        %v5888 = vrcp.pop %v5248
        %v5889 = vrcp.pop %v5249
        %v5890 = vrcp.pop %v5250
        %v5891 = vrcp.pop %v5251
        %v5892 = vrcp.pop %v5252
        %v5893 = vrcp.pop %v5253
        %v5894 = vrcp.pop %v5254
        %v5895 = vrcp.pop %v5255
        %v5896 = vrcp.pop %v5256
        %v5897 = vrcp.pop %v5257
        %v5898 = vrcp.pop %v5258
        %v5899 = vmul.f32 %v969, %v5259
        %v5900 = vmul.f32 %v971, %v5260
        %v5901 = vmul.f32 %v1322, %v5261
        %v5902 = vmul.f32 %v1324, %v5262
        %v5903 = vmul.f32 %v1675, %v5263
        %v5904 = vmul.f32 %v1677, %v5264
        %v5905 = vmul.f32 %v2028, %v5265
        %v5906 = vmul.f32 %v2030, %v5266
        %v5907 = vmul.f32 %v2381, %v5267
        %v5908 = vmul.f32 %v2383, %v5268
        %v5909 = vmul.f32 %v973, %v5269
        %v5910 = vmul.f32 %v975, %v5270
        %v5911 = vmul.f32 %v1326, %v5271
        %v5912 = vmul.f32 %v1328, %v5272
        %v5913 = vmul.f32 %v1679, %v5273
        %v5914 = vmul.f32 %v1681, %v5274
        %v5915 = vmul.f32 %v2032, %v5275
        %v5916 = vmul.f32 %v2034, %v5276
        %v5917 = vmul.f32 %v2385, %v5277
        %v5918 = vmul.f32 %v2387, %v5278
        %v5919 = vmul.f32 %v979, %v5279
        %v5920 = vmul.f32 %v981, %v5280
        %v5921 = vmul.f32 %v1332, %v5281
        %v5922 = vmul.f32 %v1334, %v5282
        %v5923 = vmul.f32 %v1685, %v5283
        %v5924 = vmul.f32 %v1687, %v5284
        %v5925 = vmul.f32 %v2038, %v5285
        %v5926 = vmul.f32 %v2040, %v5286
        %v5927 = vmul.f32 %v2391, %v5287
        %v5928 = vmul.f32 %v2393, %v5288
        %v5929 = vmul.f32 %v983, %v5289
        %v5930 = vmul.f32 %v985, %v5290
        %v5931 = vmul.f32 %v1336, %v5291
        %v5932 = vmul.f32 %v1338, %v5292
        %v5933 = vmul.f32 %v1689, %v5293
        %v5934 = vmul.f32 %v1691, %v5294
        %v5935 = vmul.f32 %v2042, %v5295
        %v5936 = vmul.f32 %v2044, %v5296
        %v5937 = vmul.f32 %v2395, %v5297
        %v5938 = vmul.f32 %v2397, %v5298
        %v5939 = vmul.f32 %v989, %v5299
        %v5940 = vmul.f32 %v991, %v5300
        %v5941 = vmul.f32 %v1342, %v5301
        %v5942 = vmul.f32 %v1344, %v5302
        %v5943 = vmul.f32 %v1695, %v5303
        %v5944 = vmul.f32 %v1697, %v5304
        %v5945 = vmul.f32 %v2048, %v5305
        %v5946 = vmul.f32 %v2050, %v5306
        %v5947 = vmul.f32 %v2401, %v5307
        %v5948 = vmul.f32 %v2403, %v5308
        %v5949 = vmul.f32 %v993, %v5309
        %v5950 = vmul.f32 %v995, %v5310
        %v5951 = vmul.f32 %v1346, %v5311
        %v5952 = vmul.f32 %v1348, %v5312
        %v5953 = vmul.f32 %v1699, %v5313
        %v5954 = vmul.f32 %v1701, %v5314
        %v5955 = vmul.f32 %v2052, %v5315
        %v5956 = vmul.f32 %v2054, %v5316
        %v5957 = vmul.f32 %v2405, %v5317
        %v5958 = vmul.f32 %v2407, %v5318
        %v5959 = vmul.f32 %v999, %v5319
        %v5960 = vmul.f32 %v1001, %v5320
        %v5961 = vmul.f32 %v1352, %v5321
        %v5962 = vmul.f32 %v1354, %v5322
        %v5963 = vmul.f32 %v1705, %v5323
        %v5964 = vmul.f32 %v1707, %v5324
        %v5965 = vmul.f32 %v2058, %v5325
        %v5966 = vmul.f32 %v2060, %v5326
        %v5967 = vmul.f32 %v2411, %v5327
        %v5968 = vmul.f32 %v2413, %v5328
        %v5969 = vmul.f32 %v1003, %v5329
        %v5970 = vmul.f32 %v1005, %v5330
        %v5971 = vmul.f32 %v1356, %v5331
        %v5972 = vmul.f32 %v1358, %v5332
        %v5973 = vmul.f32 %v1709, %v5333
        %v5974 = vmul.f32 %v1711, %v5334
        %v5975 = vmul.f32 %v2062, %v5335
        %v5976 = vmul.f32 %v2064, %v5336
        %v5977 = vmul.f32 %v2415, %v5337
        %v5978 = vmul.f32 %v2417, %v5338
        %v5979 = vmul.f32 %v1009, %v5339
        %v5980 = vmul.f32 %v1011, %v5340
        %v5981 = vmul.f32 %v1362, %v5341
        %v5982 = vmul.f32 %v1364, %v5342
        %v5983 = vmul.f32 %v1715, %v5343
        %v5984 = vmul.f32 %v1717, %v5344
        %v5985 = vmul.f32 %v2068, %v5345
        %v5986 = vmul.f32 %v2070, %v5346
        %v5987 = vmul.f32 %v2421, %v5347
        %v5988 = vmul.f32 %v2423, %v5348
        %v5989 = vmul.f32 %v1013, %v5349
        %v5990 = vmul.f32 %v1015, %v5350
        %v5991 = vmul.f32 %v1366, %v5351
        %v5992 = vmul.f32 %v1368, %v5352
        %v5993 = vmul.f32 %v1719, %v5353
        %v5994 = vmul.f32 %v1721, %v5354
        %v5995 = vmul.f32 %v2072, %v5355
        %v5996 = vmul.f32 %v2074, %v5356
        %v5997 = vmul.f32 %v2425, %v5357
        %v5998 = vmul.f32 %v2427, %v5358
        %v5999 = vmul.f32 %v1019, %v5359
        %v6000 = vmul.f32 %v1021, %v5360
        %v6001 = vmul.f32 %v1372, %v5361
        %v6002 = vmul.f32 %v1374, %v5362
        %v6003 = vmul.f32 %v1725, %v5363
        %v6004 = vmul.f32 %v1727, %v5364
        %v6005 = vmul.f32 %v2078, %v5365
        %v6006 = vmul.f32 %v2080, %v5366
        %v6007 = vmul.f32 %v2431, %v5367
        %v6008 = vmul.f32 %v2433, %v5368
        %v6009 = vmul.f32 %v1023, %v5369
        %v6010 = vmul.f32 %v1025, %v5370
        %v6011 = vmul.f32 %v1376, %v5371
        %v6012 = vmul.f32 %v1378, %v5372
        %v6013 = vmul.f32 %v1729, %v5373
        %v6014 = vmul.f32 %v1731, %v5374
        %v6015 = vmul.f32 %v2082, %v5375
        %v6016 = vmul.f32 %v2084, %v5376
        %v6017 = vmul.f32 %v2435, %v5377
        %v6018 = vmul.f32 %v2437, %v5378
        %v6019 = vmul.f32 %v1029, %v5379
        %v6020 = vmul.f32 %v1031, %v5380
        %v6021 = vmul.f32 %v1382, %v5381
        %v6022 = vmul.f32 %v1384, %v5382
        %v6023 = vmul.f32 %v1735, %v5383
        %v6024 = vmul.f32 %v1737, %v5384
        %v6025 = vmul.f32 %v2088, %v5385
        %v6026 = vmul.f32 %v2090, %v5386
        %v6027 = vmul.f32 %v2441, %v5387
        %v6028 = vmul.f32 %v2443, %v5388
        %v6029 = vmul.f32 %v1033, %v5389
        %v6030 = vmul.f32 %v1035, %v5390
        %v6031 = vmul.f32 %v1386, %v5391
        %v6032 = vmul.f32 %v1388, %v5392
        %v6033 = vmul.f32 %v1739, %v5393
        %v6034 = vmul.f32 %v1741, %v5394
        %v6035 = vmul.f32 %v2092, %v5395
        %v6036 = vmul.f32 %v2094, %v5396
        %v6037 = vmul.f32 %v2445, %v5397
        %v6038 = vmul.f32 %v2447, %v5398
        %v6039 = vmul.f32 %v1039, %v5399
        %v6040 = vmul.f32 %v1041, %v5400
        %v6041 = vmul.f32 %v1392, %v5401
        %v6042 = vmul.f32 %v1394, %v5402
        %v6043 = vmul.f32 %v1745, %v5403
        %v6044 = vmul.f32 %v1747, %v5404
        %v6045 = vmul.f32 %v2098, %v5405
        %v6046 = vmul.f32 %v2100, %v5406
        %v6047 = vmul.f32 %v2451, %v5407
        %v6048 = vmul.f32 %v2453, %v5408
        %v6049 = vmul.f32 %v1043, %v5409
        %v6050 = vmul.f32 %v1045, %v5410
        %v6051 = vmul.f32 %v1396, %v5411
        %v6052 = vmul.f32 %v1398, %v5412
        %v6053 = vmul.f32 %v1749, %v5413
        %v6054 = vmul.f32 %v1751, %v5414
        %v6055 = vmul.f32 %v2102, %v5415
        %v6056 = vmul.f32 %v2104, %v5416
        %v6057 = vmul.f32 %v2455, %v5417
        %v6058 = vmul.f32 %v2457, %v5418
        %v6059 = vmul.f32 %v1049, %v5419
        %v6060 = vmul.f32 %v1051, %v5420
        %v6061 = vmul.f32 %v1402, %v5421
        %v6062 = vmul.f32 %v1404, %v5422
        %v6063 = vmul.f32 %v1755, %v5423
        %v6064 = vmul.f32 %v1757, %v5424
        %v6065 = vmul.f32 %v2108, %v5425
        %v6066 = vmul.f32 %v2110, %v5426
        %v6067 = vmul.f32 %v2461, %v5427
        %v6068 = vmul.f32 %v2463, %v5428
        %v6069 = vmul.f32 %v1053, %v5429
        %v6070 = vmul.f32 %v1055, %v5430
        %v6071 = vmul.f32 %v1406, %v5431
        %v6072 = vmul.f32 %v1408, %v5432
        %v6073 = vmul.f32 %v1759, %v5433
        %v6074 = vmul.f32 %v1761, %v5434
        %v6075 = vmul.f32 %v2112, %v5435
        %v6076 = vmul.f32 %v2114, %v5436
        %v6077 = vmul.f32 %v2465, %v5437
        %v6078 = vmul.f32 %v2467, %v5438
        %v6079 = vmul.f32 %v1059, %v5439
        %v6080 = vmul.f32 %v1061, %v5440
        %v6081 = vmul.f32 %v1412, %v5441
        %v6082 = vmul.f32 %v1414, %v5442
        %v6083 = vmul.f32 %v1765, %v5443
        %v6084 = vmul.f32 %v1767, %v5444
        %v6085 = vmul.f32 %v2118, %v5445
        %v6086 = vmul.f32 %v2120, %v5446
        %v6087 = vmul.f32 %v2471, %v5447
        %v6088 = vmul.f32 %v2473, %v5448
        %v6089 = vmul.f32 %v1063, %v5449
        %v6090 = vmul.f32 %v1065, %v5450
        %v6091 = vmul.f32 %v1416, %v5451
        %v6092 = vmul.f32 %v1418, %v5452
        %v6093 = vmul.f32 %v1769, %v5453
        %v6094 = vmul.f32 %v1771, %v5454
        %v6095 = vmul.f32 %v2122, %v5455
        %v6096 = vmul.f32 %v2124, %v5456
        %v6097 = vmul.f32 %v2475, %v5457
        %v6098 = vmul.f32 %v2477, %v5458
        %v6099 = vmul.f32 %v1069, %v5459
        %v6100 = vmul.f32 %v1071, %v5460
        %v6101 = vmul.f32 %v1422, %v5461
        %v6102 = vmul.f32 %v1424, %v5462
        %v6103 = vmul.f32 %v1775, %v5463
        %v6104 = vmul.f32 %v1777, %v5464
        %v6105 = vmul.f32 %v2128, %v5465
        %v6106 = vmul.f32 %v2130, %v5466
        %v6107 = vmul.f32 %v2481, %v5467
        %v6108 = vmul.f32 %v2483, %v5468
        %v6109 = vmul.f32 %v1073, %v5469
        %v6110 = vmul.f32 %v1075, %v5470
        %v6111 = vmul.f32 %v1426, %v5471
        %v6112 = vmul.f32 %v1428, %v5472
        %v6113 = vmul.f32 %v1779, %v5473
        %v6114 = vmul.f32 %v1781, %v5474
        %v6115 = vmul.f32 %v2132, %v5475
        %v6116 = vmul.f32 %v2134, %v5476
        %v6117 = vmul.f32 %v2485, %v5477
        %v6118 = vmul.f32 %v2487, %v5478
        %v6119 = vmul.f32 %v1079, %v5479
        %v6120 = vmul.f32 %v1081, %v5480
        %v6121 = vmul.f32 %v1432, %v5481
        %v6122 = vmul.f32 %v1434, %v5482
        %v6123 = vmul.f32 %v1785, %v5483
        %v6124 = vmul.f32 %v1787, %v5484
        %v6125 = vmul.f32 %v2138, %v5485
        %v6126 = vmul.f32 %v2140, %v5486
        %v6127 = vmul.f32 %v2491, %v5487
        %v6128 = vmul.f32 %v2493, %v5488
        %v6129 = vmul.f32 %v1083, %v5489
        %v6130 = vmul.f32 %v1085, %v5490
        %v6131 = vmul.f32 %v1436, %v5491
        %v6132 = vmul.f32 %v1438, %v5492
        %v6133 = vmul.f32 %v1789, %v5493
        %v6134 = vmul.f32 %v1791, %v5494
        %v6135 = vmul.f32 %v2142, %v5495
        %v6136 = vmul.f32 %v2144, %v5496
        %v6137 = vmul.f32 %v2495, %v5497
        %v6138 = vmul.f32 %v2497, %v5498
        %v6139 = vmul.f32 %v1089, %v5499
        %v6140 = vmul.f32 %v1091, %v5500
        %v6141 = vmul.f32 %v1442, %v5501
        %v6142 = vmul.f32 %v1444, %v5502
        %v6143 = vmul.f32 %v1795, %v5503
        %v6144 = vmul.f32 %v1797, %v5504
        %v6145 = vmul.f32 %v2148, %v5505
        %v6146 = vmul.f32 %v2150, %v5506
        %v6147 = vmul.f32 %v2501, %v5507
        %v6148 = vmul.f32 %v2503, %v5508
        %v6149 = vmul.f32 %v1093, %v5509
        %v6150 = vmul.f32 %v1095, %v5510
        %v6151 = vmul.f32 %v1446, %v5511
        %v6152 = vmul.f32 %v1448, %v5512
        %v6153 = vmul.f32 %v1799, %v5513
        %v6154 = vmul.f32 %v1801, %v5514
        %v6155 = vmul.f32 %v2152, %v5515
        %v6156 = vmul.f32 %v2154, %v5516
        %v6157 = vmul.f32 %v2505, %v5517
        %v6158 = vmul.f32 %v2507, %v5518
        %v6159 = vmul.f32 %v1099, %v5519
        %v6160 = vmul.f32 %v1101, %v5520
        %v6161 = vmul.f32 %v1452, %v5521
        %v6162 = vmul.f32 %v1454, %v5522
        %v6163 = vmul.f32 %v1805, %v5523
        %v6164 = vmul.f32 %v1807, %v5524
        %v6165 = vmul.f32 %v2158, %v5525
        %v6166 = vmul.f32 %v2160, %v5526
        %v6167 = vmul.f32 %v2511, %v5527
        %v6168 = vmul.f32 %v2513, %v5528
        %v6169 = vmul.f32 %v1103, %v5529
        %v6170 = vmul.f32 %v1105, %v5530
        %v6171 = vmul.f32 %v1456, %v5531
        %v6172 = vmul.f32 %v1458, %v5532
        %v6173 = vmul.f32 %v1809, %v5533
        %v6174 = vmul.f32 %v1811, %v5534
        %v6175 = vmul.f32 %v2162, %v5535
        %v6176 = vmul.f32 %v2164, %v5536
        %v6177 = vmul.f32 %v2515, %v5537
        %v6178 = vmul.f32 %v2517, %v5538
        %v6179 = vmul.f32 %v1109, %v5539
        %v6180 = vmul.f32 %v1111, %v5540
        %v6181 = vmul.f32 %v1462, %v5541
        %v6182 = vmul.f32 %v1464, %v5542
        %v6183 = vmul.f32 %v1815, %v5543
        %v6184 = vmul.f32 %v1817, %v5544
        %v6185 = vmul.f32 %v2168, %v5545
        %v6186 = vmul.f32 %v2170, %v5546
        %v6187 = vmul.f32 %v2521, %v5547
        %v6188 = vmul.f32 %v2523, %v5548
        %v6189 = vmul.f32 %v1113, %v5549
        %v6190 = vmul.f32 %v1115, %v5550
        %v6191 = vmul.f32 %v1466, %v5551
        %v6192 = vmul.f32 %v1468, %v5552
        %v6193 = vmul.f32 %v1819, %v5553
        %v6194 = vmul.f32 %v1821, %v5554
        %v6195 = vmul.f32 %v2172, %v5555
        %v6196 = vmul.f32 %v2174, %v5556
        %v6197 = vmul.f32 %v2525, %v5557
        %v6198 = vmul.f32 %v2527, %v5558
        %v6199 = vmul.f32 %v1119, %v5559
        %v6200 = vmul.f32 %v1121, %v5560
        %v6201 = vmul.f32 %v1472, %v5561
        %v6202 = vmul.f32 %v1474, %v5562
        %v6203 = vmul.f32 %v1825, %v5563
        %v6204 = vmul.f32 %v1827, %v5564
        %v6205 = vmul.f32 %v2178, %v5565
        %v6206 = vmul.f32 %v2180, %v5566
        %v6207 = vmul.f32 %v2531, %v5567
        %v6208 = vmul.f32 %v2533, %v5568
        %v6209 = vmul.f32 %v1123, %v5569
        %v6210 = vmul.f32 %v1125, %v5570
        %v6211 = vmul.f32 %v1476, %v5571
        %v6212 = vmul.f32 %v1478, %v5572
        %v6213 = vmul.f32 %v1829, %v5573
        %v6214 = vmul.f32 %v1831, %v5574
        %v6215 = vmul.f32 %v2182, %v5575
        %v6216 = vmul.f32 %v2184, %v5576
        %v6217 = vmul.f32 %v2535, %v5577
        %v6218 = vmul.f32 %v2537, %v5578
        %v6219 = vmul.f32 %v1129, %v5579
        %v6220 = vmul.f32 %v1131, %v5580
        %v6221 = vmul.f32 %v1482, %v5581
        %v6222 = vmul.f32 %v1484, %v5582
        %v6223 = vmul.f32 %v1835, %v5583
        %v6224 = vmul.f32 %v1837, %v5584
        %v6225 = vmul.f32 %v2188, %v5585
        %v6226 = vmul.f32 %v2190, %v5586
        %v6227 = vmul.f32 %v2541, %v5587
        %v6228 = vmul.f32 %v2543, %v5588
        %v6229 = vmul.f32 %v1133, %v5589
        %v6230 = vmul.f32 %v1135, %v5590
        %v6231 = vmul.f32 %v1486, %v5591
        %v6232 = vmul.f32 %v1488, %v5592
        %v6233 = vmul.f32 %v1839, %v5593
        %v6234 = vmul.f32 %v1841, %v5594
        %v6235 = vmul.f32 %v2192, %v5595
        %v6236 = vmul.f32 %v2194, %v5596
        %v6237 = vmul.f32 %v2545, %v5597
        %v6238 = vmul.f32 %v2547, %v5598
        %v6239 = vmul.f32 %v1139, %v5599
        %v6240 = vmul.f32 %v1141, %v5600
        %v6241 = vmul.f32 %v1492, %v5601
        %v6242 = vmul.f32 %v1494, %v5602
        %v6243 = vmul.f32 %v1845, %v5603
        %v6244 = vmul.f32 %v1847, %v5604
        %v6245 = vmul.f32 %v2198, %v5605
        %v6246 = vmul.f32 %v2200, %v5606
        %v6247 = vmul.f32 %v2551, %v5607
        %v6248 = vmul.f32 %v2553, %v5608
        %v6249 = vmul.f32 %v1143, %v5609
        %v6250 = vmul.f32 %v1145, %v5610
        %v6251 = vmul.f32 %v1496, %v5611
        %v6252 = vmul.f32 %v1498, %v5612
        %v6253 = vmul.f32 %v1849, %v5613
        %v6254 = vmul.f32 %v1851, %v5614
        %v6255 = vmul.f32 %v2202, %v5615
        %v6256 = vmul.f32 %v2204, %v5616
        %v6257 = vmul.f32 %v2555, %v5617
        %v6258 = vmul.f32 %v2557, %v5618
        %v6259 = vmul.f32 %v1149, %v5619
        %v6260 = vmul.f32 %v1151, %v5620
        %v6261 = vmul.f32 %v1502, %v5621
        %v6262 = vmul.f32 %v1504, %v5622
        %v6263 = vmul.f32 %v1855, %v5623
        %v6264 = vmul.f32 %v1857, %v5624
        %v6265 = vmul.f32 %v2208, %v5625
        %v6266 = vmul.f32 %v2210, %v5626
        %v6267 = vmul.f32 %v2561, %v5627
        %v6268 = vmul.f32 %v2563, %v5628
        %v6269 = vmul.f32 %v1153, %v5629
        %v6270 = vmul.f32 %v1155, %v5630
        %v6271 = vmul.f32 %v1506, %v5631
        %v6272 = vmul.f32 %v1508, %v5632
        %v6273 = vmul.f32 %v1859, %v5633
        %v6274 = vmul.f32 %v1861, %v5634
        %v6275 = vmul.f32 %v2212, %v5635
        %v6276 = vmul.f32 %v2214, %v5636
        %v6277 = vmul.f32 %v2565, %v5637
        %v6278 = vmul.f32 %v2567, %v5638
        %v6279 = vmul.f32 %v1159, %v5639
        %v6280 = vmul.f32 %v1161, %v5640
        %v6281 = vmul.f32 %v1512, %v5641
        %v6282 = vmul.f32 %v1514, %v5642
        %v6283 = vmul.f32 %v1865, %v5643
        %v6284 = vmul.f32 %v1867, %v5644
        %v6285 = vmul.f32 %v2218, %v5645
        %v6286 = vmul.f32 %v2220, %v5646
        %v6287 = vmul.f32 %v2571, %v5647
        %v6288 = vmul.f32 %v2573, %v5648
        %v6289 = vmul.f32 %v1163, %v5649
        %v6290 = vmul.f32 %v1165, %v5650
        %v6291 = vmul.f32 %v1516, %v5651
        %v6292 = vmul.f32 %v1518, %v5652
        %v6293 = vmul.f32 %v1869, %v5653
        %v6294 = vmul.f32 %v1871, %v5654
        %v6295 = vmul.f32 %v2222, %v5655
        %v6296 = vmul.f32 %v2224, %v5656
        %v6297 = vmul.f32 %v2575, %v5657
        %v6298 = vmul.f32 %v2577, %v5658
        %v6299 = vmul.f32 %v1169, %v5659
        %v6300 = vmul.f32 %v1171, %v5660
        %v6301 = vmul.f32 %v1522, %v5661
        %v6302 = vmul.f32 %v1524, %v5662
        %v6303 = vmul.f32 %v1875, %v5663
        %v6304 = vmul.f32 %v1877, %v5664
        %v6305 = vmul.f32 %v2228, %v5665
        %v6306 = vmul.f32 %v2230, %v5666
        %v6307 = vmul.f32 %v2581, %v5667
        %v6308 = vmul.f32 %v2583, %v5668
        %v6309 = vmul.f32 %v1173, %v5669
        %v6310 = vmul.f32 %v1175, %v5670
        %v6311 = vmul.f32 %v1526, %v5671
        %v6312 = vmul.f32 %v1528, %v5672
        %v6313 = vmul.f32 %v1879, %v5673
        %v6314 = vmul.f32 %v1881, %v5674
        %v6315 = vmul.f32 %v2232, %v5675
        %v6316 = vmul.f32 %v2234, %v5676
        %v6317 = vmul.f32 %v2585, %v5677
        %v6318 = vmul.f32 %v2587, %v5678
        %v6319 = vmul.f32 %v1179, %v5679
        %v6320 = vmul.f32 %v1181, %v5680
        %v6321 = vmul.f32 %v1532, %v5681
        %v6322 = vmul.f32 %v1534, %v5682
        %v6323 = vmul.f32 %v1885, %v5683
        %v6324 = vmul.f32 %v1887, %v5684
        %v6325 = vmul.f32 %v2238, %v5685
        %v6326 = vmul.f32 %v2240, %v5686
        %v6327 = vmul.f32 %v2591, %v5687
        %v6328 = vmul.f32 %v2593, %v5688
        %v6329 = vmul.f32 %v1183, %v5689
        %v6330 = vmul.f32 %v1185, %v5690
        %v6331 = vmul.f32 %v1536, %v5691
        %v6332 = vmul.f32 %v1538, %v5692
        %v6333 = vmul.f32 %v1889, %v5693
        %v6334 = vmul.f32 %v1891, %v5694
        %v6335 = vmul.f32 %v2242, %v5695
        %v6336 = vmul.f32 %v2244, %v5696
        %v6337 = vmul.f32 %v2595, %v5697
        %v6338 = vmul.f32 %v2597, %v5698
        %v6339 = vmul.f32 %v1189, %v5699
        %v6340 = vmul.f32 %v1191, %v5700
        %v6341 = vmul.f32 %v1542, %v5701
        %v6342 = vmul.f32 %v1544, %v5702
        %v6343 = vmul.f32 %v1895, %v5703
        %v6344 = vmul.f32 %v1897, %v5704
        %v6345 = vmul.f32 %v2248, %v5705
        %v6346 = vmul.f32 %v2250, %v5706
        %v6347 = vmul.f32 %v2601, %v5707
        %v6348 = vmul.f32 %v2603, %v5708
        %v6349 = vmul.f32 %v1193, %v5709
        %v6350 = vmul.f32 %v1195, %v5710
        %v6351 = vmul.f32 %v1546, %v5711
        %v6352 = vmul.f32 %v1548, %v5712
        %v6353 = vmul.f32 %v1899, %v5713
        %v6354 = vmul.f32 %v1901, %v5714
        %v6355 = vmul.f32 %v2252, %v5715
        %v6356 = vmul.f32 %v2254, %v5716
        %v6357 = vmul.f32 %v2605, %v5717
        %v6358 = vmul.f32 %v2607, %v5718
        %v6359 = vmul.f32 %v1199, %v5719
        %v6360 = vmul.f32 %v1201, %v5720
        %v6361 = vmul.f32 %v1552, %v5721
        %v6362 = vmul.f32 %v1554, %v5722
        %v6363 = vmul.f32 %v1905, %v5723
        %v6364 = vmul.f32 %v1907, %v5724
        %v6365 = vmul.f32 %v2258, %v5725
        %v6366 = vmul.f32 %v2260, %v5726
        %v6367 = vmul.f32 %v2611, %v5727
        %v6368 = vmul.f32 %v2613, %v5728
        %v6369 = vmul.f32 %v1203, %v5729
        %v6370 = vmul.f32 %v1205, %v5730
        %v6371 = vmul.f32 %v1556, %v5731
        %v6372 = vmul.f32 %v1558, %v5732
        %v6373 = vmul.f32 %v1909, %v5733
        %v6374 = vmul.f32 %v1911, %v5734
        %v6375 = vmul.f32 %v2262, %v5735
        %v6376 = vmul.f32 %v2264, %v5736
        %v6377 = vmul.f32 %v2615, %v5737
        %v6378 = vmul.f32 %v2617, %v5738
        %v6379 = vmul.f32 %v1209, %v5739
        %v6380 = vmul.f32 %v1211, %v5740
        %v6381 = vmul.f32 %v1562, %v5741
        %v6382 = vmul.f32 %v1564, %v5742
        %v6383 = vmul.f32 %v1915, %v5743
        %v6384 = vmul.f32 %v1917, %v5744
        %v6385 = vmul.f32 %v2268, %v5745
        %v6386 = vmul.f32 %v2270, %v5746
        %v6387 = vmul.f32 %v2621, %v5747
        %v6388 = vmul.f32 %v2623, %v5748
        %v6389 = vmul.f32 %v1213, %v5749
        %v6390 = vmul.f32 %v1215, %v5750
        %v6391 = vmul.f32 %v1566, %v5751
        %v6392 = vmul.f32 %v1568, %v5752
        %v6393 = vmul.f32 %v1919, %v5753
        %v6394 = vmul.f32 %v1921, %v5754
        %v6395 = vmul.f32 %v2272, %v5755
        %v6396 = vmul.f32 %v2274, %v5756
        %v6397 = vmul.f32 %v2625, %v5757
        %v6398 = vmul.f32 %v2627, %v5758
        %v6399 = vmul.f32 %v1219, %v5759
        %v6400 = vmul.f32 %v1221, %v5760
        %v6401 = vmul.f32 %v1572, %v5761
        %v6402 = vmul.f32 %v1574, %v5762
        %v6403 = vmul.f32 %v1925, %v5763
        %v6404 = vmul.f32 %v1927, %v5764
        %v6405 = vmul.f32 %v2278, %v5765
        %v6406 = vmul.f32 %v2280, %v5766
        %v6407 = vmul.f32 %v2631, %v5767
        %v6408 = vmul.f32 %v2633, %v5768
        %v6409 = vmul.f32 %v1223, %v5769
        %v6410 = vmul.f32 %v1225, %v5770
        %v6411 = vmul.f32 %v1576, %v5771
        %v6412 = vmul.f32 %v1578, %v5772
        %v6413 = vmul.f32 %v1929, %v5773
        %v6414 = vmul.f32 %v1931, %v5774
        %v6415 = vmul.f32 %v2282, %v5775
        %v6416 = vmul.f32 %v2284, %v5776
        %v6417 = vmul.f32 %v2635, %v5777
        %v6418 = vmul.f32 %v2637, %v5778
        %v6419 = vmul.f32 %v1229, %v5779
        %v6420 = vmul.f32 %v1231, %v5780
        %v6421 = vmul.f32 %v1582, %v5781
        %v6422 = vmul.f32 %v1584, %v5782
        %v6423 = vmul.f32 %v1935, %v5783
        %v6424 = vmul.f32 %v1937, %v5784
        %v6425 = vmul.f32 %v2288, %v5785
        %v6426 = vmul.f32 %v2290, %v5786
        %v6427 = vmul.f32 %v2641, %v5787
        %v6428 = vmul.f32 %v2643, %v5788
        %v6429 = vmul.f32 %v1233, %v5789
        %v6430 = vmul.f32 %v1235, %v5790
        %v6431 = vmul.f32 %v1586, %v5791
        %v6432 = vmul.f32 %v1588, %v5792
        %v6433 = vmul.f32 %v1939, %v5793
        %v6434 = vmul.f32 %v1941, %v5794
        %v6435 = vmul.f32 %v2292, %v5795
        %v6436 = vmul.f32 %v2294, %v5796
        %v6437 = vmul.f32 %v2645, %v5797
        %v6438 = vmul.f32 %v2647, %v5798
        %v6439 = vmul.f32 %v1239, %v5799
        %v6440 = vmul.f32 %v1241, %v5800
        %v6441 = vmul.f32 %v1592, %v5801
        %v6442 = vmul.f32 %v1594, %v5802
        %v6443 = vmul.f32 %v1945, %v5803
        %v6444 = vmul.f32 %v1947, %v5804
        %v6445 = vmul.f32 %v2298, %v5805
        %v6446 = vmul.f32 %v2300, %v5806
        %v6447 = vmul.f32 %v2651, %v5807
        %v6448 = vmul.f32 %v2653, %v5808
        %v6449 = vmul.f32 %v1243, %v5809
        %v6450 = vmul.f32 %v1245, %v5810
        %v6451 = vmul.f32 %v1596, %v5811
        %v6452 = vmul.f32 %v1598, %v5812
        %v6453 = vmul.f32 %v1949, %v5813
        %v6454 = vmul.f32 %v1951, %v5814
        %v6455 = vmul.f32 %v2302, %v5815
        %v6456 = vmul.f32 %v2304, %v5816
        %v6457 = vmul.f32 %v2655, %v5817
        %v6458 = vmul.f32 %v2657, %v5818
        %v6459 = vmul.f32 %v1249, %v5819
        %v6460 = vmul.f32 %v1251, %v5820
        %v6461 = vmul.f32 %v1602, %v5821
        %v6462 = vmul.f32 %v1604, %v5822
        %v6463 = vmul.f32 %v1955, %v5823
        %v6464 = vmul.f32 %v1957, %v5824
        %v6465 = vmul.f32 %v2308, %v5825
        %v6466 = vmul.f32 %v2310, %v5826
        %v6467 = vmul.f32 %v2661, %v5827
        %v6468 = vmul.f32 %v2663, %v5828
        %v6469 = vmul.f32 %v1253, %v5829
        %v6470 = vmul.f32 %v1255, %v5830
        %v6471 = vmul.f32 %v1606, %v5831
        %v6472 = vmul.f32 %v1608, %v5832
        %v6473 = vmul.f32 %v1959, %v5833
        %v6474 = vmul.f32 %v1961, %v5834
        %v6475 = vmul.f32 %v2312, %v5835
        %v6476 = vmul.f32 %v2314, %v5836
        %v6477 = vmul.f32 %v2665, %v5837
        %v6478 = vmul.f32 %v2667, %v5838
        %v6479 = vmul.f32 %v1259, %v5839
        %v6480 = vmul.f32 %v1261, %v5840
        %v6481 = vmul.f32 %v1612, %v5841
        %v6482 = vmul.f32 %v1614, %v5842
        %v6483 = vmul.f32 %v1965, %v5843
        %v6484 = vmul.f32 %v1967, %v5844
        %v6485 = vmul.f32 %v2318, %v5845
        %v6486 = vmul.f32 %v2320, %v5846
        %v6487 = vmul.f32 %v2671, %v5847
        %v6488 = vmul.f32 %v2673, %v5848
        %v6489 = vmul.f32 %v1263, %v5849
        %v6490 = vmul.f32 %v1265, %v5850
        %v6491 = vmul.f32 %v1616, %v5851
        %v6492 = vmul.f32 %v1618, %v5852
        %v6493 = vmul.f32 %v1969, %v5853
        %v6494 = vmul.f32 %v1971, %v5854
        %v6495 = vmul.f32 %v2322, %v5855
        %v6496 = vmul.f32 %v2324, %v5856
        %v6497 = vmul.f32 %v2675, %v5857
        %v6498 = vmul.f32 %v2677, %v5858
        %v6499 = vmul.f32 %v1269, %v5859
        %v6500 = vmul.f32 %v1271, %v5860
        %v6501 = vmul.f32 %v1622, %v5861
        %v6502 = vmul.f32 %v1624, %v5862
        %v6503 = vmul.f32 %v1975, %v5863
        %v6504 = vmul.f32 %v1977, %v5864
        %v6505 = vmul.f32 %v2328, %v5865
        %v6506 = vmul.f32 %v2330, %v5866
        %v6507 = vmul.f32 %v2681, %v5867
        %v6508 = vmul.f32 %v2683, %v5868
        %v6509 = vmul.f32 %v1273, %v5869
        %v6510 = vmul.f32 %v1275, %v5870
        %v6511 = vmul.f32 %v1626, %v5871
        %v6512 = vmul.f32 %v1628, %v5872
        %v6513 = vmul.f32 %v1979, %v5873
        %v6514 = vmul.f32 %v1981, %v5874
        %v6515 = vmul.f32 %v2332, %v5875
        %v6516 = vmul.f32 %v2334, %v5876
        %v6517 = vmul.f32 %v2685, %v5877
        %v6518 = vmul.f32 %v2687, %v5878
        %v6519 = vmul.f32 %v1279, %v5879
        %v6520 = vmul.f32 %v1281, %v5880
        %v6521 = vmul.f32 %v1632, %v5881
        %v6522 = vmul.f32 %v1634, %v5882
        %v6523 = vmul.f32 %v1985, %v5883
        %v6524 = vmul.f32 %v1987, %v5884
        %v6525 = vmul.f32 %v2338, %v5885
        %v6526 = vmul.f32 %v2340, %v5886
        %v6527 = vmul.f32 %v2691, %v5887
        %v6528 = vmul.f32 %v2693, %v5888
        %v6529 = vmul.f32 %v1283, %v5889
        %v6530 = vmul.f32 %v1285, %v5890
        %v6531 = vmul.f32 %v1636, %v5891
        %v6532 = vmul.f32 %v1638, %v5892
        %v6533 = vmul.f32 %v1989, %v5893
        %v6534 = vmul.f32 %v1991, %v5894
        %v6535 = vmul.f32 %v2342, %v5895
        %v6536 = vmul.f32 %v2344, %v5896
        %v6537 = vmul.f32 %v2695, %v5897
        %v6538 = vmul.f32 %v2697, %v5898
        %v6539 = vld [vmem:[#allocation5] sm:$0xf]
        %v6540 = vpack.c.bf16 %v5909, %v5899
        %v6541 = vpack.c.bf16 %v5910, %v5900
        %v6542 = vpack.c.bf16 %v5911, %v5901
        %v6543 = vpack.c.bf16 %v5912, %v5902
        %v6544 = vpack.c.bf16 %v5913, %v5903
        %v6545 = vpack.c.bf16 %v5914, %v5904
        %v6546 = vpack.c.bf16 %v5915, %v5905
        %v6547 = vpack.c.bf16 %v5916, %v5906
        %v6548 = vpack.c.bf16 %v5917, %v5907
        %v6549 = vpack.c.bf16 %v5918, %v5908
        %v6550 = vpack.c.bf16 %v5929, %v5919
        %v6551 = vpack.c.bf16 %v5930, %v5920
        %v6552 = vpack.c.bf16 %v5931, %v5921
        %v6553 = vpack.c.bf16 %v5932, %v5922
        %v6554 = vpack.c.bf16 %v5933, %v5923
        %v6555 = vpack.c.bf16 %v5934, %v5924
        %v6556 = vpack.c.bf16 %v5935, %v5925
        %v6557 = vpack.c.bf16 %v5936, %v5926
        %v6558 = vpack.c.bf16 %v5937, %v5927
        %v6559 = vpack.c.bf16 %v5938, %v5928
        %v6560 = vpack.c.bf16 %v5949, %v5939
        %v6561 = vpack.c.bf16 %v5950, %v5940
        %v6562 = vpack.c.bf16 %v5951, %v5941
        %v6563 = vpack.c.bf16 %v5952, %v5942
        %v6564 = vpack.c.bf16 %v5953, %v5943
        %v6565 = vpack.c.bf16 %v5954, %v5944
        %v6566 = vpack.c.bf16 %v5955, %v5945
        %v6567 = vpack.c.bf16 %v5956, %v5946
        %v6568 = vpack.c.bf16 %v5957, %v5947
        %v6569 = vpack.c.bf16 %v5958, %v5948
        %v6570 = vpack.c.bf16 %v5969, %v5959
        %v6571 = vpack.c.bf16 %v5970, %v5960
        %v6572 = vpack.c.bf16 %v5971, %v5961
        %v6573 = vpack.c.bf16 %v5972, %v5962
        %v6574 = vpack.c.bf16 %v5973, %v5963
        %v6575 = vpack.c.bf16 %v5974, %v5964
        %v6576 = vpack.c.bf16 %v5975, %v5965
        %v6577 = vpack.c.bf16 %v5976, %v5966
        %v6578 = vpack.c.bf16 %v5977, %v5967
        %v6579 = vpack.c.bf16 %v5978, %v5968
        %v6580 = vpack.c.bf16 %v5989, %v5979
        %v6581 = vpack.c.bf16 %v5990, %v5980
        %v6582 = vpack.c.bf16 %v5991, %v5981
        %v6583 = vpack.c.bf16 %v5992, %v5982
        %v6584 = vpack.c.bf16 %v5993, %v5983
        %v6585 = vpack.c.bf16 %v5994, %v5984
        %v6586 = vpack.c.bf16 %v5995, %v5985
        %v6587 = vpack.c.bf16 %v5996, %v5986
        %v6588 = vpack.c.bf16 %v5997, %v5987
        %v6589 = vpack.c.bf16 %v5998, %v5988
        %v6590 = vpack.c.bf16 %v6009, %v5999
        %v6591 = vpack.c.bf16 %v6010, %v6000
        %v6592 = vpack.c.bf16 %v6011, %v6001
        %v6593 = vpack.c.bf16 %v6012, %v6002
        %v6594 = vpack.c.bf16 %v6013, %v6003
        %v6595 = vpack.c.bf16 %v6014, %v6004
        %v6596 = vpack.c.bf16 %v6015, %v6005
        %v6597 = vpack.c.bf16 %v6016, %v6006
        %v6598 = vpack.c.bf16 %v6017, %v6007
        %v6599 = vpack.c.bf16 %v6018, %v6008
        %v6600 = vpack.c.bf16 %v6029, %v6019
        %v6601 = vpack.c.bf16 %v6030, %v6020
        %v6602 = vpack.c.bf16 %v6031, %v6021
        %v6603 = vpack.c.bf16 %v6032, %v6022
        %v6604 = vpack.c.bf16 %v6033, %v6023
        %v6605 = vpack.c.bf16 %v6034, %v6024
        %v6606 = vpack.c.bf16 %v6035, %v6025
        %v6607 = vpack.c.bf16 %v6036, %v6026
        %v6608 = vpack.c.bf16 %v6037, %v6027
        %v6609 = vpack.c.bf16 %v6038, %v6028
        %v6610 = vpack.c.bf16 %v6049, %v6039
        %v6611 = vpack.c.bf16 %v6050, %v6040
        %v6612 = vpack.c.bf16 %v6051, %v6041
        %v6613 = vpack.c.bf16 %v6052, %v6042
        %v6614 = vpack.c.bf16 %v6053, %v6043
        %v6615 = vpack.c.bf16 %v6054, %v6044
        %v6616 = vpack.c.bf16 %v6055, %v6045
        %v6617 = vpack.c.bf16 %v6056, %v6046
        %v6618 = vpack.c.bf16 %v6057, %v6047
        %v6619 = vpack.c.bf16 %v6058, %v6048
        %v6620 = vpack.c.bf16 %v6069, %v6059
        %v6621 = vpack.c.bf16 %v6070, %v6060
        %v6622 = vpack.c.bf16 %v6071, %v6061
        %v6623 = vpack.c.bf16 %v6072, %v6062
        %v6624 = vpack.c.bf16 %v6073, %v6063
        %v6625 = vpack.c.bf16 %v6074, %v6064
        %v6626 = vpack.c.bf16 %v6075, %v6065
        %v6627 = vpack.c.bf16 %v6076, %v6066
        %v6628 = vpack.c.bf16 %v6077, %v6067
        %v6629 = vpack.c.bf16 %v6078, %v6068
        %v6630 = vpack.c.bf16 %v6089, %v6079
        %v6631 = vpack.c.bf16 %v6090, %v6080
        %v6632 = vpack.c.bf16 %v6091, %v6081
        %v6633 = vpack.c.bf16 %v6092, %v6082
        %v6634 = vpack.c.bf16 %v6093, %v6083
        %v6635 = vpack.c.bf16 %v6094, %v6084
        %v6636 = vpack.c.bf16 %v6095, %v6085
        %v6637 = vpack.c.bf16 %v6096, %v6086
        %v6638 = vpack.c.bf16 %v6097, %v6087
        %v6639 = vpack.c.bf16 %v6098, %v6088
        %v6640 = vpack.c.bf16 %v6109, %v6099
        %v6641 = vpack.c.bf16 %v6110, %v6100
        %v6642 = vpack.c.bf16 %v6111, %v6101
        %v6643 = vpack.c.bf16 %v6112, %v6102
        %v6644 = vpack.c.bf16 %v6113, %v6103
        %v6645 = vpack.c.bf16 %v6114, %v6104
        %v6646 = vpack.c.bf16 %v6115, %v6105
        %v6647 = vpack.c.bf16 %v6116, %v6106
        %v6648 = vpack.c.bf16 %v6117, %v6107
        %v6649 = vpack.c.bf16 %v6118, %v6108
        %v6650 = vpack.c.bf16 %v6129, %v6119
        %v6651 = vpack.c.bf16 %v6130, %v6120
        %v6652 = vpack.c.bf16 %v6131, %v6121
        %v6653 = vpack.c.bf16 %v6132, %v6122
        %v6654 = vpack.c.bf16 %v6133, %v6123
        %v6655 = vpack.c.bf16 %v6134, %v6124
        %v6656 = vpack.c.bf16 %v6135, %v6125
        %v6657 = vpack.c.bf16 %v6136, %v6126
        %v6658 = vpack.c.bf16 %v6137, %v6127
        %v6659 = vpack.c.bf16 %v6138, %v6128
        %v6660 = vpack.c.bf16 %v6149, %v6139
        %v6661 = vpack.c.bf16 %v6150, %v6140
        %v6662 = vpack.c.bf16 %v6151, %v6141
        %v6663 = vpack.c.bf16 %v6152, %v6142
        %v6664 = vpack.c.bf16 %v6153, %v6143
        %v6665 = vpack.c.bf16 %v6154, %v6144
        %v6666 = vpack.c.bf16 %v6155, %v6145
        %v6667 = vpack.c.bf16 %v6156, %v6146
        %v6668 = vpack.c.bf16 %v6157, %v6147
        %v6669 = vpack.c.bf16 %v6158, %v6148
        %v6670 = vpack.c.bf16 %v6169, %v6159
        %v6671 = vpack.c.bf16 %v6170, %v6160
        %v6672 = vpack.c.bf16 %v6171, %v6161
        %v6673 = vpack.c.bf16 %v6172, %v6162
        %v6674 = vpack.c.bf16 %v6173, %v6163
        %v6675 = vpack.c.bf16 %v6174, %v6164
        %v6676 = vpack.c.bf16 %v6175, %v6165
        %v6677 = vpack.c.bf16 %v6176, %v6166
        %v6678 = vpack.c.bf16 %v6177, %v6167
        %v6679 = vpack.c.bf16 %v6178, %v6168
        %v6680 = vpack.c.bf16 %v6189, %v6179
        %v6681 = vpack.c.bf16 %v6190, %v6180
        %v6682 = vpack.c.bf16 %v6191, %v6181
        %v6683 = vpack.c.bf16 %v6192, %v6182
        %v6684 = vpack.c.bf16 %v6193, %v6183
        %v6685 = vpack.c.bf16 %v6194, %v6184
        %v6686 = vpack.c.bf16 %v6195, %v6185
        %v6687 = vpack.c.bf16 %v6196, %v6186
        %v6688 = vpack.c.bf16 %v6197, %v6187
        %v6689 = vpack.c.bf16 %v6198, %v6188
        %v6690 = vpack.c.bf16 %v6209, %v6199
        %v6691 = vpack.c.bf16 %v6210, %v6200
        %v6692 = vpack.c.bf16 %v6211, %v6201
        %v6693 = vpack.c.bf16 %v6212, %v6202
        %v6694 = vpack.c.bf16 %v6213, %v6203
        %v6695 = vpack.c.bf16 %v6214, %v6204
        %v6696 = vpack.c.bf16 %v6215, %v6205
        %v6697 = vpack.c.bf16 %v6216, %v6206
        %v6698 = vpack.c.bf16 %v6217, %v6207
        %v6699 = vpack.c.bf16 %v6218, %v6208
        %v6700 = vpack.c.bf16 %v6229, %v6219
        %v6701 = vpack.c.bf16 %v6230, %v6220
        %v6702 = vpack.c.bf16 %v6231, %v6221
        %v6703 = vpack.c.bf16 %v6232, %v6222
        %v6704 = vpack.c.bf16 %v6233, %v6223
        %v6705 = vpack.c.bf16 %v6234, %v6224
        %v6706 = vpack.c.bf16 %v6235, %v6225
        %v6707 = vpack.c.bf16 %v6236, %v6226
        %v6708 = vpack.c.bf16 %v6237, %v6227
        %v6709 = vpack.c.bf16 %v6238, %v6228
        %v6710 = vpack.c.bf16 %v6249, %v6239
        %v6711 = vpack.c.bf16 %v6250, %v6240
        %v6712 = vpack.c.bf16 %v6251, %v6241
        %v6713 = vpack.c.bf16 %v6252, %v6242
        %v6714 = vpack.c.bf16 %v6253, %v6243
        %v6715 = vpack.c.bf16 %v6254, %v6244
        %v6716 = vpack.c.bf16 %v6255, %v6245
        %v6717 = vpack.c.bf16 %v6256, %v6246
        %v6718 = vpack.c.bf16 %v6257, %v6247
        %v6719 = vpack.c.bf16 %v6258, %v6248
        %v6720 = vpack.c.bf16 %v6269, %v6259
        %v6721 = vpack.c.bf16 %v6270, %v6260
        %v6722 = vpack.c.bf16 %v6271, %v6261
        %v6723 = vpack.c.bf16 %v6272, %v6262
        %v6724 = vpack.c.bf16 %v6273, %v6263
        %v6725 = vpack.c.bf16 %v6274, %v6264
        %v6726 = vpack.c.bf16 %v6275, %v6265
        %v6727 = vpack.c.bf16 %v6276, %v6266
        %v6728 = vpack.c.bf16 %v6277, %v6267
        %v6729 = vpack.c.bf16 %v6278, %v6268
        %v6730 = vpack.c.bf16 %v6289, %v6279
        %v6731 = vpack.c.bf16 %v6290, %v6280
        %v6732 = vpack.c.bf16 %v6291, %v6281
        %v6733 = vpack.c.bf16 %v6292, %v6282
        %v6734 = vpack.c.bf16 %v6293, %v6283
        %v6735 = vpack.c.bf16 %v6294, %v6284
        %v6736 = vpack.c.bf16 %v6295, %v6285
        %v6737 = vpack.c.bf16 %v6296, %v6286
        %v6738 = vpack.c.bf16 %v6297, %v6287
        %v6739 = vpack.c.bf16 %v6298, %v6288
        %v6740 = vpack.c.bf16 %v6309, %v6299
        %v6741 = vpack.c.bf16 %v6310, %v6300
        %v6742 = vpack.c.bf16 %v6311, %v6301
        %v6743 = vpack.c.bf16 %v6312, %v6302
        %v6744 = vpack.c.bf16 %v6313, %v6303
        %v6745 = vpack.c.bf16 %v6314, %v6304
        %v6746 = vpack.c.bf16 %v6315, %v6305
        %v6747 = vpack.c.bf16 %v6316, %v6306
        %v6748 = vpack.c.bf16 %v6317, %v6307
        %v6749 = vpack.c.bf16 %v6318, %v6308
        %v6750 = vpack.c.bf16 %v6329, %v6319
        %v6751 = vpack.c.bf16 %v6330, %v6320
        %v6752 = vpack.c.bf16 %v6331, %v6321
        %v6753 = vpack.c.bf16 %v6332, %v6322
        %v6754 = vpack.c.bf16 %v6333, %v6323
        %v6755 = vpack.c.bf16 %v6334, %v6324
        %v6756 = vpack.c.bf16 %v6335, %v6325
        %v6757 = vpack.c.bf16 %v6336, %v6326
        %v6758 = vpack.c.bf16 %v6337, %v6327
        %v6759 = vpack.c.bf16 %v6338, %v6328
        %v6760 = vpack.c.bf16 %v6349, %v6339
        %v6761 = vpack.c.bf16 %v6350, %v6340
        %v6762 = vpack.c.bf16 %v6351, %v6341
        %v6763 = vpack.c.bf16 %v6352, %v6342
        %v6764 = vpack.c.bf16 %v6353, %v6343
        %v6765 = vpack.c.bf16 %v6354, %v6344
        %v6766 = vpack.c.bf16 %v6355, %v6345
        %v6767 = vpack.c.bf16 %v6356, %v6346
        %v6768 = vpack.c.bf16 %v6357, %v6347
        %v6769 = vpack.c.bf16 %v6358, %v6348
        %v6770 = vpack.c.bf16 %v6369, %v6359
        %v6771 = vpack.c.bf16 %v6370, %v6360
        %v6772 = vpack.c.bf16 %v6371, %v6361
        %v6773 = vpack.c.bf16 %v6372, %v6362
        %v6774 = vpack.c.bf16 %v6373, %v6363
        %v6775 = vpack.c.bf16 %v6374, %v6364
        %v6776 = vpack.c.bf16 %v6375, %v6365
        %v6777 = vpack.c.bf16 %v6376, %v6366
        %v6778 = vpack.c.bf16 %v6377, %v6367
        %v6779 = vpack.c.bf16 %v6378, %v6368
        %v6780 = vpack.c.bf16 %v6389, %v6379
        %v6781 = vpack.c.bf16 %v6390, %v6380
        %v6782 = vpack.c.bf16 %v6391, %v6381
        %v6783 = vpack.c.bf16 %v6392, %v6382
        %v6784 = vpack.c.bf16 %v6393, %v6383
        %v6785 = vpack.c.bf16 %v6394, %v6384
        %v6786 = vpack.c.bf16 %v6395, %v6385
        %v6787 = vpack.c.bf16 %v6396, %v6386
        %v6788 = vpack.c.bf16 %v6397, %v6387
        %v6789 = vpack.c.bf16 %v6398, %v6388
        %v6790 = vpack.c.bf16 %v6409, %v6399
        %v6791 = vpack.c.bf16 %v6410, %v6400
        %v6792 = vpack.c.bf16 %v6411, %v6401
        %v6793 = vpack.c.bf16 %v6412, %v6402
        %v6794 = vpack.c.bf16 %v6413, %v6403
        %v6795 = vpack.c.bf16 %v6414, %v6404
        %v6796 = vpack.c.bf16 %v6415, %v6405
        %v6797 = vpack.c.bf16 %v6416, %v6406
        %v6798 = vpack.c.bf16 %v6417, %v6407
        %v6799 = vpack.c.bf16 %v6418, %v6408
        %v6800 = vpack.c.bf16 %v6429, %v6419
        %v6801 = vpack.c.bf16 %v6430, %v6420
        %v6802 = vpack.c.bf16 %v6431, %v6421
        %v6803 = vpack.c.bf16 %v6432, %v6422
        %v6804 = vpack.c.bf16 %v6433, %v6423
        %v6805 = vpack.c.bf16 %v6434, %v6424
        %v6806 = vpack.c.bf16 %v6435, %v6425
        %v6807 = vpack.c.bf16 %v6436, %v6426
        %v6808 = vpack.c.bf16 %v6437, %v6427
        %v6809 = vpack.c.bf16 %v6438, %v6428
        %v6810 = vpack.c.bf16 %v6449, %v6439
        %v6811 = vpack.c.bf16 %v6450, %v6440
        %v6812 = vpack.c.bf16 %v6451, %v6441
        %v6813 = vpack.c.bf16 %v6452, %v6442
        %v6814 = vpack.c.bf16 %v6453, %v6443
        %v6815 = vpack.c.bf16 %v6454, %v6444
        %v6816 = vpack.c.bf16 %v6455, %v6445
        %v6817 = vpack.c.bf16 %v6456, %v6446
        %v6818 = vpack.c.bf16 %v6457, %v6447
        %v6819 = vpack.c.bf16 %v6458, %v6448
        %v6820 = vpack.c.bf16 %v6469, %v6459
        %v6821 = vpack.c.bf16 %v6470, %v6460
        %v6822 = vpack.c.bf16 %v6471, %v6461
        %v6823 = vpack.c.bf16 %v6472, %v6462
        %v6824 = vpack.c.bf16 %v6473, %v6463
        %v6825 = vpack.c.bf16 %v6474, %v6464
        %v6826 = vpack.c.bf16 %v6475, %v6465
        %v6827 = vpack.c.bf16 %v6476, %v6466
        %v6828 = vpack.c.bf16 %v6477, %v6467
        %v6829 = vpack.c.bf16 %v6478, %v6468
        %v6830 = vpack.c.bf16 %v6489, %v6479
        %v6831 = vpack.c.bf16 %v6490, %v6480
        %v6832 = vpack.c.bf16 %v6491, %v6481
        %v6833 = vpack.c.bf16 %v6492, %v6482
        %v6834 = vpack.c.bf16 %v6493, %v6483
        %v6835 = vpack.c.bf16 %v6494, %v6484
        %v6836 = vpack.c.bf16 %v6495, %v6485
        %v6837 = vpack.c.bf16 %v6496, %v6486
        %v6838 = vpack.c.bf16 %v6497, %v6487
        %v6839 = vpack.c.bf16 %v6498, %v6488
        %v6840 = vpack.c.bf16 %v6509, %v6499
        %v6841 = vpack.c.bf16 %v6510, %v6500
        %v6842 = vpack.c.bf16 %v6511, %v6501
        %v6843 = vpack.c.bf16 %v6512, %v6502
        %v6844 = vpack.c.bf16 %v6513, %v6503
        %v6845 = vpack.c.bf16 %v6514, %v6504
        %v6846 = vpack.c.bf16 %v6515, %v6505
        %v6847 = vpack.c.bf16 %v6516, %v6506
        %v6848 = vpack.c.bf16 %v6517, %v6507
        %v6849 = vpack.c.bf16 %v6518, %v6508
        %v6850 = vpack.c.bf16 %v6529, %v6519
        %v6851 = vpack.c.bf16 %v6530, %v6520
        %v6852 = vpack.c.bf16 %v6531, %v6521
        %v6853 = vpack.c.bf16 %v6532, %v6522
        %v6854 = vpack.c.bf16 %v6533, %v6523
        %v6855 = vpack.c.bf16 %v6534, %v6524
        %v6856 = vpack.c.bf16 %v6535, %v6525
        %v6857 = vpack.c.bf16 %v6536, %v6526
        %v6858 = vpack.c.bf16 %v6537, %v6527
        %v6859 = vpack.c.bf16 %v6538, %v6528
        %v6862 = vunpack.c.l.s4 1966171168
        %v6863 = vunpack.c.0.s8 %v6862
        %v6864 = vlaneseq
        %v6865 = vshrl.u32 %v6864, 7
        %v6866 = vsub.s32 %v6863, %v6865
        %v6867 = vrot.slane %v6539, %v6866
        %v6868 = vcombine.high %v6867, %v6867
        %v6870 = vunpack.c.l.s4 1966171168
        %v6871 = vunpack.c.0.s8 %v6870
        %v6872 = vlaneseq
        %v6873 = vshrl.u32 %v6872, 7
        %v6874 = vsub.s32 %v6871, %v6873
        %v6875 = vrot.slane %v6867, %v6874
        %v6877 = vunpack.c.l.s4 1966171168
        %v6878 = vunpack.c.0.s8 %v6877
        %v6879 = vlaneseq
        %v6880 = vshrl.u32 %v6879, 7
        %v6881 = vsub.s32 %v6878, %v6880
        %v6882 = vrot.slane %v6868, %v6881
        %v6883 = vcombine.high %v6875, %v6875
        %v6884 = vcombine.high %v6882, %v6882
        %6889 = vmatprep.subr.bf16.mxu0 %v6611
        %6890 = vmatpush1.bf16.msra.mxu0 %v6610
        %6891 = vmatprep.subr.bf16.mxu0 %v6601
        %6892 = vmatpush1.bf16.msra.mxu0 %v6600
        %6893 = vmatprep.subr.bf16.mxu0 %v6591
        %6894 = vmatpush1.bf16.msra.mxu0 %v6590
        %6895 = vmatprep.subr.bf16.mxu0 %v6581
        %6896 = vmatpush1.bf16.msra.mxu0 %v6580
        %6897 = vmatprep.subr.bf16.mxu0 %v6571
        %6898 = vmatpush1.bf16.msra.mxu0 %v6570
        %6899 = vmatprep.subr.bf16.mxu0 %v6561
        %6900 = vmatpush1.bf16.msra.mxu0 %v6560
        %6901 = vmatprep.subr.bf16.mxu0 %v6551
        %6902 = vmatpush1.bf16.msra.mxu0 %v6550
        %6903 = vmatprep.subr.bf16.mxu0 %v6541
        %6904 = vmatpush1.bf16.msra.mxu0 %v6540
        %6905 = vmatprep.subr.bf16.mxu0 %v6691
        %6906 = vmatpush2.bf16.msra.mxu0 %v6690
        %6907 = vmatprep.subr.bf16.mxu0 %v6681
        %6908 = vmatpush2.bf16.msra.mxu0 %v6680
        %6909 = vmatprep.subr.bf16.mxu0 %v6671
        %6910 = vmatpush2.bf16.msra.mxu0 %v6670
        %6911 = vmatprep.subr.bf16.mxu0 %v6661
        %6912 = vmatpush2.bf16.msra.mxu0 %v6660
        %6913 = vmatprep.subr.bf16.mxu0 %v6651
        %6914 = vmatpush2.bf16.msra.mxu0 %v6650
        %6915 = vmatprep.subr.bf16.mxu0 %v6641
        %6916 = vmatpush2.bf16.msra.mxu0 %v6640
        %6917 = vmatprep.subr.bf16.mxu0 %v6631
        %6918 = vmatpush2.bf16.msra.mxu0 %v6630
        %6919 = vmatprep.subr.bf16.mxu0 %v6621
        %6920 = vmatpush2.bf16.msra.mxu0 %v6620
        %6921 = vmatprep.mubr.bf16.mxu0 %v6882
        %6922 = vmatmul.mubr.bf16.gmra.mxu0 %v6875
        %v6923 = vpop.f32.mrf.mxu0
        %v6924 = vadd.f32 0.0, %v6923
        %v6925 = vpop.f32.mrf.mxu0
        %v6926 = vadd.f32 0.0, %v6925
        %v6927 = vpop.f32.mrf.mxu0
        %v6928 = vpop.f32.mrf.mxu0
        %6929 = vdwg.mxu0
        %6930 = vmatprep.subr.bf16.mxu0 %v6771
        %6931 = vmatpush1.bf16.msra.mxu0 %v6770
        %6932 = vmatprep.subr.bf16.mxu0 %v6761
        %6933 = vmatpush1.bf16.msra.mxu0 %v6760
        %6934 = vmatprep.subr.bf16.mxu0 %v6751
        %6935 = vmatpush1.bf16.msra.mxu0 %v6750
        %6936 = vmatprep.subr.bf16.mxu0 %v6741
        %6937 = vmatpush1.bf16.msra.mxu0 %v6740
        %6938 = vmatprep.subr.bf16.mxu0 %v6731
        %6939 = vmatpush1.bf16.msra.mxu0 %v6730
        %6940 = vmatprep.subr.bf16.mxu0 %v6721
        %6941 = vmatpush1.bf16.msra.mxu0 %v6720
        %6942 = vmatprep.subr.bf16.mxu0 %v6711
        %6943 = vmatpush1.bf16.msra.mxu0 %v6710
        %6944 = vmatprep.subr.bf16.mxu0 %v6701
        %6945 = vmatpush1.bf16.msra.mxu0 %v6700
        %6946 = vmatprep.subr.bf16.mxu0 %v6851
        %6947 = vmatpush2.bf16.msra.mxu0 %v6850
        %6948 = vmatprep.subr.bf16.mxu0 %v6841
        %6949 = vmatpush2.bf16.msra.mxu0 %v6840
        %6950 = vmatprep.subr.bf16.mxu0 %v6831
        %6951 = vmatpush2.bf16.msra.mxu0 %v6830
        %6952 = vmatprep.subr.bf16.mxu0 %v6821
        %6953 = vmatpush2.bf16.msra.mxu0 %v6820
        %6954 = vmatprep.subr.bf16.mxu0 %v6811
        %6955 = vmatpush2.bf16.msra.mxu0 %v6810
        %6956 = vmatprep.subr.bf16.mxu0 %v6801
        %6957 = vmatpush2.bf16.msra.mxu0 %v6800
        %6958 = vmatprep.subr.bf16.mxu0 %v6791
        %6959 = vmatpush2.bf16.msra.mxu0 %v6790
        %6960 = vmatprep.subr.bf16.mxu0 %v6781
        %6961 = vmatpush2.bf16.msra.mxu0 %v6780
        %6962 = vmatprep.mubr.bf16.mxu0 %v6884
        %6963 = vmatmul.mubr.bf16.gmra.mxu0 %v6883
        %v6964 = vpop.f32.mrf.mxu0
        %v6965 = vadd.f32 %v6924, %v6964
        %v6966 = vpop.f32.mrf.mxu0
        %v6967 = vadd.f32 %v6926, %v6966
        %v6968 = vpop.f32.mrf.mxu0
        %v6969 = vpop.f32.mrf.mxu0
        %6970 = vdwg.mxu0
        %6971 = vmatprep.subr.bf16.mxu0 %v6613
        %6972 = vmatpush1.bf16.msra.mxu0 %v6612
        %6973 = vmatprep.subr.bf16.mxu0 %v6603
        %6974 = vmatpush1.bf16.msra.mxu0 %v6602
        %6975 = vmatprep.subr.bf16.mxu0 %v6593
        %6976 = vmatpush1.bf16.msra.mxu0 %v6592
        %6977 = vmatprep.subr.bf16.mxu0 %v6583
        %6978 = vmatpush1.bf16.msra.mxu0 %v6582
        %6979 = vmatprep.subr.bf16.mxu0 %v6573
        %6980 = vmatpush1.bf16.msra.mxu0 %v6572
        %6981 = vmatprep.subr.bf16.mxu0 %v6563
        %6982 = vmatpush1.bf16.msra.mxu0 %v6562
        %6983 = vmatprep.subr.bf16.mxu0 %v6553
        %6984 = vmatpush1.bf16.msra.mxu0 %v6552
        %6985 = vmatprep.subr.bf16.mxu0 %v6543
        %6986 = vmatpush1.bf16.msra.mxu0 %v6542
        %6987 = vmatprep.subr.bf16.mxu0 %v6693
        %6988 = vmatpush2.bf16.msra.mxu0 %v6692
        %6989 = vmatprep.subr.bf16.mxu0 %v6683
        %6990 = vmatpush2.bf16.msra.mxu0 %v6682
        %6991 = vmatprep.subr.bf16.mxu0 %v6673
        %6992 = vmatpush2.bf16.msra.mxu0 %v6672
        %6993 = vmatprep.subr.bf16.mxu0 %v6663
        %6994 = vmatpush2.bf16.msra.mxu0 %v6662
        %6995 = vmatprep.subr.bf16.mxu0 %v6653
        %6996 = vmatpush2.bf16.msra.mxu0 %v6652
        %6997 = vmatprep.subr.bf16.mxu0 %v6643
        %6998 = vmatpush2.bf16.msra.mxu0 %v6642
        %6999 = vmatprep.subr.bf16.mxu0 %v6633
        %7000 = vmatpush2.bf16.msra.mxu0 %v6632
        %7001 = vmatprep.subr.bf16.mxu0 %v6623
        %7002 = vmatpush2.bf16.msra.mxu0 %v6622
        %7003 = vmatprep.mubr.bf16.mxu0 %v6882
        %7004 = vmatmul.mubr.bf16.gmra.mxu0 %v6875
        %v7005 = vpop.f32.mrf.mxu0
        %v7006 = vadd.f32 0.0, %v7005
        %v7007 = vpop.f32.mrf.mxu0
        %v7008 = vadd.f32 0.0, %v7007
        %v7009 = vpop.f32.mrf.mxu0
        %v7010 = vpop.f32.mrf.mxu0
        %7011 = vdwg.mxu0
        %7012 = vmatprep.subr.bf16.mxu0 %v6773
        %7013 = vmatpush1.bf16.msra.mxu0 %v6772
        %7014 = vmatprep.subr.bf16.mxu0 %v6763
        %7015 = vmatpush1.bf16.msra.mxu0 %v6762
        %7016 = vmatprep.subr.bf16.mxu0 %v6753
        %7017 = vmatpush1.bf16.msra.mxu0 %v6752
        %7018 = vmatprep.subr.bf16.mxu0 %v6743
        %7019 = vmatpush1.bf16.msra.mxu0 %v6742
        %7020 = vmatprep.subr.bf16.mxu0 %v6733
        %7021 = vmatpush1.bf16.msra.mxu0 %v6732
        %7022 = vmatprep.subr.bf16.mxu0 %v6723
        %7023 = vmatpush1.bf16.msra.mxu0 %v6722
        %7024 = vmatprep.subr.bf16.mxu0 %v6713
        %7025 = vmatpush1.bf16.msra.mxu0 %v6712
        %7026 = vmatprep.subr.bf16.mxu0 %v6703
        %7027 = vmatpush1.bf16.msra.mxu0 %v6702
        %7028 = vmatprep.subr.bf16.mxu0 %v6853
        %7029 = vmatpush2.bf16.msra.mxu0 %v6852
        %7030 = vmatprep.subr.bf16.mxu0 %v6843
        %7031 = vmatpush2.bf16.msra.mxu0 %v6842
        %7032 = vmatprep.subr.bf16.mxu0 %v6833
        %7033 = vmatpush2.bf16.msra.mxu0 %v6832
        %7034 = vmatprep.subr.bf16.mxu0 %v6823
        %7035 = vmatpush2.bf16.msra.mxu0 %v6822
        %7036 = vmatprep.subr.bf16.mxu0 %v6813
        %7037 = vmatpush2.bf16.msra.mxu0 %v6812
        %7038 = vmatprep.subr.bf16.mxu0 %v6803
        %7039 = vmatpush2.bf16.msra.mxu0 %v6802
        %7040 = vmatprep.subr.bf16.mxu0 %v6793
        %7041 = vmatpush2.bf16.msra.mxu0 %v6792
        %7042 = vmatprep.subr.bf16.mxu0 %v6783
        %7043 = vmatpush2.bf16.msra.mxu0 %v6782
        %7044 = vmatprep.mubr.bf16.mxu0 %v6884
        %7045 = vmatmul.mubr.bf16.gmra.mxu0 %v6883
        %v7046 = vpop.f32.mrf.mxu0
        %v7047 = vadd.f32 %v7006, %v7046
        %v7048 = vpop.f32.mrf.mxu0
        %v7049 = vadd.f32 %v7008, %v7048
        %v7050 = vpop.f32.mrf.mxu0
        %v7051 = vpop.f32.mrf.mxu0
        %7052 = vdwg.mxu0
        %7053 = vmatprep.subr.bf16.mxu0 %v6615
        %7054 = vmatpush1.bf16.msra.mxu0 %v6614
        %7055 = vmatprep.subr.bf16.mxu0 %v6605
        %7056 = vmatpush1.bf16.msra.mxu0 %v6604
        %7057 = vmatprep.subr.bf16.mxu0 %v6595
        %7058 = vmatpush1.bf16.msra.mxu0 %v6594
        %7059 = vmatprep.subr.bf16.mxu0 %v6585
        %7060 = vmatpush1.bf16.msra.mxu0 %v6584
        %7061 = vmatprep.subr.bf16.mxu0 %v6575
        %7062 = vmatpush1.bf16.msra.mxu0 %v6574
        %7063 = vmatprep.subr.bf16.mxu0 %v6565
        %7064 = vmatpush1.bf16.msra.mxu0 %v6564
        %7065 = vmatprep.subr.bf16.mxu0 %v6555
        %7066 = vmatpush1.bf16.msra.mxu0 %v6554
        %7067 = vmatprep.subr.bf16.mxu0 %v6545
        %7068 = vmatpush1.bf16.msra.mxu0 %v6544
        %7069 = vmatprep.subr.bf16.mxu0 %v6695
        %7070 = vmatpush2.bf16.msra.mxu0 %v6694
        %7071 = vmatprep.subr.bf16.mxu0 %v6685
        %7072 = vmatpush2.bf16.msra.mxu0 %v6684
        %7073 = vmatprep.subr.bf16.mxu0 %v6675
        %7074 = vmatpush2.bf16.msra.mxu0 %v6674
        %7075 = vmatprep.subr.bf16.mxu0 %v6665
        %7076 = vmatpush2.bf16.msra.mxu0 %v6664
        %7077 = vmatprep.subr.bf16.mxu0 %v6655
        %7078 = vmatpush2.bf16.msra.mxu0 %v6654
        %7079 = vmatprep.subr.bf16.mxu0 %v6645
        %7080 = vmatpush2.bf16.msra.mxu0 %v6644
        %7081 = vmatprep.subr.bf16.mxu0 %v6635
        %7082 = vmatpush2.bf16.msra.mxu0 %v6634
        %7083 = vmatprep.subr.bf16.mxu0 %v6625
        %7084 = vmatpush2.bf16.msra.mxu0 %v6624
        %7085 = vmatprep.mubr.bf16.mxu0 %v6882
        %7086 = vmatmul.mubr.bf16.gmra.mxu0 %v6875
        %v7087 = vpop.f32.mrf.mxu0
        %v7088 = vadd.f32 0.0, %v7087
        %v7089 = vpop.f32.mrf.mxu0
        %v7090 = vadd.f32 0.0, %v7089
        %v7091 = vpop.f32.mrf.mxu0
        %v7092 = vpop.f32.mrf.mxu0
        %7093 = vdwg.mxu0
        %7094 = vmatprep.subr.bf16.mxu0 %v6775
        %7095 = vmatpush1.bf16.msra.mxu0 %v6774
        %7096 = vmatprep.subr.bf16.mxu0 %v6765
        %7097 = vmatpush1.bf16.msra.mxu0 %v6764
        %7098 = vmatprep.subr.bf16.mxu0 %v6755
        %7099 = vmatpush1.bf16.msra.mxu0 %v6754
        %7100 = vmatprep.subr.bf16.mxu0 %v6745
        %7101 = vmatpush1.bf16.msra.mxu0 %v6744
        %7102 = vmatprep.subr.bf16.mxu0 %v6735
        %7103 = vmatpush1.bf16.msra.mxu0 %v6734
        %7104 = vmatprep.subr.bf16.mxu0 %v6725
        %7105 = vmatpush1.bf16.msra.mxu0 %v6724
        %7106 = vmatprep.subr.bf16.mxu0 %v6715
        %7107 = vmatpush1.bf16.msra.mxu0 %v6714
        %7108 = vmatprep.subr.bf16.mxu0 %v6705
        %7109 = vmatpush1.bf16.msra.mxu0 %v6704
        %7110 = vmatprep.subr.bf16.mxu0 %v6855
        %7111 = vmatpush2.bf16.msra.mxu0 %v6854
        %7112 = vmatprep.subr.bf16.mxu0 %v6845
        %7113 = vmatpush2.bf16.msra.mxu0 %v6844
        %7114 = vmatprep.subr.bf16.mxu0 %v6835
        %7115 = vmatpush2.bf16.msra.mxu0 %v6834
        %7116 = vmatprep.subr.bf16.mxu0 %v6825
        %7117 = vmatpush2.bf16.msra.mxu0 %v6824
        %7118 = vmatprep.subr.bf16.mxu0 %v6815
        %7119 = vmatpush2.bf16.msra.mxu0 %v6814
        %7120 = vmatprep.subr.bf16.mxu0 %v6805
        %7121 = vmatpush2.bf16.msra.mxu0 %v6804
        %7122 = vmatprep.subr.bf16.mxu0 %v6795
        %7123 = vmatpush2.bf16.msra.mxu0 %v6794
        %7124 = vmatprep.subr.bf16.mxu0 %v6785
        %7125 = vmatpush2.bf16.msra.mxu0 %v6784
        %7126 = vmatprep.mubr.bf16.mxu0 %v6884
        %7127 = vmatmul.mubr.bf16.gmra.mxu0 %v6883
        %v7128 = vpop.f32.mrf.mxu0
        %v7129 = vadd.f32 %v7088, %v7128
        %v7130 = vpop.f32.mrf.mxu0
        %v7131 = vadd.f32 %v7090, %v7130
        %v7132 = vpop.f32.mrf.mxu0
        %v7133 = vpop.f32.mrf.mxu0
        %7134 = vdwg.mxu0
        %7135 = vmatprep.subr.bf16.mxu0 %v6617
        %7136 = vmatpush1.bf16.msra.mxu0 %v6616
        %7137 = vmatprep.subr.bf16.mxu0 %v6607
        %7138 = vmatpush1.bf16.msra.mxu0 %v6606
        %7139 = vmatprep.subr.bf16.mxu0 %v6597
        %7140 = vmatpush1.bf16.msra.mxu0 %v6596
        %7141 = vmatprep.subr.bf16.mxu0 %v6587
        %7142 = vmatpush1.bf16.msra.mxu0 %v6586
        %7143 = vmatprep.subr.bf16.mxu0 %v6577
        %7144 = vmatpush1.bf16.msra.mxu0 %v6576
        %7145 = vmatprep.subr.bf16.mxu0 %v6567
        %7146 = vmatpush1.bf16.msra.mxu0 %v6566
        %7147 = vmatprep.subr.bf16.mxu0 %v6557
        %7148 = vmatpush1.bf16.msra.mxu0 %v6556
        %7149 = vmatprep.subr.bf16.mxu0 %v6547
        %7150 = vmatpush1.bf16.msra.mxu0 %v6546
        %7151 = vmatprep.subr.bf16.mxu0 %v6697
        %7152 = vmatpush2.bf16.msra.mxu0 %v6696
        %7153 = vmatprep.subr.bf16.mxu0 %v6687
        %7154 = vmatpush2.bf16.msra.mxu0 %v6686
        %7155 = vmatprep.subr.bf16.mxu0 %v6677
        %7156 = vmatpush2.bf16.msra.mxu0 %v6676
        %7157 = vmatprep.subr.bf16.mxu0 %v6667
        %7158 = vmatpush2.bf16.msra.mxu0 %v6666
        %7159 = vmatprep.subr.bf16.mxu0 %v6657
        %7160 = vmatpush2.bf16.msra.mxu0 %v6656
        %7161 = vmatprep.subr.bf16.mxu0 %v6647
        %7162 = vmatpush2.bf16.msra.mxu0 %v6646
        %7163 = vmatprep.subr.bf16.mxu0 %v6637
        %7164 = vmatpush2.bf16.msra.mxu0 %v6636
        %7165 = vmatprep.subr.bf16.mxu0 %v6627
        %7166 = vmatpush2.bf16.msra.mxu0 %v6626
        %7167 = vmatprep.mubr.bf16.mxu0 %v6882
        %7168 = vmatmul.mubr.bf16.gmra.mxu0 %v6875
        %v7169 = vpop.f32.mrf.mxu0
        %v7170 = vadd.f32 0.0, %v7169
        %v7171 = vpop.f32.mrf.mxu0
        %v7172 = vadd.f32 0.0, %v7171
        %v7173 = vpop.f32.mrf.mxu0
        %v7174 = vpop.f32.mrf.mxu0
        %7175 = vdwg.mxu0
        %7176 = vmatprep.subr.bf16.mxu0 %v6777
        %7177 = vmatpush1.bf16.msra.mxu0 %v6776
        %7178 = vmatprep.subr.bf16.mxu0 %v6767
        %7179 = vmatpush1.bf16.msra.mxu0 %v6766
        %7180 = vmatprep.subr.bf16.mxu0 %v6757
        %7181 = vmatpush1.bf16.msra.mxu0 %v6756
        %7182 = vmatprep.subr.bf16.mxu0 %v6747
        %7183 = vmatpush1.bf16.msra.mxu0 %v6746
        %7184 = vmatprep.subr.bf16.mxu0 %v6737
        %7185 = vmatpush1.bf16.msra.mxu0 %v6736
        %7186 = vmatprep.subr.bf16.mxu0 %v6727
        %7187 = vmatpush1.bf16.msra.mxu0 %v6726
        %7188 = vmatprep.subr.bf16.mxu0 %v6717
        %7189 = vmatpush1.bf16.msra.mxu0 %v6716
        %7190 = vmatprep.subr.bf16.mxu0 %v6707
        %7191 = vmatpush1.bf16.msra.mxu0 %v6706
        %7192 = vmatprep.subr.bf16.mxu0 %v6857
        %7193 = vmatpush2.bf16.msra.mxu0 %v6856
        %7194 = vmatprep.subr.bf16.mxu0 %v6847
        %7195 = vmatpush2.bf16.msra.mxu0 %v6846
        %7196 = vmatprep.subr.bf16.mxu0 %v6837
        %7197 = vmatpush2.bf16.msra.mxu0 %v6836
        %7198 = vmatprep.subr.bf16.mxu0 %v6827
        %7199 = vmatpush2.bf16.msra.mxu0 %v6826
        %7200 = vmatprep.subr.bf16.mxu0 %v6817
        %7201 = vmatpush2.bf16.msra.mxu0 %v6816
        %7202 = vmatprep.subr.bf16.mxu0 %v6807
        %7203 = vmatpush2.bf16.msra.mxu0 %v6806
        %7204 = vmatprep.subr.bf16.mxu0 %v6797
        %7205 = vmatpush2.bf16.msra.mxu0 %v6796
        %7206 = vmatprep.subr.bf16.mxu0 %v6787
        %7207 = vmatpush2.bf16.msra.mxu0 %v6786
        %7208 = vmatprep.mubr.bf16.mxu0 %v6884
        %7209 = vmatmul.mubr.bf16.gmra.mxu0 %v6883
        %v7210 = vpop.f32.mrf.mxu0
        %v7211 = vadd.f32 %v7170, %v7210
        %v7212 = vpop.f32.mrf.mxu0
        %v7213 = vadd.f32 %v7172, %v7212
        %v7214 = vpop.f32.mrf.mxu0
        %v7215 = vpop.f32.mrf.mxu0
        %7216 = vdwg.mxu0
        %7217 = vmatprep.subr.bf16.mxu0 %v6619
        %7218 = vmatpush1.bf16.msra.mxu0 %v6618
        %7219 = vmatprep.subr.bf16.mxu0 %v6609
        %7220 = vmatpush1.bf16.msra.mxu0 %v6608
        %7221 = vmatprep.subr.bf16.mxu0 %v6599
        %7222 = vmatpush1.bf16.msra.mxu0 %v6598
        %7223 = vmatprep.subr.bf16.mxu0 %v6589
        %7224 = vmatpush1.bf16.msra.mxu0 %v6588
        %7225 = vmatprep.subr.bf16.mxu0 %v6579
        %7226 = vmatpush1.bf16.msra.mxu0 %v6578
        %7227 = vmatprep.subr.bf16.mxu0 %v6569
        %7228 = vmatpush1.bf16.msra.mxu0 %v6568
        %7229 = vmatprep.subr.bf16.mxu0 %v6559
        %7230 = vmatpush1.bf16.msra.mxu0 %v6558
        %7231 = vmatprep.subr.bf16.mxu0 %v6549
        %7232 = vmatpush1.bf16.msra.mxu0 %v6548
        %7233 = vmatprep.subr.bf16.mxu0 %v6699
        %7234 = vmatpush2.bf16.msra.mxu0 %v6698
        %7235 = vmatprep.subr.bf16.mxu0 %v6689
        %7236 = vmatpush2.bf16.msra.mxu0 %v6688
        %7237 = vmatprep.subr.bf16.mxu0 %v6679
        %7238 = vmatpush2.bf16.msra.mxu0 %v6678
        %7239 = vmatprep.subr.bf16.mxu0 %v6669
        %7240 = vmatpush2.bf16.msra.mxu0 %v6668
        %7241 = vmatprep.subr.bf16.mxu0 %v6659
        %7242 = vmatpush2.bf16.msra.mxu0 %v6658
        %7243 = vmatprep.subr.bf16.mxu0 %v6649
        %7244 = vmatpush2.bf16.msra.mxu0 %v6648
        %7245 = vmatprep.subr.bf16.mxu0 %v6639
        %7246 = vmatpush2.bf16.msra.mxu0 %v6638
        %7247 = vmatprep.subr.bf16.mxu0 %v6629
        %7248 = vmatpush2.bf16.msra.mxu0 %v6628
        %7249 = vmatprep.mubr.bf16.mxu0 %v6882
        %7250 = vmatmul.mubr.bf16.gmra.mxu0 %v6875
        %v7251 = vpop.f32.mrf.mxu0
        %v7252 = vadd.f32 0.0, %v7251
        %v7253 = vpop.f32.mrf.mxu0
        %v7254 = vadd.f32 0.0, %v7253
        %v7255 = vpop.f32.mrf.mxu0
        %v7256 = vpop.f32.mrf.mxu0
        %7257 = vdwg.mxu0
        %7258 = vmatprep.subr.bf16.mxu0 %v6779
        %7259 = vmatpush1.bf16.msra.mxu0 %v6778
        %7260 = vmatprep.subr.bf16.mxu0 %v6769
        %7261 = vmatpush1.bf16.msra.mxu0 %v6768
        %7262 = vmatprep.subr.bf16.mxu0 %v6759
        %7263 = vmatpush1.bf16.msra.mxu0 %v6758
        %7264 = vmatprep.subr.bf16.mxu0 %v6749
        %7265 = vmatpush1.bf16.msra.mxu0 %v6748
        %7266 = vmatprep.subr.bf16.mxu0 %v6739
        %7267 = vmatpush1.bf16.msra.mxu0 %v6738
        %7268 = vmatprep.subr.bf16.mxu0 %v6729
        %7269 = vmatpush1.bf16.msra.mxu0 %v6728
        %7270 = vmatprep.subr.bf16.mxu0 %v6719
        %7271 = vmatpush1.bf16.msra.mxu0 %v6718
        %7272 = vmatprep.subr.bf16.mxu0 %v6709
        %7273 = vmatpush1.bf16.msra.mxu0 %v6708
        %7274 = vmatprep.subr.bf16.mxu0 %v6859
        %7275 = vmatpush2.bf16.msra.mxu0 %v6858
        %7276 = vmatprep.subr.bf16.mxu0 %v6849
        %7277 = vmatpush2.bf16.msra.mxu0 %v6848
        %7278 = vmatprep.subr.bf16.mxu0 %v6839
        %7279 = vmatpush2.bf16.msra.mxu0 %v6838
        %7280 = vmatprep.subr.bf16.mxu0 %v6829
        %7281 = vmatpush2.bf16.msra.mxu0 %v6828
        %7282 = vmatprep.subr.bf16.mxu0 %v6819
        %7283 = vmatpush2.bf16.msra.mxu0 %v6818
        %7284 = vmatprep.subr.bf16.mxu0 %v6809
        %7285 = vmatpush2.bf16.msra.mxu0 %v6808
        %7286 = vmatprep.subr.bf16.mxu0 %v6799
        %7287 = vmatpush2.bf16.msra.mxu0 %v6798
        %7288 = vmatprep.subr.bf16.mxu0 %v6789
        %7289 = vmatpush2.bf16.msra.mxu0 %v6788
        %7290 = vmatprep.mubr.bf16.mxu0 %v6884
        %7291 = vmatmul.mubr.bf16.gmra.mxu0 %v6883
        %v7292 = vpop.f32.mrf.mxu0
        %v7293 = vadd.f32 %v7252, %v7292
        %v7294 = vpop.f32.mrf.mxu0
        %v7295 = vadd.f32 %v7254, %v7294
        %v7296 = vpop.f32.mrf.mxu0
        %v7297 = vpop.f32.mrf.mxu0
        %7298 = vdwg.mxu0
        %v7299 = vpack.c.bf16 %v6965, %v6965
        %v7300 = vpack.c.bf16 %v6967, %v6967
        %v7301 = vpack.c.bf16 %v7047, %v7047
        %v7302 = vpack.c.bf16 %v7049, %v7049
        %v7303 = vpack.c.bf16 %v7129, %v7129
        %v7304 = vpack.c.bf16 %v7131, %v7131
        %v7305 = vpack.c.bf16 %v7211, %v7211
        %v7306 = vpack.c.bf16 %v7213, %v7213
        %v7307 = vpack.c.bf16 %v7293, %v7293
        %v7308 = vpack.c.bf16 %v7295, %v7295
        %v7309 = vld [vmem:[%s405] sm:$0xff]
        %v7310 = vld [vmem:[%s405 + $0x8] sm:$0xf]
        %v7311 = vld [vmem:[%s405 + $0xc] sm:$0xff]
        %v7312 = vld [vmem:[%s405 + $0x14] sm:$0xf]
        %v7313 = vld [vmem:[%s405 + $0x18] sm:$0xff]
        %v7314 = vld [vmem:[%s405 + $0x20] sm:$0xf]
        %v7315 = vld [vmem:[%s405 + $0x24] sm:$0xff]
        %v7316 = vld [vmem:[%s405 + $0x2c] sm:$0xf]
        %v7317 = vld [vmem:[%s405 + $0x30] sm:$0xff]
        %v7318 = vld [vmem:[%s405 + $0x38] sm:$0xf]
        %v7319 = vld [vmem:[%s405 + $0x3c] sm:$0xff]
        %v7320 = vld [vmem:[%s405 + $0x44] sm:$0xf]
        %v7321 = vld [vmem:[%s405 + $0x48] sm:$0xff]
        %v7322 = vld [vmem:[%s405 + $0x50] sm:$0xf]
        %v7323 = vld [vmem:[%s405 + $0x54] sm:$0xff]
        %v7324 = vld [vmem:[%s405 + $0x5c] sm:$0xf]
        %v7325 = vld [vmem:[%s405 + $0x60] sm:$0xff]
        %v7326 = vld [vmem:[%s405 + $0x68] sm:$0xf]
        %v7327 = vld [vmem:[%s405 + $0x6c] sm:$0xff]
        %v7328 = vld [vmem:[%s405 + $0x74] sm:$0xf]
        %v7329 = vld [vmem:[%s405 + $0x78] sm:$0xff]
        %v7330 = vld [vmem:[%s405 + $0x80] sm:$0xf]
        %v7331 = vld [vmem:[%s405 + $0x84] sm:$0xff]
        %v7332 = vld [vmem:[%s405 + $0x8c] sm:$0xf]
        %v7333 = vld [vmem:[%s405 + $0x90] sm:$0xff]
        %v7334 = vld [vmem:[%s405 + $0x98] sm:$0xf]
        %v7335 = vld [vmem:[%s405 + $0x9c] sm:$0xff]
        %v7336 = vld [vmem:[%s405 + $0xa4] sm:$0xf]
        %v7337 = vld [vmem:[%s405 + $0xa8] sm:$0xff]
        %v7338 = vld [vmem:[%s405 + $0xb0] sm:$0xf]
        %v7339 = vld [vmem:[%s405 + $0xb4] sm:$0xff]
        %v7340 = vld [vmem:[%s405 + $0xbc] sm:$0xf]
        %v7341 = vld [vmem:[%s405 + $0xc0] sm:$0xff]
        %v7342 = vld [vmem:[%s405 + $0xc8] sm:$0xf]
        %v7343 = vld [vmem:[%s405 + $0xcc] sm:$0xff]
        %v7344 = vld [vmem:[%s405 + $0xd4] sm:$0xf]
        %v7345 = vld [vmem:[%s405 + $0xd8] sm:$0xff]
        %v7346 = vld [vmem:[%s405 + $0xe0] sm:$0xf]
        %v7347 = vld [vmem:[%s405 + $0xe4] sm:$0xff]
        %v7348 = vld [vmem:[%s405 + $0xec] sm:$0xf]
        %v7349 = vld [vmem:[%s405 + $0xf0] sm:$0xff]
        %v7350 = vld [vmem:[%s405 + $0xf8] sm:$0xf]
        %v7351 = vld [vmem:[%s405 + $0xfc] sm:$0xff]
        %v7352 = vld [vmem:[%s405 + $0x104] sm:$0xf]
        %v7353 = vld [vmem:[%s405 + $0x108] sm:$0xff]
        %v7354 = vld [vmem:[%s405 + $0x110] sm:$0xf]
        %v7355 = vld [vmem:[%s405 + $0x114] sm:$0xff]
        %v7356 = vld [vmem:[%s405 + $0x11c] sm:$0xf]
        %v7357 = vld [vmem:[%s405 + $0x120] sm:$0xff]
        %v7358 = vld [vmem:[%s405 + $0x128] sm:$0xf]
        %v7359 = vld [vmem:[%s405 + $0x12c] sm:$0xff]
        %v7360 = vld [vmem:[%s405 + $0x134] sm:$0xf]
        %v7361 = vld [vmem:[%s405 + $0x138] sm:$0xff]
        %v7362 = vld [vmem:[%s405 + $0x140] sm:$0xf]
        %v7363 = vld [vmem:[%s405 + $0x144] sm:$0xff]
        %v7364 = vld [vmem:[%s405 + $0x14c] sm:$0xf]
        %v7365 = vld [vmem:[%s405 + $0x150] sm:$0xff]
        %v7366 = vld [vmem:[%s405 + $0x158] sm:$0xf]
        %v7367 = vld [vmem:[%s405 + $0x15c] sm:$0xff]
        %v7368 = vld [vmem:[%s405 + $0x164] sm:$0xf]
        %v7369 = vld [vmem:[%s405 + $0x168] sm:$0xff]
        %v7370 = vld [vmem:[%s405 + $0x170] sm:$0xf]
        %v7371 = vld [vmem:[%s405 + $0x174] sm:$0xff]
        %v7372 = vld [vmem:[%s405 + $0x17c] sm:$0xf]
        %v7373 = vld [vmem:[%s405 + $0x180] sm:$0xff]
        %v7374 = vld [vmem:[%s405 + $0x188] sm:$0xf]
        %v7375 = vld [vmem:[%s405 + $0x18c] sm:$0xff]
        %v7376 = vld [vmem:[%s405 + $0x194] sm:$0xf]
        %v7377 = vld [vmem:[%s405 + $0x198] sm:$0xff]
        %v7378 = vld [vmem:[%s405 + $0x1a0] sm:$0xf]
        %v7379 = vld [vmem:[%s405 + $0x1a4] sm:$0xff]
        %v7380 = vld [vmem:[%s405 + $0x1ac] sm:$0xf]
        %v7381 = vld [vmem:[%s405 + $0x1b0] sm:$0xff]
        %v7382 = vld [vmem:[%s405 + $0x1b8] sm:$0xf]
        %v7383 = vld [vmem:[%s405 + $0x1bc] sm:$0xff]
        %v7384 = vld [vmem:[%s405 + $0x1c4] sm:$0xf]
        %v7385 = vld [vmem:[%s405 + $0x1c8] sm:$0xff]
        %v7386 = vld [vmem:[%s405 + $0x1d0] sm:$0xf]
        %v7387 = vld [vmem:[%s405 + $0x1d4] sm:$0xff]
        %v7388 = vld [vmem:[%s405 + $0x1dc] sm:$0xf]
        %v7389 = vld [vmem:[%s405 + $0x1e0] sm:$0xff]
        %v7390 = vld [vmem:[%s405 + $0x1e8] sm:$0xf]
        %v7391 = vld [vmem:[%s405 + $0x1ec] sm:$0xff]
        %v7392 = vld [vmem:[%s405 + $0x1f4] sm:$0xf]
        %v7393 = vld [vmem:[%s405 + $0x1f8] sm:$0xff]
        %v7394 = vld [vmem:[%s405 + $0x200] sm:$0xf]
        %v7395 = vld [vmem:[%s405 + $0x204] sm:$0xff]
        %v7396 = vld [vmem:[%s405 + $0x20c] sm:$0xf]
        %v7397 = vld [vmem:[%s405 + $0x210] sm:$0xff]
        %v7398 = vld [vmem:[%s405 + $0x218] sm:$0xf]
        %v7399 = vld [vmem:[%s405 + $0x21c] sm:$0xff]
        %v7400 = vld [vmem:[%s405 + $0x224] sm:$0xf]
        %v7401 = vld [vmem:[%s405 + $0x228] sm:$0xff]
        %v7402 = vld [vmem:[%s405 + $0x230] sm:$0xf]
        %v7403 = vld [vmem:[%s405 + $0x234] sm:$0xff]
        %v7404 = vld [vmem:[%s405 + $0x23c] sm:$0xf]
        %v7405 = vld [vmem:[%s405 + $0x240] sm:$0xff]
        %v7406 = vld [vmem:[%s405 + $0x248] sm:$0xf]
        %v7407 = vld [vmem:[%s405 + $0x24c] sm:$0xff]
        %v7408 = vld [vmem:[%s405 + $0x254] sm:$0xf]
        %v7409 = vld [vmem:[%s405 + $0x258] sm:$0xff]
        %v7410 = vld [vmem:[%s405 + $0x260] sm:$0xf]
        %v7411 = vld [vmem:[%s405 + $0x264] sm:$0xff]
        %v7412 = vld [vmem:[%s405 + $0x26c] sm:$0xf]
        %v7413 = vld [vmem:[%s405 + $0x270] sm:$0xff]
        %v7414 = vld [vmem:[%s405 + $0x278] sm:$0xf]
        %v7415 = vld [vmem:[%s405 + $0x27c] sm:$0xff]
        %v7416 = vld [vmem:[%s405 + $0x284] sm:$0xf]
        %v7417 = vld [vmem:[%s405 + $0x288] sm:$0xff]
        %v7418 = vld [vmem:[%s405 + $0x290] sm:$0xf]
        %v7419 = vld [vmem:[%s405 + $0x294] sm:$0xff]
        %v7420 = vld [vmem:[%s405 + $0x29c] sm:$0xf]
        %v7421 = vld [vmem:[%s405 + $0x2a0] sm:$0xff]
        %v7422 = vld [vmem:[%s405 + $0x2a8] sm:$0xf]
        %v7423 = vld [vmem:[%s405 + $0x2ac] sm:$0xff]
        %v7424 = vld [vmem:[%s405 + $0x2b4] sm:$0xf]
        %v7425 = vld [vmem:[%s405 + $0x2b8] sm:$0xff]
        %v7426 = vld [vmem:[%s405 + $0x2c0] sm:$0xf]
        %v7427 = vld [vmem:[%s405 + $0x2c4] sm:$0xff]
        %v7428 = vld [vmem:[%s405 + $0x2cc] sm:$0xf]
        %v7429 = vld [vmem:[%s405 + $0x2d0] sm:$0xff]
        %v7430 = vld [vmem:[%s405 + $0x2d8] sm:$0xf]
        %v7431 = vld [vmem:[%s405 + $0x2dc] sm:$0xff]
        %v7432 = vld [vmem:[%s405 + $0x2e4] sm:$0xf]
        %v7433 = vld [vmem:[%s405 + $0x2e8] sm:$0xff]
        %v7434 = vld [vmem:[%s405 + $0x2f0] sm:$0xf]
        %v7435 = vld [vmem:[%s405 + $0x2f4] sm:$0xff]
        %v7436 = vld [vmem:[%s405 + $0x2fc] sm:$0xf]
        %v7437 = vld [vmem:[%s405 + $0x300] sm:$0xff]
        %v7438 = vld [vmem:[%s405 + $0x308] sm:$0xf]
        %v7439 = vld [vmem:[%s405 + $0x30c] sm:$0xff]
        %v7440 = vld [vmem:[%s405 + $0x314] sm:$0xf]
        %v7441 = vld [vmem:[%s405 + $0x318] sm:$0xff]
        %v7442 = vld [vmem:[%s405 + $0x320] sm:$0xf]
        %v7443 = vld [vmem:[%s405 + $0x324] sm:$0xff]
        %v7444 = vld [vmem:[%s405 + $0x32c] sm:$0xf]
        %v7445 = vld [vmem:[%s405 + $0x330] sm:$0xff]
        %v7446 = vld [vmem:[%s405 + $0x338] sm:$0xf]
        %v7447 = vld [vmem:[%s405 + $0x33c] sm:$0xff]
        %v7448 = vld [vmem:[%s405 + $0x344] sm:$0xf]
        %v7449 = vld [vmem:[%s405 + $0x348] sm:$0xff]
        %v7450 = vld [vmem:[%s405 + $0x350] sm:$0xf]
        %v7451 = vld [vmem:[%s405 + $0x354] sm:$0xff]
        %v7452 = vld [vmem:[%s405 + $0x35c] sm:$0xf]
        %v7453 = vld [vmem:[%s405 + $0x360] sm:$0xff]
        %v7454 = vld [vmem:[%s405 + $0x368] sm:$0xf]
        %v7455 = vld [vmem:[%s405 + $0x36c] sm:$0xff]
        %v7456 = vld [vmem:[%s405 + $0x374] sm:$0xf]
        %v7457 = vld [vmem:[%s405 + $0x378] sm:$0xff]
        %v7458 = vld [vmem:[%s405 + $0x380] sm:$0xf]
        %v7459 = vld [vmem:[%s405 + $0x384] sm:$0xff]
        %v7460 = vld [vmem:[%s405 + $0x38c] sm:$0xf]
        %v7461 = vld [vmem:[%s405 + $0x390] sm:$0xff]
        %v7462 = vld [vmem:[%s405 + $0x398] sm:$0xf]
        %v7463 = vld [vmem:[%s405 + $0x39c] sm:$0xff]
        %v7464 = vld [vmem:[%s405 + $0x3a4] sm:$0xf]
        %v7465 = vld [vmem:[%s405 + $0x3a8] sm:$0xff]
        %v7466 = vld [vmem:[%s405 + $0x3b0] sm:$0xf]
        %v7467 = vld [vmem:[%s405 + $0x3b4] sm:$0xff]
        %v7468 = vld [vmem:[%s405 + $0x3bc] sm:$0xf]
        %v7469 = vld [vmem:[%s405 + $0x3c0] sm:$0xff]
        %v7470 = vld [vmem:[%s405 + $0x3c8] sm:$0xf]
        %v7471 = vld [vmem:[%s405 + $0x3cc] sm:$0xff]
        %v7472 = vld [vmem:[%s405 + $0x3d4] sm:$0xf]
        %v7473 = vld [vmem:[%s405 + $0x3d8] sm:$0xff]
        %v7474 = vld [vmem:[%s405 + $0x3e0] sm:$0xf]
        %v7475 = vld [vmem:[%s405 + $0x3e4] sm:$0xff]
        %v7476 = vld [vmem:[%s405 + $0x3ec] sm:$0xf]
        %v7477 = vld [vmem:[%s405 + $0x3f0] sm:$0xff]
        %v7478 = vld [vmem:[%s405 + $0x3f8] sm:$0xf]
        %v7479 = vld [vmem:[%s405 + $0x3fc] sm:$0xff]
        %v7480 = vld [vmem:[%s405 + $0x404] sm:$0xf]
        %v7481 = vld [vmem:[%s405 + $0x408] sm:$0xff]
        %v7482 = vld [vmem:[%s405 + $0x410] sm:$0xf]
        %v7483 = vld [vmem:[%s405 + $0x414] sm:$0xff]
        %v7484 = vld [vmem:[%s405 + $0x41c] sm:$0xf]
        %v7485 = vld [vmem:[%s405 + $0x420] sm:$0xff]
        %v7486 = vld [vmem:[%s405 + $0x428] sm:$0xf]
        %v7487 = vld [vmem:[%s405 + $0x42c] sm:$0xff]
        %v7488 = vld [vmem:[%s405 + $0x434] sm:$0xf]
        %v7489 = vld [vmem:[%s405 + $0x438] sm:$0xff]
        %v7490 = vld [vmem:[%s405 + $0x440] sm:$0xf]
        %v7491 = vld [vmem:[%s405 + $0x444] sm:$0xff]
        %v7492 = vld [vmem:[%s405 + $0x44c] sm:$0xf]
        %v7493 = vld [vmem:[%s405 + $0x450] sm:$0xff]
        %v7494 = vld [vmem:[%s405 + $0x458] sm:$0xf]
        %v7495 = vld [vmem:[%s405 + $0x45c] sm:$0xff]
        %v7496 = vld [vmem:[%s405 + $0x464] sm:$0xf]
        %v7497 = vld [vmem:[%s405 + $0x468] sm:$0xff]
        %v7498 = vld [vmem:[%s405 + $0x470] sm:$0xf]
        %v7499 = vld [vmem:[%s405 + $0x474] sm:$0xff]
        %v7500 = vld [vmem:[%s405 + $0x47c] sm:$0xf]
        %v7501 = vld [vmem:[%s405 + $0x480] sm:$0xff]
        %v7502 = vld [vmem:[%s405 + $0x488] sm:$0xf]
        %v7503 = vld [vmem:[%s405 + $0x48c] sm:$0xff]
        %v7504 = vld [vmem:[%s405 + $0x494] sm:$0xf]
        %v7505 = vld [vmem:[%s405 + $0x498] sm:$0xff]
        %v7506 = vld [vmem:[%s405 + $0x4a0] sm:$0xf]
        %v7507 = vld [vmem:[%s405 + $0x4a4] sm:$0xff]
        %v7508 = vld [vmem:[%s405 + $0x4ac] sm:$0xf]
        %v7509 = vld [vmem:[%s405 + $0x4b0] sm:$0xff]
        %v7510 = vld [vmem:[%s405 + $0x4b8] sm:$0xf]
        %v7511 = vld [vmem:[%s405 + $0x4bc] sm:$0xff]
        %v7512 = vld [vmem:[%s405 + $0x4c4] sm:$0xf]
        %v7513 = vld [vmem:[%s405 + $0x4c8] sm:$0xff]
        %v7514 = vld [vmem:[%s405 + $0x4d0] sm:$0xf]
        %v7515 = vld [vmem:[%s405 + $0x4d4] sm:$0xff]
        %v7516 = vld [vmem:[%s405 + $0x4dc] sm:$0xf]
        %v7517 = vld [vmem:[%s405 + $0x4e0] sm:$0xff]
        %v7518 = vld [vmem:[%s405 + $0x4e8] sm:$0xf]
        %v7519 = vld [vmem:[%s405 + $0x4ec] sm:$0xff]
        %v7520 = vld [vmem:[%s405 + $0x4f4] sm:$0xf]
        %v7521 = vld [vmem:[%s405 + $0x4f8] sm:$0xff]
        %v7522 = vld [vmem:[%s405 + $0x500] sm:$0xf]
        %v7523 = vld [vmem:[%s405 + $0x504] sm:$0xff]
        %v7524 = vld [vmem:[%s405 + $0x50c] sm:$0xf]
        %v7525 = vld [vmem:[%s405 + $0x510] sm:$0xff]
        %v7526 = vld [vmem:[%s405 + $0x518] sm:$0xf]
        %v7527 = vld [vmem:[%s405 + $0x51c] sm:$0xff]
        %v7528 = vld [vmem:[%s405 + $0x524] sm:$0xf]
        %v7529 = vld [vmem:[%s405 + $0x528] sm:$0xff]
        %v7530 = vld [vmem:[%s405 + $0x530] sm:$0xf]
        %v7531 = vld [vmem:[%s405 + $0x534] sm:$0xff]
        %v7532 = vld [vmem:[%s405 + $0x53c] sm:$0xf]
        %v7533 = vld [vmem:[%s405 + $0x540] sm:$0xff]
        %v7534 = vld [vmem:[%s405 + $0x548] sm:$0xf]
        %v7535 = vld [vmem:[%s405 + $0x54c] sm:$0xff]
        %v7536 = vld [vmem:[%s405 + $0x554] sm:$0xf]
        %v7537 = vld [vmem:[%s405 + $0x558] sm:$0xff]
        %v7538 = vld [vmem:[%s405 + $0x560] sm:$0xf]
        %v7539 = vld [vmem:[%s405 + $0x564] sm:$0xff]
        %v7540 = vld [vmem:[%s405 + $0x56c] sm:$0xf]
        %v7541 = vld [vmem:[%s405 + $0x570] sm:$0xff]
        %v7542 = vld [vmem:[%s405 + $0x578] sm:$0xf]
        %v7543 = vld [vmem:[%s405 + $0x57c] sm:$0xff]
        %v7544 = vld [vmem:[%s405 + $0x584] sm:$0xf]
        %v7545 = vld [vmem:[%s405 + $0x588] sm:$0xff]
        %v7546 = vld [vmem:[%s405 + $0x590] sm:$0xf]
        %v7547 = vld [vmem:[%s405 + $0x594] sm:$0xff]
        %v7548 = vld [vmem:[%s405 + $0x59c] sm:$0xf]
        %v7549 = vld [vmem:[%s405 + $0x5a0] sm:$0xff]
        %v7550 = vld [vmem:[%s405 + $0x5a8] sm:$0xf]
        %v7551 = vld [vmem:[%s405 + $0x5ac] sm:$0xff]
        %v7552 = vld [vmem:[%s405 + $0x5b4] sm:$0xf]
        %v7553 = vld [vmem:[%s405 + $0x5b8] sm:$0xff]
        %v7554 = vld [vmem:[%s405 + $0x5c0] sm:$0xf]
        %v7555 = vld [vmem:[%s405 + $0x5c4] sm:$0xff]
        %v7556 = vld [vmem:[%s405 + $0x5cc] sm:$0xf]
        %v7557 = vld [vmem:[%s405 + $0x5d0] sm:$0xff]
        %v7558 = vld [vmem:[%s405 + $0x5d8] sm:$0xf]
        %v7559 = vld [vmem:[%s405 + $0x5dc] sm:$0xff]
        %v7560 = vld [vmem:[%s405 + $0x5e4] sm:$0xf]
        %v7561 = vld [vmem:[%s405 + $0x5e8] sm:$0xff]
        %v7562 = vld [vmem:[%s405 + $0x5f0] sm:$0xf]
        %v7563 = vld [vmem:[%s405 + $0x5f4] sm:$0xff]
        %v7564 = vld [vmem:[%s405 + $0x5fc] sm:$0xf]
        %v7565 = vld [vmem:[%s405 + $0x600] sm:$0xff]
        %v7566 = vld [vmem:[%s405 + $0x608] sm:$0xf]
        %v7567 = vld [vmem:[%s405 + $0x60c] sm:$0xff]
        %v7568 = vld [vmem:[%s405 + $0x614] sm:$0xf]
        %v7569 = vld [vmem:[%s405 + $0x618] sm:$0xff]
        %v7570 = vld [vmem:[%s405 + $0x620] sm:$0xf]
        %v7571 = vld [vmem:[%s405 + $0x624] sm:$0xff]
        %v7572 = vld [vmem:[%s405 + $0x62c] sm:$0xf]
        %v7573 = vld [vmem:[%s405 + $0x630] sm:$0xff]
        %v7574 = vld [vmem:[%s405 + $0x638] sm:$0xf]
        %v7575 = vld [vmem:[%s405 + $0x63c] sm:$0xff]
        %v7576 = vld [vmem:[%s405 + $0x644] sm:$0xf]
        %v7577 = vld [vmem:[%s405 + $0x648] sm:$0xff]
        %v7578 = vld [vmem:[%s405 + $0x650] sm:$0xf]
        %v7579 = vld [vmem:[%s405 + $0x654] sm:$0xff]
        %v7580 = vld [vmem:[%s405 + $0x65c] sm:$0xf]
        %v7581 = vld [vmem:[%s405 + $0x660] sm:$0xff]
        %v7582 = vld [vmem:[%s405 + $0x668] sm:$0xf]
        %v7583 = vld [vmem:[%s405 + $0x66c] sm:$0xff]
        %v7584 = vld [vmem:[%s405 + $0x674] sm:$0xf]
        %v7585 = vld [vmem:[%s405 + $0x678] sm:$0xff]
        %v7586 = vld [vmem:[%s405 + $0x680] sm:$0xf]
        %v7587 = vld [vmem:[%s405 + $0x684] sm:$0xff]
        %v7588 = vld [vmem:[%s405 + $0x68c] sm:$0xf]
        %v7589 = vld [vmem:[%s405 + $0x690] sm:$0xff]
        %v7590 = vld [vmem:[%s405 + $0x698] sm:$0xf]
        %v7591 = vld [vmem:[%s405 + $0x69c] sm:$0xff]
        %v7592 = vld [vmem:[%s405 + $0x6a4] sm:$0xf]
        %v7593 = vld [vmem:[%s405 + $0x6a8] sm:$0xff]
        %v7594 = vld [vmem:[%s405 + $0x6b0] sm:$0xf]
        %v7595 = vld [vmem:[%s405 + $0x6b4] sm:$0xff]
        %v7596 = vld [vmem:[%s405 + $0x6bc] sm:$0xf]
        %v7597 = vld [vmem:[%s405 + $0x6c0] sm:$0xff]
        %v7598 = vld [vmem:[%s405 + $0x6c8] sm:$0xf]
        %v7599 = vld [vmem:[%s405 + $0x6cc] sm:$0xff]
        %v7600 = vld [vmem:[%s405 + $0x6d4] sm:$0xf]
        %v7601 = vld [vmem:[%s405 + $0x6d8] sm:$0xff]
        %v7602 = vld [vmem:[%s405 + $0x6e0] sm:$0xf]
        %v7603 = vld [vmem:[%s405 + $0x6e4] sm:$0xff]
        %v7604 = vld [vmem:[%s405 + $0x6ec] sm:$0xf]
        %v7605 = vld [vmem:[%s405 + $0x6f0] sm:$0xff]
        %v7606 = vld [vmem:[%s405 + $0x6f8] sm:$0xf]
        %v7607 = vld [vmem:[%s405 + $0x6fc] sm:$0xff]
        %v7608 = vld [vmem:[%s405 + $0x704] sm:$0xf]
        %v7609 = vld [vmem:[%s405 + $0x708] sm:$0xff]
        %v7610 = vld [vmem:[%s405 + $0x710] sm:$0xf]
        %v7611 = vld [vmem:[%s405 + $0x714] sm:$0xff]
        %v7612 = vld [vmem:[%s405 + $0x71c] sm:$0xf]
        %v7613 = vld [vmem:[%s405 + $0x720] sm:$0xff]
        %v7614 = vld [vmem:[%s405 + $0x728] sm:$0xf]
        %v7615 = vld [vmem:[%s405 + $0x72c] sm:$0xff]
        %v7616 = vld [vmem:[%s405 + $0x734] sm:$0xf]
        %v7617 = vld [vmem:[%s405 + $0x738] sm:$0xff]
        %v7618 = vld [vmem:[%s405 + $0x740] sm:$0xf]
        %v7619 = vld [vmem:[%s405 + $0x744] sm:$0xff]
        %v7620 = vld [vmem:[%s405 + $0x74c] sm:$0xf]
        %v7621 = vld [vmem:[%s405 + $0x750] sm:$0xff]
        %v7622 = vld [vmem:[%s405 + $0x758] sm:$0xf]
        %v7623 = vld [vmem:[%s405 + $0x75c] sm:$0xff]
        %v7624 = vld [vmem:[%s405 + $0x764] sm:$0xf]
        %v7625 = vld [vmem:[%s405 + $0x768] sm:$0xff]
        %v7626 = vld [vmem:[%s405 + $0x770] sm:$0xf]
        %v7627 = vld [vmem:[%s405 + $0x774] sm:$0xff]
        %v7628 = vld [vmem:[%s405 + $0x77c] sm:$0xf]
        %v7629 = vld [vmem:[%s414] sm:$0x7]
        %v7631 = vlaneseq
        %v7632 = vshrl.u32 %v7631, 7
        %v7633 = vsub.s32 0, %v7632
        %v7634 = vrot.slane %v7629, %v7633
        %v7635 = vlaneseq
        %v7636 = vshrl.u32 %v7635, 7
        %v7637 = vsub.s32 1, %v7636
        %v7638 = vrot.slane %v7629, %v7637
        %v7639 = vlaneseq
        %v7640 = vshrl.u32 %v7639, 7
        %v7641 = vsub.s32 2, %v7640
        %v7642 = vrot.slane %v7629, %v7641
        %v7966 = vunpack.c.l.b16 %v7309
        %v7967 = vunpack.c.h.b16 %v7309
        %v7968 = vunpack.c.l.b16 %v7310
        %v7969 = vunpack.c.l.b16 %v7311
        %v7970 = vunpack.c.h.b16 %v7311
        %v7971 = vunpack.c.l.b16 %v7312
        %v7972 = vunpack.c.l.b16 %v7313
        %v7973 = vunpack.c.h.b16 %v7313
        %v7974 = vunpack.c.l.b16 %v7314
        %v7975 = vunpack.c.l.b16 %v7315
        %v7976 = vunpack.c.h.b16 %v7315
        %v7977 = vunpack.c.l.b16 %v7316
        %v7978 = vunpack.c.l.b16 %v7317
        %v7979 = vunpack.c.h.b16 %v7317
        %v7980 = vunpack.c.l.b16 %v7318
        %v7981 = vunpack.c.l.b16 %v7319
        %v7982 = vunpack.c.h.b16 %v7319
        %v7983 = vunpack.c.l.b16 %v7320
        %v7984 = vunpack.c.l.b16 %v7321
        %v7985 = vunpack.c.h.b16 %v7321
        %v7986 = vunpack.c.l.b16 %v7322
        %v7987 = vunpack.c.l.b16 %v7323
        %v7988 = vunpack.c.h.b16 %v7323
        %v7989 = vunpack.c.l.b16 %v7324
        %v7990 = vunpack.c.l.b16 %v7325
        %v7991 = vunpack.c.h.b16 %v7325
        %v7992 = vunpack.c.l.b16 %v7326
        %v7993 = vunpack.c.l.b16 %v7327
        %v7994 = vunpack.c.h.b16 %v7327
        %v7995 = vunpack.c.l.b16 %v7328
        %v7996 = vunpack.c.l.b16 %v7329
        %v7997 = vunpack.c.h.b16 %v7329
        %v7998 = vunpack.c.l.b16 %v7330
        %v7999 = vunpack.c.l.b16 %v7331
        %v8000 = vunpack.c.h.b16 %v7331
        %v8001 = vunpack.c.l.b16 %v7332
        %v8002 = vunpack.c.l.b16 %v7333
        %v8003 = vunpack.c.h.b16 %v7333
        %v8004 = vunpack.c.l.b16 %v7334
        %v8005 = vunpack.c.l.b16 %v7335
        %v8006 = vunpack.c.h.b16 %v7335
        %v8007 = vunpack.c.l.b16 %v7336
        %v8008 = vunpack.c.l.b16 %v7337
        %v8009 = vunpack.c.h.b16 %v7337
        %v8010 = vunpack.c.l.b16 %v7338
        %v8011 = vunpack.c.l.b16 %v7339
        %v8012 = vunpack.c.h.b16 %v7339
        %v8013 = vunpack.c.l.b16 %v7340
        %v8014 = vunpack.c.l.b16 %v7341
        %v8015 = vunpack.c.h.b16 %v7341
        %v8016 = vunpack.c.l.b16 %v7342
        %v8017 = vunpack.c.l.b16 %v7343
        %v8018 = vunpack.c.h.b16 %v7343
        %v8019 = vunpack.c.l.b16 %v7344
        %v8020 = vunpack.c.l.b16 %v7345
        %v8021 = vunpack.c.h.b16 %v7345
        %v8022 = vunpack.c.l.b16 %v7346
        %v8023 = vunpack.c.l.b16 %v7347
        %v8024 = vunpack.c.h.b16 %v7347
        %v8025 = vunpack.c.l.b16 %v7348
        %v8026 = vunpack.c.l.b16 %v7349
        %v8027 = vunpack.c.h.b16 %v7349
        %v8028 = vunpack.c.l.b16 %v7350
        %v8029 = vunpack.c.l.b16 %v7351
        %v8030 = vunpack.c.h.b16 %v7351
        %v8031 = vunpack.c.l.b16 %v7352
        %v8032 = vunpack.c.l.b16 %v7353
        %v8033 = vunpack.c.h.b16 %v7353
        %v8034 = vunpack.c.l.b16 %v7354
        %v8035 = vunpack.c.l.b16 %v7355
        %v8036 = vunpack.c.h.b16 %v7355
        %v8037 = vunpack.c.l.b16 %v7356
        %v8038 = vunpack.c.l.b16 %v7357
        %v8039 = vunpack.c.h.b16 %v7357
        %v8040 = vunpack.c.l.b16 %v7358
        %v8041 = vunpack.c.l.b16 %v7359
        %v8042 = vunpack.c.h.b16 %v7359
        %v8043 = vunpack.c.l.b16 %v7360
        %v8044 = vunpack.c.l.b16 %v7361
        %v8045 = vunpack.c.h.b16 %v7361
        %v8046 = vunpack.c.l.b16 %v7362
        %v8047 = vunpack.c.l.b16 %v7363
        %v8048 = vunpack.c.h.b16 %v7363
        %v8049 = vunpack.c.l.b16 %v7364
        %v8050 = vunpack.c.l.b16 %v7365
        %v8051 = vunpack.c.h.b16 %v7365
        %v8052 = vunpack.c.l.b16 %v7366
        %v8053 = vunpack.c.l.b16 %v7367
        %v8054 = vunpack.c.h.b16 %v7367
        %v8055 = vunpack.c.l.b16 %v7368
        %v8056 = vunpack.c.l.b16 %v7369
        %v8057 = vunpack.c.h.b16 %v7369
        %v8058 = vunpack.c.l.b16 %v7370
        %v8059 = vunpack.c.l.b16 %v7371
        %v8060 = vunpack.c.h.b16 %v7371
        %v8061 = vunpack.c.l.b16 %v7372
        %v8062 = vunpack.c.l.b16 %v7373
        %v8063 = vunpack.c.h.b16 %v7373
        %v8064 = vunpack.c.l.b16 %v7374
        %v8065 = vunpack.c.l.b16 %v7375
        %v8066 = vunpack.c.h.b16 %v7375
        %v8067 = vunpack.c.l.b16 %v7376
        %v8068 = vunpack.c.l.b16 %v7377
        %v8069 = vunpack.c.h.b16 %v7377
        %v8070 = vunpack.c.l.b16 %v7378
        %v8071 = vunpack.c.l.b16 %v7379
        %v8072 = vunpack.c.h.b16 %v7379
        %v8073 = vunpack.c.l.b16 %v7380
        %v8074 = vunpack.c.l.b16 %v7381
        %v8075 = vunpack.c.h.b16 %v7381
        %v8076 = vunpack.c.l.b16 %v7382
        %v8077 = vunpack.c.l.b16 %v7383
        %v8078 = vunpack.c.h.b16 %v7383
        %v8079 = vunpack.c.l.b16 %v7384
        %v8080 = vunpack.c.l.b16 %v7385
        %v8081 = vunpack.c.h.b16 %v7385
        %v8082 = vunpack.c.l.b16 %v7386
        %v8083 = vunpack.c.l.b16 %v7387
        %v8084 = vunpack.c.h.b16 %v7387
        %v8085 = vunpack.c.l.b16 %v7388
        %v8086 = vunpack.c.l.b16 %v7389
        %v8087 = vunpack.c.h.b16 %v7389
        %v8088 = vunpack.c.l.b16 %v7390
        %v8089 = vunpack.c.l.b16 %v7391
        %v8090 = vunpack.c.h.b16 %v7391
        %v8091 = vunpack.c.l.b16 %v7392
        %v8092 = vunpack.c.l.b16 %v7393
        %v8093 = vunpack.c.h.b16 %v7393
        %v8094 = vunpack.c.l.b16 %v7394
        %v8095 = vunpack.c.l.b16 %v7395
        %v8096 = vunpack.c.h.b16 %v7395
        %v8097 = vunpack.c.l.b16 %v7396
        %v8098 = vunpack.c.l.b16 %v7397
        %v8099 = vunpack.c.h.b16 %v7397
        %v8100 = vunpack.c.l.b16 %v7398
        %v8101 = vunpack.c.l.b16 %v7399
        %v8102 = vunpack.c.h.b16 %v7399
        %v8103 = vunpack.c.l.b16 %v7400
        %v8104 = vunpack.c.l.b16 %v7401
        %v8105 = vunpack.c.h.b16 %v7401
        %v8106 = vunpack.c.l.b16 %v7402
        %v8107 = vunpack.c.l.b16 %v7403
        %v8108 = vunpack.c.h.b16 %v7403
        %v8109 = vunpack.c.l.b16 %v7404
        %v8110 = vunpack.c.l.b16 %v7405
        %v8111 = vunpack.c.h.b16 %v7405
        %v8112 = vunpack.c.l.b16 %v7406
        %v8113 = vunpack.c.l.b16 %v7407
        %v8114 = vunpack.c.h.b16 %v7407
        %v8115 = vunpack.c.l.b16 %v7408
        %v8116 = vunpack.c.l.b16 %v7409
        %v8117 = vunpack.c.h.b16 %v7409
        %v8118 = vunpack.c.l.b16 %v7410
        %v8119 = vunpack.c.l.b16 %v7411
        %v8120 = vunpack.c.h.b16 %v7411
        %v8121 = vunpack.c.l.b16 %v7412
        %v8122 = vunpack.c.l.b16 %v7413
        %v8123 = vunpack.c.h.b16 %v7413
        %v8124 = vunpack.c.l.b16 %v7414
        %v8125 = vunpack.c.l.b16 %v7415
        %v8126 = vunpack.c.h.b16 %v7415
        %v8127 = vunpack.c.l.b16 %v7416
        %v8128 = vunpack.c.l.b16 %v7417
        %v8129 = vunpack.c.h.b16 %v7417
        %v8130 = vunpack.c.l.b16 %v7418
        %v8131 = vunpack.c.l.b16 %v7419
        %v8132 = vunpack.c.h.b16 %v7419
        %v8133 = vunpack.c.l.b16 %v7420
        %v8134 = vunpack.c.l.b16 %v7421
        %v8135 = vunpack.c.h.b16 %v7421
        %v8136 = vunpack.c.l.b16 %v7422
        %v8137 = vunpack.c.l.b16 %v7423
        %v8138 = vunpack.c.h.b16 %v7423
        %v8139 = vunpack.c.l.b16 %v7424
        %v8140 = vunpack.c.l.b16 %v7425
        %v8141 = vunpack.c.h.b16 %v7425
        %v8142 = vunpack.c.l.b16 %v7426
        %v8143 = vunpack.c.l.b16 %v7427
        %v8144 = vunpack.c.h.b16 %v7427
        %v8145 = vunpack.c.l.b16 %v7428
        %v8146 = vunpack.c.l.b16 %v7429
        %v8147 = vunpack.c.h.b16 %v7429
        %v8148 = vunpack.c.l.b16 %v7430
        %v8149 = vunpack.c.l.b16 %v7431
        %v8150 = vunpack.c.h.b16 %v7431
        %v8151 = vunpack.c.l.b16 %v7432
        %v8152 = vunpack.c.l.b16 %v7433
        %v8153 = vunpack.c.h.b16 %v7433
        %v8154 = vunpack.c.l.b16 %v7434
        %v8155 = vunpack.c.l.b16 %v7435
        %v8156 = vunpack.c.h.b16 %v7435
        %v8157 = vunpack.c.l.b16 %v7436
        %v8158 = vunpack.c.l.b16 %v7437
        %v8159 = vunpack.c.h.b16 %v7437
        %v8160 = vunpack.c.l.b16 %v7438
        %v8161 = vunpack.c.l.b16 %v7439
        %v8162 = vunpack.c.h.b16 %v7439
        %v8163 = vunpack.c.l.b16 %v7440
        %v8164 = vunpack.c.l.b16 %v7441
        %v8165 = vunpack.c.h.b16 %v7441
        %v8166 = vunpack.c.l.b16 %v7442
        %v8167 = vunpack.c.l.b16 %v7443
        %v8168 = vunpack.c.h.b16 %v7443
        %v8169 = vunpack.c.l.b16 %v7444
        %v8170 = vunpack.c.l.b16 %v7445
        %v8171 = vunpack.c.h.b16 %v7445
        %v8172 = vunpack.c.l.b16 %v7446
        %v8173 = vunpack.c.l.b16 %v7447
        %v8174 = vunpack.c.h.b16 %v7447
        %v8175 = vunpack.c.l.b16 %v7448
        %v8176 = vunpack.c.l.b16 %v7449
        %v8177 = vunpack.c.h.b16 %v7449
        %v8178 = vunpack.c.l.b16 %v7450
        %v8179 = vunpack.c.l.b16 %v7451
        %v8180 = vunpack.c.h.b16 %v7451
        %v8181 = vunpack.c.l.b16 %v7452
        %v8182 = vunpack.c.l.b16 %v7453
        %v8183 = vunpack.c.h.b16 %v7453
        %v8184 = vunpack.c.l.b16 %v7454
        %v8185 = vunpack.c.l.b16 %v7455
        %v8186 = vunpack.c.h.b16 %v7455
        %v8187 = vunpack.c.l.b16 %v7456
        %v8188 = vunpack.c.l.b16 %v7457
        %v8189 = vunpack.c.h.b16 %v7457
        %v8190 = vunpack.c.l.b16 %v7458
        %v8191 = vunpack.c.l.b16 %v7459
        %v8192 = vunpack.c.h.b16 %v7459
        %v8193 = vunpack.c.l.b16 %v7460
        %v8194 = vunpack.c.l.b16 %v7461
        %v8195 = vunpack.c.h.b16 %v7461
        %v8196 = vunpack.c.l.b16 %v7462
        %v8197 = vunpack.c.l.b16 %v7463
        %v8198 = vunpack.c.h.b16 %v7463
        %v8199 = vunpack.c.l.b16 %v7464
        %v8200 = vunpack.c.l.b16 %v7465
        %v8201 = vunpack.c.h.b16 %v7465
        %v8202 = vunpack.c.l.b16 %v7466
        %v8203 = vunpack.c.l.b16 %v7467
        %v8204 = vunpack.c.h.b16 %v7467
        %v8205 = vunpack.c.l.b16 %v7468
        %v8206 = vunpack.c.l.b16 %v7469
        %v8207 = vunpack.c.h.b16 %v7469
        %v8208 = vunpack.c.l.b16 %v7470
        %v8209 = vunpack.c.l.b16 %v7471
        %v8210 = vunpack.c.h.b16 %v7471
        %v8211 = vunpack.c.l.b16 %v7472
        %v8212 = vunpack.c.l.b16 %v7473
        %v8213 = vunpack.c.h.b16 %v7473
        %v8214 = vunpack.c.l.b16 %v7474
        %v8215 = vunpack.c.l.b16 %v7475
        %v8216 = vunpack.c.h.b16 %v7475
        %v8217 = vunpack.c.l.b16 %v7476
        %v8218 = vunpack.c.l.b16 %v7477
        %v8219 = vunpack.c.h.b16 %v7477
        %v8220 = vunpack.c.l.b16 %v7478
        %v8221 = vunpack.c.l.b16 %v7479
        %v8222 = vunpack.c.h.b16 %v7479
        %v8223 = vunpack.c.l.b16 %v7480
        %v8224 = vunpack.c.l.b16 %v7481
        %v8225 = vunpack.c.h.b16 %v7481
        %v8226 = vunpack.c.l.b16 %v7482
        %v8227 = vunpack.c.l.b16 %v7483
        %v8228 = vunpack.c.h.b16 %v7483
        %v8229 = vunpack.c.l.b16 %v7484
        %v8230 = vunpack.c.l.b16 %v7485
        %v8231 = vunpack.c.h.b16 %v7485
        %v8232 = vunpack.c.l.b16 %v7486
        %v8233 = vunpack.c.l.b16 %v7487
        %v8234 = vunpack.c.h.b16 %v7487
        %v8235 = vunpack.c.l.b16 %v7488
        %v8236 = vunpack.c.l.b16 %v7489
        %v8237 = vunpack.c.h.b16 %v7489
        %v8238 = vunpack.c.l.b16 %v7490
        %v8239 = vunpack.c.l.b16 %v7491
        %v8240 = vunpack.c.h.b16 %v7491
        %v8241 = vunpack.c.l.b16 %v7492
        %v8242 = vunpack.c.l.b16 %v7493
        %v8243 = vunpack.c.h.b16 %v7493
        %v8244 = vunpack.c.l.b16 %v7494
        %v8245 = vunpack.c.l.b16 %v7495
        %v8246 = vunpack.c.h.b16 %v7495
        %v8247 = vunpack.c.l.b16 %v7496
        %v8248 = vunpack.c.l.b16 %v7497
        %v8249 = vunpack.c.h.b16 %v7497
        %v8250 = vunpack.c.l.b16 %v7498
        %v8251 = vunpack.c.l.b16 %v7499
        %v8252 = vunpack.c.h.b16 %v7499
        %v8253 = vunpack.c.l.b16 %v7500
        %v8254 = vunpack.c.l.b16 %v7501
        %v8255 = vunpack.c.h.b16 %v7501
        %v8256 = vunpack.c.l.b16 %v7502
        %v8257 = vunpack.c.l.b16 %v7503
        %v8258 = vunpack.c.h.b16 %v7503
        %v8259 = vunpack.c.l.b16 %v7504
        %v8260 = vunpack.c.l.b16 %v7505
        %v8261 = vunpack.c.h.b16 %v7505
        %v8262 = vunpack.c.l.b16 %v7506
        %v8263 = vunpack.c.l.b16 %v7507
        %v8264 = vunpack.c.h.b16 %v7507
        %v8265 = vunpack.c.l.b16 %v7508
        %v8266 = vunpack.c.l.b16 %v7509
        %v8267 = vunpack.c.h.b16 %v7509
        %v8268 = vunpack.c.l.b16 %v7510
        %v8269 = vunpack.c.l.b16 %v7511
        %v8270 = vunpack.c.h.b16 %v7511
        %v8271 = vunpack.c.l.b16 %v7512
        %v8272 = vunpack.c.l.b16 %v7513
        %v8273 = vunpack.c.h.b16 %v7513
        %v8274 = vunpack.c.l.b16 %v7514
        %v8275 = vunpack.c.l.b16 %v7515
        %v8276 = vunpack.c.h.b16 %v7515
        %v8277 = vunpack.c.l.b16 %v7516
        %v8278 = vunpack.c.l.b16 %v7517
        %v8279 = vunpack.c.h.b16 %v7517
        %v8280 = vunpack.c.l.b16 %v7518
        %v8281 = vunpack.c.l.b16 %v7519
        %v8282 = vunpack.c.h.b16 %v7519
        %v8283 = vunpack.c.l.b16 %v7520
        %v8284 = vunpack.c.l.b16 %v7521
        %v8285 = vunpack.c.h.b16 %v7521
        %v8286 = vunpack.c.l.b16 %v7522
        %v8287 = vunpack.c.l.b16 %v7523
        %v8288 = vunpack.c.h.b16 %v7523
        %v8289 = vunpack.c.l.b16 %v7524
        %v8290 = vunpack.c.l.b16 %v7525
        %v8291 = vunpack.c.h.b16 %v7525
        %v8292 = vunpack.c.l.b16 %v7526
        %v8293 = vunpack.c.l.b16 %v7527
        %v8294 = vunpack.c.h.b16 %v7527
        %v8295 = vunpack.c.l.b16 %v7528
        %v8296 = vunpack.c.l.b16 %v7529
        %v8297 = vunpack.c.h.b16 %v7529
        %v8298 = vunpack.c.l.b16 %v7530
        %v8299 = vunpack.c.l.b16 %v7531
        %v8300 = vunpack.c.h.b16 %v7531
        %v8301 = vunpack.c.l.b16 %v7532
        %v8302 = vunpack.c.l.b16 %v7533
        %v8303 = vunpack.c.h.b16 %v7533
        %v8304 = vunpack.c.l.b16 %v7534
        %v8305 = vunpack.c.l.b16 %v7535
        %v8306 = vunpack.c.h.b16 %v7535
        %v8307 = vunpack.c.l.b16 %v7536
        %v8308 = vunpack.c.l.b16 %v7537
        %v8309 = vunpack.c.h.b16 %v7537
        %v8310 = vunpack.c.l.b16 %v7538
        %v8311 = vunpack.c.l.b16 %v7539
        %v8312 = vunpack.c.h.b16 %v7539
        %v8313 = vunpack.c.l.b16 %v7540
        %v8314 = vunpack.c.l.b16 %v7541
        %v8315 = vunpack.c.h.b16 %v7541
        %v8316 = vunpack.c.l.b16 %v7542
        %v8317 = vunpack.c.l.b16 %v7543
        %v8318 = vunpack.c.h.b16 %v7543
        %v8319 = vunpack.c.l.b16 %v7544
        %v8320 = vunpack.c.l.b16 %v7545
        %v8321 = vunpack.c.h.b16 %v7545
        %v8322 = vunpack.c.l.b16 %v7546
        %v8323 = vunpack.c.l.b16 %v7547
        %v8324 = vunpack.c.h.b16 %v7547
        %v8325 = vunpack.c.l.b16 %v7548
        %v8326 = vunpack.c.l.b16 %v7549
        %v8327 = vunpack.c.h.b16 %v7549
        %v8328 = vunpack.c.l.b16 %v7550
        %v8329 = vunpack.c.l.b16 %v7551
        %v8330 = vunpack.c.h.b16 %v7551
        %v8331 = vunpack.c.l.b16 %v7552
        %v8332 = vunpack.c.l.b16 %v7553
        %v8333 = vunpack.c.h.b16 %v7553
        %v8334 = vunpack.c.l.b16 %v7554
        %v8335 = vunpack.c.l.b16 %v7555
        %v8336 = vunpack.c.h.b16 %v7555
        %v8337 = vunpack.c.l.b16 %v7556
        %v8338 = vunpack.c.l.b16 %v7557
        %v8339 = vunpack.c.h.b16 %v7557
        %v8340 = vunpack.c.l.b16 %v7558
        %v8341 = vunpack.c.l.b16 %v7559
        %v8342 = vunpack.c.h.b16 %v7559
        %v8343 = vunpack.c.l.b16 %v7560
        %v8344 = vunpack.c.l.b16 %v7561
        %v8345 = vunpack.c.h.b16 %v7561
        %v8346 = vunpack.c.l.b16 %v7562
        %v8347 = vunpack.c.l.b16 %v7563
        %v8348 = vunpack.c.h.b16 %v7563
        %v8349 = vunpack.c.l.b16 %v7564
        %v8350 = vunpack.c.l.b16 %v7565
        %v8351 = vunpack.c.h.b16 %v7565
        %v8352 = vunpack.c.l.b16 %v7566
        %v8353 = vunpack.c.l.b16 %v7567
        %v8354 = vunpack.c.h.b16 %v7567
        %v8355 = vunpack.c.l.b16 %v7568
        %v8356 = vunpack.c.l.b16 %v7569
        %v8357 = vunpack.c.h.b16 %v7569
        %v8358 = vunpack.c.l.b16 %v7570
        %v8359 = vunpack.c.l.b16 %v7571
        %v8360 = vunpack.c.h.b16 %v7571
        %v8361 = vunpack.c.l.b16 %v7572
        %v8362 = vunpack.c.l.b16 %v7573
        %v8363 = vunpack.c.h.b16 %v7573
        %v8364 = vunpack.c.l.b16 %v7574
        %v8365 = vunpack.c.l.b16 %v7575
        %v8366 = vunpack.c.h.b16 %v7575
        %v8367 = vunpack.c.l.b16 %v7576
        %v8368 = vunpack.c.l.b16 %v7577
        %v8369 = vunpack.c.h.b16 %v7577
        %v8370 = vunpack.c.l.b16 %v7578
        %v8371 = vunpack.c.l.b16 %v7579
        %v8372 = vunpack.c.h.b16 %v7579
        %v8373 = vunpack.c.l.b16 %v7580
        %v8374 = vunpack.c.l.b16 %v7581
        %v8375 = vunpack.c.h.b16 %v7581
        %v8376 = vunpack.c.l.b16 %v7582
        %v8377 = vunpack.c.l.b16 %v7583
        %v8378 = vunpack.c.h.b16 %v7583
        %v8379 = vunpack.c.l.b16 %v7584
        %v8380 = vunpack.c.l.b16 %v7585
        %v8381 = vunpack.c.h.b16 %v7585
        %v8382 = vunpack.c.l.b16 %v7586
        %v8383 = vunpack.c.l.b16 %v7587
        %v8384 = vunpack.c.h.b16 %v7587
        %v8385 = vunpack.c.l.b16 %v7588
        %v8386 = vunpack.c.l.b16 %v7589
        %v8387 = vunpack.c.h.b16 %v7589
        %v8388 = vunpack.c.l.b16 %v7590
        %v8389 = vunpack.c.l.b16 %v7591
        %v8390 = vunpack.c.h.b16 %v7591
        %v8391 = vunpack.c.l.b16 %v7592
        %v8392 = vunpack.c.l.b16 %v7593
        %v8393 = vunpack.c.h.b16 %v7593
        %v8394 = vunpack.c.l.b16 %v7594
        %v8395 = vunpack.c.l.b16 %v7595
        %v8396 = vunpack.c.h.b16 %v7595
        %v8397 = vunpack.c.l.b16 %v7596
        %v8398 = vunpack.c.l.b16 %v7597
        %v8399 = vunpack.c.h.b16 %v7597
        %v8400 = vunpack.c.l.b16 %v7598
        %v8401 = vunpack.c.l.b16 %v7599
        %v8402 = vunpack.c.h.b16 %v7599
        %v8403 = vunpack.c.l.b16 %v7600
        %v8404 = vunpack.c.l.b16 %v7601
        %v8405 = vunpack.c.h.b16 %v7601
        %v8406 = vunpack.c.l.b16 %v7602
        %v8407 = vunpack.c.l.b16 %v7603
        %v8408 = vunpack.c.h.b16 %v7603
        %v8409 = vunpack.c.l.b16 %v7604
        %v8410 = vunpack.c.l.b16 %v7605
        %v8411 = vunpack.c.h.b16 %v7605
        %v8412 = vunpack.c.l.b16 %v7606
        %v8413 = vunpack.c.l.b16 %v7607
        %v8414 = vunpack.c.h.b16 %v7607
        %v8415 = vunpack.c.l.b16 %v7608
        %v8416 = vunpack.c.l.b16 %v7609
        %v8417 = vunpack.c.h.b16 %v7609
        %v8418 = vunpack.c.l.b16 %v7610
        %v8419 = vunpack.c.l.b16 %v7611
        %v8420 = vunpack.c.h.b16 %v7611
        %v8421 = vunpack.c.l.b16 %v7612
        %v8422 = vunpack.c.l.b16 %v7613
        %v8423 = vunpack.c.h.b16 %v7613
        %v8424 = vunpack.c.l.b16 %v7614
        %v8425 = vunpack.c.l.b16 %v7615
        %v8426 = vunpack.c.h.b16 %v7615
        %v8427 = vunpack.c.l.b16 %v7616
        %v8428 = vunpack.c.l.b16 %v7617
        %v8429 = vunpack.c.h.b16 %v7617
        %v8430 = vunpack.c.l.b16 %v7618
        %v8431 = vunpack.c.l.b16 %v7619
        %v8432 = vunpack.c.h.b16 %v7619
        %v8433 = vunpack.c.l.b16 %v7620
        %v8434 = vunpack.c.l.b16 %v7621
        %v8435 = vunpack.c.h.b16 %v7621
        %v8436 = vunpack.c.l.b16 %v7622
        %v8437 = vunpack.c.l.b16 %v7623
        %v8438 = vunpack.c.h.b16 %v7623
        %v8439 = vunpack.c.l.b16 %v7624
        %v8440 = vunpack.c.l.b16 %v7625
        %v8441 = vunpack.c.h.b16 %v7625
        %v8442 = vunpack.c.l.b16 %v7626
        %v8443 = vunpack.c.l.b16 %v7627
        %v8444 = vunpack.c.h.b16 %v7627
        %v8445 = vunpack.c.l.b16 %v7628
        %v8446 = vpack.c.b16 %v7969, %v7966
        %v8447 = vpack.c.b16 %v7970, %v7967
        %v8448 = vpack.c.b16 %v7971, %v7968
        %v8449 = vpack.c.b16 %v7975, %v7972
        %v8450 = vpack.c.b16 %v7976, %v7973
        %v8451 = vpack.c.b16 %v7977, %v7974
        %v8452 = vpack.c.b16 %v7981, %v7978
        %v8453 = vpack.c.b16 %v7982, %v7979
        %v8454 = vpack.c.b16 %v7983, %v7980
        %v8455 = vpack.c.b16 %v7987, %v7984
        %v8456 = vpack.c.b16 %v7988, %v7985
        %v8457 = vpack.c.b16 %v7989, %v7986
        %v8458 = vpack.c.b16 %v7993, %v7990
        %v8459 = vpack.c.b16 %v7994, %v7991
        %v8460 = vpack.c.b16 %v7995, %v7992
        %v8461 = vpack.c.b16 %v7999, %v7996
        %v8462 = vpack.c.b16 %v8000, %v7997
        %v8463 = vpack.c.b16 %v8001, %v7998
        %v8464 = vpack.c.b16 %v8005, %v8002
        %v8465 = vpack.c.b16 %v8006, %v8003
        %v8466 = vpack.c.b16 %v8007, %v8004
        %v8467 = vpack.c.b16 %v8011, %v8008
        %v8468 = vpack.c.b16 %v8012, %v8009
        %v8469 = vpack.c.b16 %v8013, %v8010
        %v8470 = vpack.c.b16 %v8017, %v8014
        %v8471 = vpack.c.b16 %v8018, %v8015
        %v8472 = vpack.c.b16 %v8019, %v8016
        %v8473 = vpack.c.b16 %v8023, %v8020
        %v8474 = vpack.c.b16 %v8024, %v8021
        %v8475 = vpack.c.b16 %v8025, %v8022
        %v8476 = vpack.c.b16 %v8029, %v8026
        %v8477 = vpack.c.b16 %v8030, %v8027
        %v8478 = vpack.c.b16 %v8031, %v8028
        %v8479 = vpack.c.b16 %v8035, %v8032
        %v8480 = vpack.c.b16 %v8036, %v8033
        %v8481 = vpack.c.b16 %v8037, %v8034
        %v8482 = vpack.c.b16 %v8041, %v8038
        %v8483 = vpack.c.b16 %v8042, %v8039
        %v8484 = vpack.c.b16 %v8043, %v8040
        %v8485 = vpack.c.b16 %v8047, %v8044
        %v8486 = vpack.c.b16 %v8048, %v8045
        %v8487 = vpack.c.b16 %v8049, %v8046
        %v8488 = vpack.c.b16 %v8053, %v8050
        %v8489 = vpack.c.b16 %v8054, %v8051
        %v8490 = vpack.c.b16 %v8055, %v8052
        %v8491 = vpack.c.b16 %v8059, %v8056
        %v8492 = vpack.c.b16 %v8060, %v8057
        %v8493 = vpack.c.b16 %v8061, %v8058
        %v8494 = vpack.c.b16 %v8065, %v8062
        %v8495 = vpack.c.b16 %v8066, %v8063
        %v8496 = vpack.c.b16 %v8067, %v8064
        %v8497 = vpack.c.b16 %v8071, %v8068
        %v8498 = vpack.c.b16 %v8072, %v8069
        %v8499 = vpack.c.b16 %v8073, %v8070
        %v8500 = vpack.c.b16 %v8077, %v8074
        %v8501 = vpack.c.b16 %v8078, %v8075
        %v8502 = vpack.c.b16 %v8079, %v8076
        %v8503 = vpack.c.b16 %v8083, %v8080
        %v8504 = vpack.c.b16 %v8084, %v8081
        %v8505 = vpack.c.b16 %v8085, %v8082
        %v8506 = vpack.c.b16 %v8089, %v8086
        %v8507 = vpack.c.b16 %v8090, %v8087
        %v8508 = vpack.c.b16 %v8091, %v8088
        %v8509 = vpack.c.b16 %v8095, %v8092
        %v8510 = vpack.c.b16 %v8096, %v8093
        %v8511 = vpack.c.b16 %v8097, %v8094
        %v8512 = vpack.c.b16 %v8101, %v8098
        %v8513 = vpack.c.b16 %v8102, %v8099
        %v8514 = vpack.c.b16 %v8103, %v8100
        %v8515 = vpack.c.b16 %v8107, %v8104
        %v8516 = vpack.c.b16 %v8108, %v8105
        %v8517 = vpack.c.b16 %v8109, %v8106
        %v8518 = vpack.c.b16 %v8113, %v8110
        %v8519 = vpack.c.b16 %v8114, %v8111
        %v8520 = vpack.c.b16 %v8115, %v8112
        %v8521 = vpack.c.b16 %v8119, %v8116
        %v8522 = vpack.c.b16 %v8120, %v8117
        %v8523 = vpack.c.b16 %v8121, %v8118
        %v8524 = vpack.c.b16 %v8125, %v8122
        %v8525 = vpack.c.b16 %v8126, %v8123
        %v8526 = vpack.c.b16 %v8127, %v8124
        %v8527 = vpack.c.b16 %v8131, %v8128
        %v8528 = vpack.c.b16 %v8132, %v8129
        %v8529 = vpack.c.b16 %v8133, %v8130
        %v8530 = vpack.c.b16 %v8137, %v8134
        %v8531 = vpack.c.b16 %v8138, %v8135
        %v8532 = vpack.c.b16 %v8139, %v8136
        %v8533 = vpack.c.b16 %v8143, %v8140
        %v8534 = vpack.c.b16 %v8144, %v8141
        %v8535 = vpack.c.b16 %v8145, %v8142
        %v8536 = vpack.c.b16 %v8149, %v8146
        %v8537 = vpack.c.b16 %v8150, %v8147
        %v8538 = vpack.c.b16 %v8151, %v8148
        %v8539 = vpack.c.b16 %v8155, %v8152
        %v8540 = vpack.c.b16 %v8156, %v8153
        %v8541 = vpack.c.b16 %v8157, %v8154
        %v8542 = vpack.c.b16 %v8161, %v8158
        %v8543 = vpack.c.b16 %v8162, %v8159
        %v8544 = vpack.c.b16 %v8163, %v8160
        %v8545 = vpack.c.b16 %v8167, %v8164
        %v8546 = vpack.c.b16 %v8168, %v8165
        %v8547 = vpack.c.b16 %v8169, %v8166
        %v8548 = vpack.c.b16 %v8173, %v8170
        %v8549 = vpack.c.b16 %v8174, %v8171
        %v8550 = vpack.c.b16 %v8175, %v8172
        %v8551 = vpack.c.b16 %v8179, %v8176
        %v8552 = vpack.c.b16 %v8180, %v8177
        %v8553 = vpack.c.b16 %v8181, %v8178
        %v8554 = vpack.c.b16 %v8185, %v8182
        %v8555 = vpack.c.b16 %v8186, %v8183
        %v8556 = vpack.c.b16 %v8187, %v8184
        %v8557 = vpack.c.b16 %v8191, %v8188
        %v8558 = vpack.c.b16 %v8192, %v8189
        %v8559 = vpack.c.b16 %v8193, %v8190
        %v8560 = vpack.c.b16 %v8197, %v8194
        %v8561 = vpack.c.b16 %v8198, %v8195
        %v8562 = vpack.c.b16 %v8199, %v8196
        %v8563 = vpack.c.b16 %v8203, %v8200
        %v8564 = vpack.c.b16 %v8204, %v8201
        %v8565 = vpack.c.b16 %v8205, %v8202
        %v8566 = vpack.c.b16 %v8209, %v8206
        %v8567 = vpack.c.b16 %v8210, %v8207
        %v8568 = vpack.c.b16 %v8211, %v8208
        %v8569 = vpack.c.b16 %v8215, %v8212
        %v8570 = vpack.c.b16 %v8216, %v8213
        %v8571 = vpack.c.b16 %v8217, %v8214
        %v8572 = vpack.c.b16 %v8221, %v8218
        %v8573 = vpack.c.b16 %v8222, %v8219
        %v8574 = vpack.c.b16 %v8223, %v8220
        %v8575 = vpack.c.b16 %v8227, %v8224
        %v8576 = vpack.c.b16 %v8228, %v8225
        %v8577 = vpack.c.b16 %v8229, %v8226
        %v8578 = vpack.c.b16 %v8233, %v8230
        %v8579 = vpack.c.b16 %v8234, %v8231
        %v8580 = vpack.c.b16 %v8235, %v8232
        %v8581 = vpack.c.b16 %v8239, %v8236
        %v8582 = vpack.c.b16 %v8240, %v8237
        %v8583 = vpack.c.b16 %v8241, %v8238
        %v8584 = vpack.c.b16 %v8245, %v8242
        %v8585 = vpack.c.b16 %v8246, %v8243
        %v8586 = vpack.c.b16 %v8247, %v8244
        %v8587 = vpack.c.b16 %v8251, %v8248
        %v8588 = vpack.c.b16 %v8252, %v8249
        %v8589 = vpack.c.b16 %v8253, %v8250
        %v8590 = vpack.c.b16 %v8257, %v8254
        %v8591 = vpack.c.b16 %v8258, %v8255
        %v8592 = vpack.c.b16 %v8259, %v8256
        %v8593 = vpack.c.b16 %v8263, %v8260
        %v8594 = vpack.c.b16 %v8264, %v8261
        %v8595 = vpack.c.b16 %v8265, %v8262
        %v8596 = vpack.c.b16 %v8269, %v8266
        %v8597 = vpack.c.b16 %v8270, %v8267
        %v8598 = vpack.c.b16 %v8271, %v8268
        %v8599 = vpack.c.b16 %v8275, %v8272
        %v8600 = vpack.c.b16 %v8276, %v8273
        %v8601 = vpack.c.b16 %v8277, %v8274
        %v8602 = vpack.c.b16 %v8281, %v8278
        %v8603 = vpack.c.b16 %v8282, %v8279
        %v8604 = vpack.c.b16 %v8283, %v8280
        %v8605 = vpack.c.b16 %v8287, %v8284
        %v8606 = vpack.c.b16 %v8288, %v8285
        %v8607 = vpack.c.b16 %v8289, %v8286
        %v8608 = vpack.c.b16 %v8293, %v8290
        %v8609 = vpack.c.b16 %v8294, %v8291
        %v8610 = vpack.c.b16 %v8295, %v8292
        %v8611 = vpack.c.b16 %v8299, %v8296
        %v8612 = vpack.c.b16 %v8300, %v8297
        %v8613 = vpack.c.b16 %v8301, %v8298
        %v8614 = vpack.c.b16 %v8305, %v8302
        %v8615 = vpack.c.b16 %v8306, %v8303
        %v8616 = vpack.c.b16 %v8307, %v8304
        %v8617 = vpack.c.b16 %v8311, %v8308
        %v8618 = vpack.c.b16 %v8312, %v8309
        %v8619 = vpack.c.b16 %v8313, %v8310
        %v8620 = vpack.c.b16 %v8317, %v8314
        %v8621 = vpack.c.b16 %v8318, %v8315
        %v8622 = vpack.c.b16 %v8319, %v8316
        %v8623 = vpack.c.b16 %v8323, %v8320
        %v8624 = vpack.c.b16 %v8324, %v8321
        %v8625 = vpack.c.b16 %v8325, %v8322
        %v8626 = vpack.c.b16 %v8329, %v8326
        %v8627 = vpack.c.b16 %v8330, %v8327
        %v8628 = vpack.c.b16 %v8331, %v8328
        %v8629 = vpack.c.b16 %v8335, %v8332
        %v8630 = vpack.c.b16 %v8336, %v8333
        %v8631 = vpack.c.b16 %v8337, %v8334
        %v8632 = vpack.c.b16 %v8341, %v8338
        %v8633 = vpack.c.b16 %v8342, %v8339
        %v8634 = vpack.c.b16 %v8343, %v8340
        %v8635 = vpack.c.b16 %v8347, %v8344
        %v8636 = vpack.c.b16 %v8348, %v8345
        %v8637 = vpack.c.b16 %v8349, %v8346
        %v8638 = vpack.c.b16 %v8353, %v8350
        %v8639 = vpack.c.b16 %v8354, %v8351
        %v8640 = vpack.c.b16 %v8355, %v8352
        %v8641 = vpack.c.b16 %v8359, %v8356
        %v8642 = vpack.c.b16 %v8360, %v8357
        %v8643 = vpack.c.b16 %v8361, %v8358
        %v8644 = vpack.c.b16 %v8365, %v8362
        %v8645 = vpack.c.b16 %v8366, %v8363
        %v8646 = vpack.c.b16 %v8367, %v8364
        %v8647 = vpack.c.b16 %v8371, %v8368
        %v8648 = vpack.c.b16 %v8372, %v8369
        %v8649 = vpack.c.b16 %v8373, %v8370
        %v8650 = vpack.c.b16 %v8377, %v8374
        %v8651 = vpack.c.b16 %v8378, %v8375
        %v8652 = vpack.c.b16 %v8379, %v8376
        %v8653 = vpack.c.b16 %v8383, %v8380
        %v8654 = vpack.c.b16 %v8384, %v8381
        %v8655 = vpack.c.b16 %v8385, %v8382
        %v8656 = vpack.c.b16 %v8389, %v8386
        %v8657 = vpack.c.b16 %v8390, %v8387
        %v8658 = vpack.c.b16 %v8391, %v8388
        %v8659 = vpack.c.b16 %v8395, %v8392
        %v8660 = vpack.c.b16 %v8396, %v8393
        %v8661 = vpack.c.b16 %v8397, %v8394
        %v8662 = vpack.c.b16 %v8401, %v8398
        %v8663 = vpack.c.b16 %v8402, %v8399
        %v8664 = vpack.c.b16 %v8403, %v8400
        %v8665 = vpack.c.b16 %v8407, %v8404
        %v8666 = vpack.c.b16 %v8408, %v8405
        %v8667 = vpack.c.b16 %v8409, %v8406
        %v8668 = vpack.c.b16 %v8413, %v8410
        %v8669 = vpack.c.b16 %v8414, %v8411
        %v8670 = vpack.c.b16 %v8415, %v8412
        %v8671 = vpack.c.b16 %v8419, %v8416
        %v8672 = vpack.c.b16 %v8420, %v8417
        %v8673 = vpack.c.b16 %v8421, %v8418
        %v8674 = vpack.c.b16 %v8425, %v8422
        %v8675 = vpack.c.b16 %v8426, %v8423
        %v8676 = vpack.c.b16 %v8427, %v8424
        %v8677 = vpack.c.b16 %v8431, %v8428
        %v8678 = vpack.c.b16 %v8432, %v8429
        %v8679 = vpack.c.b16 %v8433, %v8430
        %v8680 = vpack.c.b16 %v8437, %v8434
        %v8681 = vpack.c.b16 %v8438, %v8435
        %v8682 = vpack.c.b16 %v8439, %v8436
        %v8683 = vpack.c.b16 %v8443, %v8440
        %v8684 = vpack.c.b16 %v8444, %v8441
        %v8685 = vpack.c.b16 %v8445, %v8442
        %8926 = vmatprep.subr.bf16.mxu0 %v8468
        %8927 = vmatpush1.bf16.msra.mxu0 %v8467
        %8928 = vmatprep.subr.bf16.mxu0 %v8465
        %8929 = vmatpush1.bf16.msra.mxu0 %v8464
        %8930 = vmatprep.subr.bf16.mxu0 %v8462
        %8931 = vmatpush1.bf16.msra.mxu0 %v8461
        %8932 = vmatprep.subr.bf16.mxu0 %v8459
        %8933 = vmatpush1.bf16.msra.mxu0 %v8458
        %8934 = vmatprep.subr.bf16.mxu0 %v8456
        %8935 = vmatpush1.bf16.msra.mxu0 %v8455
        %8936 = vmatprep.subr.bf16.mxu0 %v8453
        %8937 = vmatpush1.bf16.msra.mxu0 %v8452
        %8938 = vmatprep.subr.bf16.mxu0 %v8450
        %8939 = vmatpush1.bf16.msra.mxu0 %v8449
        %8940 = vmatprep.subr.bf16.mxu0 %v8447
        %8941 = vmatpush1.bf16.msra.mxu0 %v8446
        %8942 = vmatprep.subr.bf16.mxu0 %v8492
        %8943 = vmatpush2.bf16.msra.mxu0 %v8491
        %8944 = vmatprep.subr.bf16.mxu0 %v8489
        %8945 = vmatpush2.bf16.msra.mxu0 %v8488
        %8946 = vmatprep.subr.bf16.mxu0 %v8486
        %8947 = vmatpush2.bf16.msra.mxu0 %v8485
        %8948 = vmatprep.subr.bf16.mxu0 %v8483
        %8949 = vmatpush2.bf16.msra.mxu0 %v8482
        %8950 = vmatprep.subr.bf16.mxu0 %v8480
        %8951 = vmatpush2.bf16.msra.mxu0 %v8479
        %8952 = vmatprep.subr.bf16.mxu0 %v8477
        %8953 = vmatpush2.bf16.msra.mxu0 %v8476
        %8954 = vmatprep.subr.bf16.mxu0 %v8474
        %8955 = vmatpush2.bf16.msra.mxu0 %v8473
        %8956 = vmatprep.subr.bf16.mxu0 %v8471
        %8957 = vmatpush2.bf16.msra.mxu0 %v8470
        %8958 = vmatprep.mubr.bf16.mxu0 %v7300
        %8959 = vmatmul.mubr.bf16.gmra.mxu0 %v7299
        %v8960 = vpop.f32.mrf.mxu0
        %v8961 = vadd.f32 %v7634, %v8960
        %v8962 = vpop.f32.mrf.mxu0
        %v8963 = vadd.f32 %v7638, %v8962
        %v8964 = vpop.f32.mrf.mxu0
        %v8965 = vpop.f32.mrf.mxu0
        %8966 = vdwg.mxu0
        %8967 = vmatprep.subr.bf16.mxu0 %v8516
        %8968 = vmatpush1.bf16.msra.mxu0 %v8515
        %8969 = vmatprep.subr.bf16.mxu0 %v8513
        %8970 = vmatpush1.bf16.msra.mxu0 %v8512
        %8971 = vmatprep.subr.bf16.mxu0 %v8510
        %8972 = vmatpush1.bf16.msra.mxu0 %v8509
        %8973 = vmatprep.subr.bf16.mxu0 %v8507
        %8974 = vmatpush1.bf16.msra.mxu0 %v8506
        %8975 = vmatprep.subr.bf16.mxu0 %v8504
        %8976 = vmatpush1.bf16.msra.mxu0 %v8503
        %8977 = vmatprep.subr.bf16.mxu0 %v8501
        %8978 = vmatpush1.bf16.msra.mxu0 %v8500
        %8979 = vmatprep.subr.bf16.mxu0 %v8498
        %8980 = vmatpush1.bf16.msra.mxu0 %v8497
        %8981 = vmatprep.subr.bf16.mxu0 %v8495
        %8982 = vmatpush1.bf16.msra.mxu0 %v8494
        %8983 = vmatprep.subr.bf16.mxu0 %v8540
        %8984 = vmatpush2.bf16.msra.mxu0 %v8539
        %8985 = vmatprep.subr.bf16.mxu0 %v8537
        %8986 = vmatpush2.bf16.msra.mxu0 %v8536
        %8987 = vmatprep.subr.bf16.mxu0 %v8534
        %8988 = vmatpush2.bf16.msra.mxu0 %v8533
        %8989 = vmatprep.subr.bf16.mxu0 %v8531
        %8990 = vmatpush2.bf16.msra.mxu0 %v8530
        %8991 = vmatprep.subr.bf16.mxu0 %v8528
        %8992 = vmatpush2.bf16.msra.mxu0 %v8527
        %8993 = vmatprep.subr.bf16.mxu0 %v8525
        %8994 = vmatpush2.bf16.msra.mxu0 %v8524
        %8995 = vmatprep.subr.bf16.mxu0 %v8522
        %8996 = vmatpush2.bf16.msra.mxu0 %v8521
        %8997 = vmatprep.subr.bf16.mxu0 %v8519
        %8998 = vmatpush2.bf16.msra.mxu0 %v8518
        %8999 = vmatprep.mubr.bf16.mxu0 %v7302
        %9000 = vmatmul.mubr.bf16.gmra.mxu0 %v7301
        %v9001 = vpop.f32.mrf.mxu0
        %v9002 = vadd.f32 %v8961, %v9001
        %v9003 = vpop.f32.mrf.mxu0
        %v9004 = vadd.f32 %v8963, %v9003
        %v9005 = vpop.f32.mrf.mxu0
        %v9006 = vpop.f32.mrf.mxu0
        %9007 = vdwg.mxu0
        %9008 = vmatprep.subr.bf16.mxu0 %v8564
        %9009 = vmatpush1.bf16.msra.mxu0 %v8563
        %9010 = vmatprep.subr.bf16.mxu0 %v8561
        %9011 = vmatpush1.bf16.msra.mxu0 %v8560
        %9012 = vmatprep.subr.bf16.mxu0 %v8558
        %9013 = vmatpush1.bf16.msra.mxu0 %v8557
        %9014 = vmatprep.subr.bf16.mxu0 %v8555
        %9015 = vmatpush1.bf16.msra.mxu0 %v8554
        %9016 = vmatprep.subr.bf16.mxu0 %v8552
        %9017 = vmatpush1.bf16.msra.mxu0 %v8551
        %9018 = vmatprep.subr.bf16.mxu0 %v8549
        %9019 = vmatpush1.bf16.msra.mxu0 %v8548
        %9020 = vmatprep.subr.bf16.mxu0 %v8546
        %9021 = vmatpush1.bf16.msra.mxu0 %v8545
        %9022 = vmatprep.subr.bf16.mxu0 %v8543
        %9023 = vmatpush1.bf16.msra.mxu0 %v8542
        %9024 = vmatprep.subr.bf16.mxu0 %v8588
        %9025 = vmatpush2.bf16.msra.mxu0 %v8587
        %9026 = vmatprep.subr.bf16.mxu0 %v8585
        %9027 = vmatpush2.bf16.msra.mxu0 %v8584
        %9028 = vmatprep.subr.bf16.mxu0 %v8582
        %9029 = vmatpush2.bf16.msra.mxu0 %v8581
        %9030 = vmatprep.subr.bf16.mxu0 %v8579
        %9031 = vmatpush2.bf16.msra.mxu0 %v8578
        %9032 = vmatprep.subr.bf16.mxu0 %v8576
        %9033 = vmatpush2.bf16.msra.mxu0 %v8575
        %9034 = vmatprep.subr.bf16.mxu0 %v8573
        %9035 = vmatpush2.bf16.msra.mxu0 %v8572
        %9036 = vmatprep.subr.bf16.mxu0 %v8570
        %9037 = vmatpush2.bf16.msra.mxu0 %v8569
        %9038 = vmatprep.subr.bf16.mxu0 %v8567
        %9039 = vmatpush2.bf16.msra.mxu0 %v8566
        %9040 = vmatprep.mubr.bf16.mxu0 %v7304
        %9041 = vmatmul.mubr.bf16.gmra.mxu0 %v7303
        %v9042 = vpop.f32.mrf.mxu0
        %v9043 = vadd.f32 %v9002, %v9042
        %v9044 = vpop.f32.mrf.mxu0
        %v9045 = vadd.f32 %v9004, %v9044
        %v9046 = vpop.f32.mrf.mxu0
        %v9047 = vpop.f32.mrf.mxu0
        %9048 = vdwg.mxu0
        %9049 = vmatprep.subr.bf16.mxu0 %v8612
        %9050 = vmatpush1.bf16.msra.mxu0 %v8611
        %9051 = vmatprep.subr.bf16.mxu0 %v8609
        %9052 = vmatpush1.bf16.msra.mxu0 %v8608
        %9053 = vmatprep.subr.bf16.mxu0 %v8606
        %9054 = vmatpush1.bf16.msra.mxu0 %v8605
        %9055 = vmatprep.subr.bf16.mxu0 %v8603
        %9056 = vmatpush1.bf16.msra.mxu0 %v8602
        %9057 = vmatprep.subr.bf16.mxu0 %v8600
        %9058 = vmatpush1.bf16.msra.mxu0 %v8599
        %9059 = vmatprep.subr.bf16.mxu0 %v8597
        %9060 = vmatpush1.bf16.msra.mxu0 %v8596
        %9061 = vmatprep.subr.bf16.mxu0 %v8594
        %9062 = vmatpush1.bf16.msra.mxu0 %v8593
        %9063 = vmatprep.subr.bf16.mxu0 %v8591
        %9064 = vmatpush1.bf16.msra.mxu0 %v8590
        %9065 = vmatprep.subr.bf16.mxu0 %v8636
        %9066 = vmatpush2.bf16.msra.mxu0 %v8635
        %9067 = vmatprep.subr.bf16.mxu0 %v8633
        %9068 = vmatpush2.bf16.msra.mxu0 %v8632
        %9069 = vmatprep.subr.bf16.mxu0 %v8630
        %9070 = vmatpush2.bf16.msra.mxu0 %v8629
        %9071 = vmatprep.subr.bf16.mxu0 %v8627
        %9072 = vmatpush2.bf16.msra.mxu0 %v8626
        %9073 = vmatprep.subr.bf16.mxu0 %v8624
        %9074 = vmatpush2.bf16.msra.mxu0 %v8623
        %9075 = vmatprep.subr.bf16.mxu0 %v8621
        %9076 = vmatpush2.bf16.msra.mxu0 %v8620
        %9077 = vmatprep.subr.bf16.mxu0 %v8618
        %9078 = vmatpush2.bf16.msra.mxu0 %v8617
        %9079 = vmatprep.subr.bf16.mxu0 %v8615
        %9080 = vmatpush2.bf16.msra.mxu0 %v8614
        %9081 = vmatprep.mubr.bf16.mxu0 %v7306
        %9082 = vmatmul.mubr.bf16.gmra.mxu0 %v7305
        %v9083 = vpop.f32.mrf.mxu0
        %v9084 = vadd.f32 %v9043, %v9083
        %v9085 = vpop.f32.mrf.mxu0
        %v9086 = vadd.f32 %v9045, %v9085
        %v9087 = vpop.f32.mrf.mxu0
        %v9088 = vpop.f32.mrf.mxu0
        %9089 = vdwg.mxu0
        %9090 = vmatprep.subr.bf16.mxu0 %v8660
        %9091 = vmatpush1.bf16.msra.mxu0 %v8659
        %9092 = vmatprep.subr.bf16.mxu0 %v8657
        %9093 = vmatpush1.bf16.msra.mxu0 %v8656
        %9094 = vmatprep.subr.bf16.mxu0 %v8654
        %9095 = vmatpush1.bf16.msra.mxu0 %v8653
        %9096 = vmatprep.subr.bf16.mxu0 %v8651
        %9097 = vmatpush1.bf16.msra.mxu0 %v8650
        %9098 = vmatprep.subr.bf16.mxu0 %v8648
        %9099 = vmatpush1.bf16.msra.mxu0 %v8647
        %9100 = vmatprep.subr.bf16.mxu0 %v8645
        %9101 = vmatpush1.bf16.msra.mxu0 %v8644
        %9102 = vmatprep.subr.bf16.mxu0 %v8642
        %9103 = vmatpush1.bf16.msra.mxu0 %v8641
        %9104 = vmatprep.subr.bf16.mxu0 %v8639
        %9105 = vmatpush1.bf16.msra.mxu0 %v8638
        %9106 = vmatprep.subr.bf16.mxu0 %v8684
        %9107 = vmatpush2.bf16.msra.mxu0 %v8683
        %9108 = vmatprep.subr.bf16.mxu0 %v8681
        %9109 = vmatpush2.bf16.msra.mxu0 %v8680
        %9110 = vmatprep.subr.bf16.mxu0 %v8678
        %9111 = vmatpush2.bf16.msra.mxu0 %v8677
        %9112 = vmatprep.subr.bf16.mxu0 %v8675
        %9113 = vmatpush2.bf16.msra.mxu0 %v8674
        %9114 = vmatprep.subr.bf16.mxu0 %v8672
        %9115 = vmatpush2.bf16.msra.mxu0 %v8671
        %9116 = vmatprep.subr.bf16.mxu0 %v8669
        %9117 = vmatpush2.bf16.msra.mxu0 %v8668
        %9118 = vmatprep.subr.bf16.mxu0 %v8666
        %9119 = vmatpush2.bf16.msra.mxu0 %v8665
        %9120 = vmatprep.subr.bf16.mxu0 %v8663
        %9121 = vmatpush2.bf16.msra.mxu0 %v8662
        %9122 = vmatprep.mubr.bf16.mxu0 %v7308
        %9123 = vmatmul.mubr.bf16.gmra.mxu0 %v7307
        %v9124 = vpop.f32.mrf.mxu0
        %v9125 = vadd.f32 %v9084, %v9124
        %v9126 = vpop.f32.mrf.mxu0
        %v9127 = vadd.f32 %v9086, %v9126
        %v9128 = vpop.f32.mrf.mxu0
        %v9129 = vpop.f32.mrf.mxu0
        %9130 = vdwg.mxu0
        %9131 = vmatprep.subr.bf16.mxu0 0
        %9132 = vmatpush1.bf16.msra.mxu0 %v8469
        %9133 = vmatprep.subr.bf16.mxu0 0
        %9134 = vmatpush1.bf16.msra.mxu0 %v8466
        %9135 = vmatprep.subr.bf16.mxu0 0
        %9136 = vmatpush1.bf16.msra.mxu0 %v8463
        %9137 = vmatprep.subr.bf16.mxu0 0
        %9138 = vmatpush1.bf16.msra.mxu0 %v8460
        %9139 = vmatprep.subr.bf16.mxu0 0
        %9140 = vmatpush1.bf16.msra.mxu0 %v8457
        %9141 = vmatprep.subr.bf16.mxu0 0
        %9142 = vmatpush1.bf16.msra.mxu0 %v8454
        %9143 = vmatprep.subr.bf16.mxu0 0
        %9144 = vmatpush1.bf16.msra.mxu0 %v8451
        %9145 = vmatprep.subr.bf16.mxu0 0
        %9146 = vmatpush1.bf16.msra.mxu0 %v8448
        %9147 = vmatprep.subr.bf16.mxu0 0
        %9148 = vmatpush2.bf16.msra.mxu0 %v8493
        %9149 = vmatprep.subr.bf16.mxu0 0
        %9150 = vmatpush2.bf16.msra.mxu0 %v8490
        %9151 = vmatprep.subr.bf16.mxu0 0
        %9152 = vmatpush2.bf16.msra.mxu0 %v8487
        %9153 = vmatprep.subr.bf16.mxu0 0
        %9154 = vmatpush2.bf16.msra.mxu0 %v8484
        %9155 = vmatprep.subr.bf16.mxu0 0
        %9156 = vmatpush2.bf16.msra.mxu0 %v8481
        %9157 = vmatprep.subr.bf16.mxu0 0
        %9158 = vmatpush2.bf16.msra.mxu0 %v8478
        %9159 = vmatprep.subr.bf16.mxu0 0
        %9160 = vmatpush2.bf16.msra.mxu0 %v8475
        %9161 = vmatprep.subr.bf16.mxu0 0
        %9162 = vmatpush2.bf16.msra.mxu0 %v8472
        %9163 = vmatprep.mubr.bf16.mxu0 %v7300
        %9164 = vmatmul.mubr.bf16.gmra.mxu0 %v7299
        %v9165 = vpop.f32.mrf.mxu0
        %v9166 = vadd.f32 %v7642, %v9165
        %v9167 = vpop.f32.mrf.mxu0
        %v9168 = vpop.f32.mrf.mxu0
        %v9169 = vpop.f32.mrf.mxu0
        %9170 = vdwg.mxu0
        %9171 = vmatprep.subr.bf16.mxu0 0
        %9172 = vmatpush1.bf16.msra.mxu0 %v8517
        %9173 = vmatprep.subr.bf16.mxu0 0
        %9174 = vmatpush1.bf16.msra.mxu0 %v8514
        %9175 = vmatprep.subr.bf16.mxu0 0
        %9176 = vmatpush1.bf16.msra.mxu0 %v8511
        %9177 = vmatprep.subr.bf16.mxu0 0
        %9178 = vmatpush1.bf16.msra.mxu0 %v8508
        %9179 = vmatprep.subr.bf16.mxu0 0
        %9180 = vmatpush1.bf16.msra.mxu0 %v8505
        %9181 = vmatprep.subr.bf16.mxu0 0
        %9182 = vmatpush1.bf16.msra.mxu0 %v8502
        %9183 = vmatprep.subr.bf16.mxu0 0
        %9184 = vmatpush1.bf16.msra.mxu0 %v8499
        %9185 = vmatprep.subr.bf16.mxu0 0
        %9186 = vmatpush1.bf16.msra.mxu0 %v8496
        %9187 = vmatprep.subr.bf16.mxu0 0
        %9188 = vmatpush2.bf16.msra.mxu0 %v8541
        %9189 = vmatprep.subr.bf16.mxu0 0
        %9190 = vmatpush2.bf16.msra.mxu0 %v8538
        %9191 = vmatprep.subr.bf16.mxu0 0
        %9192 = vmatpush2.bf16.msra.mxu0 %v8535
        %9193 = vmatprep.subr.bf16.mxu0 0
        %9194 = vmatpush2.bf16.msra.mxu0 %v8532
        %9195 = vmatprep.subr.bf16.mxu0 0
        %9196 = vmatpush2.bf16.msra.mxu0 %v8529
        %9197 = vmatprep.subr.bf16.mxu0 0
        %9198 = vmatpush2.bf16.msra.mxu0 %v8526
        %9199 = vmatprep.subr.bf16.mxu0 0
        %9200 = vmatpush2.bf16.msra.mxu0 %v8523
        %9201 = vmatprep.subr.bf16.mxu0 0
        %9202 = vmatpush2.bf16.msra.mxu0 %v8520
        %9203 = vmatprep.mubr.bf16.mxu0 %v7302
        %9204 = vmatmul.mubr.bf16.gmra.mxu0 %v7301
        %v9205 = vpop.f32.mrf.mxu0
        %v9206 = vadd.f32 %v9166, %v9205
        %v9207 = vpop.f32.mrf.mxu0
        %v9208 = vpop.f32.mrf.mxu0
        %v9209 = vpop.f32.mrf.mxu0
        %9210 = vdwg.mxu0
        %9211 = vmatprep.subr.bf16.mxu0 0
        %9212 = vmatpush1.bf16.msra.mxu0 %v8565
        %9213 = vmatprep.subr.bf16.mxu0 0
        %9214 = vmatpush1.bf16.msra.mxu0 %v8562
        %9215 = vmatprep.subr.bf16.mxu0 0
        %9216 = vmatpush1.bf16.msra.mxu0 %v8559
        %9217 = vmatprep.subr.bf16.mxu0 0
        %9218 = vmatpush1.bf16.msra.mxu0 %v8556
        %9219 = vmatprep.subr.bf16.mxu0 0
        %9220 = vmatpush1.bf16.msra.mxu0 %v8553
        %9221 = vmatprep.subr.bf16.mxu0 0
        %9222 = vmatpush1.bf16.msra.mxu0 %v8550
        %9223 = vmatprep.subr.bf16.mxu0 0
        %9224 = vmatpush1.bf16.msra.mxu0 %v8547
        %9225 = vmatprep.subr.bf16.mxu0 0
        %9226 = vmatpush1.bf16.msra.mxu0 %v8544
        %9227 = vmatprep.subr.bf16.mxu0 0
        %9228 = vmatpush2.bf16.msra.mxu0 %v8589
        %9229 = vmatprep.subr.bf16.mxu0 0
        %9230 = vmatpush2.bf16.msra.mxu0 %v8586
        %9231 = vmatprep.subr.bf16.mxu0 0
        %9232 = vmatpush2.bf16.msra.mxu0 %v8583
        %9233 = vmatprep.subr.bf16.mxu0 0
        %9234 = vmatpush2.bf16.msra.mxu0 %v8580
        %9235 = vmatprep.subr.bf16.mxu0 0
        %9236 = vmatpush2.bf16.msra.mxu0 %v8577
        %9237 = vmatprep.subr.bf16.mxu0 0
        %9238 = vmatpush2.bf16.msra.mxu0 %v8574
        %9239 = vmatprep.subr.bf16.mxu0 0
        %9240 = vmatpush2.bf16.msra.mxu0 %v8571
        %9241 = vmatprep.subr.bf16.mxu0 0
        %9242 = vmatpush2.bf16.msra.mxu0 %v8568
        %9243 = vmatprep.mubr.bf16.mxu0 %v7304
        %9244 = vmatmul.mubr.bf16.gmra.mxu0 %v7303
        %v9245 = vpop.f32.mrf.mxu0
        %v9246 = vadd.f32 %v9206, %v9245
        %v9247 = vpop.f32.mrf.mxu0
        %v9248 = vpop.f32.mrf.mxu0
        %v9249 = vpop.f32.mrf.mxu0
        %9250 = vdwg.mxu0
        %9251 = vmatprep.subr.bf16.mxu0 0
        %9252 = vmatpush1.bf16.msra.mxu0 %v8613
        %9253 = vmatprep.subr.bf16.mxu0 0
        %9254 = vmatpush1.bf16.msra.mxu0 %v8610
        %9255 = vmatprep.subr.bf16.mxu0 0
        %9256 = vmatpush1.bf16.msra.mxu0 %v8607
        %9257 = vmatprep.subr.bf16.mxu0 0
        %9258 = vmatpush1.bf16.msra.mxu0 %v8604
        %9259 = vmatprep.subr.bf16.mxu0 0
        %9260 = vmatpush1.bf16.msra.mxu0 %v8601
        %9261 = vmatprep.subr.bf16.mxu0 0
        %9262 = vmatpush1.bf16.msra.mxu0 %v8598
        %9263 = vmatprep.subr.bf16.mxu0 0
        %9264 = vmatpush1.bf16.msra.mxu0 %v8595
        %9265 = vmatprep.subr.bf16.mxu0 0
        %9266 = vmatpush1.bf16.msra.mxu0 %v8592
        %9267 = vmatprep.subr.bf16.mxu0 0
        %9268 = vmatpush2.bf16.msra.mxu0 %v8637
        %9269 = vmatprep.subr.bf16.mxu0 0
        %9270 = vmatpush2.bf16.msra.mxu0 %v8634
        %9271 = vmatprep.subr.bf16.mxu0 0
        %9272 = vmatpush2.bf16.msra.mxu0 %v8631
        %9273 = vmatprep.subr.bf16.mxu0 0
        %9274 = vmatpush2.bf16.msra.mxu0 %v8628
        %9275 = vmatprep.subr.bf16.mxu0 0
        %9276 = vmatpush2.bf16.msra.mxu0 %v8625
        %9277 = vmatprep.subr.bf16.mxu0 0
        %9278 = vmatpush2.bf16.msra.mxu0 %v8622
        %9279 = vmatprep.subr.bf16.mxu0 0
        %9280 = vmatpush2.bf16.msra.mxu0 %v8619
        %9281 = vmatprep.subr.bf16.mxu0 0
        %9282 = vmatpush2.bf16.msra.mxu0 %v8616
        %9283 = vmatprep.mubr.bf16.mxu0 %v7306
        %9284 = vmatmul.mubr.bf16.gmra.mxu0 %v7305
        %v9285 = vpop.f32.mrf.mxu0
        %v9286 = vadd.f32 %v9246, %v9285
        %v9287 = vpop.f32.mrf.mxu0
        %v9288 = vpop.f32.mrf.mxu0
        %v9289 = vpop.f32.mrf.mxu0
        %9290 = vdwg.mxu0
        %9291 = vmatprep.subr.bf16.mxu0 0
        %9292 = vmatpush1.bf16.msra.mxu0 %v8661
        %9293 = vmatprep.subr.bf16.mxu0 0
        %9294 = vmatpush1.bf16.msra.mxu0 %v8658
        %9295 = vmatprep.subr.bf16.mxu0 0
        %9296 = vmatpush1.bf16.msra.mxu0 %v8655
        %9297 = vmatprep.subr.bf16.mxu0 0
        %9298 = vmatpush1.bf16.msra.mxu0 %v8652
        %9299 = vmatprep.subr.bf16.mxu0 0
        %9300 = vmatpush1.bf16.msra.mxu0 %v8649
        %9301 = vmatprep.subr.bf16.mxu0 0
        %9302 = vmatpush1.bf16.msra.mxu0 %v8646
        %9303 = vmatprep.subr.bf16.mxu0 0
        %9304 = vmatpush1.bf16.msra.mxu0 %v8643
        %9305 = vmatprep.subr.bf16.mxu0 0
        %9306 = vmatpush1.bf16.msra.mxu0 %v8640
        %9307 = vmatprep.subr.bf16.mxu0 0
        %9308 = vmatpush2.bf16.msra.mxu0 %v8685
        %9309 = vmatprep.subr.bf16.mxu0 0
        %9310 = vmatpush2.bf16.msra.mxu0 %v8682
        %9311 = vmatprep.subr.bf16.mxu0 0
        %9312 = vmatpush2.bf16.msra.mxu0 %v8679
        %9313 = vmatprep.subr.bf16.mxu0 0
        %9314 = vmatpush2.bf16.msra.mxu0 %v8676
        %9315 = vmatprep.subr.bf16.mxu0 0
        %9316 = vmatpush2.bf16.msra.mxu0 %v8673
        %9317 = vmatprep.subr.bf16.mxu0 0
        %9318 = vmatpush2.bf16.msra.mxu0 %v8670
        %9319 = vmatprep.subr.bf16.mxu0 0
        %9320 = vmatpush2.bf16.msra.mxu0 %v8667
        %9321 = vmatprep.subr.bf16.mxu0 0
        %9322 = vmatpush2.bf16.msra.mxu0 %v8664
        %9323 = vmatprep.mubr.bf16.mxu0 %v7308
        %9324 = vmatmul.mubr.bf16.gmra.mxu0 %v7307
        %v9325 = vpop.f32.mrf.mxu0
        %v9326 = vadd.f32 %v9286, %v9325
        %v9327 = vpop.f32.mrf.mxu0
        %v9328 = vpop.f32.mrf.mxu0
        %v9329 = vpop.f32.mrf.mxu0
        %9330 = vdwg.mxu0
        %s9331 = sld [smem:[#allocation4 + %s33]]
        %v9335 = vcombine.low %v9125, %v9127
        %v9337 = vunpack.c.l.s4 1983009808
        %v9338 = vunpack.c.0.s8 %v9337
        %v9339 = vlaneseq
        %v9340 = vshrl.u32 %v9339, 7
        %v9341 = vsub.s32 %v9338, %v9340
        %v9342 = vrot.slane %v9335, %v9341
        %v9344 = vunpack.c.l.s4 1983009808
        %v9345 = vunpack.c.0.s8 %v9344
        %v9346 = vlaneseq
        %v9347 = vshrl.u32 %v9346, 7
        %v9348 = vsub.s32 %v9345, %v9347
        %v9349 = vrot.slane %v9326, %v9348
        %v9350 = vcombine.low %v9342, %v9349
        %s9352 = sshra.s32 %s9331, 7
        %s9353 = sand.u32 %s9331, 127
        %s9354 = smul.addr %s9352, 2
        %s9355 = scalar_lea.vmem [#allocation2], %s9354
        %9356 = vst [vmem:[%s9355] sm:$0x3f] %v9350
        %p9357 = scmp.eq.s32.totalorder %s33, 5
        // Predicated region
        $region81: #{tpu_custom_call.1} parent=51 // pred_check
          %p9358 = pneg %p9357
        $region82: #{tpu_custom_call.1} parent=51 // pred_check_branch
          %9360 = sbr.rel (%p9358) target = $region84
        $region83: #{tpu_custom_call.1} parent=51 // pred_region
          %v9361 = vld [vmem:[#allocation2] sm:$0xff]
          %v9362 = vld [vmem:[#allocation2 + $0x8] sm:$0xff]
          %v9363 = vld [vmem:[#allocation2 + $0x10] sm:$0xff]
          %v9364 = vld [vmem:[#allocation2 + $0x18] sm:$0xff]
          %v9369 = vcombine.high %v9361, %v9361
          %v9371 = vunpack.c.l.s4 1983009808
          %v9372 = vunpack.c.0.s8 %v9371
          %v9373 = vlaneseq
          %v9374 = vshrl.u32 %v9373, 7
          %v9375 = vsub.s32 %v9372, %v9374
          %v9376 = vrot.slane %v9361, %v9375
          %v9378 = vunpack.c.l.s4 1983009808
          %v9379 = vunpack.c.0.s8 %v9378
          %v9380 = vlaneseq
          %v9381 = vshrl.u32 %v9380, 7
          %v9382 = vsub.s32 %v9379, %v9381
          %v9383 = vrot.slane %v9369, %v9382
          %v9384 = vcombine.high %v9376, %v9376
          %v9385 = vcombine.high %v9383, %v9383
          %v9386 = vcombine.high %v9362, %v9362
          %v9388 = vunpack.c.l.s4 1983009808
          %v9389 = vunpack.c.0.s8 %v9388
          %v9390 = vlaneseq
          %v9391 = vshrl.u32 %v9390, 7
          %v9392 = vsub.s32 %v9389, %v9391
          %v9393 = vrot.slane %v9362, %v9392
          %v9395 = vunpack.c.l.s4 1983009808
          %v9396 = vunpack.c.0.s8 %v9395
          %v9397 = vlaneseq
          %v9398 = vshrl.u32 %v9397, 7
          %v9399 = vsub.s32 %v9396, %v9398
          %v9400 = vrot.slane %v9386, %v9399
          %v9401 = vcombine.high %v9393, %v9393
          %v9402 = vcombine.high %v9400, %v9400
          %v9403 = vcombine.high %v9363, %v9363
          %v9405 = vunpack.c.l.s4 1983009808
          %v9406 = vunpack.c.0.s8 %v9405
          %v9407 = vlaneseq
          %v9408 = vshrl.u32 %v9407, 7
          %v9409 = vsub.s32 %v9406, %v9408
          %v9410 = vrot.slane %v9363, %v9409
          %v9412 = vunpack.c.l.s4 1983009808
          %v9413 = vunpack.c.0.s8 %v9412
          %v9414 = vlaneseq
          %v9415 = vshrl.u32 %v9414, 7
          %v9416 = vsub.s32 %v9413, %v9415
          %v9417 = vrot.slane %v9403, %v9416
          %v9418 = vcombine.high %v9410, %v9410
          %v9419 = vcombine.high %v9417, %v9417
          %v9420 = vcombine.high %v9364, %v9364
          %v9422 = vunpack.c.l.s4 1983009808
          %v9423 = vunpack.c.0.s8 %v9422
          %v9424 = vlaneseq
          %v9425 = vshrl.u32 %v9424, 7
          %v9426 = vsub.s32 %v9423, %v9425
          %v9427 = vrot.slane %v9364, %v9426
          %v9429 = vunpack.c.l.s4 1983009808
          %v9430 = vunpack.c.0.s8 %v9429
          %v9431 = vlaneseq
          %v9432 = vshrl.u32 %v9431, 7
          %v9433 = vsub.s32 %v9430, %v9432
          %v9434 = vrot.slane %v9420, %v9433
          %v9435 = vcombine.high %v9427, %v9427
          %v9436 = vcombine.high %v9434, %v9434
          %v9453 = vpack.c.bf16 %v9376, %v9376
          %v9454 = vpack.c.bf16 %v9384, %v9384
          %v9455 = vpack.c.bf16 %v9383, %v9383
          %v9456 = vpack.c.bf16 %v9385, %v9385
          %v9457 = vpack.c.bf16 %v9393, %v9393
          %v9458 = vpack.c.bf16 %v9401, %v9401
          %v9459 = vpack.c.bf16 %v9400, %v9400
          %v9460 = vpack.c.bf16 %v9402, %v9402
          %v9461 = vpack.c.bf16 %v9410, %v9410
          %v9462 = vpack.c.bf16 %v9418, %v9418
          %v9463 = vpack.c.bf16 %v9417, %v9417
          %v9464 = vpack.c.bf16 %v9419, %v9419
          %v9465 = vpack.c.bf16 %v9427, %v9427
          %v9466 = vpack.c.bf16 %v9435, %v9435
          %v9467 = vpack.c.bf16 %v9434, %v9434
          %v9468 = vpack.c.bf16 %v9436, %v9436
          %v9469 = vld [vmem:[%s7] sm:$0xf]
          %v9470 = vld [vmem:[%s7 + $0x4] sm:$0xf]
          %v9471 = vld [vmem:[%s7 + $0x8] sm:$0xf]
          %v9472 = vld [vmem:[%s7 + $0xc] sm:$0xf]
          %v9473 = vld [vmem:[%s7 + $0x10] sm:$0xf]
          %v9474 = vld [vmem:[%s7 + $0x14] sm:$0xf]
          %v9475 = vld [vmem:[%s7 + $0x18] sm:$0xf]
          %v9476 = vld [vmem:[%s7 + $0x1c] sm:$0xf]
          %v9477 = vld [vmem:[%s7 + $0x20] sm:$0xf]
          %v9478 = vld [vmem:[%s7 + $0x24] sm:$0xf]
          %v9479 = vld [vmem:[%s7 + $0x28] sm:$0xf]
          %v9480 = vld [vmem:[%s7 + $0x2c] sm:$0xf]
          %v9481 = vld [vmem:[%s7 + $0x30] sm:$0xf]
          %v9482 = vld [vmem:[%s7 + $0x34] sm:$0xf]
          %v9483 = vld [vmem:[%s7 + $0x38] sm:$0xf]
          %v9484 = vld [vmem:[%s7 + $0x3c] sm:$0xf]
          %v9485 = vld [vmem:[%s7 + $0x40] sm:$0xf]
          %v9486 = vld [vmem:[%s7 + $0x44] sm:$0xf]
          %v9487 = vld [vmem:[%s7 + $0x48] sm:$0xf]
          %v9488 = vld [vmem:[%s7 + $0x4c] sm:$0xf]
          %v9489 = vld [vmem:[%s7 + $0x50] sm:$0xf]
          %v9490 = vld [vmem:[%s7 + $0x54] sm:$0xf]
          %v9491 = vld [vmem:[%s7 + $0x58] sm:$0xf]
          %v9492 = vld [vmem:[%s7 + $0x5c] sm:$0xf]
          %v9493 = vld [vmem:[%s7 + $0x60] sm:$0xf]
          %v9494 = vld [vmem:[%s7 + $0x64] sm:$0xf]
          %v9495 = vld [vmem:[%s7 + $0x68] sm:$0xf]
          %v9496 = vld [vmem:[%s7 + $0x6c] sm:$0xf]
          %v9497 = vld [vmem:[%s7 + $0x70] sm:$0xf]
          %v9498 = vld [vmem:[%s7 + $0x74] sm:$0xf]
          %v9499 = vld [vmem:[%s7 + $0x78] sm:$0xf]
          %v9500 = vld [vmem:[%s7 + $0x7c] sm:$0xf]
          %v9501 = vld [vmem:[%s7 + $0x80] sm:$0xf]
          %v9502 = vld [vmem:[%s7 + $0x84] sm:$0xf]
          %v9503 = vld [vmem:[%s7 + $0x88] sm:$0xf]
          %v9504 = vld [vmem:[%s7 + $0x8c] sm:$0xf]
          %v9505 = vld [vmem:[%s7 + $0x90] sm:$0xf]
          %v9506 = vld [vmem:[%s7 + $0x94] sm:$0xf]
          %v9507 = vld [vmem:[%s7 + $0x98] sm:$0xf]
          %v9508 = vld [vmem:[%s7 + $0x9c] sm:$0xf]
          %v9509 = vld [vmem:[%s7 + $0xa0] sm:$0xf]
          %v9510 = vld [vmem:[%s7 + $0xa4] sm:$0xf]
          %v9511 = vld [vmem:[%s7 + $0xa8] sm:$0xf]
          %v9512 = vld [vmem:[%s7 + $0xac] sm:$0xf]
          %v9513 = vld [vmem:[%s7 + $0xb0] sm:$0xf]
          %v9514 = vld [vmem:[%s7 + $0xb4] sm:$0xf]
          %v9515 = vld [vmem:[%s7 + $0xb8] sm:$0xf]
          %v9516 = vld [vmem:[%s7 + $0xbc] sm:$0xf]
          %v9517 = vld [vmem:[%s7 + $0xc0] sm:$0xf]
          %v9518 = vld [vmem:[%s7 + $0xc4] sm:$0xf]
          %v9519 = vld [vmem:[%s7 + $0xc8] sm:$0xf]
          %v9520 = vld [vmem:[%s7 + $0xcc] sm:$0xf]
          %v9521 = vld [vmem:[%s7 + $0xd0] sm:$0xf]
          %v9522 = vld [vmem:[%s7 + $0xd4] sm:$0xf]
          %v9523 = vld [vmem:[%s7 + $0xd8] sm:$0xf]
          %v9524 = vld [vmem:[%s7 + $0xdc] sm:$0xf]
          %v9525 = vld [vmem:[%s7 + $0xe0] sm:$0xf]
          %v9526 = vld [vmem:[%s7 + $0xe4] sm:$0xf]
          %v9527 = vld [vmem:[%s7 + $0xe8] sm:$0xf]
          %v9528 = vld [vmem:[%s7 + $0xec] sm:$0xf]
          %v9529 = vld [vmem:[%s7 + $0xf0] sm:$0xf]
          %v9530 = vld [vmem:[%s7 + $0xf4] sm:$0xf]
          %v9531 = vld [vmem:[%s7 + $0xf8] sm:$0xf]
          %v9532 = vld [vmem:[%s7 + $0xfc] sm:$0xf]
          %v9533 = vld [vmem:[%s7 + $0x100] sm:$0xf]
          %v9534 = vld [vmem:[%s7 + $0x104] sm:$0xf]
          %v9535 = vld [vmem:[%s7 + $0x108] sm:$0xf]
          %v9536 = vld [vmem:[%s7 + $0x10c] sm:$0xf]
          %v9537 = vld [vmem:[%s7 + $0x110] sm:$0xf]
          %v9538 = vld [vmem:[%s7 + $0x114] sm:$0xf]
          %v9539 = vld [vmem:[%s7 + $0x118] sm:$0xf]
          %v9540 = vld [vmem:[%s7 + $0x11c] sm:$0xf]
          %v9541 = vld [vmem:[%s7 + $0x120] sm:$0xf]
          %v9542 = vld [vmem:[%s7 + $0x124] sm:$0xf]
          %v9543 = vld [vmem:[%s7 + $0x128] sm:$0xf]
          %v9544 = vld [vmem:[%s7 + $0x12c] sm:$0xf]
          %v9545 = vld [vmem:[%s7 + $0x130] sm:$0xf]
          %v9546 = vld [vmem:[%s7 + $0x134] sm:$0xf]
          %v9547 = vld [vmem:[%s7 + $0x138] sm:$0xf]
          %v9548 = vld [vmem:[%s7 + $0x13c] sm:$0xf]
          %v9549 = vld [vmem:[%s7 + $0x140] sm:$0xf]
          %v9550 = vld [vmem:[%s7 + $0x144] sm:$0xf]
          %v9551 = vld [vmem:[%s7 + $0x148] sm:$0xf]
          %v9552 = vld [vmem:[%s7 + $0x14c] sm:$0xf]
          %v9553 = vld [vmem:[%s7 + $0x150] sm:$0xf]
          %v9554 = vld [vmem:[%s7 + $0x154] sm:$0xf]
          %v9555 = vld [vmem:[%s7 + $0x158] sm:$0xf]
          %v9556 = vld [vmem:[%s7 + $0x15c] sm:$0xf]
          %v9557 = vld [vmem:[%s7 + $0x160] sm:$0xf]
          %v9558 = vld [vmem:[%s7 + $0x164] sm:$0xf]
          %v9559 = vld [vmem:[%s7 + $0x168] sm:$0xf]
          %v9560 = vld [vmem:[%s7 + $0x16c] sm:$0xf]
          %v9561 = vld [vmem:[%s7 + $0x170] sm:$0xf]
          %v9562 = vld [vmem:[%s7 + $0x174] sm:$0xf]
          %v9563 = vld [vmem:[%s7 + $0x178] sm:$0xf]
          %v9564 = vld [vmem:[%s7 + $0x17c] sm:$0xf]
          %v9565 = vld [vmem:[%s7 + $0x180] sm:$0xf]
          %v9566 = vld [vmem:[%s7 + $0x184] sm:$0xf]
          %v9567 = vld [vmem:[%s7 + $0x188] sm:$0xf]
          %v9568 = vld [vmem:[%s7 + $0x18c] sm:$0xf]
          %v9569 = vld [vmem:[%s7 + $0x190] sm:$0xf]
          %v9570 = vld [vmem:[%s7 + $0x194] sm:$0xf]
          %v9571 = vld [vmem:[%s7 + $0x198] sm:$0xf]
          %v9572 = vld [vmem:[%s7 + $0x19c] sm:$0xf]
          %v9573 = vld [vmem:[%s7 + $0x1a0] sm:$0xf]
          %v9574 = vld [vmem:[%s7 + $0x1a4] sm:$0xf]
          %v9575 = vld [vmem:[%s7 + $0x1a8] sm:$0xf]
          %v9576 = vld [vmem:[%s7 + $0x1ac] sm:$0xf]
          %v9577 = vld [vmem:[%s7 + $0x1b0] sm:$0xf]
          %v9578 = vld [vmem:[%s7 + $0x1b4] sm:$0xf]
          %v9579 = vld [vmem:[%s7 + $0x1b8] sm:$0xf]
          %v9580 = vld [vmem:[%s7 + $0x1bc] sm:$0xf]
          %v9581 = vld [vmem:[%s7 + $0x1c0] sm:$0xf]
          %v9582 = vld [vmem:[%s7 + $0x1c4] sm:$0xf]
          %v9583 = vld [vmem:[%s7 + $0x1c8] sm:$0xf]
          %v9584 = vld [vmem:[%s7 + $0x1cc] sm:$0xf]
          %v9585 = vld [vmem:[%s7 + $0x1d0] sm:$0xf]
          %v9586 = vld [vmem:[%s7 + $0x1d4] sm:$0xf]
          %v9587 = vld [vmem:[%s7 + $0x1d8] sm:$0xf]
          %v9588 = vld [vmem:[%s7 + $0x1dc] sm:$0xf]
          %v9589 = vld [vmem:[%s7 + $0x1e0] sm:$0xf]
          %v9590 = vld [vmem:[%s7 + $0x1e4] sm:$0xf]
          %v9591 = vld [vmem:[%s7 + $0x1e8] sm:$0xf]
          %v9592 = vld [vmem:[%s7 + $0x1ec] sm:$0xf]
          %v9593 = vld [vmem:[%s7 + $0x1f0] sm:$0xf]
          %v9594 = vld [vmem:[%s7 + $0x1f4] sm:$0xf]
          %v9595 = vld [vmem:[%s7 + $0x1f8] sm:$0xf]
          %v9596 = vld [vmem:[%s7 + $0x1fc] sm:$0xf]
          %v9597 = vld [vmem:[%s7 + $0x200] sm:$0xf]
          %v9598 = vld [vmem:[%s7 + $0x204] sm:$0xf]
          %v9599 = vld [vmem:[%s7 + $0x208] sm:$0xf]
          %v9600 = vld [vmem:[%s7 + $0x20c] sm:$0xf]
          %v9601 = vld [vmem:[%s7 + $0x210] sm:$0xf]
          %v9602 = vld [vmem:[%s7 + $0x214] sm:$0xf]
          %v9603 = vld [vmem:[%s7 + $0x218] sm:$0xf]
          %v9604 = vld [vmem:[%s7 + $0x21c] sm:$0xf]
          %v9605 = vld [vmem:[%s7 + $0x220] sm:$0xf]
          %v9606 = vld [vmem:[%s7 + $0x224] sm:$0xf]
          %v9607 = vld [vmem:[%s7 + $0x228] sm:$0xf]
          %v9608 = vld [vmem:[%s7 + $0x22c] sm:$0xf]
          %v9609 = vld [vmem:[%s7 + $0x230] sm:$0xf]
          %v9610 = vld [vmem:[%s7 + $0x234] sm:$0xf]
          %v9611 = vld [vmem:[%s7 + $0x238] sm:$0xf]
          %v9612 = vld [vmem:[%s7 + $0x23c] sm:$0xf]
          %v9613 = vld [vmem:[%s7 + $0x240] sm:$0xf]
          %v9614 = vld [vmem:[%s7 + $0x244] sm:$0xf]
          %v9615 = vld [vmem:[%s7 + $0x248] sm:$0xf]
          %v9616 = vld [vmem:[%s7 + $0x24c] sm:$0xf]
          %v9617 = vld [vmem:[%s7 + $0x250] sm:$0xf]
          %v9618 = vld [vmem:[%s7 + $0x254] sm:$0xf]
          %v9619 = vld [vmem:[%s7 + $0x258] sm:$0xf]
          %v9620 = vld [vmem:[%s7 + $0x25c] sm:$0xf]
          %v9621 = vld [vmem:[%s7 + $0x260] sm:$0xf]
          %v9622 = vld [vmem:[%s7 + $0x264] sm:$0xf]
          %v9623 = vld [vmem:[%s7 + $0x268] sm:$0xf]
          %v9624 = vld [vmem:[%s7 + $0x26c] sm:$0xf]
          %v9625 = vld [vmem:[%s7 + $0x270] sm:$0xf]
          %v9626 = vld [vmem:[%s7 + $0x274] sm:$0xf]
          %v9627 = vld [vmem:[%s7 + $0x278] sm:$0xf]
          %v9628 = vld [vmem:[%s7 + $0x27c] sm:$0xf]
          %v9629 = vld [vmem:[%s7 + $0x280] sm:$0xf]
          %v9630 = vld [vmem:[%s7 + $0x284] sm:$0xf]
          %v9631 = vld [vmem:[%s7 + $0x288] sm:$0xf]
          %v9632 = vld [vmem:[%s7 + $0x28c] sm:$0xf]
          %v9633 = vld [vmem:[%s7 + $0x290] sm:$0xf]
          %v9634 = vld [vmem:[%s7 + $0x294] sm:$0xf]
          %v9635 = vld [vmem:[%s7 + $0x298] sm:$0xf]
          %v9636 = vld [vmem:[%s7 + $0x29c] sm:$0xf]
          %v9637 = vld [vmem:[%s7 + $0x2a0] sm:$0xf]
          %v9638 = vld [vmem:[%s7 + $0x2a4] sm:$0xf]
          %v9639 = vld [vmem:[%s7 + $0x2a8] sm:$0xf]
          %v9640 = vld [vmem:[%s7 + $0x2ac] sm:$0xf]
          %v9641 = vld [vmem:[%s7 + $0x2b0] sm:$0xf]
          %v9642 = vld [vmem:[%s7 + $0x2b4] sm:$0xf]
          %v9643 = vld [vmem:[%s7 + $0x2b8] sm:$0xf]
          %v9644 = vld [vmem:[%s7 + $0x2bc] sm:$0xf]
          %v9645 = vld [vmem:[%s7 + $0x2c0] sm:$0xf]
          %v9646 = vld [vmem:[%s7 + $0x2c4] sm:$0xf]
          %v9647 = vld [vmem:[%s7 + $0x2c8] sm:$0xf]
          %v9648 = vld [vmem:[%s7 + $0x2cc] sm:$0xf]
          %v9649 = vld [vmem:[%s7 + $0x2d0] sm:$0xf]
          %v9650 = vld [vmem:[%s7 + $0x2d4] sm:$0xf]
          %v9651 = vld [vmem:[%s7 + $0x2d8] sm:$0xf]
          %v9652 = vld [vmem:[%s7 + $0x2dc] sm:$0xf]
          %v9653 = vld [vmem:[%s7 + $0x2e0] sm:$0xf]
          %v9654 = vld [vmem:[%s7 + $0x2e4] sm:$0xf]
          %v9655 = vld [vmem:[%s7 + $0x2e8] sm:$0xf]
          %v9656 = vld [vmem:[%s7 + $0x2ec] sm:$0xf]
          %v9657 = vld [vmem:[%s7 + $0x2f0] sm:$0xf]
          %v9658 = vld [vmem:[%s7 + $0x2f4] sm:$0xf]
          %v9659 = vld [vmem:[%s7 + $0x2f8] sm:$0xf]
          %v9660 = vld [vmem:[%s7 + $0x2fc] sm:$0xf]
          %v9661 = vld [vmem:[%s7 + $0x300] sm:$0xf]
          %v9662 = vld [vmem:[%s7 + $0x304] sm:$0xf]
          %v9663 = vld [vmem:[%s7 + $0x308] sm:$0xf]
          %v9664 = vld [vmem:[%s7 + $0x30c] sm:$0xf]
          %v9665 = vld [vmem:[%s7 + $0x310] sm:$0xf]
          %v9666 = vld [vmem:[%s7 + $0x314] sm:$0xf]
          %v9667 = vld [vmem:[%s7 + $0x318] sm:$0xf]
          %v9668 = vld [vmem:[%s7 + $0x31c] sm:$0xf]
          %v9669 = vld [vmem:[%s7 + $0x320] sm:$0xf]
          %v9670 = vld [vmem:[%s7 + $0x324] sm:$0xf]
          %v9671 = vld [vmem:[%s7 + $0x328] sm:$0xf]
          %v9672 = vld [vmem:[%s7 + $0x32c] sm:$0xf]
          %v9673 = vld [vmem:[%s7 + $0x330] sm:$0xf]
          %v9674 = vld [vmem:[%s7 + $0x334] sm:$0xf]
          %v9675 = vld [vmem:[%s7 + $0x338] sm:$0xf]
          %v9676 = vld [vmem:[%s7 + $0x33c] sm:$0xf]
          %v9677 = vld [vmem:[%s7 + $0x340] sm:$0xf]
          %v9678 = vld [vmem:[%s7 + $0x344] sm:$0xf]
          %v9679 = vld [vmem:[%s7 + $0x348] sm:$0xf]
          %v9680 = vld [vmem:[%s7 + $0x34c] sm:$0xf]
          %v9681 = vld [vmem:[%s7 + $0x350] sm:$0xf]
          %v9682 = vld [vmem:[%s7 + $0x354] sm:$0xf]
          %v9683 = vld [vmem:[%s7 + $0x358] sm:$0xf]
          %v9684 = vld [vmem:[%s7 + $0x35c] sm:$0xf]
          %v9685 = vld [vmem:[%s7 + $0x360] sm:$0xf]
          %v9686 = vld [vmem:[%s7 + $0x364] sm:$0xf]
          %v9687 = vld [vmem:[%s7 + $0x368] sm:$0xf]
          %v9688 = vld [vmem:[%s7 + $0x36c] sm:$0xf]
          %v9689 = vld [vmem:[%s7 + $0x370] sm:$0xf]
          %v9690 = vld [vmem:[%s7 + $0x374] sm:$0xf]
          %v9691 = vld [vmem:[%s7 + $0x378] sm:$0xf]
          %v9692 = vld [vmem:[%s7 + $0x37c] sm:$0xf]
          %v9693 = vld [vmem:[%s7 + $0x380] sm:$0xf]
          %v9694 = vld [vmem:[%s7 + $0x384] sm:$0xf]
          %v9695 = vld [vmem:[%s7 + $0x388] sm:$0xf]
          %v9696 = vld [vmem:[%s7 + $0x38c] sm:$0xf]
          %v9697 = vld [vmem:[%s7 + $0x390] sm:$0xf]
          %v9698 = vld [vmem:[%s7 + $0x394] sm:$0xf]
          %v9699 = vld [vmem:[%s7 + $0x398] sm:$0xf]
          %v9700 = vld [vmem:[%s7 + $0x39c] sm:$0xf]
          %v9701 = vld [vmem:[%s7 + $0x3a0] sm:$0xf]
          %v9702 = vld [vmem:[%s7 + $0x3a4] sm:$0xf]
          %v9703 = vld [vmem:[%s7 + $0x3a8] sm:$0xf]
          %v9704 = vld [vmem:[%s7 + $0x3ac] sm:$0xf]
          %v9705 = vld [vmem:[%s7 + $0x3b0] sm:$0xf]
          %v9706 = vld [vmem:[%s7 + $0x3b4] sm:$0xf]
          %v9707 = vld [vmem:[%s7 + $0x3b8] sm:$0xf]
          %v9708 = vld [vmem:[%s7 + $0x3bc] sm:$0xf]
          %v9709 = vld [vmem:[%s7 + $0x3c0] sm:$0xf]
          %v9710 = vld [vmem:[%s7 + $0x3c4] sm:$0xf]
          %v9711 = vld [vmem:[%s7 + $0x3c8] sm:$0xf]
          %v9712 = vld [vmem:[%s7 + $0x3cc] sm:$0xf]
          %v9713 = vld [vmem:[%s7 + $0x3d0] sm:$0xf]
          %v9714 = vld [vmem:[%s7 + $0x3d4] sm:$0xf]
          %v9715 = vld [vmem:[%s7 + $0x3d8] sm:$0xf]
          %v9716 = vld [vmem:[%s7 + $0x3dc] sm:$0xf]
          %v9717 = vld [vmem:[%s7 + $0x3e0] sm:$0xf]
          %v9718 = vld [vmem:[%s7 + $0x3e4] sm:$0xf]
          %v9719 = vld [vmem:[%s7 + $0x3e8] sm:$0xf]
          %v9720 = vld [vmem:[%s7 + $0x3ec] sm:$0xf]
          %v9721 = vld [vmem:[%s7 + $0x3f0] sm:$0xf]
          %v9722 = vld [vmem:[%s7 + $0x3f4] sm:$0xf]
          %v9723 = vld [vmem:[%s7 + $0x3f8] sm:$0xf]
          %v9724 = vld [vmem:[%s7 + $0x3fc] sm:$0xf]
          %v9725 = vld [vmem:[#allocation14] sm:$0x1]
          %v9727 = vlaneseq
          %v9728 = vshrl.u32 %v9727, 7
          %v9729 = vsub.s32 0, %v9728
          %v9730 = vrot.slane %v9725, %v9729
          %v9988 = vunpack.c.l.b16 %v9469
          %v9989 = vunpack.c.l.b16 %v9470
          %v9990 = vunpack.c.l.b16 %v9471
          %v9991 = vunpack.c.l.b16 %v9472
          %v9992 = vunpack.c.l.b16 %v9473
          %v9993 = vunpack.c.l.b16 %v9474
          %v9994 = vunpack.c.l.b16 %v9475
          %v9995 = vunpack.c.l.b16 %v9476
          %v9996 = vunpack.c.l.b16 %v9477
          %v9997 = vunpack.c.l.b16 %v9478
          %v9998 = vunpack.c.l.b16 %v9479
          %v9999 = vunpack.c.l.b16 %v9480
          %v10000 = vunpack.c.l.b16 %v9481
          %v10001 = vunpack.c.l.b16 %v9482
          %v10002 = vunpack.c.l.b16 %v9483
          %v10003 = vunpack.c.l.b16 %v9484
          %v10004 = vunpack.c.l.b16 %v9485
          %v10005 = vunpack.c.l.b16 %v9486
          %v10006 = vunpack.c.l.b16 %v9487
          %v10007 = vunpack.c.l.b16 %v9488
          %v10008 = vunpack.c.l.b16 %v9489
          %v10009 = vunpack.c.l.b16 %v9490
          %v10010 = vunpack.c.l.b16 %v9491
          %v10011 = vunpack.c.l.b16 %v9492
          %v10012 = vunpack.c.l.b16 %v9493
          %v10013 = vunpack.c.l.b16 %v9494
          %v10014 = vunpack.c.l.b16 %v9495
          %v10015 = vunpack.c.l.b16 %v9496
          %v10016 = vunpack.c.l.b16 %v9497
          %v10017 = vunpack.c.l.b16 %v9498
          %v10018 = vunpack.c.l.b16 %v9499
          %v10019 = vunpack.c.l.b16 %v9500
          %v10020 = vunpack.c.l.b16 %v9501
          %v10021 = vunpack.c.l.b16 %v9502
          %v10022 = vunpack.c.l.b16 %v9503
          %v10023 = vunpack.c.l.b16 %v9504
          %v10024 = vunpack.c.l.b16 %v9505
          %v10025 = vunpack.c.l.b16 %v9506
          %v10026 = vunpack.c.l.b16 %v9507
          %v10027 = vunpack.c.l.b16 %v9508
          %v10028 = vunpack.c.l.b16 %v9509
          %v10029 = vunpack.c.l.b16 %v9510
          %v10030 = vunpack.c.l.b16 %v9511
          %v10031 = vunpack.c.l.b16 %v9512
          %v10032 = vunpack.c.l.b16 %v9513
          %v10033 = vunpack.c.l.b16 %v9514
          %v10034 = vunpack.c.l.b16 %v9515
          %v10035 = vunpack.c.l.b16 %v9516
          %v10036 = vunpack.c.l.b16 %v9517
          %v10037 = vunpack.c.l.b16 %v9518
          %v10038 = vunpack.c.l.b16 %v9519
          %v10039 = vunpack.c.l.b16 %v9520
          %v10040 = vunpack.c.l.b16 %v9521
          %v10041 = vunpack.c.l.b16 %v9522
          %v10042 = vunpack.c.l.b16 %v9523
          %v10043 = vunpack.c.l.b16 %v9524
          %v10044 = vunpack.c.l.b16 %v9525
          %v10045 = vunpack.c.l.b16 %v9526
          %v10046 = vunpack.c.l.b16 %v9527
          %v10047 = vunpack.c.l.b16 %v9528
          %v10048 = vunpack.c.l.b16 %v9529
          %v10049 = vunpack.c.l.b16 %v9530
          %v10050 = vunpack.c.l.b16 %v9531
          %v10051 = vunpack.c.l.b16 %v9532
          %v10052 = vunpack.c.l.b16 %v9533
          %v10053 = vunpack.c.l.b16 %v9534
          %v10054 = vunpack.c.l.b16 %v9535
          %v10055 = vunpack.c.l.b16 %v9536
          %v10056 = vunpack.c.l.b16 %v9537
          %v10057 = vunpack.c.l.b16 %v9538
          %v10058 = vunpack.c.l.b16 %v9539
          %v10059 = vunpack.c.l.b16 %v9540
          %v10060 = vunpack.c.l.b16 %v9541
          %v10061 = vunpack.c.l.b16 %v9542
          %v10062 = vunpack.c.l.b16 %v9543
          %v10063 = vunpack.c.l.b16 %v9544
          %v10064 = vunpack.c.l.b16 %v9545
          %v10065 = vunpack.c.l.b16 %v9546
          %v10066 = vunpack.c.l.b16 %v9547
          %v10067 = vunpack.c.l.b16 %v9548
          %v10068 = vunpack.c.l.b16 %v9549
          %v10069 = vunpack.c.l.b16 %v9550
          %v10070 = vunpack.c.l.b16 %v9551
          %v10071 = vunpack.c.l.b16 %v9552
          %v10072 = vunpack.c.l.b16 %v9553
          %v10073 = vunpack.c.l.b16 %v9554
          %v10074 = vunpack.c.l.b16 %v9555
          %v10075 = vunpack.c.l.b16 %v9556
          %v10076 = vunpack.c.l.b16 %v9557
          %v10077 = vunpack.c.l.b16 %v9558
          %v10078 = vunpack.c.l.b16 %v9559
          %v10079 = vunpack.c.l.b16 %v9560
          %v10080 = vunpack.c.l.b16 %v9561
          %v10081 = vunpack.c.l.b16 %v9562
          %v10082 = vunpack.c.l.b16 %v9563
          %v10083 = vunpack.c.l.b16 %v9564
          %v10084 = vunpack.c.l.b16 %v9565
          %v10085 = vunpack.c.l.b16 %v9566
          %v10086 = vunpack.c.l.b16 %v9567
          %v10087 = vunpack.c.l.b16 %v9568
          %v10088 = vunpack.c.l.b16 %v9569
          %v10089 = vunpack.c.l.b16 %v9570
          %v10090 = vunpack.c.l.b16 %v9571
          %v10091 = vunpack.c.l.b16 %v9572
          %v10092 = vunpack.c.l.b16 %v9573
          %v10093 = vunpack.c.l.b16 %v9574
          %v10094 = vunpack.c.l.b16 %v9575
          %v10095 = vunpack.c.l.b16 %v9576
          %v10096 = vunpack.c.l.b16 %v9577
          %v10097 = vunpack.c.l.b16 %v9578
          %v10098 = vunpack.c.l.b16 %v9579
          %v10099 = vunpack.c.l.b16 %v9580
          %v10100 = vunpack.c.l.b16 %v9581
          %v10101 = vunpack.c.l.b16 %v9582
          %v10102 = vunpack.c.l.b16 %v9583
          %v10103 = vunpack.c.l.b16 %v9584
          %v10104 = vunpack.c.l.b16 %v9585
          %v10105 = vunpack.c.l.b16 %v9586
          %v10106 = vunpack.c.l.b16 %v9587
          %v10107 = vunpack.c.l.b16 %v9588
          %v10108 = vunpack.c.l.b16 %v9589
          %v10109 = vunpack.c.l.b16 %v9590
          %v10110 = vunpack.c.l.b16 %v9591
          %v10111 = vunpack.c.l.b16 %v9592
          %v10112 = vunpack.c.l.b16 %v9593
          %v10113 = vunpack.c.l.b16 %v9594
          %v10114 = vunpack.c.l.b16 %v9595
          %v10115 = vunpack.c.l.b16 %v9596
          %v10116 = vunpack.c.l.b16 %v9597
          %v10117 = vunpack.c.l.b16 %v9598
          %v10118 = vunpack.c.l.b16 %v9599
          %v10119 = vunpack.c.l.b16 %v9600
          %v10120 = vunpack.c.l.b16 %v9601
          %v10121 = vunpack.c.l.b16 %v9602
          %v10122 = vunpack.c.l.b16 %v9603
          %v10123 = vunpack.c.l.b16 %v9604
          %v10124 = vunpack.c.l.b16 %v9605
          %v10125 = vunpack.c.l.b16 %v9606
          %v10126 = vunpack.c.l.b16 %v9607
          %v10127 = vunpack.c.l.b16 %v9608
          %v10128 = vunpack.c.l.b16 %v9609
          %v10129 = vunpack.c.l.b16 %v9610
          %v10130 = vunpack.c.l.b16 %v9611
          %v10131 = vunpack.c.l.b16 %v9612
          %v10132 = vunpack.c.l.b16 %v9613
          %v10133 = vunpack.c.l.b16 %v9614
          %v10134 = vunpack.c.l.b16 %v9615
          %v10135 = vunpack.c.l.b16 %v9616
          %v10136 = vunpack.c.l.b16 %v9617
          %v10137 = vunpack.c.l.b16 %v9618
          %v10138 = vunpack.c.l.b16 %v9619
          %v10139 = vunpack.c.l.b16 %v9620
          %v10140 = vunpack.c.l.b16 %v9621
          %v10141 = vunpack.c.l.b16 %v9622
          %v10142 = vunpack.c.l.b16 %v9623
          %v10143 = vunpack.c.l.b16 %v9624
          %v10144 = vunpack.c.l.b16 %v9625
          %v10145 = vunpack.c.l.b16 %v9626
          %v10146 = vunpack.c.l.b16 %v9627
          %v10147 = vunpack.c.l.b16 %v9628
          %v10148 = vunpack.c.l.b16 %v9629
          %v10149 = vunpack.c.l.b16 %v9630
          %v10150 = vunpack.c.l.b16 %v9631
          %v10151 = vunpack.c.l.b16 %v9632
          %v10152 = vunpack.c.l.b16 %v9633
          %v10153 = vunpack.c.l.b16 %v9634
          %v10154 = vunpack.c.l.b16 %v9635
          %v10155 = vunpack.c.l.b16 %v9636
          %v10156 = vunpack.c.l.b16 %v9637
          %v10157 = vunpack.c.l.b16 %v9638
          %v10158 = vunpack.c.l.b16 %v9639
          %v10159 = vunpack.c.l.b16 %v9640
          %v10160 = vunpack.c.l.b16 %v9641
          %v10161 = vunpack.c.l.b16 %v9642
          %v10162 = vunpack.c.l.b16 %v9643
          %v10163 = vunpack.c.l.b16 %v9644
          %v10164 = vunpack.c.l.b16 %v9645
          %v10165 = vunpack.c.l.b16 %v9646
          %v10166 = vunpack.c.l.b16 %v9647
          %v10167 = vunpack.c.l.b16 %v9648
          %v10168 = vunpack.c.l.b16 %v9649
          %v10169 = vunpack.c.l.b16 %v9650
          %v10170 = vunpack.c.l.b16 %v9651
          %v10171 = vunpack.c.l.b16 %v9652
          %v10172 = vunpack.c.l.b16 %v9653
          %v10173 = vunpack.c.l.b16 %v9654
          %v10174 = vunpack.c.l.b16 %v9655
          %v10175 = vunpack.c.l.b16 %v9656
          %v10176 = vunpack.c.l.b16 %v9657
          %v10177 = vunpack.c.l.b16 %v9658
          %v10178 = vunpack.c.l.b16 %v9659
          %v10179 = vunpack.c.l.b16 %v9660
          %v10180 = vunpack.c.l.b16 %v9661
          %v10181 = vunpack.c.l.b16 %v9662
          %v10182 = vunpack.c.l.b16 %v9663
          %v10183 = vunpack.c.l.b16 %v9664
          %v10184 = vunpack.c.l.b16 %v9665
          %v10185 = vunpack.c.l.b16 %v9666
          %v10186 = vunpack.c.l.b16 %v9667
          %v10187 = vunpack.c.l.b16 %v9668
          %v10188 = vunpack.c.l.b16 %v9669
          %v10189 = vunpack.c.l.b16 %v9670
          %v10190 = vunpack.c.l.b16 %v9671
          %v10191 = vunpack.c.l.b16 %v9672
          %v10192 = vunpack.c.l.b16 %v9673
          %v10193 = vunpack.c.l.b16 %v9674
          %v10194 = vunpack.c.l.b16 %v9675
          %v10195 = vunpack.c.l.b16 %v9676
          %v10196 = vunpack.c.l.b16 %v9677
          %v10197 = vunpack.c.l.b16 %v9678
          %v10198 = vunpack.c.l.b16 %v9679
          %v10199 = vunpack.c.l.b16 %v9680
          %v10200 = vunpack.c.l.b16 %v9681
          %v10201 = vunpack.c.l.b16 %v9682
          %v10202 = vunpack.c.l.b16 %v9683
          %v10203 = vunpack.c.l.b16 %v9684
          %v10204 = vunpack.c.l.b16 %v9685
          %v10205 = vunpack.c.l.b16 %v9686
          %v10206 = vunpack.c.l.b16 %v9687
          %v10207 = vunpack.c.l.b16 %v9688
          %v10208 = vunpack.c.l.b16 %v9689
          %v10209 = vunpack.c.l.b16 %v9690
          %v10210 = vunpack.c.l.b16 %v9691
          %v10211 = vunpack.c.l.b16 %v9692
          %v10212 = vunpack.c.l.b16 %v9693
          %v10213 = vunpack.c.l.b16 %v9694
          %v10214 = vunpack.c.l.b16 %v9695
          %v10215 = vunpack.c.l.b16 %v9696
          %v10216 = vunpack.c.l.b16 %v9697
          %v10217 = vunpack.c.l.b16 %v9698
          %v10218 = vunpack.c.l.b16 %v9699
          %v10219 = vunpack.c.l.b16 %v9700
          %v10220 = vunpack.c.l.b16 %v9701
          %v10221 = vunpack.c.l.b16 %v9702
          %v10222 = vunpack.c.l.b16 %v9703
          %v10223 = vunpack.c.l.b16 %v9704
          %v10224 = vunpack.c.l.b16 %v9705
          %v10225 = vunpack.c.l.b16 %v9706
          %v10226 = vunpack.c.l.b16 %v9707
          %v10227 = vunpack.c.l.b16 %v9708
          %v10228 = vunpack.c.l.b16 %v9709
          %v10229 = vunpack.c.l.b16 %v9710
          %v10230 = vunpack.c.l.b16 %v9711
          %v10231 = vunpack.c.l.b16 %v9712
          %v10232 = vunpack.c.l.b16 %v9713
          %v10233 = vunpack.c.l.b16 %v9714
          %v10234 = vunpack.c.l.b16 %v9715
          %v10235 = vunpack.c.l.b16 %v9716
          %v10236 = vunpack.c.l.b16 %v9717
          %v10237 = vunpack.c.l.b16 %v9718
          %v10238 = vunpack.c.l.b16 %v9719
          %v10239 = vunpack.c.l.b16 %v9720
          %v10240 = vunpack.c.l.b16 %v9721
          %v10241 = vunpack.c.l.b16 %v9722
          %v10242 = vunpack.c.l.b16 %v9723
          %v10243 = vunpack.c.l.b16 %v9724
          %v10244 = vpack.c.b16 %v9989, %v9988
          %v10245 = vpack.c.b16 %v9991, %v9990
          %v10246 = vpack.c.b16 %v9993, %v9992
          %v10247 = vpack.c.b16 %v9995, %v9994
          %v10248 = vpack.c.b16 %v9997, %v9996
          %v10249 = vpack.c.b16 %v9999, %v9998
          %v10250 = vpack.c.b16 %v10001, %v10000
          %v10251 = vpack.c.b16 %v10003, %v10002
          %v10252 = vpack.c.b16 %v10005, %v10004
          %v10253 = vpack.c.b16 %v10007, %v10006
          %v10254 = vpack.c.b16 %v10009, %v10008
          %v10255 = vpack.c.b16 %v10011, %v10010
          %v10256 = vpack.c.b16 %v10013, %v10012
          %v10257 = vpack.c.b16 %v10015, %v10014
          %v10258 = vpack.c.b16 %v10017, %v10016
          %v10259 = vpack.c.b16 %v10019, %v10018
          %v10260 = vpack.c.b16 %v10021, %v10020
          %v10261 = vpack.c.b16 %v10023, %v10022
          %v10262 = vpack.c.b16 %v10025, %v10024
          %v10263 = vpack.c.b16 %v10027, %v10026
          %v10264 = vpack.c.b16 %v10029, %v10028
          %v10265 = vpack.c.b16 %v10031, %v10030
          %v10266 = vpack.c.b16 %v10033, %v10032
          %v10267 = vpack.c.b16 %v10035, %v10034
          %v10268 = vpack.c.b16 %v10037, %v10036
          %v10269 = vpack.c.b16 %v10039, %v10038
          %v10270 = vpack.c.b16 %v10041, %v10040
          %v10271 = vpack.c.b16 %v10043, %v10042
          %v10272 = vpack.c.b16 %v10045, %v10044
          %v10273 = vpack.c.b16 %v10047, %v10046
          %v10274 = vpack.c.b16 %v10049, %v10048
          %v10275 = vpack.c.b16 %v10051, %v10050
          %v10276 = vpack.c.b16 %v10053, %v10052
          %v10277 = vpack.c.b16 %v10055, %v10054
          %v10278 = vpack.c.b16 %v10057, %v10056
          %v10279 = vpack.c.b16 %v10059, %v10058
          %v10280 = vpack.c.b16 %v10061, %v10060
          %v10281 = vpack.c.b16 %v10063, %v10062
          %v10282 = vpack.c.b16 %v10065, %v10064
          %v10283 = vpack.c.b16 %v10067, %v10066
          %v10284 = vpack.c.b16 %v10069, %v10068
          %v10285 = vpack.c.b16 %v10071, %v10070
          %v10286 = vpack.c.b16 %v10073, %v10072
          %v10287 = vpack.c.b16 %v10075, %v10074
          %v10288 = vpack.c.b16 %v10077, %v10076
          %v10289 = vpack.c.b16 %v10079, %v10078
          %v10290 = vpack.c.b16 %v10081, %v10080
          %v10291 = vpack.c.b16 %v10083, %v10082
          %v10292 = vpack.c.b16 %v10085, %v10084
          %v10293 = vpack.c.b16 %v10087, %v10086
          %v10294 = vpack.c.b16 %v10089, %v10088
          %v10295 = vpack.c.b16 %v10091, %v10090
          %v10296 = vpack.c.b16 %v10093, %v10092
          %v10297 = vpack.c.b16 %v10095, %v10094
          %v10298 = vpack.c.b16 %v10097, %v10096
          %v10299 = vpack.c.b16 %v10099, %v10098
          %v10300 = vpack.c.b16 %v10101, %v10100
          %v10301 = vpack.c.b16 %v10103, %v10102
          %v10302 = vpack.c.b16 %v10105, %v10104
          %v10303 = vpack.c.b16 %v10107, %v10106
          %v10304 = vpack.c.b16 %v10109, %v10108
          %v10305 = vpack.c.b16 %v10111, %v10110
          %v10306 = vpack.c.b16 %v10113, %v10112
          %v10307 = vpack.c.b16 %v10115, %v10114
          %v10308 = vpack.c.b16 %v10117, %v10116
          %v10309 = vpack.c.b16 %v10119, %v10118
          %v10310 = vpack.c.b16 %v10121, %v10120
          %v10311 = vpack.c.b16 %v10123, %v10122
          %v10312 = vpack.c.b16 %v10125, %v10124
          %v10313 = vpack.c.b16 %v10127, %v10126
          %v10314 = vpack.c.b16 %v10129, %v10128
          %v10315 = vpack.c.b16 %v10131, %v10130
          %v10316 = vpack.c.b16 %v10133, %v10132
          %v10317 = vpack.c.b16 %v10135, %v10134
          %v10318 = vpack.c.b16 %v10137, %v10136
          %v10319 = vpack.c.b16 %v10139, %v10138
          %v10320 = vpack.c.b16 %v10141, %v10140
          %v10321 = vpack.c.b16 %v10143, %v10142
          %v10322 = vpack.c.b16 %v10145, %v10144
          %v10323 = vpack.c.b16 %v10147, %v10146
          %v10324 = vpack.c.b16 %v10149, %v10148
          %v10325 = vpack.c.b16 %v10151, %v10150
          %v10326 = vpack.c.b16 %v10153, %v10152
          %v10327 = vpack.c.b16 %v10155, %v10154
          %v10328 = vpack.c.b16 %v10157, %v10156
          %v10329 = vpack.c.b16 %v10159, %v10158
          %v10330 = vpack.c.b16 %v10161, %v10160
          %v10331 = vpack.c.b16 %v10163, %v10162
          %v10332 = vpack.c.b16 %v10165, %v10164
          %v10333 = vpack.c.b16 %v10167, %v10166
          %v10334 = vpack.c.b16 %v10169, %v10168
          %v10335 = vpack.c.b16 %v10171, %v10170
          %v10336 = vpack.c.b16 %v10173, %v10172
          %v10337 = vpack.c.b16 %v10175, %v10174
          %v10338 = vpack.c.b16 %v10177, %v10176
          %v10339 = vpack.c.b16 %v10179, %v10178
          %v10340 = vpack.c.b16 %v10181, %v10180
          %v10341 = vpack.c.b16 %v10183, %v10182
          %v10342 = vpack.c.b16 %v10185, %v10184
          %v10343 = vpack.c.b16 %v10187, %v10186
          %v10344 = vpack.c.b16 %v10189, %v10188
          %v10345 = vpack.c.b16 %v10191, %v10190
          %v10346 = vpack.c.b16 %v10193, %v10192
          %v10347 = vpack.c.b16 %v10195, %v10194
          %v10348 = vpack.c.b16 %v10197, %v10196
          %v10349 = vpack.c.b16 %v10199, %v10198
          %v10350 = vpack.c.b16 %v10201, %v10200
          %v10351 = vpack.c.b16 %v10203, %v10202
          %v10352 = vpack.c.b16 %v10205, %v10204
          %v10353 = vpack.c.b16 %v10207, %v10206
          %v10354 = vpack.c.b16 %v10209, %v10208
          %v10355 = vpack.c.b16 %v10211, %v10210
          %v10356 = vpack.c.b16 %v10213, %v10212
          %v10357 = vpack.c.b16 %v10215, %v10214
          %v10358 = vpack.c.b16 %v10217, %v10216
          %v10359 = vpack.c.b16 %v10219, %v10218
          %v10360 = vpack.c.b16 %v10221, %v10220
          %v10361 = vpack.c.b16 %v10223, %v10222
          %v10362 = vpack.c.b16 %v10225, %v10224
          %v10363 = vpack.c.b16 %v10227, %v10226
          %v10364 = vpack.c.b16 %v10229, %v10228
          %v10365 = vpack.c.b16 %v10231, %v10230
          %v10366 = vpack.c.b16 %v10233, %v10232
          %v10367 = vpack.c.b16 %v10235, %v10234
          %v10368 = vpack.c.b16 %v10237, %v10236
          %v10369 = vpack.c.b16 %v10239, %v10238
          %v10370 = vpack.c.b16 %v10241, %v10240
          %v10371 = vpack.c.b16 %v10243, %v10242
          %10500 = vmatprep.subr.bf16.mxu0 0
          %10501 = vmatpush1.bf16.msra.mxu0 %v10251
          %10502 = vmatprep.subr.bf16.mxu0 0
          %10503 = vmatpush1.bf16.msra.mxu0 %v10250
          %10504 = vmatprep.subr.bf16.mxu0 0
          %10505 = vmatpush1.bf16.msra.mxu0 %v10249
          %10506 = vmatprep.subr.bf16.mxu0 0
          %10507 = vmatpush1.bf16.msra.mxu0 %v10248
          %10508 = vmatprep.subr.bf16.mxu0 0
          %10509 = vmatpush1.bf16.msra.mxu0 %v10247
          %10510 = vmatprep.subr.bf16.mxu0 0
          %10511 = vmatpush1.bf16.msra.mxu0 %v10246
          %10512 = vmatprep.subr.bf16.mxu0 0
          %10513 = vmatpush1.bf16.msra.mxu0 %v10245
          %10514 = vmatprep.subr.bf16.mxu0 0
          %10515 = vmatpush1.bf16.msra.mxu0 %v10244
          %10516 = vmatprep.subr.bf16.mxu0 0
          %10517 = vmatpush2.bf16.msra.mxu0 %v10259
          %10518 = vmatprep.subr.bf16.mxu0 0
          %10519 = vmatpush2.bf16.msra.mxu0 %v10258
          %10520 = vmatprep.subr.bf16.mxu0 0
          %10521 = vmatpush2.bf16.msra.mxu0 %v10257
          %10522 = vmatprep.subr.bf16.mxu0 0
          %10523 = vmatpush2.bf16.msra.mxu0 %v10256
          %10524 = vmatprep.subr.bf16.mxu0 0
          %10525 = vmatpush2.bf16.msra.mxu0 %v10255
          %10526 = vmatprep.subr.bf16.mxu0 0
          %10527 = vmatpush2.bf16.msra.mxu0 %v10254
          %10528 = vmatprep.subr.bf16.mxu0 0
          %10529 = vmatpush2.bf16.msra.mxu0 %v10253
          %10530 = vmatprep.subr.bf16.mxu0 0
          %10531 = vmatpush2.bf16.msra.mxu0 %v10252
          %10532 = vmatprep.mubr.bf16.mxu0 %v9454
          %10533 = vmatmul.mubr.bf16.gmra.mxu0 %v9453
          %v10534 = vpop.f32.mrf.mxu0
          %v10535 = vadd.f32 %v9730, %v10534
          %v10536 = vpop.f32.mrf.mxu0
          %v10537 = vpop.f32.mrf.mxu0
          %v10538 = vpop.f32.mrf.mxu0
          %10539 = vdwg.mxu0
          %10540 = vmatprep.subr.bf16.mxu0 0
          %10541 = vmatpush1.bf16.msra.mxu0 %v10267
          %10542 = vmatprep.subr.bf16.mxu0 0
          %10543 = vmatpush1.bf16.msra.mxu0 %v10266
          %10544 = vmatprep.subr.bf16.mxu0 0
          %10545 = vmatpush1.bf16.msra.mxu0 %v10265
          %10546 = vmatprep.subr.bf16.mxu0 0
          %10547 = vmatpush1.bf16.msra.mxu0 %v10264
          %10548 = vmatprep.subr.bf16.mxu0 0
          %10549 = vmatpush1.bf16.msra.mxu0 %v10263
          %10550 = vmatprep.subr.bf16.mxu0 0
          %10551 = vmatpush1.bf16.msra.mxu0 %v10262
          %10552 = vmatprep.subr.bf16.mxu0 0
          %10553 = vmatpush1.bf16.msra.mxu0 %v10261
          %10554 = vmatprep.subr.bf16.mxu0 0
          %10555 = vmatpush1.bf16.msra.mxu0 %v10260
          %10556 = vmatprep.subr.bf16.mxu0 0
          %10557 = vmatpush2.bf16.msra.mxu0 %v10275
          %10558 = vmatprep.subr.bf16.mxu0 0
          %10559 = vmatpush2.bf16.msra.mxu0 %v10274
          %10560 = vmatprep.subr.bf16.mxu0 0
          %10561 = vmatpush2.bf16.msra.mxu0 %v10273
          %10562 = vmatprep.subr.bf16.mxu0 0
          %10563 = vmatpush2.bf16.msra.mxu0 %v10272
          %10564 = vmatprep.subr.bf16.mxu0 0
          %10565 = vmatpush2.bf16.msra.mxu0 %v10271
          %10566 = vmatprep.subr.bf16.mxu0 0
          %10567 = vmatpush2.bf16.msra.mxu0 %v10270
          %10568 = vmatprep.subr.bf16.mxu0 0
          %10569 = vmatpush2.bf16.msra.mxu0 %v10269
          %10570 = vmatprep.subr.bf16.mxu0 0
          %10571 = vmatpush2.bf16.msra.mxu0 %v10268
          %10572 = vmatprep.mubr.bf16.mxu0 %v9456
          %10573 = vmatmul.mubr.bf16.gmra.mxu0 %v9455
          %v10574 = vpop.f32.mrf.mxu0
          %v10575 = vadd.f32 %v10535, %v10574
          %v10576 = vpop.f32.mrf.mxu0
          %v10577 = vpop.f32.mrf.mxu0
          %v10578 = vpop.f32.mrf.mxu0
          %10579 = vdwg.mxu0
          %10580 = vmatprep.subr.bf16.mxu0 0
          %10581 = vmatpush1.bf16.msra.mxu0 %v10283
          %10582 = vmatprep.subr.bf16.mxu0 0
          %10583 = vmatpush1.bf16.msra.mxu0 %v10282
          %10584 = vmatprep.subr.bf16.mxu0 0
          %10585 = vmatpush1.bf16.msra.mxu0 %v10281
          %10586 = vmatprep.subr.bf16.mxu0 0
          %10587 = vmatpush1.bf16.msra.mxu0 %v10280
          %10588 = vmatprep.subr.bf16.mxu0 0
          %10589 = vmatpush1.bf16.msra.mxu0 %v10279
          %10590 = vmatprep.subr.bf16.mxu0 0
          %10591 = vmatpush1.bf16.msra.mxu0 %v10278
          %10592 = vmatprep.subr.bf16.mxu0 0
          %10593 = vmatpush1.bf16.msra.mxu0 %v10277
          %10594 = vmatprep.subr.bf16.mxu0 0
          %10595 = vmatpush1.bf16.msra.mxu0 %v10276
          %10596 = vmatprep.subr.bf16.mxu0 0
          %10597 = vmatpush2.bf16.msra.mxu0 %v10291
          %10598 = vmatprep.subr.bf16.mxu0 0
          %10599 = vmatpush2.bf16.msra.mxu0 %v10290
          %10600 = vmatprep.subr.bf16.mxu0 0
          %10601 = vmatpush2.bf16.msra.mxu0 %v10289
          %10602 = vmatprep.subr.bf16.mxu0 0
          %10603 = vmatpush2.bf16.msra.mxu0 %v10288
          %10604 = vmatprep.subr.bf16.mxu0 0
          %10605 = vmatpush2.bf16.msra.mxu0 %v10287
          %10606 = vmatprep.subr.bf16.mxu0 0
          %10607 = vmatpush2.bf16.msra.mxu0 %v10286
          %10608 = vmatprep.subr.bf16.mxu0 0
          %10609 = vmatpush2.bf16.msra.mxu0 %v10285
          %10610 = vmatprep.subr.bf16.mxu0 0
          %10611 = vmatpush2.bf16.msra.mxu0 %v10284
          %10612 = vmatprep.mubr.bf16.mxu0 %v9458
          %10613 = vmatmul.mubr.bf16.gmra.mxu0 %v9457
          %v10614 = vpop.f32.mrf.mxu0
          %v10615 = vadd.f32 %v10575, %v10614
          %v10616 = vpop.f32.mrf.mxu0
          %v10617 = vpop.f32.mrf.mxu0
          %v10618 = vpop.f32.mrf.mxu0
          %10619 = vdwg.mxu0
          %10620 = vmatprep.subr.bf16.mxu0 0
          %10621 = vmatpush1.bf16.msra.mxu0 %v10299
          %10622 = vmatprep.subr.bf16.mxu0 0
          %10623 = vmatpush1.bf16.msra.mxu0 %v10298
          %10624 = vmatprep.subr.bf16.mxu0 0
          %10625 = vmatpush1.bf16.msra.mxu0 %v10297
          %10626 = vmatprep.subr.bf16.mxu0 0
          %10627 = vmatpush1.bf16.msra.mxu0 %v10296
          %10628 = vmatprep.subr.bf16.mxu0 0
          %10629 = vmatpush1.bf16.msra.mxu0 %v10295
          %10630 = vmatprep.subr.bf16.mxu0 0
          %10631 = vmatpush1.bf16.msra.mxu0 %v10294
          %10632 = vmatprep.subr.bf16.mxu0 0
          %10633 = vmatpush1.bf16.msra.mxu0 %v10293
          %10634 = vmatprep.subr.bf16.mxu0 0
          %10635 = vmatpush1.bf16.msra.mxu0 %v10292
          %10636 = vmatprep.subr.bf16.mxu0 0
          %10637 = vmatpush2.bf16.msra.mxu0 %v10307
          %10638 = vmatprep.subr.bf16.mxu0 0
          %10639 = vmatpush2.bf16.msra.mxu0 %v10306
          %10640 = vmatprep.subr.bf16.mxu0 0
          %10641 = vmatpush2.bf16.msra.mxu0 %v10305
          %10642 = vmatprep.subr.bf16.mxu0 0
          %10643 = vmatpush2.bf16.msra.mxu0 %v10304
          %10644 = vmatprep.subr.bf16.mxu0 0
          %10645 = vmatpush2.bf16.msra.mxu0 %v10303
          %10646 = vmatprep.subr.bf16.mxu0 0
          %10647 = vmatpush2.bf16.msra.mxu0 %v10302
          %10648 = vmatprep.subr.bf16.mxu0 0
          %10649 = vmatpush2.bf16.msra.mxu0 %v10301
          %10650 = vmatprep.subr.bf16.mxu0 0
          %10651 = vmatpush2.bf16.msra.mxu0 %v10300
          %10652 = vmatprep.mubr.bf16.mxu0 %v9460
          %10653 = vmatmul.mubr.bf16.gmra.mxu0 %v9459
          %v10654 = vpop.f32.mrf.mxu0
          %v10655 = vadd.f32 %v10615, %v10654
          %v10656 = vpop.f32.mrf.mxu0
          %v10657 = vpop.f32.mrf.mxu0
          %v10658 = vpop.f32.mrf.mxu0
          %10659 = vdwg.mxu0
          %10660 = vmatprep.subr.bf16.mxu0 0
          %10661 = vmatpush1.bf16.msra.mxu0 %v10315
          %10662 = vmatprep.subr.bf16.mxu0 0
          %10663 = vmatpush1.bf16.msra.mxu0 %v10314
          %10664 = vmatprep.subr.bf16.mxu0 0
          %10665 = vmatpush1.bf16.msra.mxu0 %v10313
          %10666 = vmatprep.subr.bf16.mxu0 0
          %10667 = vmatpush1.bf16.msra.mxu0 %v10312
          %10668 = vmatprep.subr.bf16.mxu0 0
          %10669 = vmatpush1.bf16.msra.mxu0 %v10311
          %10670 = vmatprep.subr.bf16.mxu0 0
          %10671 = vmatpush1.bf16.msra.mxu0 %v10310
          %10672 = vmatprep.subr.bf16.mxu0 0
          %10673 = vmatpush1.bf16.msra.mxu0 %v10309
          %10674 = vmatprep.subr.bf16.mxu0 0
          %10675 = vmatpush1.bf16.msra.mxu0 %v10308
          %10676 = vmatprep.subr.bf16.mxu0 0
          %10677 = vmatpush2.bf16.msra.mxu0 %v10323
          %10678 = vmatprep.subr.bf16.mxu0 0
          %10679 = vmatpush2.bf16.msra.mxu0 %v10322
          %10680 = vmatprep.subr.bf16.mxu0 0
          %10681 = vmatpush2.bf16.msra.mxu0 %v10321
          %10682 = vmatprep.subr.bf16.mxu0 0
          %10683 = vmatpush2.bf16.msra.mxu0 %v10320
          %10684 = vmatprep.subr.bf16.mxu0 0
          %10685 = vmatpush2.bf16.msra.mxu0 %v10319
          %10686 = vmatprep.subr.bf16.mxu0 0
          %10687 = vmatpush2.bf16.msra.mxu0 %v10318
          %10688 = vmatprep.subr.bf16.mxu0 0
          %10689 = vmatpush2.bf16.msra.mxu0 %v10317
          %10690 = vmatprep.subr.bf16.mxu0 0
          %10691 = vmatpush2.bf16.msra.mxu0 %v10316
          %10692 = vmatprep.mubr.bf16.mxu0 %v9462
          %10693 = vmatmul.mubr.bf16.gmra.mxu0 %v9461
          %v10694 = vpop.f32.mrf.mxu0
          %v10695 = vadd.f32 %v10655, %v10694
          %v10696 = vpop.f32.mrf.mxu0
          %v10697 = vpop.f32.mrf.mxu0
          %v10698 = vpop.f32.mrf.mxu0
          %10699 = vdwg.mxu0
          %10700 = vmatprep.subr.bf16.mxu0 0
          %10701 = vmatpush1.bf16.msra.mxu0 %v10331
          %10702 = vmatprep.subr.bf16.mxu0 0
          %10703 = vmatpush1.bf16.msra.mxu0 %v10330
          %10704 = vmatprep.subr.bf16.mxu0 0
          %10705 = vmatpush1.bf16.msra.mxu0 %v10329
          %10706 = vmatprep.subr.bf16.mxu0 0
          %10707 = vmatpush1.bf16.msra.mxu0 %v10328
          %10708 = vmatprep.subr.bf16.mxu0 0
          %10709 = vmatpush1.bf16.msra.mxu0 %v10327
          %10710 = vmatprep.subr.bf16.mxu0 0
          %10711 = vmatpush1.bf16.msra.mxu0 %v10326
          %10712 = vmatprep.subr.bf16.mxu0 0
          %10713 = vmatpush1.bf16.msra.mxu0 %v10325
          %10714 = vmatprep.subr.bf16.mxu0 0
          %10715 = vmatpush1.bf16.msra.mxu0 %v10324
          %10716 = vmatprep.subr.bf16.mxu0 0
          %10717 = vmatpush2.bf16.msra.mxu0 %v10339
          %10718 = vmatprep.subr.bf16.mxu0 0
          %10719 = vmatpush2.bf16.msra.mxu0 %v10338
          %10720 = vmatprep.subr.bf16.mxu0 0
          %10721 = vmatpush2.bf16.msra.mxu0 %v10337
          %10722 = vmatprep.subr.bf16.mxu0 0
          %10723 = vmatpush2.bf16.msra.mxu0 %v10336
          %10724 = vmatprep.subr.bf16.mxu0 0
          %10725 = vmatpush2.bf16.msra.mxu0 %v10335
          %10726 = vmatprep.subr.bf16.mxu0 0
          %10727 = vmatpush2.bf16.msra.mxu0 %v10334
          %10728 = vmatprep.subr.bf16.mxu0 0
          %10729 = vmatpush2.bf16.msra.mxu0 %v10333
          %10730 = vmatprep.subr.bf16.mxu0 0
          %10731 = vmatpush2.bf16.msra.mxu0 %v10332
          %10732 = vmatprep.mubr.bf16.mxu0 %v9464
          %10733 = vmatmul.mubr.bf16.gmra.mxu0 %v9463
          %v10734 = vpop.f32.mrf.mxu0
          %v10735 = vadd.f32 %v10695, %v10734
          %v10736 = vpop.f32.mrf.mxu0
          %v10737 = vpop.f32.mrf.mxu0
          %v10738 = vpop.f32.mrf.mxu0
          %10739 = vdwg.mxu0
          %10740 = vmatprep.subr.bf16.mxu0 0
          %10741 = vmatpush1.bf16.msra.mxu0 %v10347
          %10742 = vmatprep.subr.bf16.mxu0 0
          %10743 = vmatpush1.bf16.msra.mxu0 %v10346
          %10744 = vmatprep.subr.bf16.mxu0 0
          %10745 = vmatpush1.bf16.msra.mxu0 %v10345
          %10746 = vmatprep.subr.bf16.mxu0 0
          %10747 = vmatpush1.bf16.msra.mxu0 %v10344
          %10748 = vmatprep.subr.bf16.mxu0 0
          %10749 = vmatpush1.bf16.msra.mxu0 %v10343
          %10750 = vmatprep.subr.bf16.mxu0 0
          %10751 = vmatpush1.bf16.msra.mxu0 %v10342
          %10752 = vmatprep.subr.bf16.mxu0 0
          %10753 = vmatpush1.bf16.msra.mxu0 %v10341
          %10754 = vmatprep.subr.bf16.mxu0 0
          %10755 = vmatpush1.bf16.msra.mxu0 %v10340
          %10756 = vmatprep.subr.bf16.mxu0 0
          %10757 = vmatpush2.bf16.msra.mxu0 %v10355
          %10758 = vmatprep.subr.bf16.mxu0 0
          %10759 = vmatpush2.bf16.msra.mxu0 %v10354
          %10760 = vmatprep.subr.bf16.mxu0 0
          %10761 = vmatpush2.bf16.msra.mxu0 %v10353
          %10762 = vmatprep.subr.bf16.mxu0 0
          %10763 = vmatpush2.bf16.msra.mxu0 %v10352
          %10764 = vmatprep.subr.bf16.mxu0 0
          %10765 = vmatpush2.bf16.msra.mxu0 %v10351
          %10766 = vmatprep.subr.bf16.mxu0 0
          %10767 = vmatpush2.bf16.msra.mxu0 %v10350
          %10768 = vmatprep.subr.bf16.mxu0 0
          %10769 = vmatpush2.bf16.msra.mxu0 %v10349
          %10770 = vmatprep.subr.bf16.mxu0 0
          %10771 = vmatpush2.bf16.msra.mxu0 %v10348
          %10772 = vmatprep.mubr.bf16.mxu0 %v9466
          %10773 = vmatmul.mubr.bf16.gmra.mxu0 %v9465
          %v10774 = vpop.f32.mrf.mxu0
          %v10775 = vadd.f32 %v10735, %v10774
          %v10776 = vpop.f32.mrf.mxu0
          %v10777 = vpop.f32.mrf.mxu0
          %v10778 = vpop.f32.mrf.mxu0
          %10779 = vdwg.mxu0
          %10780 = vmatprep.subr.bf16.mxu0 0
          %10781 = vmatpush1.bf16.msra.mxu0 %v10363
          %10782 = vmatprep.subr.bf16.mxu0 0
          %10783 = vmatpush1.bf16.msra.mxu0 %v10362
          %10784 = vmatprep.subr.bf16.mxu0 0
          %10785 = vmatpush1.bf16.msra.mxu0 %v10361
          %10786 = vmatprep.subr.bf16.mxu0 0
          %10787 = vmatpush1.bf16.msra.mxu0 %v10360
          %10788 = vmatprep.subr.bf16.mxu0 0
          %10789 = vmatpush1.bf16.msra.mxu0 %v10359
          %10790 = vmatprep.subr.bf16.mxu0 0
          %10791 = vmatpush1.bf16.msra.mxu0 %v10358
          %10792 = vmatprep.subr.bf16.mxu0 0
          %10793 = vmatpush1.bf16.msra.mxu0 %v10357
          %10794 = vmatprep.subr.bf16.mxu0 0
          %10795 = vmatpush1.bf16.msra.mxu0 %v10356
          %10796 = vmatprep.subr.bf16.mxu0 0
          %10797 = vmatpush2.bf16.msra.mxu0 %v10371
          %10798 = vmatprep.subr.bf16.mxu0 0
          %10799 = vmatpush2.bf16.msra.mxu0 %v10370
          %10800 = vmatprep.subr.bf16.mxu0 0
          %10801 = vmatpush2.bf16.msra.mxu0 %v10369
          %10802 = vmatprep.subr.bf16.mxu0 0
          %10803 = vmatpush2.bf16.msra.mxu0 %v10368
          %10804 = vmatprep.subr.bf16.mxu0 0
          %10805 = vmatpush2.bf16.msra.mxu0 %v10367
          %10806 = vmatprep.subr.bf16.mxu0 0
          %10807 = vmatpush2.bf16.msra.mxu0 %v10366
          %10808 = vmatprep.subr.bf16.mxu0 0
          %10809 = vmatpush2.bf16.msra.mxu0 %v10365
          %10810 = vmatprep.subr.bf16.mxu0 0
          %10811 = vmatpush2.bf16.msra.mxu0 %v10364
          %10812 = vmatprep.mubr.bf16.mxu0 %v9468
          %10813 = vmatmul.mubr.bf16.gmra.mxu0 %v9467
          %v10814 = vpop.f32.mrf.mxu0
          %v10815 = vadd.f32 %v10775, %v10814
          %v10816 = vpop.f32.mrf.mxu0
          %v10817 = vpop.f32.mrf.mxu0
          %v10818 = vpop.f32.mrf.mxu0
          %10819 = vdwg.mxu0
          %v10820 = vsub.f32 0.0, %v10815
          %v10821 = vmul.f32 %v10820, 1.442695
          %v10822 = vpow.pop %v10821
          %v10823 = vadd.f32 %v10822, 1.0
          %v10824 = vrcp.pop %v10823
          %v10825 = vmul.f32 1.0, %v10824
          %vm10826 = vcmask 33792
          %10827 = vst.msk [vmem:[#allocation16] sm:$0x3] %vm10826, %v10825
        $region84: #{tpu_custom_call.1} parent=51 // pred_fallthru
          _
        // Predicated region
        $region85: #{tpu_custom_call.1} parent=51 // pred_check
          %p10828 = pneg %p239
        $region86: #{tpu_custom_call.1} parent=51 // pred_check_branch
          %10830 = sbr.rel (%p10828) target = $region88
        $region87: #{tpu_custom_call.1} parent=51 // pred_region
          %s10832 = ssub.s32 32, 32
          %10833 = vsyncadd [#allocation7], %s10832
          %s10835 = sshll.u32 [#allocation16], 4
          %s10836 = int_to_ptr.vmem [resolvable:$true] %s10835
          %10838 = dma.vmem_to_hbm [thread:$0]  %s10836, 32, %s9, [#allocation7]
        $region88: #{tpu_custom_call.1} parent=51 // pred_fallthru
          _
        // Predicated region
        $region89: #{tpu_custom_call.1} parent=51 // pred_check
          %p10839 = pneg %p239
        $region90: #{tpu_custom_call.1} parent=51 // pred_check_branch
          %10841 = sbr.rel (%p10839) target = $region92
        $region91: #{tpu_custom_call.1} parent=51 // pred_region
          %10842 = dma.done [#allocation7], 32
        $region92: #{tpu_custom_call.1} parent=51 // pred_fallthru
          _
      $region52: #{tpu_custom_call.1} parent=5 // pred_fallthru
        _
      %p10843 = scmp.le.s32.totalorder 2, %s28
      // Predicated region
      $region93: #{tpu_custom_call.1} parent=5 // pred_check
        %p10844 = pneg %p10843
      $region94: #{tpu_custom_call.1} parent=5 // pred_check_branch
        %10846 = sbr.rel (%p10844) target = $region96
      $region95: #{tpu_custom_call.1} parent=5 // pred_region
        %s10847 = ssub.s32 %s28, 2
      $region96: #{tpu_custom_call.1} parent=5 // pred_fallthru
        _
    $region6: #{tpu_custom_call.1} parent=1 // loop_footer
      %s32 = sadd.s32 1, %s28
    $region7: #{tpu_custom_call.1} parent=1 // loop_footer_branch
      %27 = sbr.rel target = $region3
    $region8: #{tpu_custom_call.1} parent=1 // loop_exit
      _
    %10848 = vsyncpa [#allocation6], 1
    %s10849 = scalar_lea.sflag [#allocation6], 1
    %10850 = vsyncpa %s10849, 1
    %10851 = vsyncpa [#allocation9], 1
    %s10852 = scalar_lea.sflag [#allocation9], 1
    %10853 = vsyncpa %s10852, 1
    %10854 = vsyncpa [#allocation12], 1
    %s10855 = scalar_lea.sflag [#allocation12], 1
    %10856 = vsyncpa %s10855, 1
    %10857 = vsyncpa [#allocation15], 1
    %10858 = vsyncpa [#allocation7], 1
    %s10859 = scalar_lea.sflag [#allocation7], 1
    %10860 = vsyncpa %s10859, 1

</llo_original>
